<compile_context>
chip_gen: v5e
topology: v5e:2x2
jax: 0.10.0
libtpu: 0.0.40
codegen_flags: <defaults>
</compile_context>

<pallas_src>
import functools

import jax
import jax.numpy as jnp
from jax import lax
from jax.experimental import pallas as pl
from jax.experimental.pallas import tpu as pltpu

_EPS = 1e-5  # PyTorch BatchNorm2d default eps


# ---------------------------------------------------------------------------
# Pallas kernels
# ---------------------------------------------------------------------------
def conv_im2col_kernel(x_ref, w_ref, a_ref, c_ref, o_ref, *, kk, hout, wout, relu):
    """Stride-1 kk x kk conv + per-channel affine (+ optional ReLU), 1 sample/step.

    x_ref: (1, hout+kk-1, wout+kk-1, cin)  pre-padded input block
    w_ref: (kk*kk*cin, cout) bf16          im2col-ordered weights
    a_ref, c_ref: (1, cout) f32            folded (eval) BatchNorm scale / shift
    """
    xp = x_ref[0]
    cin = xp.shape[-1]
    m = hout * wout
    if kk == 1:
        patches = xp.reshape(m, cin)
    else:
        pieces = [xp[a:a + hout, b:b + wout, :].reshape(m, cin)
                  for a in range(kk) for b in range(kk)]
        patches = jnp.concatenate(pieces, axis=1)          # (m, kk*kk*cin)
    acc = jnp.dot(patches.astype(jnp.bfloat16), w_ref[...],
                  preferred_element_type=jnp.float32)
    y = acc * a_ref[...] + c_ref[...]
    if relu:
        y = jnp.maximum(y, 0.0)
    o_ref[0] = y.reshape(hout, wout, y.shape[-1]).astype(o_ref.dtype)


def bottleneck_kernel(x_ref, w1_ref, a1_ref, c1_ref,
                      w2_ref, a2_ref, c2_ref,
                      w3_ref, a3_ref, c3_ref,
                      *rest, kk, hout, wout, cy, has_down, has_proj):
    """Fused BottleneckBlock (eval BatchNorm), one sample per grid step.

    stride=1 blocks: x_ref (1, H, W, Cin),      kk=3, cy = planes//4
    stride=2 blocks: x_ref (1, H/2, W/2, 4*Cin) (space-to-depth input),
                     kk=2, cy = 4*(planes//4); downsample weights appended.
    has_proj: a trailing 1x1 projection conv (wp, bp) is fused after the block.
    """
    idx = 0
    if has_down:
        wd_ref, ad_ref, cd_ref = rest[idx], rest[idx + 1], rest[idx + 2]
        idx += 3
    if has_proj:
        wp_ref, bp_ref = rest[idx], rest[idx + 1]
        idx += 2
    o_ref, pad_ref = rest[idx], rest[idx + 1]

    x = x_ref[0]
    cx = x.shape[-1]
    m = hout * wout
    xf = x.reshape(m, cx)
    xb = xf.astype(jnp.bfloat16)

    # conv1 (1x1) + BN + ReLU
    y1 = jnp.dot(xb, w1_ref[...], preferred_element_type=jnp.float32)
    y1 = jnp.maximum(y1 * a1_ref[...] + c1_ref[...], 0.0)

    # Stage y1 in a zero-padded VMEM scratch for the 3x3 conv. Only the halo
    # rows/cols are cleared (the interior is fully rewritten every step), which
    # stays correct when the parallel batch axis is split across TensorCores.
    hs, ws = hout + kk - 1, wout + kk - 1
    pad_ref[0:1, :, :] = jnp.zeros((1, ws, cy), jnp.float32)
    pad_ref[:, 0:1, :] = jnp.zeros((hs, 1, cy), jnp.float32)
    if kk == 3:
        pad_ref[hout + 1:hout + 2, :, :] = jnp.zeros((1, ws, cy), jnp.float32)
        pad_ref[:, wout + 1:wout + 2, :] = jnp.zeros((hs, 1, cy), jnp.float32)
    pad_ref[1:1 + hout, 1:1 + wout, :] = y1.reshape(hout, wout, cy)
    ysp = pad_ref[...]

    # conv2 (3x3; stride-2 handled via the space-to-depth input) as ONE matmul.
    pieces = [ysp[a:a + hout, b:b + wout, :].reshape(m, cy)
              for a in range(kk) for b in range(kk)]
    patches = jnp.concatenate(pieces, axis=1).astype(jnp.bfloat16)
    y2 = jnp.dot(patches, w2_ref[...], preferred_element_type=jnp.float32)
    y2 = jnp.maximum(y2 * a2_ref[...] + c2_ref[...], 0.0)

    # conv3 (1x1) + BN + ReLU
    y3 = jnp.dot(y2.astype(jnp.bfloat16), w3_ref[...],
                 preferred_element_type=jnp.float32)
    y3 = jnp.maximum(y3 * a3_ref[...] + c3_ref[...], 0.0)

    # residual branch (with fused 1x1/stride-2 downsample conv + BN if present)
    if has_down:
        res = jnp.dot(xb, wd_ref[...], preferred_element_type=jnp.float32)
        res = res * ad_ref[...] + cd_ref[...]
    else:
        res = xf
    out = jnp.maximum(res + y3, 0.0)

    # optional fused output projection (SmallEncoder.conv2: 1x1, bias, no norm)
    if has_proj:
        out = jnp.dot(out.astype(jnp.bfloat16), wp_ref[...],
                      preferred_element_type=jnp.float32) + bp_ref[...]

    o_ref[0] = out.reshape(hout, wout, out.shape[-1]).astype(o_ref.dtype)


# ---------------------------------------------------------------------------
# Wrapper-side layout plumbing (plain JAX, outside the kernels)
# ---------------------------------------------------------------------------
def _full_spec(shape):
    zeros = (0,) * len(shape)
    return pl.BlockSpec(tuple(shape), lambda n: zeros)


def _sample_spec(shape):
    nrest = len(shape) - 1
    return pl.BlockSpec((1,) + tuple(shape[1:]),
                        lambda n: (n,) + (0,) * nrest)


def fold_bn(conv_bias, bn):
    """Eval-mode BatchNorm folded with the conv bias into a scale / shift pair."""
    scale = bn["gamma"] / jnp.sqrt(bn["var"] + _EPS)
    shift = (conv_bias - bn["mean"]) * scale + bn["beta"]
    return scale.reshape(1, -1), shift.reshape(1, -1)


def space_to_depth(x):
    """(N, H, W, C) -> (N, H//2, W//2, 4*C); channel group index = 2*p + q."""
    n, h, w, c = x.shape
    assert h % 2 == 0 and w % 2 == 0
    x = x.reshape(n, h // 2, 2, w // 2, 2, c)
    x = jnp.transpose(x, (0, 1, 3, 2, 4, 5))
    return x.reshape(n, h // 2, w // 2, 4 * c)


def _im2col_weight_s1(w_oihw):
    """(O, I, k, k) OIHW -> (k*k*I, O); row order = (dy, dx, cin)."""
    o, i, k, _ = w_oihw.shape
    return jnp.transpose(w_oihw, (2, 3, 1, 0)).reshape(k * k * i, o)


def _im2col_weight_s2d(w_oihw, taps):
    """Stride-2 conv (odd k, pad=(k-1)//2) remapped for the equivalent stride-1
    `taps x taps` conv over the space-to-depth input.
    Row order = (A, B, p, q, cin); original tap dy = 2A+p-1, dx = 2B+q-1."""
    o, i, k, _ = w_oihw.shape
    w = jnp.transpose(w_oihw, (2, 3, 1, 0))                 # (k, k, i, o)
    out = jnp.zeros((taps, taps, 2, 2, i, o), w.dtype)
    for a in range(taps):
        for p in range(2):
            dy = 2 * a + p - 1
            if not 0 <= dy < k:
                continue
            for b in range(taps):
                for q in range(2):
                    dx = 2 * b + q - 1
                    if not 0 <= dx < k:
                        continue
                    out = out.at[a, b, p, q].set(w[dy, dx])
    return out.reshape(taps * taps * 4 * i, o)


# ---------------------------------------------------------------------------
# pallas_call wrappers
# ---------------------------------------------------------------------------
def conv_call(xpad, w_bf16, alpha, beta, *, kk, hout, wout, relu):
    n = xpad.shape[0]
    cout = w_bf16.shape[-1]
    kernel = functools.partial(conv_im2col_kernel,
                               kk=kk, hout=hout, wout=wout, relu=relu)
    return pl.pallas_call(
        kernel,
        out_shape=jax.ShapeDtypeStruct((n, hout, wout, cout), jnp.float32),
        grid_spec=pltpu.PrefetchScalarGridSpec(
            num_scalar_prefetch=0,
            grid=(n,),
            in_specs=[_sample_spec(xpad.shape),
                      _full_spec(w_bf16.shape),
                      _full_spec(alpha.shape),
                      _full_spec(beta.shape)],
            out_specs=pl.BlockSpec((1, hout, wout, cout),
                                   lambda i: (i, 0, 0, 0)),
        ),
        compiler_params=pltpu.CompilerParams(
            dimension_semantics=("parallel",)),
    )(xpad, w_bf16, alpha, beta)


def bottleneck_call(x_nhwc, blk, *, stride, proj=None):
    n, h, w, cin = x_nhwc.shape
    planes = blk["w3"].shape[0]
    cm = blk["w1"].shape[0]

    a1, c1 = fold_bn(blk["b1"], blk["n1"])
    a2, c2 = fold_bn(blk["b2"], blk["n2"])
    a3, c3 = fold_bn(blk["b3"], blk["n3"])
    w1 = blk["w1"][:, :, 0, 0].T                            # (cin, cm)
    w3 = blk["w3"][:, :, 0, 0].T                            # (cm, planes)

    if stride == 1:
        assert cin == planes, "stride-1 BottleneckBlock needs in_planes == planes"
        kk, hout, wout, cy = 3, h, w, cm
        x_in = x_nhwc
        w1k, a1k, c1k = w1, a1, c1
        w2k = _im2col_weight_s1(blk["w2"])                  # (9*cm, cm)
        down = ()
    else:
        kk, hout, wout, cy = 2, h // 2, w // 2, 4 * cm
        x_in = space_to_depth(x_nhwc)                       # (n, h/2, w/2, 4*cin)
        w1k = jnp.kron(jnp.eye(4, dtype=w1.dtype), w1)      # block-diag (4cin,4cm)
        a1k, c1k = jnp.tile(a1, (1, 4)), jnp.tile(c1, (1, 4))
        w2k = _im2col_weight_s2d(blk["w2"], taps=2)         # (16*cm, cm)
        wd = blk["wd"][:, :, 0, 0].T                        # (cin, planes)
        wd = jnp.concatenate(
            [wd, jnp.zeros((3 * cin, planes), wd.dtype)], axis=0)
        ad, cd = fold_bn(blk["bd"], blk["nd"])
        down = (wd.astype(jnp.bfloat16), ad, cd)

    if proj is not None:
        wp = proj[0][:, :, 0, 0].T.astype(jnp.bfloat16)     # (planes, out_dim)
        bp = proj[1].reshape(1, -1).astype(jnp.float32)
        extra = (wp, bp)
        cout = wp.shape[1]
    else:
        extra = ()
        cout = planes

    inputs = [x_in,
              w1k.astype(jnp.bfloat16), a1k, c1k,
              w2k.astype(jnp.bfloat16), a2, c2,
              w3.astype(jnp.bfloat16), a3, c3, *down, *extra]
    in_specs = ([_sample_spec(x_in.shape)]
                + [_full_spec(t.shape) for t in inputs[1:]])

    kernel = functools.partial(bottleneck_kernel, kk=kk, hout=hout, wout=wout,
                               cy=cy, has_down=bool(down),
                               has_proj=proj is not None)
    return pl.pallas_call(
        kernel,
        out_shape=jax.ShapeDtypeStruct((n, hout, wout, cout), jnp.float32),
        grid_spec=pltpu.PrefetchScalarGridSpec(
            num_scalar_prefetch=0,
            grid=(n,),
            in_specs=in_specs,
            out_specs=pl.BlockSpec((1, hout, wout, cout),
                                   lambda i: (i, 0, 0, 0)),
            scratch_shapes=[pltpu.VMEM(
                (hout + kk - 1, wout + kk - 1, cy), jnp.float32)],
        ),
        compiler_params=pltpu.CompilerParams(
            dimension_semantics=("parallel",)),
    )(*inputs)


def small_encoder_forward(x_nchw, params):
    """SmallEncoder forward (eval). (N, 3, H, W) -> (N, 128, H/8, W/8)."""
    x = jnp.transpose(x_nchw, (0, 2, 3, 1)).astype(jnp.float32)   # NHWC
    n, h, w, _ = x.shape
    assert h % 8 == 0 and w % 8 == 0

    # conv1 (7x7 / stride 2 / pad 3) + BN + ReLU as a 4x4 stride-1 conv over the
    # space-to-depth input (wrapper-side layout plumbing only).
    xs = jnp.pad(space_to_depth(x), ((0, 0), (2, 1), (2, 1), (0, 0)))
    w1 = _im2col_weight_s2d(params["conv1_w"], taps=4)            # (192, 32)
    a1, c1 = fold_bn(params["conv1_b"], params["norm1"])
    x = conv_call(xs, w1.astype(jnp.bfloat16), a1, c1,
                  kk=4, hout=h // 2, wout=w // 2, relu=True)

    # residual layers: each BottleneckBlock is one fused kernel; the final 1x1
    # projection conv (conv2) is fused into the very last block.
    x = bottleneck_call(x, params["layer1"][0], stride=1)
    x = bottleneck_call(x, params["layer1"][1], stride=1)
    x = bottleneck_call(x, params["layer2"][0], stride=2)
    x = bottleneck_call(x, params["layer2"][1], stride=1)
    x = bottleneck_call(x, params["layer3"][0], stride=2)
    x = bottleneck_call(x, params["layer3"][1], stride=1,
                        proj=(params["conv2_w"], params["conv2_b"]))
    return jnp.transpose(x, (0, 3, 1, 2))                         # NCHW


# ---------------------------------------------------------------------------
# Parameters and pure-JAX reference
# ---------------------------------------------------------------------------
def init_params(key):
    dims, out_dim = [32, 32, 64, 96], 128
    keys = iter(jax.random.split(key, 160))

    def conv_w(o, i, k):
        fan_in = i * k * k
        return jax.random.normal(next(keys), (o, i, k, k),
                                 jnp.float32) * jnp.sqrt(2.0 / fan_in)

    def conv_b(o):
        return 0.05 * jax.random.normal(next(keys), (o,), jnp.float32)

    def bn(c):
        return {
            "gamma": 1.0 + 0.1 * jax.random.normal(next(keys), (c,), jnp.float32),
            "beta": 0.1 * jax.random.normal(next(keys), (c,), jnp.float32),
            "mean": 0.1 * jax.random.normal(next(keys), (c,), jnp.float32),
            "var": jnp.abs(1.0 + 0.1 * jax.random.normal(next(keys), (c,), jnp.float32)),
        }

    def block(cin, planes, stride):
        cm = planes // 4
        blk = {"w1": conv_w(cm, cin, 1), "b1": conv_b(cm), "n1": bn(cm),
               "w2": conv_w(cm, cm, 3), "b2": conv_b(cm), "n2": bn(cm),
               "w3": conv_w(planes, cm, 1), "b3": conv_b(planes), "n3": bn(planes)}
        if stride != 1:
            blk["wd"], blk["bd"], blk["nd"] = (conv_w(planes, cin, 1),
                                               conv_b(planes), bn(planes))
        return blk

    return {
        "conv1_w": conv_w(dims[0], 3, 7), "conv1_b": conv_b(dims[0]),
        "norm1": bn(dims[0]),
        "layer1": [block(dims[0], dims[1], 1), block(dims[1], dims[1], 1)],
        "layer2": [block(dims[1], dims[2], 2), block(dims[2], dims[2], 1)],
        "layer3": [block(dims[2], dims[3], 2), block(dims[3], dims[3], 1)],
        "conv2_w": conv_w(out_dim, dims[3], 1), "conv2_b": conv_b(out_dim),
    }


def ref_forward(x_nchw, params):
    """Pure-JAX reference (lax.conv). Conv operands are cast to bf16 with f32
    accumulation to mirror the kernel's MXU precision; everything else is f32."""
    def conv(x, w_oihw, stride, pad):
        w = jnp.transpose(w_oihw, (2, 3, 1, 0))               # HWIO
        return lax.conv_general_dilated(
            x.astype(jnp.bfloat16), w.astype(jnp.bfloat16),
            window_strides=(stride, stride),
            padding=((pad, pad), (pad, pad)),
            dimension_numbers=("NHWC", "HWIO", "NHWC"),
            preferred_element_type=jnp.float32)

    def conv_bn(x, w, b, bn, stride, pad, relu=True):
        a, c = fold_bn(b, bn)
        y = conv(x, w, stride, pad) * a.reshape(1, 1, 1, -1) + c.reshape(1, 1, 1, -1)
        return jnp.maximum(y, 0.0) if relu else y

    def block(x, blk, stride):
        y = conv_bn(x, blk["w1"], blk["b1"], blk["n1"], 1, 0)
        y = conv_bn(y, blk["w2"], blk["b2"], blk["n2"], stride, 1)
        y = conv_bn(y, blk["w3"], blk["b3"], blk["n3"], 1, 0)
        if stride != 1:
            x = conv_bn(x, blk["wd"], blk["bd"], blk["nd"], stride, 0, relu=False)
        return jnp.maximum(x + y, 0.0)

    x = jnp.transpose(x_nchw, (0, 2, 3, 1)).astype(jnp.float32)
    x = conv_bn(x, params["conv1_w"], params["conv1_b"], params["norm1"], 2, 3)
    for blk, s in [(params["layer1"][0], 1), (params["layer1"][1], 1),
                   (params["layer2"][0], 2), (params["layer2"][1], 1),
                   (params["layer3"][0], 2), (params["layer3"][1], 1)]:
        x = block(x, blk, s)
    x = conv(x, params["conv2_w"], 1, 0) + params["conv2_b"].reshape(1, 1, 1, -1)
    return jnp.transpose(x, (0, 3, 1, 2))


if __name__ == "__main__":
    key = jax.random.PRNGKey(0)
    kp, kx = jax.random.split(key)
    params = init_params(kp)
    x = jax.random.normal(kx, (2, 3, 32, 32), jnp.float32)

    fwd = jax.jit(small_encoder_forward)
    ref_fn = jax.jit(ref_forward)

    out = jax.block_until_ready(fwd(x, params))
    ref = jax.block_until_ready(ref_fn(x, params))

    assert out.shape == ref.shape == (2, 128, 4, 4), out.shape
    max_err = float(jnp.max(jnp.abs(out - ref)))
    assert jnp.allclose(out, ref, rtol=2e-2, atol=2e-2), f"max abs err = {max_err}"
    print("KERNEL_OK")
</pallas_src>

<mosaic_0001>
module attributes {stable_mosaic.version = 11 : i64} {
  func.func @conv_im2col_kernel(%arg0: i32, %arg1: memref<1x19x19x12xf32, #tpu.memory_space<vmem>>, %arg2: memref<192x32xbf16, #tpu.memory_space<vmem>>, %arg3: memref<1x32xf32, #tpu.memory_space<vmem>>, %arg4: memref<1x32xf32, #tpu.memory_space<vmem>>, %arg5: memref<1x16x16x32xf32, #tpu.memory_space<vmem>>) attributes {dimension_semantics = [#tpu.dimension_semantics<parallel>], iteration_bounds = array<i64: 2>, scalar_prefetch = 0 : i64, scratch_operands = 0 : i64, tpu.core_type = #tpu.core_type<tc>, window_params = [{transform_indices = @transform_0, window_bounds = array<i64: 1, 19, 19, 12>}, {pipeline_mode = #tpu.pipeline_mode<synchronous>, transform_indices = @transform_1, window_bounds = array<i64: 192, 32>}, {pipeline_mode = #tpu.pipeline_mode<synchronous>, transform_indices = @transform_2, window_bounds = array<i64: 1, 32>}, {pipeline_mode = #tpu.pipeline_mode<synchronous>, transform_indices = @transform_3, window_bounds = array<i64: 1, 32>}, {transform_indices = @transform_4, window_bounds = array<i64: 1, 16, 16, 32>}]} {
    %c0 = arith.constant 0 : index
    %c0_0 = arith.constant 0 : index
    %c0_1 = arith.constant 0 : index
    %c0_2 = arith.constant 0 : index
    %0 = vector.load %arg1[%c0, %c0_0, %c0_1, %c0_2] : memref<1x19x19x12xf32, #tpu.memory_space<vmem>>, vector<1x19x19x12xf32>
    %1 = vector.shape_cast %0 : vector<1x19x19x12xf32> to vector<19x19x12xf32>
    %2 = vector.extract_strided_slice %1 {offsets = [0, 0, 0], sizes = [16, 16, 12], strides = [1, 1, 1]} : vector<19x19x12xf32> to vector<16x16x12xf32>
    %3 = vector.shape_cast %2 : vector<16x16x12xf32> to vector<256x12xf32>
    %4 = vector.extract_strided_slice %1 {offsets = [0, 1, 0], sizes = [16, 16, 12], strides = [1, 1, 1]} : vector<19x19x12xf32> to vector<16x16x12xf32>
    %5 = vector.shape_cast %4 : vector<16x16x12xf32> to vector<256x12xf32>
    %6 = vector.extract_strided_slice %1 {offsets = [0, 2, 0], sizes = [16, 16, 12], strides = [1, 1, 1]} : vector<19x19x12xf32> to vector<16x16x12xf32>
    %7 = vector.shape_cast %6 : vector<16x16x12xf32> to vector<256x12xf32>
    %8 = vector.extract_strided_slice %1 {offsets = [0, 3, 0], sizes = [16, 16, 12], strides = [1, 1, 1]} : vector<19x19x12xf32> to vector<16x16x12xf32>
    %9 = vector.shape_cast %8 : vector<16x16x12xf32> to vector<256x12xf32>
    %10 = vector.extract_strided_slice %1 {offsets = [1, 0, 0], sizes = [16, 16, 12], strides = [1, 1, 1]} : vector<19x19x12xf32> to vector<16x16x12xf32>
    %11 = vector.shape_cast %10 : vector<16x16x12xf32> to vector<256x12xf32>
    %12 = vector.extract_strided_slice %1 {offsets = [1, 1, 0], sizes = [16, 16, 12], strides = [1, 1, 1]} : vector<19x19x12xf32> to vector<16x16x12xf32>
    %13 = vector.shape_cast %12 : vector<16x16x12xf32> to vector<256x12xf32>
    %14 = vector.extract_strided_slice %1 {offsets = [1, 2, 0], sizes = [16, 16, 12], strides = [1, 1, 1]} : vector<19x19x12xf32> to vector<16x16x12xf32>
    %15 = vector.shape_cast %14 : vector<16x16x12xf32> to vector<256x12xf32>
    %16 = vector.extract_strided_slice %1 {offsets = [1, 3, 0], sizes = [16, 16, 12], strides = [1, 1, 1]} : vector<19x19x12xf32> to vector<16x16x12xf32>
    %17 = vector.shape_cast %16 : vector<16x16x12xf32> to vector<256x12xf32>
    %18 = vector.extract_strided_slice %1 {offsets = [2, 0, 0], sizes = [16, 16, 12], strides = [1, 1, 1]} : vector<19x19x12xf32> to vector<16x16x12xf32>
    %19 = vector.shape_cast %18 : vector<16x16x12xf32> to vector<256x12xf32>
    %20 = vector.extract_strided_slice %1 {offsets = [2, 1, 0], sizes = [16, 16, 12], strides = [1, 1, 1]} : vector<19x19x12xf32> to vector<16x16x12xf32>
    %21 = vector.shape_cast %20 : vector<16x16x12xf32> to vector<256x12xf32>
    %22 = vector.extract_strided_slice %1 {offsets = [2, 2, 0], sizes = [16, 16, 12], strides = [1, 1, 1]} : vector<19x19x12xf32> to vector<16x16x12xf32>
    %23 = vector.shape_cast %22 : vector<16x16x12xf32> to vector<256x12xf32>
    %24 = vector.extract_strided_slice %1 {offsets = [2, 3, 0], sizes = [16, 16, 12], strides = [1, 1, 1]} : vector<19x19x12xf32> to vector<16x16x12xf32>
    %25 = vector.shape_cast %24 : vector<16x16x12xf32> to vector<256x12xf32>
    %26 = vector.extract_strided_slice %1 {offsets = [3, 0, 0], sizes = [16, 16, 12], strides = [1, 1, 1]} : vector<19x19x12xf32> to vector<16x16x12xf32>
    %27 = vector.shape_cast %26 : vector<16x16x12xf32> to vector<256x12xf32>
    %28 = vector.extract_strided_slice %1 {offsets = [3, 1, 0], sizes = [16, 16, 12], strides = [1, 1, 1]} : vector<19x19x12xf32> to vector<16x16x12xf32>
    %29 = vector.shape_cast %28 : vector<16x16x12xf32> to vector<256x12xf32>
    %30 = vector.extract_strided_slice %1 {offsets = [3, 2, 0], sizes = [16, 16, 12], strides = [1, 1, 1]} : vector<19x19x12xf32> to vector<16x16x12xf32>
    %31 = vector.shape_cast %30 : vector<16x16x12xf32> to vector<256x12xf32>
    %32 = vector.extract_strided_slice %1 {offsets = [3, 3, 0], sizes = [16, 16, 12], strides = [1, 1, 1]} : vector<19x19x12xf32> to vector<16x16x12xf32>
    %33 = vector.shape_cast %32 : vector<16x16x12xf32> to vector<256x12xf32>
    %34 = tpu.concatenate %3, %5, %7, %9, %11, %13, %15, %17, %19, %21, %23, %25, %27, %29, %31, %33 in 1 : vector<256x12xf32>, vector<256x12xf32>, vector<256x12xf32>, vector<256x12xf32>, vector<256x12xf32>, vector<256x12xf32>, vector<256x12xf32>, vector<256x12xf32>, vector<256x12xf32>, vector<256x12xf32>, vector<256x12xf32>, vector<256x12xf32>, vector<256x12xf32>, vector<256x12xf32>, vector<256x12xf32>, vector<256x12xf32> -> vector<256x192xf32>
    %35 = arith.truncf %34 : vector<256x192xf32> to vector<256x192xbf16>
    %c0_3 = arith.constant 0 : index
    %c0_4 = arith.constant 0 : index
    %36 = vector.load %arg2[%c0_3, %c0_4] : memref<192x32xbf16, #tpu.memory_space<vmem>>, vector<192x32xbf16>
    %cst = arith.constant dense<0.000000e+00> : vector<256x32xf32>
    %37 = tpu.matmul %35, %36, %cst {dimension_numbers = #tpu.dot_dimension_numbers<[1], [0], [0], [1], [0, 0, 1, 1], [], []>} : vector<256x192xbf16>, vector<192x32xbf16>, vector<256x32xf32> -> vector<256x32xf32>
    %c0_5 = arith.constant 0 : index
    %c0_6 = arith.constant 0 : index
    %38 = vector.load %arg3[%c0_5, %c0_6] : memref<1x32xf32, #tpu.memory_space<vmem>>, vector<1x32xf32>
    %39 = vector.broadcast %38 : vector<1x32xf32> to vector<256x32xf32>
    %40 = arith.mulf %37, %39 : vector<256x32xf32>
    %c0_7 = arith.constant 0 : index
    %c0_8 = arith.constant 0 : index
    %41 = vector.load %arg4[%c0_7, %c0_8] : memref<1x32xf32, #tpu.memory_space<vmem>>, vector<1x32xf32>
    %42 = vector.broadcast %41 : vector<1x32xf32> to vector<256x32xf32>
    %43 = arith.addf %40, %42 : vector<256x32xf32>
    %cst_9 = arith.constant 0.000000e+00 : f32
    %44 = vector.broadcast %cst_9 : f32 to vector<256x32xf32>
    %45 = arith.maximumf %43, %44 : vector<256x32xf32>
    %46 = vector.shape_cast %45 : vector<256x32xf32> to vector<16x16x32xf32>
    %c0_10 = arith.constant 0 : index
    %c0_11 = arith.constant 0 : index
    %c0_12 = arith.constant 0 : index
    %c0_13 = arith.constant 0 : index
    %47 = vector.load %arg5[%c0_10, %c0_11, %c0_12, %c0_13] : memref<1x16x16x32xf32, #tpu.memory_space<vmem>>, vector<1x16x16x32xf32>
    %48 = vector.shape_cast %47 : vector<1x16x16x32xf32> to vector<16x16x32xf32>
    %49 = vector.shape_cast %46 : vector<16x16x32xf32> to vector<1x16x16x32xf32>
    tpu.vector_store %arg5[%c0_10, %c0_11, %c0_12, %c0_13], %49 {strides = array<i32>} : memref<1x16x16x32xf32, #tpu.memory_space<vmem>>, vector<1x16x16x32xf32>,
    return
  }
  func.func @transform_0(%arg0: i32) -> (i32, i32, i32, i32) {
    %c0_i32 = arith.constant 0 : i32
    %c0_i32_0 = arith.constant 0 : i32
    %c0_i32_1 = arith.constant 0 : i32
    %c0_i32_2 = arith.constant 0 : i32
    return %arg0, %c0_i32, %c0_i32_0, %c0_i32_1 : i32, i32, i32, i32
  }
  func.func @transform_1(%arg0: i32) -> (i32, i32) {
    %c0_i32 = arith.constant 0 : i32
    %c0_i32_0 = arith.constant 0 : i32
    %c0_i32_1 = arith.constant 0 : i32
    return %c0_i32, %c0_i32_0 : i32, i32
  }
  func.func @transform_2(%arg0: i32) -> (i32, i32) {
    %c0_i32 = arith.constant 0 : i32
    %c0_i32_0 = arith.constant 0 : i32
    %c0_i32_1 = arith.constant 0 : i32
    return %c0_i32, %c0_i32_0 : i32, i32
  }
  func.func @transform_3(%arg0: i32) -> (i32, i32) {
    %c0_i32 = arith.constant 0 : i32
    %c0_i32_0 = arith.constant 0 : i32
    %c0_i32_1 = arith.constant 0 : i32
    return %c0_i32, %c0_i32_0 : i32, i32
  }
  func.func @transform_4(%arg0: i32) -> (i32, i32, i32, i32) {
    %c0_i32 = arith.constant 0 : i32
    %c0_i32_0 = arith.constant 0 : i32
    %c0_i32_1 = arith.constant 0 : i32
    %c0_i32_2 = arith.constant 0 : i32
    return %arg0, %c0_i32, %c0_i32_0, %c0_i32_1 : i32, i32, i32, i32
  }
}

module attributes {stable_mosaic.version = 11 : i64} {
  func.func @bottleneck_kernel(%arg0: i32, %arg1: memref<1x16x16x32xf32, #tpu.memory_space<vmem>>, %arg2: memref<32x8xbf16, #tpu.memory_space<vmem>>, %arg3: memref<1x8xf32, #tpu.memory_space<vmem>>, %arg4: memref<1x8xf32, #tpu.memory_space<vmem>>, %arg5: memref<72x8xbf16, #tpu.memory_space<vmem>>, %arg6: memref<1x8xf32, #tpu.memory_space<vmem>>, %arg7: memref<1x8xf32, #tpu.memory_space<vmem>>, %arg8: memref<8x32xbf16, #tpu.memory_space<vmem>>, %arg9: memref<1x32xf32, #tpu.memory_space<vmem>>, %arg10: memref<1x32xf32, #tpu.memory_space<vmem>>, %arg11: memref<1x16x16x32xf32, #tpu.memory_space<vmem>>, %arg12: memref<18x18x8xf32, #tpu.memory_space<vmem>>) attributes {dimension_semantics = [#tpu.dimension_semantics<parallel>], iteration_bounds = array<i64: 2>, scalar_prefetch = 0 : i64, scratch_operands = 1 : i64, tpu.core_type = #tpu.core_type<tc>, window_params = [{transform_indices = @transform_0, window_bounds = array<i64: 1, 16, 16, 32>}, {pipeline_mode = #tpu.pipeline_mode<synchronous>, transform_indices = @transform_1, window_bounds = array<i64: 32, 8>}, {pipeline_mode = #tpu.pipeline_mode<synchronous>, transform_indices = @transform_2, window_bounds = array<i64: 1, 8>}, {pipeline_mode = #tpu.pipeline_mode<synchronous>, transform_indices = @transform_3, window_bounds = array<i64: 1, 8>}, {pipeline_mode = #tpu.pipeline_mode<synchronous>, transform_indices = @transform_4, window_bounds = array<i64: 72, 8>}, {pipeline_mode = #tpu.pipeline_mode<synchronous>, transform_indices = @transform_5, window_bounds = array<i64: 1, 8>}, {pipeline_mode = #tpu.pipeline_mode<synchronous>, transform_indices = @transform_6, window_bounds = array<i64: 1, 8>}, {pipeline_mode = #tpu.pipeline_mode<synchronous>, transform_indices = @transform_7, window_bounds = array<i64: 8, 32>}, {pipeline_mode = #tpu.pipeline_mode<synchronous>, transform_indices = @transform_8, window_bounds = array<i64: 1, 32>}, {pipeline_mode = #tpu.pipeline_mode<synchronous>, transform_indices = @transform_9, window_bounds = array<i64: 1, 32>}, {transform_indices = @transform_10, window_bounds = array<i64: 1, 16, 16, 32>}]} {
    %c0 = arith.constant 0 : index
    %c0_0 = arith.constant 0 : index
    %c0_1 = arith.constant 0 : index
    %c0_2 = arith.constant 0 : index
    %0 = vector.load %arg1[%c0, %c0_0, %c0_1, %c0_2] : memref<1x16x16x32xf32, #tpu.memory_space<vmem>>, vector<1x16x16x32xf32>
    %1 = vector.shape_cast %0 : vector<1x16x16x32xf32> to vector<16x16x32xf32>
    %2 = vector.shape_cast %1 : vector<16x16x32xf32> to vector<256x32xf32>
    %3 = arith.truncf %2 : vector<256x32xf32> to vector<256x32xbf16>
    %c0_3 = arith.constant 0 : index
    %c0_4 = arith.constant 0 : index
    %4 = vector.load %arg2[%c0_3, %c0_4] : memref<32x8xbf16, #tpu.memory_space<vmem>>, vector<32x8xbf16>
    %cst = arith.constant dense<0.000000e+00> : vector<256x8xf32>
    %5 = tpu.matmul %3, %4, %cst {dimension_numbers = #tpu.dot_dimension_numbers<[1], [0], [0], [1], [0, 0, 1, 1], [], []>} : vector<256x32xbf16>, vector<32x8xbf16>, vector<256x8xf32> -> vector<256x8xf32>
    %c0_5 = arith.constant 0 : index
    %c0_6 = arith.constant 0 : index
    %6 = vector.load %arg3[%c0_5, %c0_6] : memref<1x8xf32, #tpu.memory_space<vmem>>, vector<1x8xf32>
    %7 = vector.broadcast %6 : vector<1x8xf32> to vector<256x8xf32>
    %8 = arith.mulf %5, %7 : vector<256x8xf32>
    %c0_7 = arith.constant 0 : index
    %c0_8 = arith.constant 0 : index
    %9 = vector.load %arg4[%c0_7, %c0_8] : memref<1x8xf32, #tpu.memory_space<vmem>>, vector<1x8xf32>
    %10 = vector.broadcast %9 : vector<1x8xf32> to vector<256x8xf32>
    %11 = arith.addf %8, %10 : vector<256x8xf32>
    %cst_9 = arith.constant 0.000000e+00 : f32
    %12 = vector.broadcast %cst_9 : f32 to vector<256x8xf32>
    %13 = arith.maximumf %11, %12 : vector<256x8xf32>
    %cst_10 = arith.constant 0.000000e+00 : f32
    %14 = vector.broadcast %cst_10 : f32 to vector<1x18x8xf32>
    %c0_11 = arith.constant 0 : index
    %c0_12 = arith.constant 0 : index
    %c0_13 = arith.constant 0 : index
    %15 = vector.load %arg12[%c0_11, %c0_12, %c0_13] : memref<18x18x8xf32, #tpu.memory_space<vmem>>, vector<1x18x8xf32>
    tpu.vector_store %arg12[%c0_11, %c0_12, %c0_13], %14 {strides = array<i32>} : memref<18x18x8xf32, #tpu.memory_space<vmem>>, vector<1x18x8xf32>,
    %cst_14 = arith.constant 0.000000e+00 : f32
    %16 = vector.broadcast %cst_14 : f32 to vector<18x1x8xf32>
    %c0_15 = arith.constant 0 : index
    %c0_16 = arith.constant 0 : index
    %c0_17 = arith.constant 0 : index
    %17 = vector.load %arg12[%c0_15, %c0_16, %c0_17] : memref<18x18x8xf32, #tpu.memory_space<vmem>>, vector<18x1x8xf32>
    tpu.vector_store %arg12[%c0_15, %c0_16, %c0_17], %16 {strides = array<i32>} : memref<18x18x8xf32, #tpu.memory_space<vmem>>, vector<18x1x8xf32>,
    %cst_18 = arith.constant 0.000000e+00 : f32
    %18 = vector.broadcast %cst_18 : f32 to vector<1x18x8xf32>
    %c17 = arith.constant 17 : index
    %c0_19 = arith.constant 0 : index
    %c0_20 = arith.constant 0 : index
    %19 = vector.load %arg12[%c17, %c0_19, %c0_20] : memref<18x18x8xf32, #tpu.memory_space<vmem>>, vector<1x18x8xf32>
    tpu.vector_store %arg12[%c17, %c0_19, %c0_20], %18 {strides = array<i32>} : memref<18x18x8xf32, #tpu.memory_space<vmem>>, vector<1x18x8xf32>,
    %cst_21 = arith.constant 0.000000e+00 : f32
    %20 = vector.broadcast %cst_21 : f32 to vector<18x1x8xf32>
    %c0_22 = arith.constant 0 : index
    %c17_23 = arith.constant 17 : index
    %c0_24 = arith.constant 0 : index
    %21 = vector.load %arg12[%c0_22, %c17_23, %c0_24] : memref<18x18x8xf32, #tpu.memory_space<vmem>>, vector<18x1x8xf32>
    tpu.vector_store %arg12[%c0_22, %c17_23, %c0_24], %20 {strides = array<i32>} : memref<18x18x8xf32, #tpu.memory_space<vmem>>, vector<18x1x8xf32>,
    %22 = vector.shape_cast %13 : vector<256x8xf32> to vector<16x16x8xf32>
    %c1 = arith.constant 1 : index
    %c1_25 = arith.constant 1 : index
    %c0_26 = arith.constant 0 : index
    %23 = vector.load %arg12[%c1, %c1_25, %c0_26] : memref<18x18x8xf32, #tpu.memory_space<vmem>>, vector<16x16x8xf32>
    tpu.vector_store %arg12[%c1, %c1_25, %c0_26], %22 {strides = array<i32>} : memref<18x18x8xf32, #tpu.memory_space<vmem>>, vector<16x16x8xf32>,
    %c0_27 = arith.constant 0 : index
    %c0_28 = arith.constant 0 : index
    %c0_29 = arith.constant 0 : index
    %24 = vector.load %arg12[%c0_27, %c0_28, %c0_29] : memref<18x18x8xf32, #tpu.memory_space<vmem>>, vector<18x18x8xf32>
    %25 = vector.extract_strided_slice %24 {offsets = [0, 0, 0], sizes = [16, 16, 8], strides = [1, 1, 1]} : vector<18x18x8xf32> to vector<16x16x8xf32>
    %26 = vector.shape_cast %25 : vector<16x16x8xf32> to vector<256x8xf32>
    %27 = vector.extract_strided_slice %24 {offsets = [0, 1, 0], sizes = [16, 16, 8], strides = [1, 1, 1]} : vector<18x18x8xf32> to vector<16x16x8xf32>
    %28 = vector.shape_cast %27 : vector<16x16x8xf32> to vector<256x8xf32>
    %29 = vector.extract_strided_slice %24 {offsets = [0, 2, 0], sizes = [16, 16, 8], strides = [1, 1, 1]} : vector<18x18x8xf32> to vector<16x16x8xf32>
    %30 = vector.shape_cast %29 : vector<16x16x8xf32> to vector<256x8xf32>
    %31 = vector.extract_strided_slice %24 {offsets = [1, 0, 0], sizes = [16, 16, 8], strides = [1, 1, 1]} : vector<18x18x8xf32> to vector<16x16x8xf32>
    %32 = vector.shape_cast %31 : vector<16x16x8xf32> to vector<256x8xf32>
    %33 = vector.extract_strided_slice %24 {offsets = [1, 1, 0], sizes = [16, 16, 8], strides = [1, 1, 1]} : vector<18x18x8xf32> to vector<16x16x8xf32>
    %34 = vector.shape_cast %33 : vector<16x16x8xf32> to vector<256x8xf32>
    %35 = vector.extract_strided_slice %24 {offsets = [1, 2, 0], sizes = [16, 16, 8], strides = [1, 1, 1]} : vector<18x18x8xf32> to vector<16x16x8xf32>
    %36 = vector.shape_cast %35 : vector<16x16x8xf32> to vector<256x8xf32>
    %37 = vector.extract_strided_slice %24 {offsets = [2, 0, 0], sizes = [16, 16, 8], strides = [1, 1, 1]} : vector<18x18x8xf32> to vector<16x16x8xf32>
    %38 = vector.shape_cast %37 : vector<16x16x8xf32> to vector<256x8xf32>
    %39 = vector.extract_strided_slice %24 {offsets = [2, 1, 0], sizes = [16, 16, 8], strides = [1, 1, 1]} : vector<18x18x8xf32> to vector<16x16x8xf32>
    %40 = vector.shape_cast %39 : vector<16x16x8xf32> to vector<256x8xf32>
    %41 = vector.extract_strided_slice %24 {offsets = [2, 2, 0], sizes = [16, 16, 8], strides = [1, 1, 1]} : vector<18x18x8xf32> to vector<16x16x8xf32>
    %42 = vector.shape_cast %41 : vector<16x16x8xf32> to vector<256x8xf32>
    %43 = tpu.concatenate %26, %28, %30, %32, %34, %36, %38, %40, %42 in 1 : vector<256x8xf32>, vector<256x8xf32>, vector<256x8xf32>, vector<256x8xf32>, vector<256x8xf32>, vector<256x8xf32>, vector<256x8xf32>, vector<256x8xf32>, vector<256x8xf32> -> vector<256x72xf32>
    %44 = arith.truncf %43 : vector<256x72xf32> to vector<256x72xbf16>
    %c0_30 = arith.constant 0 : index
    %c0_31 = arith.constant 0 : index
    %45 = vector.load %arg5[%c0_30, %c0_31] : memref<72x8xbf16, #tpu.memory_space<vmem>>, vector<72x8xbf16>
    %cst_32 = arith.constant dense<0.000000e+00> : vector<256x8xf32>
    %46 = tpu.matmul %44, %45, %cst_32 {dimension_numbers = #tpu.dot_dimension_numbers<[1], [0], [0], [1], [0, 0, 1, 1], [], []>} : vector<256x72xbf16>, vector<72x8xbf16>, vector<256x8xf32> -> vector<256x8xf32>
    %c0_33 = arith.constant 0 : index
    %c0_34 = arith.constant 0 : index
    %47 = vector.load %arg6[%c0_33, %c0_34] : memref<1x8xf32, #tpu.memory_space<vmem>>, vector<1x8xf32>
    %48 = vector.broadcast %47 : vector<1x8xf32> to vector<256x8xf32>
    %49 = arith.mulf %46, %48 : vector<256x8xf32>
    %c0_35 = arith.constant 0 : index
    %c0_36 = arith.constant 0 : index
    %50 = vector.load %arg7[%c0_35, %c0_36] : memref<1x8xf32, #tpu.memory_space<vmem>>, vector<1x8xf32>
    %51 = vector.broadcast %50 : vector<1x8xf32> to vector<256x8xf32>
    %52 = arith.addf %49, %51 : vector<256x8xf32>
    %cst_37 = arith.constant 0.000000e+00 : f32
    %53 = vector.broadcast %cst_37 : f32 to vector<256x8xf32>
    %54 = arith.maximumf %52, %53 : vector<256x8xf32>
    %55 = arith.truncf %54 : vector<256x8xf32> to vector<256x8xbf16>
    %c0_38 = arith.constant 0 : index
    %c0_39 = arith.constant 0 : index
    %56 = vector.load %arg8[%c0_38, %c0_39] : memref<8x32xbf16, #tpu.memory_space<vmem>>, vector<8x32xbf16>
    %cst_40 = arith.constant dense<0.000000e+00> : vector<256x32xf32>
    %57 = tpu.matmul %55, %56, %cst_40 {dimension_numbers = #tpu.dot_dimension_numbers<[1], [0], [0], [1], [0, 0, 1, 1], [], []>} : vector<256x8xbf16>, vector<8x32xbf16>, vector<256x32xf32> -> vector<256x32xf32>
    %c0_41 = arith.constant 0 : index
    %c0_42 = arith.constant 0 : index
    %58 = vector.load %arg9[%c0_41, %c0_42] : memref<1x32xf32, #tpu.memory_space<vmem>>, vector<1x32xf32>
    %59 = vector.broadcast %58 : vector<1x32xf32> to vector<256x32xf32>
    %60 = arith.mulf %57, %59 : vector<256x32xf32>
    %c0_43 = arith.constant 0 : index
    %c0_44 = arith.constant 0 : index
    %61 = vector.load %arg10[%c0_43, %c0_44] : memref<1x32xf32, #tpu.memory_space<vmem>>, vector<1x32xf32>
    %62 = vector.broadcast %61 : vector<1x32xf32> to vector<256x32xf32>
    %63 = arith.addf %60, %62 : vector<256x32xf32>
    %cst_45 = arith.constant 0.000000e+00 : f32
    %64 = vector.broadcast %cst_45 : f32 to vector<256x32xf32>
    %65 = arith.maximumf %63, %64 : vector<256x32xf32>
    %66 = arith.addf %2, %65 : vector<256x32xf32>
    %cst_46 = arith.constant 0.000000e+00 : f32
    %67 = vector.broadcast %cst_46 : f32 to vector<256x32xf32>
    %68 = arith.maximumf %66, %67 : vector<256x32xf32>
    %69 = vector.shape_cast %68 : vector<256x32xf32> to vector<16x16x32xf32>
    %c0_47 = arith.constant 0 : index
    %c0_48 = arith.constant 0 : index
    %c0_49 = arith.constant 0 : index
    %c0_50 = arith.constant 0 : index
    %70 = vector.load %arg11[%c0_47, %c0_48, %c0_49, %c0_50] : memref<1x16x16x32xf32, #tpu.memory_space<vmem>>, vector<1x16x16x32xf32>
    %71 = vector.shape_cast %70 : vector<1x16x16x32xf32> to vector<16x16x32xf32>
    %72 = vector.shape_cast %69 : vector<16x16x32xf32> to vector<1x16x16x32xf32>
    tpu.vector_store %arg11[%c0_47, %c0_48, %c0_49, %c0_50], %72 {strides = array<i32>} : memref<1x16x16x32xf32, #tpu.memory_space<vmem>>, vector<1x16x16x32xf32>,
    return
  }
  func.func @transform_0(%arg0: i32) -> (i32, i32, i32, i32) {
    %c0_i32 = arith.constant 0 : i32
    %c0_i32_0 = arith.constant 0 : i32
    %c0_i32_1 = arith.constant 0 : i32
    %c0_i32_2 = arith.constant 0 : i32
    return %arg0, %c0_i32, %c0_i32_0, %c0_i32_1 : i32, i32, i32, i32
  }
  func.func @transform_1(%arg0: i32) -> (i32, i32) {
    %c0_i32 = arith.constant 0 : i32
    %c0_i32_0 = arith.constant 0 : i32
    %c0_i32_1 = arith.constant 0 : i32
    return %c0_i32, %c0_i32_0 : i32, i32
  }
  func.func @transform_2(%arg0: i32) -> (i32, i32) {
    %c0_i32 = arith.constant 0 : i32
    %c0_i32_0 = arith.constant 0 : i32
    %c0_i32_1 = arith.constant 0 : i32
    return %c0_i32, %c0_i32_0 : i32, i32
  }
  func.func @transform_3(%arg0: i32) -> (i32, i32) {
    %c0_i32 = arith.constant 0 : i32
    %c0_i32_0 = arith.constant 0 : i32
    %c0_i32_1 = arith.constant 0 : i32
    return %c0_i32, %c0_i32_0 : i32, i32
  }
  func.func @transform_4(%arg0: i32) -> (i32, i32) {
    %c0_i32 = arith.constant 0 : i32
    %c0_i32_0 = arith.constant 0 : i32
    %c0_i32_1 = arith.constant 0 : i32
    return %c0_i32, %c0_i32_0 : i32, i32
  }
  func.func @transform_5(%arg0: i32) -> (i32, i32) {
    %c0_i32 = arith.constant 0 : i32
    %c0_i32_0 = arith.constant 0 : i32
    %c0_i32_1 = arith.constant 0 : i32
    return %c0_i32, %c0_i32_0 : i32, i32
  }
  func.func @transform_6(%arg0: i32) -> (i32, i32) {
    %c0_i32 = arith.constant 0 : i32
    %c0_i32_0 = arith.constant 0 : i32
    %c0_i32_1 = arith.constant 0 : i32
    return %c0_i32, %c0_i32_0 : i32, i32
  }
  func.func @transform_7(%arg0: i32) -> (i32, i32) {
    %c0_i32 = arith.constant 0 : i32
    %c0_i32_0 = arith.constant 0 : i32
    %c0_i32_1 = arith.constant 0 : i32
    return %c0_i32, %c0_i32_0 : i32, i32
  }
  func.func @transform_8(%arg0: i32) -> (i32, i32) {
    %c0_i32 = arith.constant 0 : i32
    %c0_i32_0 = arith.constant 0 : i32
    %c0_i32_1 = arith.constant 0 : i32
    return %c0_i32, %c0_i32_0 : i32, i32
  }
  func.func @transform_9(%arg0: i32) -> (i32, i32) {
    %c0_i32 = arith.constant 0 : i32
    %c0_i32_0 = arith.constant 0 : i32
    %c0_i32_1 = arith.constant 0 : i32
    return %c0_i32, %c0_i32_0 : i32, i32
  }
  func.func @transform_10(%arg0: i32) -> (i32, i32, i32, i32) {
    %c0_i32 = arith.constant 0 : i32
    %c0_i32_0 = arith.constant 0 : i32
    %c0_i32_1 = arith.constant 0 : i32
    %c0_i32_2 = arith.constant 0 : i32
    return %arg0, %c0_i32, %c0_i32_0, %c0_i32_1 : i32, i32, i32, i32
  }
}

module attributes {stable_mosaic.version = 11 : i64} {
  func.func @bottleneck_kernel(%arg0: i32, %arg1: memref<1x8x8x128xf32, #tpu.memory_space<vmem>>, %arg2: memref<128x64xbf16, #tpu.memory_space<vmem>>, %arg3: memref<1x64xf32, #tpu.memory_space<vmem>>, %arg4: memref<1x64xf32, #tpu.memory_space<vmem>>, %arg5: memref<256x16xbf16, #tpu.memory_space<vmem>>, %arg6: memref<1x16xf32, #tpu.memory_space<vmem>>, %arg7: memref<1x16xf32, #tpu.memory_space<vmem>>, %arg8: memref<16x64xbf16, #tpu.memory_space<vmem>>, %arg9: memref<1x64xf32, #tpu.memory_space<vmem>>, %arg10: memref<1x64xf32, #tpu.memory_space<vmem>>, %arg11: memref<128x64xbf16, #tpu.memory_space<vmem>>, %arg12: memref<1x64xf32, #tpu.memory_space<vmem>>, %arg13: memref<1x64xf32, #tpu.memory_space<vmem>>, %arg14: memref<1x8x8x64xf32, #tpu.memory_space<vmem>>, %arg15: memref<9x9x64xf32, #tpu.memory_space<vmem>>) attributes {dimension_semantics = [#tpu.dimension_semantics<parallel>], iteration_bounds = array<i64: 2>, scalar_prefetch = 0 : i64, scratch_operands = 1 : i64, tpu.core_type = #tpu.core_type<tc>, window_params = [{transform_indices = @transform_0, window_bounds = array<i64: 1, 8, 8, 128>}, {pipeline_mode = #tpu.pipeline_mode<synchronous>, transform_indices = @transform_1, window_bounds = array<i64: 128, 64>}, {pipeline_mode = #tpu.pipeline_mode<synchronous>, transform_indices = @transform_2, window_bounds = array<i64: 1, 64>}, {pipeline_mode = #tpu.pipeline_mode<synchronous>, transform_indices = @transform_3, window_bounds = array<i64: 1, 64>}, {pipeline_mode = #tpu.pipeline_mode<synchronous>, transform_indices = @transform_4, window_bounds = array<i64: 256, 16>}, {pipeline_mode = #tpu.pipeline_mode<synchronous>, transform_indices = @transform_5, window_bounds = array<i64: 1, 16>}, {pipeline_mode = #tpu.pipeline_mode<synchronous>, transform_indices = @transform_6, window_bounds = array<i64: 1, 16>}, {pipeline_mode = #tpu.pipeline_mode<synchronous>, transform_indices = @transform_7, window_bounds = array<i64: 16, 64>}, {pipeline_mode = #tpu.pipeline_mode<synchronous>, transform_indices = @transform_8, window_bounds = array<i64: 1, 64>}, {pipeline_mode = #tpu.pipeline_mode<synchronous>, transform_indices = @transform_9, window_bounds = array<i64: 1, 64>}, {pipeline_mode = #tpu.pipeline_mode<synchronous>, transform_indices = @transform_10, window_bounds = array<i64: 128, 64>}, {pipeline_mode = #tpu.pipeline_mode<synchronous>, transform_indices = @transform_11, window_bounds = array<i64: 1, 64>}, {pipeline_mode = #tpu.pipeline_mode<synchronous>, transform_indices = @transform_12, window_bounds = array<i64: 1, 64>}, {transform_indices = @transform_13, window_bounds = array<i64: 1, 8, 8, 64>}]} {
    %c0 = arith.constant 0 : index
    %c0_0 = arith.constant 0 : index
    %c0_1 = arith.constant 0 : index
    %c0_2 = arith.constant 0 : index
    %0 = vector.load %arg1[%c0, %c0_0, %c0_1, %c0_2] : memref<1x8x8x128xf32, #tpu.memory_space<vmem>>, vector<1x8x8x128xf32>
    %1 = vector.shape_cast %0 : vector<1x8x8x128xf32> to vector<8x8x128xf32>
    %2 = vector.shape_cast %1 : vector<8x8x128xf32> to vector<64x128xf32>
    %3 = arith.truncf %2 : vector<64x128xf32> to vector<64x128xbf16>
    %c0_3 = arith.constant 0 : index
    %c0_4 = arith.constant 0 : index
    %4 = vector.load %arg2[%c0_3, %c0_4] : memref<128x64xbf16, #tpu.memory_space<vmem>>, vector<128x64xbf16>
    %cst = arith.constant dense<0.000000e+00> : vector<64x64xf32>
    %5 = tpu.matmul %3, %4, %cst {dimension_numbers = #tpu.dot_dimension_numbers<[1], [0], [0], [1], [0, 0, 1, 1], [], []>} : vector<64x128xbf16>, vector<128x64xbf16>, vector<64x64xf32> -> vector<64x64xf32>
    %c0_5 = arith.constant 0 : index
    %c0_6 = arith.constant 0 : index
    %6 = vector.load %arg3[%c0_5, %c0_6] : memref<1x64xf32, #tpu.memory_space<vmem>>, vector<1x64xf32>
    %7 = vector.broadcast %6 : vector<1x64xf32> to vector<64x64xf32>
    %8 = arith.mulf %5, %7 : vector<64x64xf32>
    %c0_7 = arith.constant 0 : index
    %c0_8 = arith.constant 0 : index
    %9 = vector.load %arg4[%c0_7, %c0_8] : memref<1x64xf32, #tpu.memory_space<vmem>>, vector<1x64xf32>
    %10 = vector.broadcast %9 : vector<1x64xf32> to vector<64x64xf32>
    %11 = arith.addf %8, %10 : vector<64x64xf32>
    %cst_9 = arith.constant 0.000000e+00 : f32
    %12 = vector.broadcast %cst_9 : f32 to vector<64x64xf32>
    %13 = arith.maximumf %11, %12 : vector<64x64xf32>
    %cst_10 = arith.constant 0.000000e+00 : f32
    %14 = vector.broadcast %cst_10 : f32 to vector<1x9x64xf32>
    %c0_11 = arith.constant 0 : index
    %c0_12 = arith.constant 0 : index
    %c0_13 = arith.constant 0 : index
    %15 = vector.load %arg15[%c0_11, %c0_12, %c0_13] : memref<9x9x64xf32, #tpu.memory_space<vmem>>, vector<1x9x64xf32>
    tpu.vector_store %arg15[%c0_11, %c0_12, %c0_13], %14 {strides = array<i32>} : memref<9x9x64xf32, #tpu.memory_space<vmem>>, vector<1x9x64xf32>,
    %cst_14 = arith.constant 0.000000e+00 : f32
    %16 = vector.broadcast %cst_14 : f32 to vector<9x1x64xf32>
    %c0_15 = arith.constant 0 : index
    %c0_16 = arith.constant 0 : index
    %c0_17 = arith.constant 0 : index
    %17 = vector.load %arg15[%c0_15, %c0_16, %c0_17] : memref<9x9x64xf32, #tpu.memory_space<vmem>>, vector<9x1x64xf32>
    tpu.vector_store %arg15[%c0_15, %c0_16, %c0_17], %16 {strides = array<i32>} : memref<9x9x64xf32, #tpu.memory_space<vmem>>, vector<9x1x64xf32>,
    %18 = vector.shape_cast %13 : vector<64x64xf32> to vector<8x8x64xf32>
    %c1 = arith.constant 1 : index
    %c1_18 = arith.constant 1 : index
    %c0_19 = arith.constant 0 : index
    %19 = vector.load %arg15[%c1, %c1_18, %c0_19] : memref<9x9x64xf32, #tpu.memory_space<vmem>>, vector<8x8x64xf32>
    tpu.vector_store %arg15[%c1, %c1_18, %c0_19], %18 {strides = array<i32>} : memref<9x9x64xf32, #tpu.memory_space<vmem>>, vector<8x8x64xf32>,
    %c0_20 = arith.constant 0 : index
    %c0_21 = arith.constant 0 : index
    %c0_22 = arith.constant 0 : index
    %20 = vector.load %arg15[%c0_20, %c0_21, %c0_22] : memref<9x9x64xf32, #tpu.memory_space<vmem>>, vector<9x9x64xf32>
    %21 = vector.extract_strided_slice %20 {offsets = [0, 0, 0], sizes = [8, 8, 64], strides = [1, 1, 1]} : vector<9x9x64xf32> to vector<8x8x64xf32>
    %22 = vector.shape_cast %21 : vector<8x8x64xf32> to vector<64x64xf32>
    %23 = vector.extract_strided_slice %20 {offsets = [0, 1, 0], sizes = [8, 8, 64], strides = [1, 1, 1]} : vector<9x9x64xf32> to vector<8x8x64xf32>
    %24 = vector.shape_cast %23 : vector<8x8x64xf32> to vector<64x64xf32>
    %25 = vector.extract_strided_slice %20 {offsets = [1, 0, 0], sizes = [8, 8, 64], strides = [1, 1, 1]} : vector<9x9x64xf32> to vector<8x8x64xf32>
    %26 = vector.shape_cast %25 : vector<8x8x64xf32> to vector<64x64xf32>
    %27 = vector.extract_strided_slice %20 {offsets = [1, 1, 0], sizes = [8, 8, 64], strides = [1, 1, 1]} : vector<9x9x64xf32> to vector<8x8x64xf32>
    %28 = vector.shape_cast %27 : vector<8x8x64xf32> to vector<64x64xf32>
    %29 = tpu.concatenate %22, %24, %26, %28 in 1 : vector<64x64xf32>, vector<64x64xf32>, vector<64x64xf32>, vector<64x64xf32> -> vector<64x256xf32>
    %30 = arith.truncf %29 : vector<64x256xf32> to vector<64x256xbf16>
    %c0_23 = arith.constant 0 : index
    %c0_24 = arith.constant 0 : index
    %31 = vector.load %arg5[%c0_23, %c0_24] : memref<256x16xbf16, #tpu.memory_space<vmem>>, vector<256x16xbf16>
    %cst_25 = arith.constant dense<0.000000e+00> : vector<64x16xf32>
    %32 = tpu.matmul %30, %31, %cst_25 {dimension_numbers = #tpu.dot_dimension_numbers<[1], [0], [0], [1], [0, 0, 1, 1], [], []>} : vector<64x256xbf16>, vector<256x16xbf16>, vector<64x16xf32> -> vector<64x16xf32>
    %c0_26 = arith.constant 0 : index
    %c0_27 = arith.constant 0 : index
    %33 = vector.load %arg6[%c0_26, %c0_27] : memref<1x16xf32, #tpu.memory_space<vmem>>, vector<1x16xf32>
    %34 = vector.broadcast %33 : vector<1x16xf32> to vector<64x16xf32>
    %35 = arith.mulf %32, %34 : vector<64x16xf32>
    %c0_28 = arith.constant 0 : index
    %c0_29 = arith.constant 0 : index
    %36 = vector.load %arg7[%c0_28, %c0_29] : memref<1x16xf32, #tpu.memory_space<vmem>>, vector<1x16xf32>
    %37 = vector.broadcast %36 : vector<1x16xf32> to vector<64x16xf32>
    %38 = arith.addf %35, %37 : vector<64x16xf32>
    %cst_30 = arith.constant 0.000000e+00 : f32
    %39 = vector.broadcast %cst_30 : f32 to vector<64x16xf32>
    %40 = arith.maximumf %38, %39 : vector<64x16xf32>
    %41 = arith.truncf %40 : vector<64x16xf32> to vector<64x16xbf16>
    %c0_31 = arith.constant 0 : index
    %c0_32 = arith.constant 0 : index
    %42 = vector.load %arg8[%c0_31, %c0_32] : memref<16x64xbf16, #tpu.memory_space<vmem>>, vector<16x64xbf16>
    %cst_33 = arith.constant dense<0.000000e+00> : vector<64x64xf32>
    %43 = tpu.matmul %41, %42, %cst_33 {dimension_numbers = #tpu.dot_dimension_numbers<[1], [0], [0], [1], [0, 0, 1, 1], [], []>} : vector<64x16xbf16>, vector<16x64xbf16>, vector<64x64xf32> -> vector<64x64xf32>
    %c0_34 = arith.constant 0 : index
    %c0_35 = arith.constant 0 : index
    %44 = vector.load %arg9[%c0_34, %c0_35] : memref<1x64xf32, #tpu.memory_space<vmem>>, vector<1x64xf32>
    %45 = vector.broadcast %44 : vector<1x64xf32> to vector<64x64xf32>
    %46 = arith.mulf %43, %45 : vector<64x64xf32>
    %c0_36 = arith.constant 0 : index
    %c0_37 = arith.constant 0 : index
    %47 = vector.load %arg10[%c0_36, %c0_37] : memref<1x64xf32, #tpu.memory_space<vmem>>, vector<1x64xf32>
    %48 = vector.broadcast %47 : vector<1x64xf32> to vector<64x64xf32>
    %49 = arith.addf %46, %48 : vector<64x64xf32>
    %cst_38 = arith.constant 0.000000e+00 : f32
    %50 = vector.broadcast %cst_38 : f32 to vector<64x64xf32>
    %51 = arith.maximumf %49, %50 : vector<64x64xf32>
    %c0_39 = arith.constant 0 : index
    %c0_40 = arith.constant 0 : index
    %52 = vector.load %arg11[%c0_39, %c0_40] : memref<128x64xbf16, #tpu.memory_space<vmem>>, vector<128x64xbf16>
    %cst_41 = arith.constant dense<0.000000e+00> : vector<64x64xf32>
    %53 = tpu.matmul %3, %52, %cst_41 {dimension_numbers = #tpu.dot_dimension_numbers<[1], [0], [0], [1], [0, 0, 1, 1], [], []>} : vector<64x128xbf16>, vector<128x64xbf16>, vector<64x64xf32> -> vector<64x64xf32>
    %c0_42 = arith.constant 0 : index
    %c0_43 = arith.constant 0 : index
    %54 = vector.load %arg12[%c0_42, %c0_43] : memref<1x64xf32, #tpu.memory_space<vmem>>, vector<1x64xf32>
    %55 = vector.broadcast %54 : vector<1x64xf32> to vector<64x64xf32>
    %56 = arith.mulf %53, %55 : vector<64x64xf32>
    %c0_44 = arith.constant 0 : index
    %c0_45 = arith.constant 0 : index
    %57 = vector.load %arg13[%c0_44, %c0_45] : memref<1x64xf32, #tpu.memory_space<vmem>>, vector<1x64xf32>
    %58 = vector.broadcast %57 : vector<1x64xf32> to vector<64x64xf32>
    %59 = arith.addf %56, %58 : vector<64x64xf32>
    %60 = arith.addf %59, %51 : vector<64x64xf32>
    %cst_46 = arith.constant 0.000000e+00 : f32
    %61 = vector.broadcast %cst_46 : f32 to vector<64x64xf32>
    %62 = arith.maximumf %60, %61 : vector<64x64xf32>
    %63 = vector.shape_cast %62 : vector<64x64xf32> to vector<8x8x64xf32>
    %c0_47 = arith.constant 0 : index
    %c0_48 = arith.constant 0 : index
    %c0_49 = arith.constant 0 : index
    %c0_50 = arith.constant 0 : index
    %64 = vector.load %arg14[%c0_47, %c0_48, %c0_49, %c0_50] : memref<1x8x8x64xf32, #tpu.memory_space<vmem>>, vector<1x8x8x64xf32>
    %65 = vector.shape_cast %64 : vector<1x8x8x64xf32> to vector<8x8x64xf32>
    %66 = vector.shape_cast %63 : vector<8x8x64xf32> to vector<1x8x8x64xf32>
    tpu.vector_store %arg14[%c0_47, %c0_48, %c0_49, %c0_50], %66 {strides = array<i32>} : memref<1x8x8x64xf32, #tpu.memory_space<vmem>>, vector<1x8x8x64xf32>,
    return
  }
  func.func @transform_0(%arg0: i32) -> (i32, i32, i32, i32) {
    %c0_i32 = arith.constant 0 : i32
    %c0_i32_0 = arith.constant 0 : i32
    %c0_i32_1 = arith.constant 0 : i32
    %c0_i32_2 = arith.constant 0 : i32
    return %arg0, %c0_i32, %c0_i32_0, %c0_i32_1 : i32, i32, i32, i32
  }
  func.func @transform_1(%arg0: i32) -> (i32, i32) {
    %c0_i32 = arith.constant 0 : i32
    %c0_i32_0 = arith.constant 0 : i32
    %c0_i32_1 = arith.constant 0 : i32
    return %c0_i32, %c0_i32_0 : i32, i32
  }
  func.func @transform_2(%arg0: i32) -> (i32, i32) {
    %c0_i32 = arith.constant 0 : i32
    %c0_i32_0 = arith.constant 0 : i32
    %c0_i32_1 = arith.constant 0 : i32
    return %c0_i32, %c0_i32_0 : i32, i32
  }
  func.func @transform_3(%arg0: i32) -> (i32, i32) {
    %c0_i32 = arith.constant 0 : i32
    %c0_i32_0 = arith.constant 0 : i32
    %c0_i32_1 = arith.constant 0 : i32
    return %c0_i32, %c0_i32_0 : i32, i32
  }
  func.func @transform_4(%arg0: i32) -> (i32, i32) {
    %c0_i32 = arith.constant 0 : i32
    %c0_i32_0 = arith.constant 0 : i32
    %c0_i32_1 = arith.constant 0 : i32
    return %c0_i32, %c0_i32_0 : i32, i32
  }
  func.func @transform_5(%arg0: i32) -> (i32, i32) {
    %c0_i32 = arith.constant 0 : i32
    %c0_i32_0 = arith.constant 0 : i32
    %c0_i32_1 = arith.constant 0 : i32
    return %c0_i32, %c0_i32_0 : i32, i32
  }
  func.func @transform_6(%arg0: i32) -> (i32, i32) {
    %c0_i32 = arith.constant 0 : i32
    %c0_i32_0 = arith.constant 0 : i32
    %c0_i32_1 = arith.constant 0 : i32
    return %c0_i32, %c0_i32_0 : i32, i32
  }
  func.func @transform_7(%arg0: i32) -> (i32, i32) {
    %c0_i32 = arith.constant 0 : i32
    %c0_i32_0 = arith.constant 0 : i32
    %c0_i32_1 = arith.constant 0 : i32
    return %c0_i32, %c0_i32_0 : i32, i32
  }
  func.func @transform_8(%arg0: i32) -> (i32, i32) {
    %c0_i32 = arith.constant 0 : i32
    %c0_i32_0 = arith.constant 0 : i32
    %c0_i32_1 = arith.constant 0 : i32
    return %c0_i32, %c0_i32_0 : i32, i32
  }
  func.func @transform_9(%arg0: i32) -> (i32, i32) {
    %c0_i32 = arith.constant 0 : i32
    %c0_i32_0 = arith.constant 0 : i32
    %c0_i32_1 = arith.constant 0 : i32
    return %c0_i32, %c0_i32_0 : i32, i32
  }
  func.func @transform_10(%arg0: i32) -> (i32, i32) {
    %c0_i32 = arith.constant 0 : i32
    %c0_i32_0 = arith.constant 0 : i32
    %c0_i32_1 = arith.constant 0 : i32
    return %c0_i32, %c0_i32_0 : i32, i32
  }
  func.func @transform_11(%arg0: i32) -> (i32, i32) {
    %c0_i32 = arith.constant 0 : i32
    %c0_i32_0 = arith.constant 0 : i32
    %c0_i32_1 = arith.constant 0 : i32
    return %c0_i32, %c0_i32_0 : i32, i32
  }
  func.func @transform_12(%arg0: i32) -> (i32, i32) {
    %c0_i32 = arith.constant 0 : i32
    %c0_i32_0 = arith.constant 0 : i32
    %c0_i32_1 = arith.constant 0 : i32
    return %c0_i32, %c0_i32_0 : i32, i32
  }
  func.func @transform_13(%arg0: i32) -> (i32, i32, i32, i32) {
    %c0_i32 = arith.constant 0 : i32
    %c0_i32_0 = arith.constant 0 : i32
    %c0_i32_1 = arith.constant 0 : i32
    %c0_i32_2 = arith.constant 0 : i32
    return %arg0, %c0_i32, %c0_i32_0, %c0_i32_1 : i32, i32, i32, i32
  }
}

module attributes {stable_mosaic.version = 11 : i64} {
  func.func @bottleneck_kernel(%arg0: i32, %arg1: memref<1x8x8x64xf32, #tpu.memory_space<vmem>>, %arg2: memref<64x16xbf16, #tpu.memory_space<vmem>>, %arg3: memref<1x16xf32, #tpu.memory_space<vmem>>, %arg4: memref<1x16xf32, #tpu.memory_space<vmem>>, %arg5: memref<144x16xbf16, #tpu.memory_space<vmem>>, %arg6: memref<1x16xf32, #tpu.memory_space<vmem>>, %arg7: memref<1x16xf32, #tpu.memory_space<vmem>>, %arg8: memref<16x64xbf16, #tpu.memory_space<vmem>>, %arg9: memref<1x64xf32, #tpu.memory_space<vmem>>, %arg10: memref<1x64xf32, #tpu.memory_space<vmem>>, %arg11: memref<1x8x8x64xf32, #tpu.memory_space<vmem>>, %arg12: memref<10x10x16xf32, #tpu.memory_space<vmem>>) attributes {dimension_semantics = [#tpu.dimension_semantics<parallel>], iteration_bounds = array<i64: 2>, scalar_prefetch = 0 : i64, scratch_operands = 1 : i64, tpu.core_type = #tpu.core_type<tc>, window_params = [{transform_indices = @transform_0, window_bounds = array<i64: 1, 8, 8, 64>}, {pipeline_mode = #tpu.pipeline_mode<synchronous>, transform_indices = @transform_1, window_bounds = array<i64: 64, 16>}, {pipeline_mode = #tpu.pipeline_mode<synchronous>, transform_indices = @transform_2, window_bounds = array<i64: 1, 16>}, {pipeline_mode = #tpu.pipeline_mode<synchronous>, transform_indices = @transform_3, window_bounds = array<i64: 1, 16>}, {pipeline_mode = #tpu.pipeline_mode<synchronous>, transform_indices = @transform_4, window_bounds = array<i64: 144, 16>}, {pipeline_mode = #tpu.pipeline_mode<synchronous>, transform_indices = @transform_5, window_bounds = array<i64: 1, 16>}, {pipeline_mode = #tpu.pipeline_mode<synchronous>, transform_indices = @transform_6, window_bounds = array<i64: 1, 16>}, {pipeline_mode = #tpu.pipeline_mode<synchronous>, transform_indices = @transform_7, window_bounds = array<i64: 16, 64>}, {pipeline_mode = #tpu.pipeline_mode<synchronous>, transform_indices = @transform_8, window_bounds = array<i64: 1, 64>}, {pipeline_mode = #tpu.pipeline_mode<synchronous>, transform_indices = @transform_9, window_bounds = array<i64: 1, 64>}, {transform_indices = @transform_10, window_bounds = array<i64: 1, 8, 8, 64>}]} {
    %c0 = arith.constant 0 : index
    %c0_0 = arith.constant 0 : index
    %c0_1 = arith.constant 0 : index
    %c0_2 = arith.constant 0 : index
    %0 = vector.load %arg1[%c0, %c0_0, %c0_1, %c0_2] : memref<1x8x8x64xf32, #tpu.memory_space<vmem>>, vector<1x8x8x64xf32>
    %1 = vector.shape_cast %0 : vector<1x8x8x64xf32> to vector<8x8x64xf32>
    %2 = vector.shape_cast %1 : vector<8x8x64xf32> to vector<64x64xf32>
    %3 = arith.truncf %2 : vector<64x64xf32> to vector<64x64xbf16>
    %c0_3 = arith.constant 0 : index
    %c0_4 = arith.constant 0 : index
    %4 = vector.load %arg2[%c0_3, %c0_4] : memref<64x16xbf16, #tpu.memory_space<vmem>>, vector<64x16xbf16>
    %cst = arith.constant dense<0.000000e+00> : vector<64x16xf32>
    %5 = tpu.matmul %3, %4, %cst {dimension_numbers = #tpu.dot_dimension_numbers<[1], [0], [0], [1], [0, 0, 1, 1], [], []>} : vector<64x64xbf16>, vector<64x16xbf16>, vector<64x16xf32> -> vector<64x16xf32>
    %c0_5 = arith.constant 0 : index
    %c0_6 = arith.constant 0 : index
    %6 = vector.load %arg3[%c0_5, %c0_6] : memref<1x16xf32, #tpu.memory_space<vmem>>, vector<1x16xf32>
    %7 = vector.broadcast %6 : vector<1x16xf32> to vector<64x16xf32>
    %8 = arith.mulf %5, %7 : vector<64x16xf32>
    %c0_7 = arith.constant 0 : index
    %c0_8 = arith.constant 0 : index
    %9 = vector.load %arg4[%c0_7, %c0_8] : memref<1x16xf32, #tpu.memory_space<vmem>>, vector<1x16xf32>
    %10 = vector.broadcast %9 : vector<1x16xf32> to vector<64x16xf32>
    %11 = arith.addf %8, %10 : vector<64x16xf32>
    %cst_9 = arith.constant 0.000000e+00 : f32
    %12 = vector.broadcast %cst_9 : f32 to vector<64x16xf32>
    %13 = arith.maximumf %11, %12 : vector<64x16xf32>
    %cst_10 = arith.constant 0.000000e+00 : f32
    %14 = vector.broadcast %cst_10 : f32 to vector<1x10x16xf32>
    %c0_11 = arith.constant 0 : index
    %c0_12 = arith.constant 0 : index
    %c0_13 = arith.constant 0 : index
    %15 = vector.load %arg12[%c0_11, %c0_12, %c0_13] : memref<10x10x16xf32, #tpu.memory_space<vmem>>, vector<1x10x16xf32>
    tpu.vector_store %arg12[%c0_11, %c0_12, %c0_13], %14 {strides = array<i32>} : memref<10x10x16xf32, #tpu.memory_space<vmem>>, vector<1x10x16xf32>,
    %cst_14 = arith.constant 0.000000e+00 : f32
    %16 = vector.broadcast %cst_14 : f32 to vector<10x1x16xf32>
    %c0_15 = arith.constant 0 : index
    %c0_16 = arith.constant 0 : index
    %c0_17 = arith.constant 0 : index
    %17 = vector.load %arg12[%c0_15, %c0_16, %c0_17] : memref<10x10x16xf32, #tpu.memory_space<vmem>>, vector<10x1x16xf32>
    tpu.vector_store %arg12[%c0_15, %c0_16, %c0_17], %16 {strides = array<i32>} : memref<10x10x16xf32, #tpu.memory_space<vmem>>, vector<10x1x16xf32>,
    %cst_18 = arith.constant 0.000000e+00 : f32
    %18 = vector.broadcast %cst_18 : f32 to vector<1x10x16xf32>
    %c9 = arith.constant 9 : index
    %c0_19 = arith.constant 0 : index
    %c0_20 = arith.constant 0 : index
    %19 = vector.load %arg12[%c9, %c0_19, %c0_20] : memref<10x10x16xf32, #tpu.memory_space<vmem>>, vector<1x10x16xf32>
    tpu.vector_store %arg12[%c9, %c0_19, %c0_20], %18 {strides = array<i32>} : memref<10x10x16xf32, #tpu.memory_space<vmem>>, vector<1x10x16xf32>,
    %cst_21 = arith.constant 0.000000e+00 : f32
    %20 = vector.broadcast %cst_21 : f32 to vector<10x1x16xf32>
    %c0_22 = arith.constant 0 : index
    %c9_23 = arith.constant 9 : index
    %c0_24 = arith.constant 0 : index
    %21 = vector.load %arg12[%c0_22, %c9_23, %c0_24] : memref<10x10x16xf32, #tpu.memory_space<vmem>>, vector<10x1x16xf32>
    tpu.vector_store %arg12[%c0_22, %c9_23, %c0_24], %20 {strides = array<i32>} : memref<10x10x16xf32, #tpu.memory_space<vmem>>, vector<10x1x16xf32>,
    %22 = vector.shape_cast %13 : vector<64x16xf32> to vector<8x8x16xf32>
    %c1 = arith.constant 1 : index
    %c1_25 = arith.constant 1 : index
    %c0_26 = arith.constant 0 : index
    %23 = vector.load %arg12[%c1, %c1_25, %c0_26] : memref<10x10x16xf32, #tpu.memory_space<vmem>>, vector<8x8x16xf32>
    tpu.vector_store %arg12[%c1, %c1_25, %c0_26], %22 {strides = array<i32>} : memref<10x10x16xf32, #tpu.memory_space<vmem>>, vector<8x8x16xf32>,
    %c0_27 = arith.constant 0 : index
    %c0_28 = arith.constant 0 : index
    %c0_29 = arith.constant 0 : index
    %24 = vector.load %arg12[%c0_27, %c0_28, %c0_29] : memref<10x10x16xf32, #tpu.memory_space<vmem>>, vector<10x10x16xf32>
    %25 = vector.extract_strided_slice %24 {offsets = [0, 0, 0], sizes = [8, 8, 16], strides = [1, 1, 1]} : vector<10x10x16xf32> to vector<8x8x16xf32>
    %26 = vector.shape_cast %25 : vector<8x8x16xf32> to vector<64x16xf32>
    %27 = vector.extract_strided_slice %24 {offsets = [0, 1, 0], sizes = [8, 8, 16], strides = [1, 1, 1]} : vector<10x10x16xf32> to vector<8x8x16xf32>
    %28 = vector.shape_cast %27 : vector<8x8x16xf32> to vector<64x16xf32>
    %29 = vector.extract_strided_slice %24 {offsets = [0, 2, 0], sizes = [8, 8, 16], strides = [1, 1, 1]} : vector<10x10x16xf32> to vector<8x8x16xf32>
    %30 = vector.shape_cast %29 : vector<8x8x16xf32> to vector<64x16xf32>
    %31 = vector.extract_strided_slice %24 {offsets = [1, 0, 0], sizes = [8, 8, 16], strides = [1, 1, 1]} : vector<10x10x16xf32> to vector<8x8x16xf32>
    %32 = vector.shape_cast %31 : vector<8x8x16xf32> to vector<64x16xf32>
    %33 = vector.extract_strided_slice %24 {offsets = [1, 1, 0], sizes = [8, 8, 16], strides = [1, 1, 1]} : vector<10x10x16xf32> to vector<8x8x16xf32>
    %34 = vector.shape_cast %33 : vector<8x8x16xf32> to vector<64x16xf32>
    %35 = vector.extract_strided_slice %24 {offsets = [1, 2, 0], sizes = [8, 8, 16], strides = [1, 1, 1]} : vector<10x10x16xf32> to vector<8x8x16xf32>
    %36 = vector.shape_cast %35 : vector<8x8x16xf32> to vector<64x16xf32>
    %37 = vector.extract_strided_slice %24 {offsets = [2, 0, 0], sizes = [8, 8, 16], strides = [1, 1, 1]} : vector<10x10x16xf32> to vector<8x8x16xf32>
    %38 = vector.shape_cast %37 : vector<8x8x16xf32> to vector<64x16xf32>
    %39 = vector.extract_strided_slice %24 {offsets = [2, 1, 0], sizes = [8, 8, 16], strides = [1, 1, 1]} : vector<10x10x16xf32> to vector<8x8x16xf32>
    %40 = vector.shape_cast %39 : vector<8x8x16xf32> to vector<64x16xf32>
    %41 = vector.extract_strided_slice %24 {offsets = [2, 2, 0], sizes = [8, 8, 16], strides = [1, 1, 1]} : vector<10x10x16xf32> to vector<8x8x16xf32>
    %42 = vector.shape_cast %41 : vector<8x8x16xf32> to vector<64x16xf32>
    %43 = tpu.concatenate %26, %28, %30, %32, %34, %36, %38, %40, %42 in 1 : vector<64x16xf32>, vector<64x16xf32>, vector<64x16xf32>, vector<64x16xf32>, vector<64x16xf32>, vector<64x16xf32>, vector<64x16xf32>, vector<64x16xf32>, vector<64x16xf32> -> vector<64x144xf32>
    %44 = arith.truncf %43 : vector<64x144xf32> to vector<64x144xbf16>
    %c0_30 = arith.constant 0 : index
    %c0_31 = arith.constant 0 : index
    %45 = vector.load %arg5[%c0_30, %c0_31] : memref<144x16xbf16, #tpu.memory_space<vmem>>, vector<144x16xbf16>
    %cst_32 = arith.constant dense<0.000000e+00> : vector<64x16xf32>
    %46 = tpu.matmul %44, %45, %cst_32 {dimension_numbers = #tpu.dot_dimension_numbers<[1], [0], [0], [1], [0, 0, 1, 1], [], []>} : vector<64x144xbf16>, vector<144x16xbf16>, vector<64x16xf32> -> vector<64x16xf32>
    %c0_33 = arith.constant 0 : index
    %c0_34 = arith.constant 0 : index
    %47 = vector.load %arg6[%c0_33, %c0_34] : memref<1x16xf32, #tpu.memory_space<vmem>>, vector<1x16xf32>
    %48 = vector.broadcast %47 : vector<1x16xf32> to vector<64x16xf32>
    %49 = arith.mulf %46, %48 : vector<64x16xf32>
    %c0_35 = arith.constant 0 : index
    %c0_36 = arith.constant 0 : index
    %50 = vector.load %arg7[%c0_35, %c0_36] : memref<1x16xf32, #tpu.memory_space<vmem>>, vector<1x16xf32>
    %51 = vector.broadcast %50 : vector<1x16xf32> to vector<64x16xf32>
    %52 = arith.addf %49, %51 : vector<64x16xf32>
    %cst_37 = arith.constant 0.000000e+00 : f32
    %53 = vector.broadcast %cst_37 : f32 to vector<64x16xf32>
    %54 = arith.maximumf %52, %53 : vector<64x16xf32>
    %55 = arith.truncf %54 : vector<64x16xf32> to vector<64x16xbf16>
    %c0_38 = arith.constant 0 : index
    %c0_39 = arith.constant 0 : index
    %56 = vector.load %arg8[%c0_38, %c0_39] : memref<16x64xbf16, #tpu.memory_space<vmem>>, vector<16x64xbf16>
    %cst_40 = arith.constant dense<0.000000e+00> : vector<64x64xf32>
    %57 = tpu.matmul %55, %56, %cst_40 {dimension_numbers = #tpu.dot_dimension_numbers<[1], [0], [0], [1], [0, 0, 1, 1], [], []>} : vector<64x16xbf16>, vector<16x64xbf16>, vector<64x64xf32> -> vector<64x64xf32>
    %c0_41 = arith.constant 0 : index
    %c0_42 = arith.constant 0 : index
    %58 = vector.load %arg9[%c0_41, %c0_42] : memref<1x64xf32, #tpu.memory_space<vmem>>, vector<1x64xf32>
    %59 = vector.broadcast %58 : vector<1x64xf32> to vector<64x64xf32>
    %60 = arith.mulf %57, %59 : vector<64x64xf32>
    %c0_43 = arith.constant 0 : index
    %c0_44 = arith.constant 0 : index
    %61 = vector.load %arg10[%c0_43, %c0_44] : memref<1x64xf32, #tpu.memory_space<vmem>>, vector<1x64xf32>
    %62 = vector.broadcast %61 : vector<1x64xf32> to vector<64x64xf32>
    %63 = arith.addf %60, %62 : vector<64x64xf32>
    %cst_45 = arith.constant 0.000000e+00 : f32
    %64 = vector.broadcast %cst_45 : f32 to vector<64x64xf32>
    %65 = arith.maximumf %63, %64 : vector<64x64xf32>
    %66 = arith.addf %2, %65 : vector<64x64xf32>
    %cst_46 = arith.constant 0.000000e+00 : f32
    %67 = vector.broadcast %cst_46 : f32 to vector<64x64xf32>
    %68 = arith.maximumf %66, %67 : vector<64x64xf32>
    %69 = vector.shape_cast %68 : vector<64x64xf32> to vector<8x8x64xf32>
    %c0_47 = arith.constant 0 : index
    %c0_48 = arith.constant 0 : index
    %c0_49 = arith.constant 0 : index
    %c0_50 = arith.constant 0 : index
    %70 = vector.load %arg11[%c0_47, %c0_48, %c0_49, %c0_50] : memref<1x8x8x64xf32, #tpu.memory_space<vmem>>, vector<1x8x8x64xf32>
    %71 = vector.shape_cast %70 : vector<1x8x8x64xf32> to vector<8x8x64xf32>
    %72 = vector.shape_cast %69 : vector<8x8x64xf32> to vector<1x8x8x64xf32>
    tpu.vector_store %arg11[%c0_47, %c0_48, %c0_49, %c0_50], %72 {strides = array<i32>} : memref<1x8x8x64xf32, #tpu.memory_space<vmem>>, vector<1x8x8x64xf32>,
    return
  }
  func.func @transform_0(%arg0: i32) -> (i32, i32, i32, i32) {
    %c0_i32 = arith.constant 0 : i32
    %c0_i32_0 = arith.constant 0 : i32
    %c0_i32_1 = arith.constant 0 : i32
    %c0_i32_2 = arith.constant 0 : i32
    return %arg0, %c0_i32, %c0_i32_0, %c0_i32_1 : i32, i32, i32, i32
  }
  func.func @transform_1(%arg0: i32) -> (i32, i32) {
    %c0_i32 = arith.constant 0 : i32
    %c0_i32_0 = arith.constant 0 : i32
    %c0_i32_1 = arith.constant 0 : i32
    return %c0_i32, %c0_i32_0 : i32, i32
  }
  func.func @transform_2(%arg0: i32) -> (i32, i32) {
    %c0_i32 = arith.constant 0 : i32
    %c0_i32_0 = arith.constant 0 : i32
    %c0_i32_1 = arith.constant 0 : i32
    return %c0_i32, %c0_i32_0 : i32, i32
  }
  func.func @transform_3(%arg0: i32) -> (i32, i32) {
    %c0_i32 = arith.constant 0 : i32
    %c0_i32_0 = arith.constant 0 : i32
    %c0_i32_1 = arith.constant 0 : i32
    return %c0_i32, %c0_i32_0 : i32, i32
  }
  func.func @transform_4(%arg0: i32) -> (i32, i32) {
    %c0_i32 = arith.constant 0 : i32
    %c0_i32_0 = arith.constant 0 : i32
    %c0_i32_1 = arith.constant 0 : i32
    return %c0_i32, %c0_i32_0 : i32, i32
  }
  func.func @transform_5(%arg0: i32) -> (i32, i32) {
    %c0_i32 = arith.constant 0 : i32
    %c0_i32_0 = arith.constant 0 : i32
    %c0_i32_1 = arith.constant 0 : i32
    return %c0_i32, %c0_i32_0 : i32, i32
  }
  func.func @transform_6(%arg0: i32) -> (i32, i32) {
    %c0_i32 = arith.constant 0 : i32
    %c0_i32_0 = arith.constant 0 : i32
    %c0_i32_1 = arith.constant 0 : i32
    return %c0_i32, %c0_i32_0 : i32, i32
  }
  func.func @transform_7(%arg0: i32) -> (i32, i32) {
    %c0_i32 = arith.constant 0 : i32
    %c0_i32_0 = arith.constant 0 : i32
    %c0_i32_1 = arith.constant 0 : i32
    return %c0_i32, %c0_i32_0 : i32, i32
  }
  func.func @transform_8(%arg0: i32) -> (i32, i32) {
    %c0_i32 = arith.constant 0 : i32
    %c0_i32_0 = arith.constant 0 : i32
    %c0_i32_1 = arith.constant 0 : i32
    return %c0_i32, %c0_i32_0 : i32, i32
  }
  func.func @transform_9(%arg0: i32) -> (i32, i32) {
    %c0_i32 = arith.constant 0 : i32
    %c0_i32_0 = arith.constant 0 : i32
    %c0_i32_1 = arith.constant 0 : i32
    return %c0_i32, %c0_i32_0 : i32, i32
  }
  func.func @transform_10(%arg0: i32) -> (i32, i32, i32, i32) {
    %c0_i32 = arith.constant 0 : i32
    %c0_i32_0 = arith.constant 0 : i32
    %c0_i32_1 = arith.constant 0 : i32
    %c0_i32_2 = arith.constant 0 : i32
    return %arg0, %c0_i32, %c0_i32_0, %c0_i32_1 : i32, i32, i32, i32
  }
}

module attributes {stable_mosaic.version = 11 : i64} {
  func.func @bottleneck_kernel(%arg0: i32, %arg1: memref<1x4x4x256xf32, #tpu.memory_space<vmem>>, %arg2: memref<256x96xbf16, #tpu.memory_space<vmem>>, %arg3: memref<1x96xf32, #tpu.memory_space<vmem>>, %arg4: memref<1x96xf32, #tpu.memory_space<vmem>>, %arg5: memref<384x24xbf16, #tpu.memory_space<vmem>>, %arg6: memref<1x24xf32, #tpu.memory_space<vmem>>, %arg7: memref<1x24xf32, #tpu.memory_space<vmem>>, %arg8: memref<24x96xbf16, #tpu.memory_space<vmem>>, %arg9: memref<1x96xf32, #tpu.memory_space<vmem>>, %arg10: memref<1x96xf32, #tpu.memory_space<vmem>>, %arg11: memref<256x96xbf16, #tpu.memory_space<vmem>>, %arg12: memref<1x96xf32, #tpu.memory_space<vmem>>, %arg13: memref<1x96xf32, #tpu.memory_space<vmem>>, %arg14: memref<1x4x4x96xf32, #tpu.memory_space<vmem>>, %arg15: memref<5x5x96xf32, #tpu.memory_space<vmem>>) attributes {dimension_semantics = [#tpu.dimension_semantics<parallel>], iteration_bounds = array<i64: 2>, scalar_prefetch = 0 : i64, scratch_operands = 1 : i64, tpu.core_type = #tpu.core_type<tc>, window_params = [{transform_indices = @transform_0, window_bounds = array<i64: 1, 4, 4, 256>}, {pipeline_mode = #tpu.pipeline_mode<synchronous>, transform_indices = @transform_1, window_bounds = array<i64: 256, 96>}, {pipeline_mode = #tpu.pipeline_mode<synchronous>, transform_indices = @transform_2, window_bounds = array<i64: 1, 96>}, {pipeline_mode = #tpu.pipeline_mode<synchronous>, transform_indices = @transform_3, window_bounds = array<i64: 1, 96>}, {pipeline_mode = #tpu.pipeline_mode<synchronous>, transform_indices = @transform_4, window_bounds = array<i64: 384, 24>}, {pipeline_mode = #tpu.pipeline_mode<synchronous>, transform_indices = @transform_5, window_bounds = array<i64: 1, 24>}, {pipeline_mode = #tpu.pipeline_mode<synchronous>, transform_indices = @transform_6, window_bounds = array<i64: 1, 24>}, {pipeline_mode = #tpu.pipeline_mode<synchronous>, transform_indices = @transform_7, window_bounds = array<i64: 24, 96>}, {pipeline_mode = #tpu.pipeline_mode<synchronous>, transform_indices = @transform_8, window_bounds = array<i64: 1, 96>}, {pipeline_mode = #tpu.pipeline_mode<synchronous>, transform_indices = @transform_9, window_bounds = array<i64: 1, 96>}, {pipeline_mode = #tpu.pipeline_mode<synchronous>, transform_indices = @transform_10, window_bounds = array<i64: 256, 96>}, {pipeline_mode = #tpu.pipeline_mode<synchronous>, transform_indices = @transform_11, window_bounds = array<i64: 1, 96>}, {pipeline_mode = #tpu.pipeline_mode<synchronous>, transform_indices = @transform_12, window_bounds = array<i64: 1, 96>}, {transform_indices = @transform_13, window_bounds = array<i64: 1, 4, 4, 96>}]} {
    %c0 = arith.constant 0 : index
    %c0_0 = arith.constant 0 : index
    %c0_1 = arith.constant 0 : index
    %c0_2 = arith.constant 0 : index
    %0 = vector.load %arg1[%c0, %c0_0, %c0_1, %c0_2] : memref<1x4x4x256xf32, #tpu.memory_space<vmem>>, vector<1x4x4x256xf32>
    %1 = vector.shape_cast %0 : vector<1x4x4x256xf32> to vector<4x4x256xf32>
    %2 = vector.shape_cast %1 : vector<4x4x256xf32> to vector<16x256xf32>
    %3 = arith.truncf %2 : vector<16x256xf32> to vector<16x256xbf16>
    %c0_3 = arith.constant 0 : index
    %c0_4 = arith.constant 0 : index
    %4 = vector.load %arg2[%c0_3, %c0_4] : memref<256x96xbf16, #tpu.memory_space<vmem>>, vector<256x96xbf16>
    %cst = arith.constant dense<0.000000e+00> : vector<16x96xf32>
    %5 = tpu.matmul %3, %4, %cst {dimension_numbers = #tpu.dot_dimension_numbers<[1], [0], [0], [1], [0, 0, 1, 1], [], []>} : vector<16x256xbf16>, vector<256x96xbf16>, vector<16x96xf32> -> vector<16x96xf32>
    %c0_5 = arith.constant 0 : index
    %c0_6 = arith.constant 0 : index
    %6 = vector.load %arg3[%c0_5, %c0_6] : memref<1x96xf32, #tpu.memory_space<vmem>>, vector<1x96xf32>
    %7 = vector.broadcast %6 : vector<1x96xf32> to vector<16x96xf32>
    %8 = arith.mulf %5, %7 : vector<16x96xf32>
    %c0_7 = arith.constant 0 : index
    %c0_8 = arith.constant 0 : index
    %9 = vector.load %arg4[%c0_7, %c0_8] : memref<1x96xf32, #tpu.memory_space<vmem>>, vector<1x96xf32>
    %10 = vector.broadcast %9 : vector<1x96xf32> to vector<16x96xf32>
    %11 = arith.addf %8, %10 : vector<16x96xf32>
    %cst_9 = arith.constant 0.000000e+00 : f32
    %12 = vector.broadcast %cst_9 : f32 to vector<16x96xf32>
    %13 = arith.maximumf %11, %12 : vector<16x96xf32>
    %cst_10 = arith.constant 0.000000e+00 : f32
    %14 = vector.broadcast %cst_10 : f32 to vector<1x5x96xf32>
    %c0_11 = arith.constant 0 : index
    %c0_12 = arith.constant 0 : index
    %c0_13 = arith.constant 0 : index
    %15 = vector.load %arg15[%c0_11, %c0_12, %c0_13] : memref<5x5x96xf32, #tpu.memory_space<vmem>>, vector<1x5x96xf32>
    tpu.vector_store %arg15[%c0_11, %c0_12, %c0_13], %14 {strides = array<i32>} : memref<5x5x96xf32, #tpu.memory_space<vmem>>, vector<1x5x96xf32>,
    %cst_14 = arith.constant 0.000000e+00 : f32
    %16 = vector.broadcast %cst_14 : f32 to vector<5x1x96xf32>
    %c0_15 = arith.constant 0 : index
    %c0_16 = arith.constant 0 : index
    %c0_17 = arith.constant 0 : index
    %17 = vector.load %arg15[%c0_15, %c0_16, %c0_17] : memref<5x5x96xf32, #tpu.memory_space<vmem>>, vector<5x1x96xf32>
    tpu.vector_store %arg15[%c0_15, %c0_16, %c0_17], %16 {strides = array<i32>} : memref<5x5x96xf32, #tpu.memory_space<vmem>>, vector<5x1x96xf32>,
    %18 = vector.shape_cast %13 : vector<16x96xf32> to vector<4x4x96xf32>
    %c1 = arith.constant 1 : index
    %c1_18 = arith.constant 1 : index
    %c0_19 = arith.constant 0 : index
    %19 = vector.load %arg15[%c1, %c1_18, %c0_19] : memref<5x5x96xf32, #tpu.memory_space<vmem>>, vector<4x4x96xf32>
    tpu.vector_store %arg15[%c1, %c1_18, %c0_19], %18 {strides = array<i32>} : memref<5x5x96xf32, #tpu.memory_space<vmem>>, vector<4x4x96xf32>,
    %c0_20 = arith.constant 0 : index
    %c0_21 = arith.constant 0 : index
    %c0_22 = arith.constant 0 : index
    %20 = vector.load %arg15[%c0_20, %c0_21, %c0_22] : memref<5x5x96xf32, #tpu.memory_space<vmem>>, vector<5x5x96xf32>
    %21 = vector.extract_strided_slice %20 {offsets = [0, 0, 0], sizes = [4, 4, 96], strides = [1, 1, 1]} : vector<5x5x96xf32> to vector<4x4x96xf32>
    %22 = vector.shape_cast %21 : vector<4x4x96xf32> to vector<16x96xf32>
    %23 = vector.extract_strided_slice %20 {offsets = [0, 1, 0], sizes = [4, 4, 96], strides = [1, 1, 1]} : vector<5x5x96xf32> to vector<4x4x96xf32>
    %24 = vector.shape_cast %23 : vector<4x4x96xf32> to vector<16x96xf32>
    %25 = vector.extract_strided_slice %20 {offsets = [1, 0, 0], sizes = [4, 4, 96], strides = [1, 1, 1]} : vector<5x5x96xf32> to vector<4x4x96xf32>
    %26 = vector.shape_cast %25 : vector<4x4x96xf32> to vector<16x96xf32>
    %27 = vector.extract_strided_slice %20 {offsets = [1, 1, 0], sizes = [4, 4, 96], strides = [1, 1, 1]} : vector<5x5x96xf32> to vector<4x4x96xf32>
    %28 = vector.shape_cast %27 : vector<4x4x96xf32> to vector<16x96xf32>
    %29 = tpu.concatenate %22, %24, %26, %28 in 1 : vector<16x96xf32>, vector<16x96xf32>, vector<16x96xf32>, vector<16x96xf32> -> vector<16x384xf32>
    %30 = arith.truncf %29 : vector<16x384xf32> to vector<16x384xbf16>
    %c0_23 = arith.constant 0 : index
    %c0_24 = arith.constant 0 : index
    %31 = vector.load %arg5[%c0_23, %c0_24] : memref<384x24xbf16, #tpu.memory_space<vmem>>, vector<384x24xbf16>
    %cst_25 = arith.constant dense<0.000000e+00> : vector<16x24xf32>
    %32 = tpu.matmul %30, %31, %cst_25 {dimension_numbers = #tpu.dot_dimension_numbers<[1], [0], [0], [1], [0, 0, 1, 1], [], []>} : vector<16x384xbf16>, vector<384x24xbf16>, vector<16x24xf32> -> vector<16x24xf32>
    %c0_26 = arith.constant 0 : index
    %c0_27 = arith.constant 0 : index
    %33 = vector.load %arg6[%c0_26, %c0_27] : memref<1x24xf32, #tpu.memory_space<vmem>>, vector<1x24xf32>
    %34 = vector.broadcast %33 : vector<1x24xf32> to vector<16x24xf32>
    %35 = arith.mulf %32, %34 : vector<16x24xf32>
    %c0_28 = arith.constant 0 : index
    %c0_29 = arith.constant 0 : index
    %36 = vector.load %arg7[%c0_28, %c0_29] : memref<1x24xf32, #tpu.memory_space<vmem>>, vector<1x24xf32>
    %37 = vector.broadcast %36 : vector<1x24xf32> to vector<16x24xf32>
    %38 = arith.addf %35, %37 : vector<16x24xf32>
    %cst_30 = arith.constant 0.000000e+00 : f32
    %39 = vector.broadcast %cst_30 : f32 to vector<16x24xf32>
    %40 = arith.maximumf %38, %39 : vector<16x24xf32>
    %41 = arith.truncf %40 : vector<16x24xf32> to vector<16x24xbf16>
    %c0_31 = arith.constant 0 : index
    %c0_32 = arith.constant 0 : index
    %42 = vector.load %arg8[%c0_31, %c0_32] : memref<24x96xbf16, #tpu.memory_space<vmem>>, vector<24x96xbf16>
    %cst_33 = arith.constant dense<0.000000e+00> : vector<16x96xf32>
    %43 = tpu.matmul %41, %42, %cst_33 {dimension_numbers = #tpu.dot_dimension_numbers<[1], [0], [0], [1], [0, 0, 1, 1], [], []>} : vector<16x24xbf16>, vector<24x96xbf16>, vector<16x96xf32> -> vector<16x96xf32>
    %c0_34 = arith.constant 0 : index
    %c0_35 = arith.constant 0 : index
    %44 = vector.load %arg9[%c0_34, %c0_35] : memref<1x96xf32, #tpu.memory_space<vmem>>, vector<1x96xf32>
    %45 = vector.broadcast %44 : vector<1x96xf32> to vector<16x96xf32>
    %46 = arith.mulf %43, %45 : vector<16x96xf32>
    %c0_36 = arith.constant 0 : index
    %c0_37 = arith.constant 0 : index
    %47 = vector.load %arg10[%c0_36, %c0_37] : memref<1x96xf32, #tpu.memory_space<vmem>>, vector<1x96xf32>
    %48 = vector.broadcast %47 : vector<1x96xf32> to vector<16x96xf32>
    %49 = arith.addf %46, %48 : vector<16x96xf32>
    %cst_38 = arith.constant 0.000000e+00 : f32
    %50 = vector.broadcast %cst_38 : f32 to vector<16x96xf32>
    %51 = arith.maximumf %49, %50 : vector<16x96xf32>
    %c0_39 = arith.constant 0 : index
    %c0_40 = arith.constant 0 : index
    %52 = vector.load %arg11[%c0_39, %c0_40] : memref<256x96xbf16, #tpu.memory_space<vmem>>, vector<256x96xbf16>
    %cst_41 = arith.constant dense<0.000000e+00> : vector<16x96xf32>
    %53 = tpu.matmul %3, %52, %cst_41 {dimension_numbers = #tpu.dot_dimension_numbers<[1], [0], [0], [1], [0, 0, 1, 1], [], []>} : vector<16x256xbf16>, vector<256x96xbf16>, vector<16x96xf32> -> vector<16x96xf32>
    %c0_42 = arith.constant 0 : index
    %c0_43 = arith.constant 0 : index
    %54 = vector.load %arg12[%c0_42, %c0_43] : memref<1x96xf32, #tpu.memory_space<vmem>>, vector<1x96xf32>
    %55 = vector.broadcast %54 : vector<1x96xf32> to vector<16x96xf32>
    %56 = arith.mulf %53, %55 : vector<16x96xf32>
    %c0_44 = arith.constant 0 : index
    %c0_45 = arith.constant 0 : index
    %57 = vector.load %arg13[%c0_44, %c0_45] : memref<1x96xf32, #tpu.memory_space<vmem>>, vector<1x96xf32>
    %58 = vector.broadcast %57 : vector<1x96xf32> to vector<16x96xf32>
    %59 = arith.addf %56, %58 : vector<16x96xf32>
    %60 = arith.addf %59, %51 : vector<16x96xf32>
    %cst_46 = arith.constant 0.000000e+00 : f32
    %61 = vector.broadcast %cst_46 : f32 to vector<16x96xf32>
    %62 = arith.maximumf %60, %61 : vector<16x96xf32>
    %63 = vector.shape_cast %62 : vector<16x96xf32> to vector<4x4x96xf32>
    %c0_47 = arith.constant 0 : index
    %c0_48 = arith.constant 0 : index
    %c0_49 = arith.constant 0 : index
    %c0_50 = arith.constant 0 : index
    %64 = vector.load %arg14[%c0_47, %c0_48, %c0_49, %c0_50] : memref<1x4x4x96xf32, #tpu.memory_space<vmem>>, vector<1x4x4x96xf32>
    %65 = vector.shape_cast %64 : vector<1x4x4x96xf32> to vector<4x4x96xf32>
    %66 = vector.shape_cast %63 : vector<4x4x96xf32> to vector<1x4x4x96xf32>
    tpu.vector_store %arg14[%c0_47, %c0_48, %c0_49, %c0_50], %66 {strides = array<i32>} : memref<1x4x4x96xf32, #tpu.memory_space<vmem>>, vector<1x4x4x96xf32>,
    return
  }
  func.func @transform_0(%arg0: i32) -> (i32, i32, i32, i32) {
    %c0_i32 = arith.constant 0 : i32
    %c0_i32_0 = arith.constant 0 : i32
    %c0_i32_1 = arith.constant 0 : i32
    %c0_i32_2 = arith.constant 0 : i32
    return %arg0, %c0_i32, %c0_i32_0, %c0_i32_1 : i32, i32, i32, i32
  }
  func.func @transform_1(%arg0: i32) -> (i32, i32) {
    %c0_i32 = arith.constant 0 : i32
    %c0_i32_0 = arith.constant 0 : i32
    %c0_i32_1 = arith.constant 0 : i32
    return %c0_i32, %c0_i32_0 : i32, i32
  }
  func.func @transform_2(%arg0: i32) -> (i32, i32) {
    %c0_i32 = arith.constant 0 : i32
    %c0_i32_0 = arith.constant 0 : i32
    %c0_i32_1 = arith.constant 0 : i32
    return %c0_i32, %c0_i32_0 : i32, i32
  }
  func.func @transform_3(%arg0: i32) -> (i32, i32) {
    %c0_i32 = arith.constant 0 : i32
    %c0_i32_0 = arith.constant 0 : i32
    %c0_i32_1 = arith.constant 0 : i32
    return %c0_i32, %c0_i32_0 : i32, i32
  }
  func.func @transform_4(%arg0: i32) -> (i32, i32) {
    %c0_i32 = arith.constant 0 : i32
    %c0_i32_0 = arith.constant 0 : i32
    %c0_i32_1 = arith.constant 0 : i32
    return %c0_i32, %c0_i32_0 : i32, i32
  }
  func.func @transform_5(%arg0: i32) -> (i32, i32) {
    %c0_i32 = arith.constant 0 : i32
    %c0_i32_0 = arith.constant 0 : i32
    %c0_i32_1 = arith.constant 0 : i32
    return %c0_i32, %c0_i32_0 : i32, i32
  }
  func.func @transform_6(%arg0: i32) -> (i32, i32) {
    %c0_i32 = arith.constant 0 : i32
    %c0_i32_0 = arith.constant 0 : i32
    %c0_i32_1 = arith.constant 0 : i32
    return %c0_i32, %c0_i32_0 : i32, i32
  }
  func.func @transform_7(%arg0: i32) -> (i32, i32) {
    %c0_i32 = arith.constant 0 : i32
    %c0_i32_0 = arith.constant 0 : i32
    %c0_i32_1 = arith.constant 0 : i32
    return %c0_i32, %c0_i32_0 : i32, i32
  }
  func.func @transform_8(%arg0: i32) -> (i32, i32) {
    %c0_i32 = arith.constant 0 : i32
    %c0_i32_0 = arith.constant 0 : i32
    %c0_i32_1 = arith.constant 0 : i32
    return %c0_i32, %c0_i32_0 : i32, i32
  }
  func.func @transform_9(%arg0: i32) -> (i32, i32) {
    %c0_i32 = arith.constant 0 : i32
    %c0_i32_0 = arith.constant 0 : i32
    %c0_i32_1 = arith.constant 0 : i32
    return %c0_i32, %c0_i32_0 : i32, i32
  }
  func.func @transform_10(%arg0: i32) -> (i32, i32) {
    %c0_i32 = arith.constant 0 : i32
    %c0_i32_0 = arith.constant 0 : i32
    %c0_i32_1 = arith.constant 0 : i32
    return %c0_i32, %c0_i32_0 : i32, i32
  }
  func.func @transform_11(%arg0: i32) -> (i32, i32) {
    %c0_i32 = arith.constant 0 : i32
    %c0_i32_0 = arith.constant 0 : i32
    %c0_i32_1 = arith.constant 0 : i32
    return %c0_i32, %c0_i32_0 : i32, i32
  }
  func.func @transform_12(%arg0: i32) -> (i32, i32) {
    %c0_i32 = arith.constant 0 : i32
    %c0_i32_0 = arith.constant 0 : i32
    %c0_i32_1 = arith.constant 0 : i32
    return %c0_i32, %c0_i32_0 : i32, i32
  }
  func.func @transform_13(%arg0: i32) -> (i32, i32, i32, i32) {
    %c0_i32 = arith.constant 0 : i32
    %c0_i32_0 = arith.constant 0 : i32
    %c0_i32_1 = arith.constant 0 : i32
    %c0_i32_2 = arith.constant 0 : i32
    return %arg0, %c0_i32, %c0_i32_0, %c0_i32_1 : i32, i32, i32, i32
  }
}

module attributes {stable_mosaic.version = 11 : i64} {
  func.func @bottleneck_kernel(%arg0: i32, %arg1: memref<1x4x4x96xf32, #tpu.memory_space<vmem>>, %arg2: memref<96x24xbf16, #tpu.memory_space<vmem>>, %arg3: memref<1x24xf32, #tpu.memory_space<vmem>>, %arg4: memref<1x24xf32, #tpu.memory_space<vmem>>, %arg5: memref<216x24xbf16, #tpu.memory_space<vmem>>, %arg6: memref<1x24xf32, #tpu.memory_space<vmem>>, %arg7: memref<1x24xf32, #tpu.memory_space<vmem>>, %arg8: memref<24x96xbf16, #tpu.memory_space<vmem>>, %arg9: memref<1x96xf32, #tpu.memory_space<vmem>>, %arg10: memref<1x96xf32, #tpu.memory_space<vmem>>, %arg11: memref<96x128xbf16, #tpu.memory_space<vmem>>, %arg12: memref<1x128xf32, #tpu.memory_space<vmem>>, %arg13: memref<1x4x4x128xf32, #tpu.memory_space<vmem>>, %arg14: memref<6x6x24xf32, #tpu.memory_space<vmem>>) attributes {dimension_semantics = [#tpu.dimension_semantics<parallel>], iteration_bounds = array<i64: 2>, scalar_prefetch = 0 : i64, scratch_operands = 1 : i64, tpu.core_type = #tpu.core_type<tc>, window_params = [{transform_indices = @transform_0, window_bounds = array<i64: 1, 4, 4, 96>}, {pipeline_mode = #tpu.pipeline_mode<synchronous>, transform_indices = @transform_1, window_bounds = array<i64: 96, 24>}, {pipeline_mode = #tpu.pipeline_mode<synchronous>, transform_indices = @transform_2, window_bounds = array<i64: 1, 24>}, {pipeline_mode = #tpu.pipeline_mode<synchronous>, transform_indices = @transform_3, window_bounds = array<i64: 1, 24>}, {pipeline_mode = #tpu.pipeline_mode<synchronous>, transform_indices = @transform_4, window_bounds = array<i64: 216, 24>}, {pipeline_mode = #tpu.pipeline_mode<synchronous>, transform_indices = @transform_5, window_bounds = array<i64: 1, 24>}, {pipeline_mode = #tpu.pipeline_mode<synchronous>, transform_indices = @transform_6, window_bounds = array<i64: 1, 24>}, {pipeline_mode = #tpu.pipeline_mode<synchronous>, transform_indices = @transform_7, window_bounds = array<i64: 24, 96>}, {pipeline_mode = #tpu.pipeline_mode<synchronous>, transform_indices = @transform_8, window_bounds = array<i64: 1, 96>}, {pipeline_mode = #tpu.pipeline_mode<synchronous>, transform_indices = @transform_9, window_bounds = array<i64: 1, 96>}, {pipeline_mode = #tpu.pipeline_mode<synchronous>, transform_indices = @transform_10, window_bounds = array<i64: 96, 128>}, {pipeline_mode = #tpu.pipeline_mode<synchronous>, transform_indices = @transform_11, window_bounds = array<i64: 1, 128>}, {transform_indices = @transform_12, window_bounds = array<i64: 1, 4, 4, 128>}]} {
    %c0 = arith.constant 0 : index
    %c0_0 = arith.constant 0 : index
    %c0_1 = arith.constant 0 : index
    %c0_2 = arith.constant 0 : index
    %0 = vector.load %arg1[%c0, %c0_0, %c0_1, %c0_2] : memref<1x4x4x96xf32, #tpu.memory_space<vmem>>, vector<1x4x4x96xf32>
    %1 = vector.shape_cast %0 : vector<1x4x4x96xf32> to vector<4x4x96xf32>
    %2 = vector.shape_cast %1 : vector<4x4x96xf32> to vector<16x96xf32>
    %3 = arith.truncf %2 : vector<16x96xf32> to vector<16x96xbf16>
    %c0_3 = arith.constant 0 : index
    %c0_4 = arith.constant 0 : index
    %4 = vector.load %arg2[%c0_3, %c0_4] : memref<96x24xbf16, #tpu.memory_space<vmem>>, vector<96x24xbf16>
    %cst = arith.constant dense<0.000000e+00> : vector<16x24xf32>
    %5 = tpu.matmul %3, %4, %cst {dimension_numbers = #tpu.dot_dimension_numbers<[1], [0], [0], [1], [0, 0, 1, 1], [], []>} : vector<16x96xbf16>, vector<96x24xbf16>, vector<16x24xf32> -> vector<16x24xf32>
    %c0_5 = arith.constant 0 : index
    %c0_6 = arith.constant 0 : index
    %6 = vector.load %arg3[%c0_5, %c0_6] : memref<1x24xf32, #tpu.memory_space<vmem>>, vector<1x24xf32>
    %7 = vector.broadcast %6 : vector<1x24xf32> to vector<16x24xf32>
    %8 = arith.mulf %5, %7 : vector<16x24xf32>
    %c0_7 = arith.constant 0 : index
    %c0_8 = arith.constant 0 : index
    %9 = vector.load %arg4[%c0_7, %c0_8] : memref<1x24xf32, #tpu.memory_space<vmem>>, vector<1x24xf32>
    %10 = vector.broadcast %9 : vector<1x24xf32> to vector<16x24xf32>
    %11 = arith.addf %8, %10 : vector<16x24xf32>
    %cst_9 = arith.constant 0.000000e+00 : f32
    %12 = vector.broadcast %cst_9 : f32 to vector<16x24xf32>
    %13 = arith.maximumf %11, %12 : vector<16x24xf32>
    %cst_10 = arith.constant 0.000000e+00 : f32
    %14 = vector.broadcast %cst_10 : f32 to vector<1x6x24xf32>
    %c0_11 = arith.constant 0 : index
    %c0_12 = arith.constant 0 : index
    %c0_13 = arith.constant 0 : index
    %15 = vector.load %arg14[%c0_11, %c0_12, %c0_13] : memref<6x6x24xf32, #tpu.memory_space<vmem>>, vector<1x6x24xf32>
    tpu.vector_store %arg14[%c0_11, %c0_12, %c0_13], %14 {strides = array<i32>} : memref<6x6x24xf32, #tpu.memory_space<vmem>>, vector<1x6x24xf32>,
    %cst_14 = arith.constant 0.000000e+00 : f32
    %16 = vector.broadcast %cst_14 : f32 to vector<6x1x24xf32>
    %c0_15 = arith.constant 0 : index
    %c0_16 = arith.constant 0 : index
    %c0_17 = arith.constant 0 : index
    %17 = vector.load %arg14[%c0_15, %c0_16, %c0_17] : memref<6x6x24xf32, #tpu.memory_space<vmem>>, vector<6x1x24xf32>
    tpu.vector_store %arg14[%c0_15, %c0_16, %c0_17], %16 {strides = array<i32>} : memref<6x6x24xf32, #tpu.memory_space<vmem>>, vector<6x1x24xf32>,
    %cst_18 = arith.constant 0.000000e+00 : f32
    %18 = vector.broadcast %cst_18 : f32 to vector<1x6x24xf32>
    %c5 = arith.constant 5 : index
    %c0_19 = arith.constant 0 : index
    %c0_20 = arith.constant 0 : index
    %19 = vector.load %arg14[%c5, %c0_19, %c0_20] : memref<6x6x24xf32, #tpu.memory_space<vmem>>, vector<1x6x24xf32>
    tpu.vector_store %arg14[%c5, %c0_19, %c0_20], %18 {strides = array<i32>} : memref<6x6x24xf32, #tpu.memory_space<vmem>>, vector<1x6x24xf32>,
    %cst_21 = arith.constant 0.000000e+00 : f32
    %20 = vector.broadcast %cst_21 : f32 to vector<6x1x24xf32>
    %c0_22 = arith.constant 0 : index
    %c5_23 = arith.constant 5 : index
    %c0_24 = arith.constant 0 : index
    %21 = vector.load %arg14[%c0_22, %c5_23, %c0_24] : memref<6x6x24xf32, #tpu.memory_space<vmem>>, vector<6x1x24xf32>
    tpu.vector_store %arg14[%c0_22, %c5_23, %c0_24], %20 {strides = array<i32>} : memref<6x6x24xf32, #tpu.memory_space<vmem>>, vector<6x1x24xf32>,
    %22 = vector.shape_cast %13 : vector<16x24xf32> to vector<4x4x24xf32>
    %c1 = arith.constant 1 : index
    %c1_25 = arith.constant 1 : index
    %c0_26 = arith.constant 0 : index
    %23 = vector.load %arg14[%c1, %c1_25, %c0_26] : memref<6x6x24xf32, #tpu.memory_space<vmem>>, vector<4x4x24xf32>
    tpu.vector_store %arg14[%c1, %c1_25, %c0_26], %22 {strides = array<i32>} : memref<6x6x24xf32, #tpu.memory_space<vmem>>, vector<4x4x24xf32>,
    %c0_27 = arith.constant 0 : index
    %c0_28 = arith.constant 0 : index
    %c0_29 = arith.constant 0 : index
    %24 = vector.load %arg14[%c0_27, %c0_28, %c0_29] : memref<6x6x24xf32, #tpu.memory_space<vmem>>, vector<6x6x24xf32>
    %25 = vector.extract_strided_slice %24 {offsets = [0, 0, 0], sizes = [4, 4, 24], strides = [1, 1, 1]} : vector<6x6x24xf32> to vector<4x4x24xf32>
    %26 = vector.shape_cast %25 : vector<4x4x24xf32> to vector<16x24xf32>
    %27 = vector.extract_strided_slice %24 {offsets = [0, 1, 0], sizes = [4, 4, 24], strides = [1, 1, 1]} : vector<6x6x24xf32> to vector<4x4x24xf32>
    %28 = vector.shape_cast %27 : vector<4x4x24xf32> to vector<16x24xf32>
    %29 = vector.extract_strided_slice %24 {offsets = [0, 2, 0], sizes = [4, 4, 24], strides = [1, 1, 1]} : vector<6x6x24xf32> to vector<4x4x24xf32>
    %30 = vector.shape_cast %29 : vector<4x4x24xf32> to vector<16x24xf32>
    %31 = vector.extract_strided_slice %24 {offsets = [1, 0, 0], sizes = [4, 4, 24], strides = [1, 1, 1]} : vector<6x6x24xf32> to vector<4x4x24xf32>
    %32 = vector.shape_cast %31 : vector<4x4x24xf32> to vector<16x24xf32>
    %33 = vector.extract_strided_slice %24 {offsets = [1, 1, 0], sizes = [4, 4, 24], strides = [1, 1, 1]} : vector<6x6x24xf32> to vector<4x4x24xf32>
    %34 = vector.shape_cast %33 : vector<4x4x24xf32> to vector<16x24xf32>
    %35 = vector.extract_strided_slice %24 {offsets = [1, 2, 0], sizes = [4, 4, 24], strides = [1, 1, 1]} : vector<6x6x24xf32> to vector<4x4x24xf32>
    %36 = vector.shape_cast %35 : vector<4x4x24xf32> to vector<16x24xf32>
    %37 = vector.extract_strided_slice %24 {offsets = [2, 0, 0], sizes = [4, 4, 24], strides = [1, 1, 1]} : vector<6x6x24xf32> to vector<4x4x24xf32>
    %38 = vector.shape_cast %37 : vector<4x4x24xf32> to vector<16x24xf32>
    %39 = vector.extract_strided_slice %24 {offsets = [2, 1, 0], sizes = [4, 4, 24], strides = [1, 1, 1]} : vector<6x6x24xf32> to vector<4x4x24xf32>
    %40 = vector.shape_cast %39 : vector<4x4x24xf32> to vector<16x24xf32>
    %41 = vector.extract_strided_slice %24 {offsets = [2, 2, 0], sizes = [4, 4, 24], strides = [1, 1, 1]} : vector<6x6x24xf32> to vector<4x4x24xf32>
    %42 = vector.shape_cast %41 : vector<4x4x24xf32> to vector<16x24xf32>
    %43 = tpu.concatenate %26, %28, %30, %32, %34, %36, %38, %40, %42 in 1 : vector<16x24xf32>, vector<16x24xf32>, vector<16x24xf32>, vector<16x24xf32>, vector<16x24xf32>, vector<16x24xf32>, vector<16x24xf32>, vector<16x24xf32>, vector<16x24xf32> -> vector<16x216xf32>
    %44 = arith.truncf %43 : vector<16x216xf32> to vector<16x216xbf16>
    %c0_30 = arith.constant 0 : index
    %c0_31 = arith.constant 0 : index
    %45 = vector.load %arg5[%c0_30, %c0_31] : memref<216x24xbf16, #tpu.memory_space<vmem>>, vector<216x24xbf16>
    %cst_32 = arith.constant dense<0.000000e+00> : vector<16x24xf32>
    %46 = tpu.matmul %44, %45, %cst_32 {dimension_numbers = #tpu.dot_dimension_numbers<[1], [0], [0], [1], [0, 0, 1, 1], [], []>} : vector<16x216xbf16>, vector<216x24xbf16>, vector<16x24xf32> -> vector<16x24xf32>
    %c0_33 = arith.constant 0 : index
    %c0_34 = arith.constant 0 : index
    %47 = vector.load %arg6[%c0_33, %c0_34] : memref<1x24xf32, #tpu.memory_space<vmem>>, vector<1x24xf32>
    %48 = vector.broadcast %47 : vector<1x24xf32> to vector<16x24xf32>
    %49 = arith.mulf %46, %48 : vector<16x24xf32>
    %c0_35 = arith.constant 0 : index
    %c0_36 = arith.constant 0 : index
    %50 = vector.load %arg7[%c0_35, %c0_36] : memref<1x24xf32, #tpu.memory_space<vmem>>, vector<1x24xf32>
    %51 = vector.broadcast %50 : vector<1x24xf32> to vector<16x24xf32>
    %52 = arith.addf %49, %51 : vector<16x24xf32>
    %cst_37 = arith.constant 0.000000e+00 : f32
    %53 = vector.broadcast %cst_37 : f32 to vector<16x24xf32>
    %54 = arith.maximumf %52, %53 : vector<16x24xf32>
    %55 = arith.truncf %54 : vector<16x24xf32> to vector<16x24xbf16>
    %c0_38 = arith.constant 0 : index
    %c0_39 = arith.constant 0 : index
    %56 = vector.load %arg8[%c0_38, %c0_39] : memref<24x96xbf16, #tpu.memory_space<vmem>>, vector<24x96xbf16>
    %cst_40 = arith.constant dense<0.000000e+00> : vector<16x96xf32>
    %57 = tpu.matmul %55, %56, %cst_40 {dimension_numbers = #tpu.dot_dimension_numbers<[1], [0], [0], [1], [0, 0, 1, 1], [], []>} : vector<16x24xbf16>, vector<24x96xbf16>, vector<16x96xf32> -> vector<16x96xf32>
    %c0_41 = arith.constant 0 : index
    %c0_42 = arith.constant 0 : index
    %58 = vector.load %arg9[%c0_41, %c0_42] : memref<1x96xf32, #tpu.memory_space<vmem>>, vector<1x96xf32>
    %59 = vector.broadcast %58 : vector<1x96xf32> to vector<16x96xf32>
    %60 = arith.mulf %57, %59 : vector<16x96xf32>
    %c0_43 = arith.constant 0 : index
    %c0_44 = arith.constant 0 : index
    %61 = vector.load %arg10[%c0_43, %c0_44] : memref<1x96xf32, #tpu.memory_space<vmem>>, vector<1x96xf32>
    %62 = vector.broadcast %61 : vector<1x96xf32> to vector<16x96xf32>
    %63 = arith.addf %60, %62 : vector<16x96xf32>
    %cst_45 = arith.constant 0.000000e+00 : f32
    %64 = vector.broadcast %cst_45 : f32 to vector<16x96xf32>
    %65 = arith.maximumf %63, %64 : vector<16x96xf32>
    %66 = arith.addf %2, %65 : vector<16x96xf32>
    %cst_46 = arith.constant 0.000000e+00 : f32
    %67 = vector.broadcast %cst_46 : f32 to vector<16x96xf32>
    %68 = arith.maximumf %66, %67 : vector<16x96xf32>
    %69 = arith.truncf %68 : vector<16x96xf32> to vector<16x96xbf16>
    %c0_47 = arith.constant 0 : index
    %c0_48 = arith.constant 0 : index
    %70 = vector.load %arg11[%c0_47, %c0_48] : memref<96x128xbf16, #tpu.memory_space<vmem>>, vector<96x128xbf16>
    %cst_49 = arith.constant dense<0.000000e+00> : vector<16x128xf32>
    %71 = tpu.matmul %69, %70, %cst_49 {dimension_numbers = #tpu.dot_dimension_numbers<[1], [0], [0], [1], [0, 0, 1, 1], [], []>} : vector<16x96xbf16>, vector<96x128xbf16>, vector<16x128xf32> -> vector<16x128xf32>
    %c0_50 = arith.constant 0 : index
    %c0_51 = arith.constant 0 : index
    %72 = vector.load %arg12[%c0_50, %c0_51] : memref<1x128xf32, #tpu.memory_space<vmem>>, vector<1x128xf32>
    %73 = vector.broadcast %72 : vector<1x128xf32> to vector<16x128xf32>
    %74 = arith.addf %71, %73 : vector<16x128xf32>
    %75 = vector.shape_cast %74 : vector<16x128xf32> to vector<4x4x128xf32>
    %c0_52 = arith.constant 0 : index
    %c0_53 = arith.constant 0 : index
    %c0_54 = arith.constant 0 : index
    %c0_55 = arith.constant 0 : index
    %76 = vector.load %arg13[%c0_52, %c0_53, %c0_54, %c0_55] : memref<1x4x4x128xf32, #tpu.memory_space<vmem>>, vector<1x4x4x128xf32>
    %77 = vector.shape_cast %76 : vector<1x4x4x128xf32> to vector<4x4x128xf32>
    %78 = vector.shape_cast %75 : vector<4x4x128xf32> to vector<1x4x4x128xf32>
    tpu.vector_store %arg13[%c0_52, %c0_53, %c0_54, %c0_55], %78 {strides = array<i32>} : memref<1x4x4x128xf32, #tpu.memory_space<vmem>>, vector<1x4x4x128xf32>,
    return
  }
  func.func @transform_0(%arg0: i32) -> (i32, i32, i32, i32) {
    %c0_i32 = arith.constant 0 : i32
    %c0_i32_0 = arith.constant 0 : i32
    %c0_i32_1 = arith.constant 0 : i32
    %c0_i32_2 = arith.constant 0 : i32
    return %arg0, %c0_i32, %c0_i32_0, %c0_i32_1 : i32, i32, i32, i32
  }
  func.func @transform_1(%arg0: i32) -> (i32, i32) {
    %c0_i32 = arith.constant 0 : i32
    %c0_i32_0 = arith.constant 0 : i32
    %c0_i32_1 = arith.constant 0 : i32
    return %c0_i32, %c0_i32_0 : i32, i32
  }
  func.func @transform_2(%arg0: i32) -> (i32, i32) {
    %c0_i32 = arith.constant 0 : i32
    %c0_i32_0 = arith.constant 0 : i32
    %c0_i32_1 = arith.constant 0 : i32
    return %c0_i32, %c0_i32_0 : i32, i32
  }
  func.func @transform_3(%arg0: i32) -> (i32, i32) {
    %c0_i32 = arith.constant 0 : i32
    %c0_i32_0 = arith.constant 0 : i32
    %c0_i32_1 = arith.constant 0 : i32
    return %c0_i32, %c0_i32_0 : i32, i32
  }
  func.func @transform_4(%arg0: i32) -> (i32, i32) {
    %c0_i32 = arith.constant 0 : i32
    %c0_i32_0 = arith.constant 0 : i32
    %c0_i32_1 = arith.constant 0 : i32
    return %c0_i32, %c0_i32_0 : i32, i32
  }
  func.func @transform_5(%arg0: i32) -> (i32, i32) {
    %c0_i32 = arith.constant 0 : i32
    %c0_i32_0 = arith.constant 0 : i32
    %c0_i32_1 = arith.constant 0 : i32
    return %c0_i32, %c0_i32_0 : i32, i32
  }
  func.func @transform_6(%arg0: i32) -> (i32, i32) {
    %c0_i32 = arith.constant 0 : i32
    %c0_i32_0 = arith.constant 0 : i32
    %c0_i32_1 = arith.constant 0 : i32
    return %c0_i32, %c0_i32_0 : i32, i32
  }
  func.func @transform_7(%arg0: i32) -> (i32, i32) {
    %c0_i32 = arith.constant 0 : i32
    %c0_i32_0 = arith.constant 0 : i32
    %c0_i32_1 = arith.constant 0 : i32
    return %c0_i32, %c0_i32_0 : i32, i32
  }
  func.func @transform_8(%arg0: i32) -> (i32, i32) {
    %c0_i32 = arith.constant 0 : i32
    %c0_i32_0 = arith.constant 0 : i32
    %c0_i32_1 = arith.constant 0 : i32
    return %c0_i32, %c0_i32_0 : i32, i32
  }
  func.func @transform_9(%arg0: i32) -> (i32, i32) {
    %c0_i32 = arith.constant 0 : i32
    %c0_i32_0 = arith.constant 0 : i32
    %c0_i32_1 = arith.constant 0 : i32
    return %c0_i32, %c0_i32_0 : i32, i32
  }
  func.func @transform_10(%arg0: i32) -> (i32, i32) {
    %c0_i32 = arith.constant 0 : i32
    %c0_i32_0 = arith.constant 0 : i32
    %c0_i32_1 = arith.constant 0 : i32
    return %c0_i32, %c0_i32_0 : i32, i32
  }
  func.func @transform_11(%arg0: i32) -> (i32, i32) {
    %c0_i32 = arith.constant 0 : i32
    %c0_i32_0 = arith.constant 0 : i32
    %c0_i32_1 = arith.constant 0 : i32
    return %c0_i32, %c0_i32_0 : i32, i32
  }
  func.func @transform_12(%arg0: i32) -> (i32, i32, i32, i32) {
    %c0_i32 = arith.constant 0 : i32
    %c0_i32_0 = arith.constant 0 : i32
    %c0_i32_1 = arith.constant 0 : i32
    %c0_i32_2 = arith.constant 0 : i32
    return %arg0, %c0_i32, %c0_i32_0, %c0_i32_1 : i32, i32, i32, i32
  }
}

</mosaic_0001>

<llo_original>
// kernel: small_encoder_forward.7
$region0: #{small_encoder_forward.7}
  #allocation0 [shape = 'u32[]', space=smem, size = 0x4, offset = 0x4, fixed_abs, tag = 'smem constant byte address 0x4 - core index']
  #allocation1 [shape = 'u32[72,128]{1,0:T(1,128)}', space=vmem, size = 0x9000, scoped, tag = 'internal scratch']
  %s0 = inlined_call_operand.vmem [shape: f32[2,19,19,12], index: 0, kind: input, shape index: {}]
  %s1 = inlined_call_operand.vmem [shape: bf16[192,32], index: 1, kind: input, shape index: {}]
  %s2 = inlined_call_operand.vmem [shape: f32[1,32], index: 2, kind: input, shape index: {}]
  %s3 = inlined_call_operand.vmem [shape: f32[1,32], index: 3, kind: input, shape index: {}]
  %s4 = inlined_call_operand.vmem [shape: f32[2,16,16,32], index: 4, kind: output, shape index: {}]
  %s5 = sld [smem:[#allocation0]]
  $region49: #{small_encoder_forward.7} parent=0
    _
  %s7 = ssub.s32 1, %s5
  %s8 = scalar_select 0, %s7, %s5
  loop: start=0, step=1, limit=4
  $region2: #{small_encoder_forward.7} parent=0 // loop_pre_header
    _
  $region3: #{small_encoder_forward.7} parent=0 // loop_header
    %s10 = sphi 0, %s14
    %p11 = scmp.ge.s32.totalorder %s10, 4
    %s20 = sphi 0, %s22
    %s23 = sphi 0, %s20
    %s24 = sphi 0, %s23
    %s40 = sphi 0, %s24
    %s44 = sphi 0, %s44
    %s46 = sphi 0, %s44
    %s47 = sphi 0, %s46
    %s61 = sphi 0, %s47
    %s65 = sphi 0, %s65
    %s67 = sphi 0, %s65
    %s68 = sphi 0, %s67
    %s82 = sphi 0, %s68
    %s86 = sphi 0, %s86
    %s88 = sphi 0, %s86
    %s89 = sphi 0, %s88
    %s103 = sphi 0, %s89
    %s109 = sphi 0, %s111
    %s112 = sphi 0, %s109
    %s113 = sphi 0, %s112
    %s129 = sphi 0, %s113
  $region4: #{small_encoder_forward.7} parent=0 // loop_header_branch
    %13 = sbr.rel (%p11) target = $region8
  $region5: #{small_encoder_forward.7} parent=0 // loop_body
    %s15 = ssub.s32 %s10, 1
    %s16 = ssub.s32 %s10, 2
    %s17 = sadd.s32 %s10, 1
    %s18 = ssub.s32 %s10, %s17
    %p19 = scmp.eq.s32.totalorder %s18, 0
    %s21 = sadd.s32 %s20, 1
    %s22 = scalar_select %p19, %s20, %s21
    %p25 = pneg %p19
    %p26 = scmp.eq.s32.totalorder %s10, 1
    %p27 = por %p25, %p26
    %p28 = scmp.ne.s32.totalorder %s20, %s23
    %p29 = scmp.eq.s32.totalorder %s10, 0
    %p30 = por %p28, %p29
    %p31 = scmp.ne.s32.totalorder %s20, %s23
    %p32 = scmp.eq.s32.totalorder %s15, 1
    %p33 = por %p31, %p32
    %p34 = scmp.ne.s32.totalorder %s23, %s24
    %p35 = scmp.eq.s32.totalorder %s15, 0
    %p36 = por %p34, %p35
    %p37 = scmp.ne.s32.totalorder %s23, %s24
    %p38 = scmp.eq.s32.totalorder %s16, 1
    %p39 = por %p37, %p38
    %p41 = scmp.ne.s32.totalorder %s24, %s40
    %p42 = scmp.eq.s32.totalorder %s16, 0
    %p43 = por %p41, %p42
    %s45 = sadd.s32 %s44, 1
    %p48 = scmp.eq.s32.totalorder %s10, 1
    %p49 = scmp.ne.s32.totalorder %s44, %s46
    %p50 = scmp.eq.s32.totalorder %s10, 0
    %p51 = por %p49, %p50
    %p52 = scmp.ne.s32.totalorder %s44, %s46
    %p53 = scmp.eq.s32.totalorder %s15, 1
    %p54 = por %p52, %p53
    %p55 = scmp.ne.s32.totalorder %s46, %s47
    %p56 = scmp.eq.s32.totalorder %s15, 0
    %p57 = por %p55, %p56
    %p58 = scmp.ne.s32.totalorder %s46, %s47
    %p59 = scmp.eq.s32.totalorder %s16, 1
    %p60 = por %p58, %p59
    %p62 = scmp.ne.s32.totalorder %s47, %s61
    %p63 = scmp.eq.s32.totalorder %s16, 0
    %p64 = por %p62, %p63
    %s66 = sadd.s32 %s65, 1
    %p69 = scmp.eq.s32.totalorder %s10, 1
    %p70 = scmp.ne.s32.totalorder %s65, %s67
    %p71 = scmp.eq.s32.totalorder %s10, 0
    %p72 = por %p70, %p71
    %p73 = scmp.ne.s32.totalorder %s65, %s67
    %p74 = scmp.eq.s32.totalorder %s15, 1
    %p75 = por %p73, %p74
    %p76 = scmp.ne.s32.totalorder %s67, %s68
    %p77 = scmp.eq.s32.totalorder %s15, 0
    %p78 = por %p76, %p77
    %p79 = scmp.ne.s32.totalorder %s67, %s68
    %p80 = scmp.eq.s32.totalorder %s16, 1
    %p81 = por %p79, %p80
    %p83 = scmp.ne.s32.totalorder %s68, %s82
    %p84 = scmp.eq.s32.totalorder %s16, 0
    %p85 = por %p83, %p84
    %s87 = sadd.s32 %s86, 1
    %p90 = scmp.eq.s32.totalorder %s10, 1
    %p91 = scmp.ne.s32.totalorder %s86, %s88
    %p92 = scmp.eq.s32.totalorder %s10, 0
    %p93 = por %p91, %p92
    %p94 = scmp.ne.s32.totalorder %s86, %s88
    %p95 = scmp.eq.s32.totalorder %s15, 1
    %p96 = por %p94, %p95
    %p97 = scmp.ne.s32.totalorder %s88, %s89
    %p98 = scmp.eq.s32.totalorder %s15, 0
    %p99 = por %p97, %p98
    %p100 = scmp.ne.s32.totalorder %s88, %s89
    %p101 = scmp.eq.s32.totalorder %s16, 1
    %p102 = por %p100, %p101
    %p104 = scmp.ne.s32.totalorder %s89, %s103
    %p105 = scmp.eq.s32.totalorder %s16, 0
    %p106 = por %p104, %p105
    %s107 = ssub.s32 %s10, %s17
    %p108 = scmp.eq.s32.totalorder %s107, 0
    %s110 = sadd.s32 %s109, 1
    %s111 = scalar_select %p108, %s109, %s110
    %p114 = pneg %p108
    %p115 = scmp.eq.s32.totalorder %s10, 1
    %p116 = por %p114, %p115
    %p117 = scmp.ne.s32.totalorder %s109, %s112
    %p118 = scmp.eq.s32.totalorder %s10, 0
    %p119 = por %p117, %p118
    %p120 = scmp.ne.s32.totalorder %s109, %s112
    %p121 = scmp.eq.s32.totalorder %s15, 1
    %p122 = por %p120, %p121
    %p123 = scmp.ne.s32.totalorder %s112, %s113
    %p124 = scmp.eq.s32.totalorder %s15, 0
    %p125 = por %p123, %p124
    %p126 = scmp.ne.s32.totalorder %s112, %s113
    %p127 = scmp.eq.s32.totalorder %s16, 1
    %p128 = por %p126, %p127
    %p130 = scmp.ne.s32.totalorder %s113, %s129
    %p131 = scmp.eq.s32.totalorder %s16, 0
    %p132 = por %p130, %p131
    %p133 = scmp.le.s32.totalorder 1, %s10
    %p134 = scmp.lt.s32.totalorder %s10, 3
    %p135 = pnand %p133, %p134
    %p136 = pneg %p135
    // Predicated region
    $region9: #{small_encoder_forward.7} parent=5 // pred_check
      _
    $region10: #{small_encoder_forward.7} parent=5 // pred_check_branch
      %138 = sbr.rel (%p135) target = $region12
    $region11: #{small_encoder_forward.7} parent=5 // pred_region
      %s139 = ssub.s32 %s10, 1
      // Predicated region
      $region13: #{small_encoder_forward.7} parent=11 // pred_check
        %p140 = pneg %p57
      $region14: #{small_encoder_forward.7} parent=11 // pred_check_branch
        %142 = sbr.rel (%p140) target = $region16
      $region15: #{small_encoder_forward.7} parent=11 // pred_region
        _
      $region16: #{small_encoder_forward.7} parent=11 // pred_fallthru
        _
      // Predicated region
      $region17: #{small_encoder_forward.7} parent=11 // pred_check
        %p143 = pneg %p78
      $region18: #{small_encoder_forward.7} parent=11 // pred_check_branch
        %145 = sbr.rel (%p143) target = $region20
      $region19: #{small_encoder_forward.7} parent=11 // pred_region
        _
      $region20: #{small_encoder_forward.7} parent=11 // pred_fallthru
        _
      // Predicated region
      $region21: #{small_encoder_forward.7} parent=11 // pred_check
        %p146 = pneg %p99
      $region22: #{small_encoder_forward.7} parent=11 // pred_check_branch
        %148 = sbr.rel (%p146) target = $region24
      $region23: #{small_encoder_forward.7} parent=11 // pred_region
        _
      $region24: #{small_encoder_forward.7} parent=11 // pred_fallthru
        _
    $region12: #{small_encoder_forward.7} parent=5 // pred_fallthru
      _
    %p149 = scmp.lt.s32.totalorder %s10, 2
    // Predicated region
    $region25: #{small_encoder_forward.7} parent=5 // pred_check
      %p150 = pneg %p149
    $region26: #{small_encoder_forward.7} parent=5 // pred_check_branch
      %152 = sbr.rel (%p150) target = $region28
    $region27: #{small_encoder_forward.7} parent=5 // pred_region
      // Predicated region
      $region29: #{small_encoder_forward.7} parent=27 // pred_check
        %p153 = pneg %p30
      $region30: #{small_encoder_forward.7} parent=27 // pred_check_branch
        %155 = sbr.rel (%p153) target = $region32
      $region31: #{small_encoder_forward.7} parent=27 // pred_region
        %p156 = scmp.lt.s32.totalorder %s10, 1
        %s157 = scalar_select %p156, %s10, 1
        %s158 = smul.addr %s157, 57
        %s159 = smul.addr %s158, 8
        %s160 = scalar_lea.vmem %s0, %s159
      $region32: #{small_encoder_forward.7} parent=27 // pred_fallthru
        _
    $region28: #{small_encoder_forward.7} parent=5 // pred_fallthru
      _
    %p161 = scmp.le.s32.totalorder 1, %s10
    %p162 = scmp.lt.s32.totalorder %s10, 3
    %p163 = pnand %p161, %p162
    %p164 = pneg %p163
    // Predicated region
    $region33: #{small_encoder_forward.7} parent=5 // pred_check
      _
    $region34: #{small_encoder_forward.7} parent=5 // pred_check_branch
      %166 = sbr.rel (%p163) target = $region36
    $region35: #{small_encoder_forward.7} parent=5 // pred_region
      %s167 = ssub.s32 %s10, 1
      %p168 = scmp.lt.s32.totalorder %s15, 1
      %s169 = scalar_select %p168, %s15, 1
      %s170 = smul.addr %s169, 57
      %s171 = smul.addr %s170, 8
      %s172 = scalar_lea.vmem %s0, %s171
      %p173 = pneg %p36
      %p174 = pneg %p33
      %p175 = pneg %p57
      %p176 = pneg %p54
      %p177 = pneg %p78
      %p178 = pneg %p75
      %p179 = pneg %p99
      %p180 = pneg %p96
      %p181 = pneg %p125
      %p182 = pneg %p122
      %p183 = scmp.lt.s32.totalorder %s15, 1
      %s184 = scalar_select %p183, %s15, 1
      %s185 = smul.addr %s184, 32
      %s186 = smul.addr %s185, 8
      %s187 = scalar_lea.vmem %s4, %s186
      %p188 = scmp.lt.s32.totalorder %s15, 1
      %s189 = scalar_select %p188, %s15, 1
      %s190 = smul.addr %s189, 57
      %s191 = smul.addr %s190, 8
      %s192 = scalar_lea.vmem %s0, %s191
      %p193 = scmp.lt.s32.totalorder %s15, 1
      %s194 = scalar_select %p193, %s15, 1
      %s195 = smul.addr %s194, 32
      %s196 = smul.addr %s195, 8
      %s197 = scalar_lea.vmem %s4, %s196
      %v199 = vld [vmem:[%s192] sm:$0xff]
      %v200 = vld [vmem:[%s192 + $0x8] sm:$0xff]
      %v201 = vld [vmem:[%s192 + $0x10] sm:$0x7]
      %v202 = vld [vmem:[%s192 + $0x18] sm:$0xff]
      %v203 = vld [vmem:[%s192 + $0x20] sm:$0xff]
      %v204 = vld [vmem:[%s192 + $0x28] sm:$0x7]
      %v205 = vld [vmem:[%s192 + $0x30] sm:$0xff]
      %v206 = vld [vmem:[%s192 + $0x38] sm:$0xff]
      %v207 = vld [vmem:[%s192 + $0x40] sm:$0x7]
      %v208 = vld [vmem:[%s192 + $0x48] sm:$0xff]
      %v209 = vld [vmem:[%s192 + $0x50] sm:$0xff]
      %v210 = vld [vmem:[%s192 + $0x58] sm:$0x7]
      %v211 = vld [vmem:[%s192 + $0x60] sm:$0xff]
      %v212 = vld [vmem:[%s192 + $0x68] sm:$0xff]
      %v213 = vld [vmem:[%s192 + $0x70] sm:$0x7]
      %v214 = vld [vmem:[%s192 + $0x78] sm:$0xff]
      %v215 = vld [vmem:[%s192 + $0x80] sm:$0xff]
      %v216 = vld [vmem:[%s192 + $0x88] sm:$0x7]
      %v217 = vld [vmem:[%s192 + $0x90] sm:$0xff]
      %v218 = vld [vmem:[%s192 + $0x98] sm:$0xff]
      %v219 = vld [vmem:[%s192 + $0xa0] sm:$0x7]
      %v220 = vld [vmem:[%s192 + $0xa8] sm:$0xff]
      %v221 = vld [vmem:[%s192 + $0xb0] sm:$0xff]
      %v222 = vld [vmem:[%s192 + $0xb8] sm:$0x7]
      %v223 = vld [vmem:[%s192 + $0xc0] sm:$0xff]
      %v224 = vld [vmem:[%s192 + $0xc8] sm:$0xff]
      %v225 = vld [vmem:[%s192 + $0xd0] sm:$0x7]
      %v226 = vld [vmem:[%s192 + $0xd8] sm:$0xff]
      %v227 = vld [vmem:[%s192 + $0xe0] sm:$0xff]
      %v228 = vld [vmem:[%s192 + $0xe8] sm:$0x7]
      %v229 = vld [vmem:[%s192 + $0xf0] sm:$0xff]
      %v230 = vld [vmem:[%s192 + $0xf8] sm:$0xff]
      %v231 = vld [vmem:[%s192 + $0x100] sm:$0x7]
      %v232 = vld [vmem:[%s192 + $0x108] sm:$0xff]
      %v233 = vld [vmem:[%s192 + $0x110] sm:$0xff]
      %v234 = vld [vmem:[%s192 + $0x118] sm:$0x7]
      %v235 = vld [vmem:[%s192 + $0x120] sm:$0xff]
      %v236 = vld [vmem:[%s192 + $0x128] sm:$0xff]
      %v237 = vld [vmem:[%s192 + $0x130] sm:$0x7]
      %v238 = vld [vmem:[%s192 + $0x138] sm:$0xff]
      %v239 = vld [vmem:[%s192 + $0x140] sm:$0xff]
      %v240 = vld [vmem:[%s192 + $0x148] sm:$0x7]
      %v241 = vld [vmem:[%s192 + $0x150] sm:$0xff]
      %v242 = vld [vmem:[%s192 + $0x158] sm:$0xff]
      %v243 = vld [vmem:[%s192 + $0x160] sm:$0x7]
      %v244 = vld [vmem:[%s192 + $0x168] sm:$0xff]
      %v245 = vld [vmem:[%s192 + $0x170] sm:$0xff]
      %v246 = vld [vmem:[%s192 + $0x178] sm:$0x7]
      %v247 = vld [vmem:[%s192 + $0x180] sm:$0xff]
      %v248 = vld [vmem:[%s192 + $0x188] sm:$0xff]
      %v249 = vld [vmem:[%s192 + $0x190] sm:$0x7]
      %v250 = vld [vmem:[%s192 + $0x198] sm:$0xff]
      %v251 = vld [vmem:[%s192 + $0x1a0] sm:$0xff]
      %v252 = vld [vmem:[%s192 + $0x1a8] sm:$0x7]
      %v253 = vld [vmem:[%s192 + $0x1b0] sm:$0xff]
      %v254 = vld [vmem:[%s192 + $0x1b8] sm:$0xff]
      %v255 = vld [vmem:[%s192 + $0x1c0] sm:$0x7]
      %vm304 = vcmask 1046528
      %v305 = vrot.slane %v199, 1
      %v306 = vrot.slane %v200, 1
      %v307 = vsel %vm304, %v305, %v306
      %v308 = vrot.slane %v201, 1
      %v309 = vsel %vm304, %v306, %v308
      %v310 = vrot.slane %v202, 1
      %v311 = vrot.slane %v203, 1
      %v312 = vsel %vm304, %v310, %v311
      %v313 = vrot.slane %v204, 1
      %v314 = vsel %vm304, %v311, %v313
      %v315 = vrot.slane %v205, 1
      %v316 = vrot.slane %v206, 1
      %v317 = vsel %vm304, %v315, %v316
      %v318 = vrot.slane %v207, 1
      %v319 = vsel %vm304, %v316, %v318
      %v320 = vrot.slane %v208, 1
      %v321 = vrot.slane %v209, 1
      %v322 = vsel %vm304, %v320, %v321
      %v323 = vrot.slane %v210, 1
      %v324 = vsel %vm304, %v321, %v323
      %v325 = vrot.slane %v211, 1
      %v326 = vrot.slane %v212, 1
      %v327 = vsel %vm304, %v325, %v326
      %v328 = vrot.slane %v213, 1
      %v329 = vsel %vm304, %v326, %v328
      %v330 = vrot.slane %v214, 1
      %v331 = vrot.slane %v215, 1
      %v332 = vsel %vm304, %v330, %v331
      %v333 = vrot.slane %v216, 1
      %v334 = vsel %vm304, %v331, %v333
      %v335 = vrot.slane %v217, 1
      %v336 = vrot.slane %v218, 1
      %v337 = vsel %vm304, %v335, %v336
      %v338 = vrot.slane %v219, 1
      %v339 = vsel %vm304, %v336, %v338
      %v340 = vrot.slane %v220, 1
      %v341 = vrot.slane %v221, 1
      %v342 = vsel %vm304, %v340, %v341
      %v343 = vrot.slane %v222, 1
      %v344 = vsel %vm304, %v341, %v343
      %v345 = vrot.slane %v223, 1
      %v346 = vrot.slane %v224, 1
      %v347 = vsel %vm304, %v345, %v346
      %v348 = vrot.slane %v225, 1
      %v349 = vsel %vm304, %v346, %v348
      %v350 = vrot.slane %v226, 1
      %v351 = vrot.slane %v227, 1
      %v352 = vsel %vm304, %v350, %v351
      %v353 = vrot.slane %v228, 1
      %v354 = vsel %vm304, %v351, %v353
      %v355 = vrot.slane %v229, 1
      %v356 = vrot.slane %v230, 1
      %v357 = vsel %vm304, %v355, %v356
      %v358 = vrot.slane %v231, 1
      %v359 = vsel %vm304, %v356, %v358
      %v360 = vrot.slane %v232, 1
      %v361 = vrot.slane %v233, 1
      %v362 = vsel %vm304, %v360, %v361
      %v363 = vrot.slane %v234, 1
      %v364 = vsel %vm304, %v361, %v363
      %v365 = vrot.slane %v235, 1
      %v366 = vrot.slane %v236, 1
      %v367 = vsel %vm304, %v365, %v366
      %v368 = vrot.slane %v237, 1
      %v369 = vsel %vm304, %v366, %v368
      %v370 = vrot.slane %v238, 1
      %v371 = vrot.slane %v239, 1
      %v372 = vsel %vm304, %v370, %v371
      %v373 = vrot.slane %v240, 1
      %v374 = vsel %vm304, %v371, %v373
      %v375 = vrot.slane %v241, 1
      %v376 = vrot.slane %v242, 1
      %v377 = vsel %vm304, %v375, %v376
      %v378 = vrot.slane %v243, 1
      %v379 = vsel %vm304, %v376, %v378
      %v380 = vrot.slane %v244, 1
      %v381 = vrot.slane %v245, 1
      %v382 = vsel %vm304, %v380, %v381
      %v383 = vrot.slane %v246, 1
      %v384 = vsel %vm304, %v381, %v383
      %vm385 = vcmask 1045504
      %v386 = vrot.slane %v199, 2
      %v387 = vrot.slane %v200, 2
      %v388 = vsel %vm385, %v386, %v387
      %v389 = vrot.slane %v201, 2
      %v390 = vsel %vm385, %v387, %v389
      %v391 = vrot.slane %v202, 2
      %v392 = vrot.slane %v203, 2
      %v393 = vsel %vm385, %v391, %v392
      %v394 = vrot.slane %v204, 2
      %v395 = vsel %vm385, %v392, %v394
      %v396 = vrot.slane %v205, 2
      %v397 = vrot.slane %v206, 2
      %v398 = vsel %vm385, %v396, %v397
      %v399 = vrot.slane %v207, 2
      %v400 = vsel %vm385, %v397, %v399
      %v401 = vrot.slane %v208, 2
      %v402 = vrot.slane %v209, 2
      %v403 = vsel %vm385, %v401, %v402
      %v404 = vrot.slane %v210, 2
      %v405 = vsel %vm385, %v402, %v404
      %v406 = vrot.slane %v211, 2
      %v407 = vrot.slane %v212, 2
      %v408 = vsel %vm385, %v406, %v407
      %v409 = vrot.slane %v213, 2
      %v410 = vsel %vm385, %v407, %v409
      %v411 = vrot.slane %v214, 2
      %v412 = vrot.slane %v215, 2
      %v413 = vsel %vm385, %v411, %v412
      %v414 = vrot.slane %v216, 2
      %v415 = vsel %vm385, %v412, %v414
      %v416 = vrot.slane %v217, 2
      %v417 = vrot.slane %v218, 2
      %v418 = vsel %vm385, %v416, %v417
      %v419 = vrot.slane %v219, 2
      %v420 = vsel %vm385, %v417, %v419
      %v421 = vrot.slane %v220, 2
      %v422 = vrot.slane %v221, 2
      %v423 = vsel %vm385, %v421, %v422
      %v424 = vrot.slane %v222, 2
      %v425 = vsel %vm385, %v422, %v424
      %v426 = vrot.slane %v223, 2
      %v427 = vrot.slane %v224, 2
      %v428 = vsel %vm385, %v426, %v427
      %v429 = vrot.slane %v225, 2
      %v430 = vsel %vm385, %v427, %v429
      %v431 = vrot.slane %v226, 2
      %v432 = vrot.slane %v227, 2
      %v433 = vsel %vm385, %v431, %v432
      %v434 = vrot.slane %v228, 2
      %v435 = vsel %vm385, %v432, %v434
      %v436 = vrot.slane %v229, 2
      %v437 = vrot.slane %v230, 2
      %v438 = vsel %vm385, %v436, %v437
      %v439 = vrot.slane %v231, 2
      %v440 = vsel %vm385, %v437, %v439
      %v441 = vrot.slane %v232, 2
      %v442 = vrot.slane %v233, 2
      %v443 = vsel %vm385, %v441, %v442
      %v444 = vrot.slane %v234, 2
      %v445 = vsel %vm385, %v442, %v444
      %v446 = vrot.slane %v235, 2
      %v447 = vrot.slane %v236, 2
      %v448 = vsel %vm385, %v446, %v447
      %v449 = vrot.slane %v237, 2
      %v450 = vsel %vm385, %v447, %v449
      %v451 = vrot.slane %v238, 2
      %v452 = vrot.slane %v239, 2
      %v453 = vsel %vm385, %v451, %v452
      %v454 = vrot.slane %v240, 2
      %v455 = vsel %vm385, %v452, %v454
      %v456 = vrot.slane %v241, 2
      %v457 = vrot.slane %v242, 2
      %v458 = vsel %vm385, %v456, %v457
      %v459 = vrot.slane %v243, 2
      %v460 = vsel %vm385, %v457, %v459
      %v461 = vrot.slane %v244, 2
      %v462 = vrot.slane %v245, 2
      %v463 = vsel %vm385, %v461, %v462
      %v464 = vrot.slane %v246, 2
      %v465 = vsel %vm385, %v462, %v464
      %vm466 = vcmask 1044480
      %v467 = vrot.slane %v199, 3
      %v468 = vrot.slane %v200, 3
      %v469 = vsel %vm466, %v467, %v468
      %v470 = vrot.slane %v201, 3
      %v471 = vsel %vm466, %v468, %v470
      %v472 = vrot.slane %v202, 3
      %v473 = vrot.slane %v203, 3
      %v474 = vsel %vm466, %v472, %v473
      %v475 = vrot.slane %v204, 3
      %v476 = vsel %vm466, %v473, %v475
      %v477 = vrot.slane %v205, 3
      %v478 = vrot.slane %v206, 3
      %v479 = vsel %vm466, %v477, %v478
      %v480 = vrot.slane %v207, 3
      %v481 = vsel %vm466, %v478, %v480
      %v482 = vrot.slane %v208, 3
      %v483 = vrot.slane %v209, 3
      %v484 = vsel %vm466, %v482, %v483
      %v485 = vrot.slane %v210, 3
      %v486 = vsel %vm466, %v483, %v485
      %v487 = vrot.slane %v211, 3
      %v488 = vrot.slane %v212, 3
      %v489 = vsel %vm466, %v487, %v488
      %v490 = vrot.slane %v213, 3
      %v491 = vsel %vm466, %v488, %v490
      %v492 = vrot.slane %v214, 3
      %v493 = vrot.slane %v215, 3
      %v494 = vsel %vm466, %v492, %v493
      %v495 = vrot.slane %v216, 3
      %v496 = vsel %vm466, %v493, %v495
      %v497 = vrot.slane %v217, 3
      %v498 = vrot.slane %v218, 3
      %v499 = vsel %vm466, %v497, %v498
      %v500 = vrot.slane %v219, 3
      %v501 = vsel %vm466, %v498, %v500
      %v502 = vrot.slane %v220, 3
      %v503 = vrot.slane %v221, 3
      %v504 = vsel %vm466, %v502, %v503
      %v505 = vrot.slane %v222, 3
      %v506 = vsel %vm466, %v503, %v505
      %v507 = vrot.slane %v223, 3
      %v508 = vrot.slane %v224, 3
      %v509 = vsel %vm466, %v507, %v508
      %v510 = vrot.slane %v225, 3
      %v511 = vsel %vm466, %v508, %v510
      %v512 = vrot.slane %v226, 3
      %v513 = vrot.slane %v227, 3
      %v514 = vsel %vm466, %v512, %v513
      %v515 = vrot.slane %v228, 3
      %v516 = vsel %vm466, %v513, %v515
      %v517 = vrot.slane %v229, 3
      %v518 = vrot.slane %v230, 3
      %v519 = vsel %vm466, %v517, %v518
      %v520 = vrot.slane %v231, 3
      %v521 = vsel %vm466, %v518, %v520
      %v522 = vrot.slane %v232, 3
      %v523 = vrot.slane %v233, 3
      %v524 = vsel %vm466, %v522, %v523
      %v525 = vrot.slane %v234, 3
      %v526 = vsel %vm466, %v523, %v525
      %v527 = vrot.slane %v235, 3
      %v528 = vrot.slane %v236, 3
      %v529 = vsel %vm466, %v527, %v528
      %v530 = vrot.slane %v237, 3
      %v531 = vsel %vm466, %v528, %v530
      %v532 = vrot.slane %v238, 3
      %v533 = vrot.slane %v239, 3
      %v534 = vsel %vm466, %v532, %v533
      %v535 = vrot.slane %v240, 3
      %v536 = vsel %vm466, %v533, %v535
      %v537 = vrot.slane %v241, 3
      %v538 = vrot.slane %v242, 3
      %v539 = vsel %vm466, %v537, %v538
      %v540 = vrot.slane %v243, 3
      %v541 = vsel %vm466, %v538, %v540
      %v542 = vrot.slane %v244, 3
      %v543 = vrot.slane %v245, 3
      %v544 = vsel %vm466, %v542, %v543
      %v545 = vrot.slane %v246, 3
      %v546 = vsel %vm466, %v543, %v545
      %v550 = vrot.slane %v247, 1
      %v551 = vrot.slane %v248, 1
      %v552 = vsel %vm304, %v550, %v551
      %v553 = vrot.slane %v249, 1
      %v554 = vsel %vm304, %v551, %v553
      %v555 = vrot.slane %v247, 2
      %v556 = vrot.slane %v248, 2
      %v557 = vsel %vm385, %v555, %v556
      %v558 = vrot.slane %v249, 2
      %v559 = vsel %vm385, %v556, %v558
      %v560 = vrot.slane %v247, 3
      %v561 = vrot.slane %v248, 3
      %v562 = vsel %vm466, %v560, %v561
      %v563 = vrot.slane %v249, 3
      %v564 = vsel %vm466, %v561, %v563
      %v568 = vrot.slane %v250, 1
      %v569 = vrot.slane %v251, 1
      %v570 = vsel %vm304, %v568, %v569
      %v571 = vrot.slane %v252, 1
      %v572 = vsel %vm304, %v569, %v571
      %v573 = vrot.slane %v250, 2
      %v574 = vrot.slane %v251, 2
      %v575 = vsel %vm385, %v573, %v574
      %v576 = vrot.slane %v252, 2
      %v577 = vsel %vm385, %v574, %v576
      %v578 = vrot.slane %v250, 3
      %v579 = vrot.slane %v251, 3
      %v580 = vsel %vm466, %v578, %v579
      %v581 = vrot.slane %v252, 3
      %v582 = vsel %vm466, %v579, %v581
      %v586 = vrot.slane %v253, 1
      %v587 = vrot.slane %v254, 1
      %v588 = vsel %vm304, %v586, %v587
      %v589 = vrot.slane %v255, 1
      %v590 = vsel %vm304, %v587, %v589
      %v591 = vrot.slane %v253, 2
      %v592 = vrot.slane %v254, 2
      %v593 = vsel %vm385, %v591, %v592
      %v594 = vrot.slane %v255, 2
      %v595 = vsel %vm385, %v592, %v594
      %v596 = vrot.slane %v253, 3
      %v597 = vrot.slane %v254, 3
      %v598 = vsel %vm466, %v596, %v597
      %v599 = vrot.slane %v255, 3
      %v600 = vsel %vm466, %v597, %v599
      %601 = vrot.lane.b32.xlu0 %v307, 12
      %v602 = vpop.permute.xlu0 %601
      %603 = vrot.lane.b32.xlu0 %v309, 12
      %v604 = vpop.permute.xlu0 %603
      %605 = vrot.lane.b32.xlu0 %v312, 12
      %v606 = vpop.permute.xlu0 %605
      %607 = vrot.lane.b32.xlu0 %v314, 12
      %v608 = vpop.permute.xlu0 %607
      %609 = vrot.lane.b32.xlu0 %v317, 12
      %v610 = vpop.permute.xlu0 %609
      %611 = vrot.lane.b32.xlu0 %v319, 12
      %v612 = vpop.permute.xlu0 %611
      %613 = vrot.lane.b32.xlu0 %v322, 12
      %v614 = vpop.permute.xlu0 %613
      %615 = vrot.lane.b32.xlu0 %v324, 12
      %v616 = vpop.permute.xlu0 %615
      %617 = vrot.lane.b32.xlu0 %v327, 12
      %v618 = vpop.permute.xlu0 %617
      %619 = vrot.lane.b32.xlu0 %v329, 12
      %v620 = vpop.permute.xlu0 %619
      %621 = vrot.lane.b32.xlu0 %v332, 12
      %v622 = vpop.permute.xlu0 %621
      %623 = vrot.lane.b32.xlu0 %v334, 12
      %v624 = vpop.permute.xlu0 %623
      %625 = vrot.lane.b32.xlu0 %v337, 12
      %v626 = vpop.permute.xlu0 %625
      %627 = vrot.lane.b32.xlu0 %v339, 12
      %v628 = vpop.permute.xlu0 %627
      %629 = vrot.lane.b32.xlu0 %v342, 12
      %v630 = vpop.permute.xlu0 %629
      %631 = vrot.lane.b32.xlu0 %v344, 12
      %v632 = vpop.permute.xlu0 %631
      %633 = vrot.lane.b32.xlu0 %v347, 12
      %v634 = vpop.permute.xlu0 %633
      %635 = vrot.lane.b32.xlu0 %v349, 12
      %v636 = vpop.permute.xlu0 %635
      %637 = vrot.lane.b32.xlu0 %v352, 12
      %v638 = vpop.permute.xlu0 %637
      %639 = vrot.lane.b32.xlu0 %v354, 12
      %v640 = vpop.permute.xlu0 %639
      %641 = vrot.lane.b32.xlu0 %v357, 12
      %v642 = vpop.permute.xlu0 %641
      %643 = vrot.lane.b32.xlu0 %v359, 12
      %v644 = vpop.permute.xlu0 %643
      %645 = vrot.lane.b32.xlu0 %v362, 12
      %v646 = vpop.permute.xlu0 %645
      %647 = vrot.lane.b32.xlu0 %v364, 12
      %v648 = vpop.permute.xlu0 %647
      %649 = vrot.lane.b32.xlu0 %v367, 12
      %v650 = vpop.permute.xlu0 %649
      %651 = vrot.lane.b32.xlu0 %v369, 12
      %v652 = vpop.permute.xlu0 %651
      %653 = vrot.lane.b32.xlu0 %v372, 12
      %v654 = vpop.permute.xlu0 %653
      %655 = vrot.lane.b32.xlu0 %v374, 12
      %v656 = vpop.permute.xlu0 %655
      %657 = vrot.lane.b32.xlu0 %v377, 12
      %v658 = vpop.permute.xlu0 %657
      %659 = vrot.lane.b32.xlu0 %v379, 12
      %v660 = vpop.permute.xlu0 %659
      %661 = vrot.lane.b32.xlu0 %v382, 12
      %v662 = vpop.permute.xlu0 %661
      %663 = vrot.lane.b32.xlu0 %v384, 12
      %v664 = vpop.permute.xlu0 %663
      %697 = vrot.lane.b32.xlu0 %v388, 24
      %v698 = vpop.permute.xlu0 %697
      %699 = vrot.lane.b32.xlu0 %v390, 24
      %v700 = vpop.permute.xlu0 %699
      %701 = vrot.lane.b32.xlu0 %v393, 24
      %v702 = vpop.permute.xlu0 %701
      %703 = vrot.lane.b32.xlu0 %v395, 24
      %v704 = vpop.permute.xlu0 %703
      %705 = vrot.lane.b32.xlu0 %v398, 24
      %v706 = vpop.permute.xlu0 %705
      %707 = vrot.lane.b32.xlu0 %v400, 24
      %v708 = vpop.permute.xlu0 %707
      %709 = vrot.lane.b32.xlu0 %v403, 24
      %v710 = vpop.permute.xlu0 %709
      %711 = vrot.lane.b32.xlu0 %v405, 24
      %v712 = vpop.permute.xlu0 %711
      %713 = vrot.lane.b32.xlu0 %v408, 24
      %v714 = vpop.permute.xlu0 %713
      %715 = vrot.lane.b32.xlu0 %v410, 24
      %v716 = vpop.permute.xlu0 %715
      %717 = vrot.lane.b32.xlu0 %v413, 24
      %v718 = vpop.permute.xlu0 %717
      %719 = vrot.lane.b32.xlu0 %v415, 24
      %v720 = vpop.permute.xlu0 %719
      %721 = vrot.lane.b32.xlu0 %v418, 24
      %v722 = vpop.permute.xlu0 %721
      %723 = vrot.lane.b32.xlu0 %v420, 24
      %v724 = vpop.permute.xlu0 %723
      %725 = vrot.lane.b32.xlu0 %v423, 24
      %v726 = vpop.permute.xlu0 %725
      %727 = vrot.lane.b32.xlu0 %v425, 24
      %v728 = vpop.permute.xlu0 %727
      %729 = vrot.lane.b32.xlu0 %v428, 24
      %v730 = vpop.permute.xlu0 %729
      %731 = vrot.lane.b32.xlu0 %v430, 24
      %v732 = vpop.permute.xlu0 %731
      %733 = vrot.lane.b32.xlu0 %v433, 24
      %v734 = vpop.permute.xlu0 %733
      %735 = vrot.lane.b32.xlu0 %v435, 24
      %v736 = vpop.permute.xlu0 %735
      %737 = vrot.lane.b32.xlu0 %v438, 24
      %v738 = vpop.permute.xlu0 %737
      %739 = vrot.lane.b32.xlu0 %v440, 24
      %v740 = vpop.permute.xlu0 %739
      %741 = vrot.lane.b32.xlu0 %v443, 24
      %v742 = vpop.permute.xlu0 %741
      %743 = vrot.lane.b32.xlu0 %v445, 24
      %v744 = vpop.permute.xlu0 %743
      %745 = vrot.lane.b32.xlu0 %v448, 24
      %v746 = vpop.permute.xlu0 %745
      %747 = vrot.lane.b32.xlu0 %v450, 24
      %v748 = vpop.permute.xlu0 %747
      %749 = vrot.lane.b32.xlu0 %v453, 24
      %v750 = vpop.permute.xlu0 %749
      %751 = vrot.lane.b32.xlu0 %v455, 24
      %v752 = vpop.permute.xlu0 %751
      %753 = vrot.lane.b32.xlu0 %v458, 24
      %v754 = vpop.permute.xlu0 %753
      %755 = vrot.lane.b32.xlu0 %v460, 24
      %v756 = vpop.permute.xlu0 %755
      %757 = vrot.lane.b32.xlu0 %v463, 24
      %v758 = vpop.permute.xlu0 %757
      %759 = vrot.lane.b32.xlu0 %v465, 24
      %v760 = vpop.permute.xlu0 %759
      %793 = vrot.lane.b32.xlu0 %v469, 36
      %v794 = vpop.permute.xlu0 %793
      %795 = vrot.lane.b32.xlu0 %v471, 36
      %v796 = vpop.permute.xlu0 %795
      %797 = vrot.lane.b32.xlu0 %v474, 36
      %v798 = vpop.permute.xlu0 %797
      %799 = vrot.lane.b32.xlu0 %v476, 36
      %v800 = vpop.permute.xlu0 %799
      %801 = vrot.lane.b32.xlu0 %v479, 36
      %v802 = vpop.permute.xlu0 %801
      %803 = vrot.lane.b32.xlu0 %v481, 36
      %v804 = vpop.permute.xlu0 %803
      %805 = vrot.lane.b32.xlu0 %v484, 36
      %v806 = vpop.permute.xlu0 %805
      %807 = vrot.lane.b32.xlu0 %v486, 36
      %v808 = vpop.permute.xlu0 %807
      %809 = vrot.lane.b32.xlu0 %v489, 36
      %v810 = vpop.permute.xlu0 %809
      %811 = vrot.lane.b32.xlu0 %v491, 36
      %v812 = vpop.permute.xlu0 %811
      %813 = vrot.lane.b32.xlu0 %v494, 36
      %v814 = vpop.permute.xlu0 %813
      %815 = vrot.lane.b32.xlu0 %v496, 36
      %v816 = vpop.permute.xlu0 %815
      %817 = vrot.lane.b32.xlu0 %v499, 36
      %v818 = vpop.permute.xlu0 %817
      %819 = vrot.lane.b32.xlu0 %v501, 36
      %v820 = vpop.permute.xlu0 %819
      %821 = vrot.lane.b32.xlu0 %v504, 36
      %v822 = vpop.permute.xlu0 %821
      %823 = vrot.lane.b32.xlu0 %v506, 36
      %v824 = vpop.permute.xlu0 %823
      %825 = vrot.lane.b32.xlu0 %v509, 36
      %v826 = vpop.permute.xlu0 %825
      %827 = vrot.lane.b32.xlu0 %v511, 36
      %v828 = vpop.permute.xlu0 %827
      %829 = vrot.lane.b32.xlu0 %v514, 36
      %v830 = vpop.permute.xlu0 %829
      %831 = vrot.lane.b32.xlu0 %v516, 36
      %v832 = vpop.permute.xlu0 %831
      %833 = vrot.lane.b32.xlu0 %v519, 36
      %v834 = vpop.permute.xlu0 %833
      %835 = vrot.lane.b32.xlu0 %v521, 36
      %v836 = vpop.permute.xlu0 %835
      %837 = vrot.lane.b32.xlu0 %v524, 36
      %v838 = vpop.permute.xlu0 %837
      %839 = vrot.lane.b32.xlu0 %v526, 36
      %v840 = vpop.permute.xlu0 %839
      %841 = vrot.lane.b32.xlu0 %v529, 36
      %v842 = vpop.permute.xlu0 %841
      %843 = vrot.lane.b32.xlu0 %v531, 36
      %v844 = vpop.permute.xlu0 %843
      %845 = vrot.lane.b32.xlu0 %v534, 36
      %v846 = vpop.permute.xlu0 %845
      %847 = vrot.lane.b32.xlu0 %v536, 36
      %v848 = vpop.permute.xlu0 %847
      %849 = vrot.lane.b32.xlu0 %v539, 36
      %v850 = vpop.permute.xlu0 %849
      %851 = vrot.lane.b32.xlu0 %v541, 36
      %v852 = vpop.permute.xlu0 %851
      %853 = vrot.lane.b32.xlu0 %v544, 36
      %v854 = vpop.permute.xlu0 %853
      %855 = vrot.lane.b32.xlu0 %v546, 36
      %v856 = vpop.permute.xlu0 %855
      %889 = vrot.lane.b32.xlu0 %v202, 48
      %v890 = vpop.permute.xlu0 %889
      %891 = vrot.lane.b32.xlu0 %v203, 48
      %v892 = vpop.permute.xlu0 %891
      %893 = vrot.lane.b32.xlu0 %v205, 48
      %v894 = vpop.permute.xlu0 %893
      %895 = vrot.lane.b32.xlu0 %v206, 48
      %v896 = vpop.permute.xlu0 %895
      %897 = vrot.lane.b32.xlu0 %v208, 48
      %v898 = vpop.permute.xlu0 %897
      %899 = vrot.lane.b32.xlu0 %v209, 48
      %v900 = vpop.permute.xlu0 %899
      %901 = vrot.lane.b32.xlu0 %v211, 48
      %v902 = vpop.permute.xlu0 %901
      %903 = vrot.lane.b32.xlu0 %v212, 48
      %v904 = vpop.permute.xlu0 %903
      %905 = vrot.lane.b32.xlu0 %v214, 48
      %v906 = vpop.permute.xlu0 %905
      %907 = vrot.lane.b32.xlu0 %v215, 48
      %v908 = vpop.permute.xlu0 %907
      %909 = vrot.lane.b32.xlu0 %v217, 48
      %v910 = vpop.permute.xlu0 %909
      %911 = vrot.lane.b32.xlu0 %v218, 48
      %v912 = vpop.permute.xlu0 %911
      %913 = vrot.lane.b32.xlu0 %v220, 48
      %v914 = vpop.permute.xlu0 %913
      %915 = vrot.lane.b32.xlu0 %v221, 48
      %v916 = vpop.permute.xlu0 %915
      %917 = vrot.lane.b32.xlu0 %v223, 48
      %v918 = vpop.permute.xlu0 %917
      %919 = vrot.lane.b32.xlu0 %v224, 48
      %v920 = vpop.permute.xlu0 %919
      %921 = vrot.lane.b32.xlu0 %v226, 48
      %v922 = vpop.permute.xlu0 %921
      %923 = vrot.lane.b32.xlu0 %v227, 48
      %v924 = vpop.permute.xlu0 %923
      %925 = vrot.lane.b32.xlu0 %v229, 48
      %v926 = vpop.permute.xlu0 %925
      %927 = vrot.lane.b32.xlu0 %v230, 48
      %v928 = vpop.permute.xlu0 %927
      %929 = vrot.lane.b32.xlu0 %v232, 48
      %v930 = vpop.permute.xlu0 %929
      %931 = vrot.lane.b32.xlu0 %v233, 48
      %v932 = vpop.permute.xlu0 %931
      %933 = vrot.lane.b32.xlu0 %v235, 48
      %v934 = vpop.permute.xlu0 %933
      %935 = vrot.lane.b32.xlu0 %v236, 48
      %v936 = vpop.permute.xlu0 %935
      %937 = vrot.lane.b32.xlu0 %v238, 48
      %v938 = vpop.permute.xlu0 %937
      %939 = vrot.lane.b32.xlu0 %v239, 48
      %v940 = vpop.permute.xlu0 %939
      %941 = vrot.lane.b32.xlu0 %v241, 48
      %v942 = vpop.permute.xlu0 %941
      %943 = vrot.lane.b32.xlu0 %v242, 48
      %v944 = vpop.permute.xlu0 %943
      %945 = vrot.lane.b32.xlu0 %v244, 48
      %v946 = vpop.permute.xlu0 %945
      %947 = vrot.lane.b32.xlu0 %v245, 48
      %v948 = vpop.permute.xlu0 %947
      %949 = vrot.lane.b32.xlu0 %v247, 48
      %v950 = vpop.permute.xlu0 %949
      %951 = vrot.lane.b32.xlu0 %v248, 48
      %v952 = vpop.permute.xlu0 %951
      %985 = vrot.lane.b32.xlu0 %v312, 60
      %v986 = vpop.permute.xlu0 %985
      %987 = vrot.lane.b32.xlu0 %v314, 60
      %v988 = vpop.permute.xlu0 %987
      %989 = vrot.lane.b32.xlu0 %v317, 60
      %v990 = vpop.permute.xlu0 %989
      %991 = vrot.lane.b32.xlu0 %v319, 60
      %v992 = vpop.permute.xlu0 %991
      %993 = vrot.lane.b32.xlu0 %v322, 60
      %v994 = vpop.permute.xlu0 %993
      %995 = vrot.lane.b32.xlu0 %v324, 60
      %v996 = vpop.permute.xlu0 %995
      %997 = vrot.lane.b32.xlu0 %v327, 60
      %v998 = vpop.permute.xlu0 %997
      %999 = vrot.lane.b32.xlu0 %v329, 60
      %v1000 = vpop.permute.xlu0 %999
      %1001 = vrot.lane.b32.xlu0 %v332, 60
      %v1002 = vpop.permute.xlu0 %1001
      %1003 = vrot.lane.b32.xlu0 %v334, 60
      %v1004 = vpop.permute.xlu0 %1003
      %1005 = vrot.lane.b32.xlu0 %v337, 60
      %v1006 = vpop.permute.xlu0 %1005
      %1007 = vrot.lane.b32.xlu0 %v339, 60
      %v1008 = vpop.permute.xlu0 %1007
      %1009 = vrot.lane.b32.xlu0 %v342, 60
      %v1010 = vpop.permute.xlu0 %1009
      %1011 = vrot.lane.b32.xlu0 %v344, 60
      %v1012 = vpop.permute.xlu0 %1011
      %1013 = vrot.lane.b32.xlu0 %v347, 60
      %v1014 = vpop.permute.xlu0 %1013
      %1015 = vrot.lane.b32.xlu0 %v349, 60
      %v1016 = vpop.permute.xlu0 %1015
      %1017 = vrot.lane.b32.xlu0 %v352, 60
      %v1018 = vpop.permute.xlu0 %1017
      %1019 = vrot.lane.b32.xlu0 %v354, 60
      %v1020 = vpop.permute.xlu0 %1019
      %1021 = vrot.lane.b32.xlu0 %v357, 60
      %v1022 = vpop.permute.xlu0 %1021
      %1023 = vrot.lane.b32.xlu0 %v359, 60
      %v1024 = vpop.permute.xlu0 %1023
      %1025 = vrot.lane.b32.xlu0 %v362, 60
      %v1026 = vpop.permute.xlu0 %1025
      %1027 = vrot.lane.b32.xlu0 %v364, 60
      %v1028 = vpop.permute.xlu0 %1027
      %1029 = vrot.lane.b32.xlu0 %v367, 60
      %v1030 = vpop.permute.xlu0 %1029
      %1031 = vrot.lane.b32.xlu0 %v369, 60
      %v1032 = vpop.permute.xlu0 %1031
      %1033 = vrot.lane.b32.xlu0 %v372, 60
      %v1034 = vpop.permute.xlu0 %1033
      %1035 = vrot.lane.b32.xlu0 %v374, 60
      %v1036 = vpop.permute.xlu0 %1035
      %1037 = vrot.lane.b32.xlu0 %v377, 60
      %v1038 = vpop.permute.xlu0 %1037
      %1039 = vrot.lane.b32.xlu0 %v379, 60
      %v1040 = vpop.permute.xlu0 %1039
      %1041 = vrot.lane.b32.xlu0 %v382, 60
      %v1042 = vpop.permute.xlu0 %1041
      %1043 = vrot.lane.b32.xlu0 %v384, 60
      %v1044 = vpop.permute.xlu0 %1043
      %1045 = vrot.lane.b32.xlu0 %v552, 60
      %v1046 = vpop.permute.xlu0 %1045
      %1047 = vrot.lane.b32.xlu0 %v554, 60
      %v1048 = vpop.permute.xlu0 %1047
      %1081 = vrot.lane.b32.xlu0 %v393, 72
      %v1082 = vpop.permute.xlu0 %1081
      %1083 = vrot.lane.b32.xlu0 %v395, 72
      %v1084 = vpop.permute.xlu0 %1083
      %1085 = vrot.lane.b32.xlu0 %v398, 72
      %v1086 = vpop.permute.xlu0 %1085
      %1087 = vrot.lane.b32.xlu0 %v400, 72
      %v1088 = vpop.permute.xlu0 %1087
      %1089 = vrot.lane.b32.xlu0 %v403, 72
      %v1090 = vpop.permute.xlu0 %1089
      %1091 = vrot.lane.b32.xlu0 %v405, 72
      %v1092 = vpop.permute.xlu0 %1091
      %1093 = vrot.lane.b32.xlu0 %v408, 72
      %v1094 = vpop.permute.xlu0 %1093
      %1095 = vrot.lane.b32.xlu0 %v410, 72
      %v1096 = vpop.permute.xlu0 %1095
      %1097 = vrot.lane.b32.xlu0 %v413, 72
      %v1098 = vpop.permute.xlu0 %1097
      %1099 = vrot.lane.b32.xlu0 %v415, 72
      %v1100 = vpop.permute.xlu0 %1099
      %1101 = vrot.lane.b32.xlu0 %v418, 72
      %v1102 = vpop.permute.xlu0 %1101
      %1103 = vrot.lane.b32.xlu0 %v420, 72
      %v1104 = vpop.permute.xlu0 %1103
      %1105 = vrot.lane.b32.xlu0 %v423, 72
      %v1106 = vpop.permute.xlu0 %1105
      %1107 = vrot.lane.b32.xlu0 %v425, 72
      %v1108 = vpop.permute.xlu0 %1107
      %1109 = vrot.lane.b32.xlu0 %v428, 72
      %v1110 = vpop.permute.xlu0 %1109
      %1111 = vrot.lane.b32.xlu0 %v430, 72
      %v1112 = vpop.permute.xlu0 %1111
      %1113 = vrot.lane.b32.xlu0 %v433, 72
      %v1114 = vpop.permute.xlu0 %1113
      %1115 = vrot.lane.b32.xlu0 %v435, 72
      %v1116 = vpop.permute.xlu0 %1115
      %1117 = vrot.lane.b32.xlu0 %v438, 72
      %v1118 = vpop.permute.xlu0 %1117
      %1119 = vrot.lane.b32.xlu0 %v440, 72
      %v1120 = vpop.permute.xlu0 %1119
      %1121 = vrot.lane.b32.xlu0 %v443, 72
      %v1122 = vpop.permute.xlu0 %1121
      %1123 = vrot.lane.b32.xlu0 %v445, 72
      %v1124 = vpop.permute.xlu0 %1123
      %1125 = vrot.lane.b32.xlu0 %v448, 72
      %v1126 = vpop.permute.xlu0 %1125
      %1127 = vrot.lane.b32.xlu0 %v450, 72
      %v1128 = vpop.permute.xlu0 %1127
      %1129 = vrot.lane.b32.xlu0 %v453, 72
      %v1130 = vpop.permute.xlu0 %1129
      %1131 = vrot.lane.b32.xlu0 %v455, 72
      %v1132 = vpop.permute.xlu0 %1131
      %1133 = vrot.lane.b32.xlu0 %v458, 72
      %v1134 = vpop.permute.xlu0 %1133
      %1135 = vrot.lane.b32.xlu0 %v460, 72
      %v1136 = vpop.permute.xlu0 %1135
      %1137 = vrot.lane.b32.xlu0 %v463, 72
      %v1138 = vpop.permute.xlu0 %1137
      %1139 = vrot.lane.b32.xlu0 %v465, 72
      %v1140 = vpop.permute.xlu0 %1139
      %1141 = vrot.lane.b32.xlu0 %v557, 72
      %v1142 = vpop.permute.xlu0 %1141
      %1143 = vrot.lane.b32.xlu0 %v559, 72
      %v1144 = vpop.permute.xlu0 %1143
      %1177 = vrot.lane.b32.xlu0 %v474, 84
      %v1178 = vpop.permute.xlu0 %1177
      %1179 = vrot.lane.b32.xlu0 %v476, 84
      %v1180 = vpop.permute.xlu0 %1179
      %1181 = vrot.lane.b32.xlu0 %v479, 84
      %v1182 = vpop.permute.xlu0 %1181
      %1183 = vrot.lane.b32.xlu0 %v481, 84
      %v1184 = vpop.permute.xlu0 %1183
      %1185 = vrot.lane.b32.xlu0 %v484, 84
      %v1186 = vpop.permute.xlu0 %1185
      %1187 = vrot.lane.b32.xlu0 %v486, 84
      %v1188 = vpop.permute.xlu0 %1187
      %1189 = vrot.lane.b32.xlu0 %v489, 84
      %v1190 = vpop.permute.xlu0 %1189
      %1191 = vrot.lane.b32.xlu0 %v491, 84
      %v1192 = vpop.permute.xlu0 %1191
      %1193 = vrot.lane.b32.xlu0 %v494, 84
      %v1194 = vpop.permute.xlu0 %1193
      %1195 = vrot.lane.b32.xlu0 %v496, 84
      %v1196 = vpop.permute.xlu0 %1195
      %1197 = vrot.lane.b32.xlu0 %v499, 84
      %v1198 = vpop.permute.xlu0 %1197
      %1199 = vrot.lane.b32.xlu0 %v501, 84
      %v1200 = vpop.permute.xlu0 %1199
      %1201 = vrot.lane.b32.xlu0 %v504, 84
      %v1202 = vpop.permute.xlu0 %1201
      %1203 = vrot.lane.b32.xlu0 %v506, 84
      %v1204 = vpop.permute.xlu0 %1203
      %1205 = vrot.lane.b32.xlu0 %v509, 84
      %v1206 = vpop.permute.xlu0 %1205
      %1207 = vrot.lane.b32.xlu0 %v511, 84
      %v1208 = vpop.permute.xlu0 %1207
      %1209 = vrot.lane.b32.xlu0 %v514, 84
      %v1210 = vpop.permute.xlu0 %1209
      %1211 = vrot.lane.b32.xlu0 %v516, 84
      %v1212 = vpop.permute.xlu0 %1211
      %1213 = vrot.lane.b32.xlu0 %v519, 84
      %v1214 = vpop.permute.xlu0 %1213
      %1215 = vrot.lane.b32.xlu0 %v521, 84
      %v1216 = vpop.permute.xlu0 %1215
      %1217 = vrot.lane.b32.xlu0 %v524, 84
      %v1218 = vpop.permute.xlu0 %1217
      %1219 = vrot.lane.b32.xlu0 %v526, 84
      %v1220 = vpop.permute.xlu0 %1219
      %1221 = vrot.lane.b32.xlu0 %v529, 84
      %v1222 = vpop.permute.xlu0 %1221
      %1223 = vrot.lane.b32.xlu0 %v531, 84
      %v1224 = vpop.permute.xlu0 %1223
      %1225 = vrot.lane.b32.xlu0 %v534, 84
      %v1226 = vpop.permute.xlu0 %1225
      %1227 = vrot.lane.b32.xlu0 %v536, 84
      %v1228 = vpop.permute.xlu0 %1227
      %1229 = vrot.lane.b32.xlu0 %v539, 84
      %v1230 = vpop.permute.xlu0 %1229
      %1231 = vrot.lane.b32.xlu0 %v541, 84
      %v1232 = vpop.permute.xlu0 %1231
      %1233 = vrot.lane.b32.xlu0 %v544, 84
      %v1234 = vpop.permute.xlu0 %1233
      %1235 = vrot.lane.b32.xlu0 %v546, 84
      %v1236 = vpop.permute.xlu0 %1235
      %1237 = vrot.lane.b32.xlu0 %v562, 84
      %v1238 = vpop.permute.xlu0 %1237
      %1239 = vrot.lane.b32.xlu0 %v564, 84
      %v1240 = vpop.permute.xlu0 %1239
      %1273 = vrot.lane.b32.xlu0 %v205, 96
      %v1274 = vpop.permute.xlu0 %1273
      %1275 = vrot.lane.b32.xlu0 %v206, 96
      %v1276 = vpop.permute.xlu0 %1275
      %1277 = vrot.lane.b32.xlu0 %v208, 96
      %v1278 = vpop.permute.xlu0 %1277
      %1279 = vrot.lane.b32.xlu0 %v209, 96
      %v1280 = vpop.permute.xlu0 %1279
      %1281 = vrot.lane.b32.xlu0 %v211, 96
      %v1282 = vpop.permute.xlu0 %1281
      %1283 = vrot.lane.b32.xlu0 %v212, 96
      %v1284 = vpop.permute.xlu0 %1283
      %1285 = vrot.lane.b32.xlu0 %v214, 96
      %v1286 = vpop.permute.xlu0 %1285
      %1287 = vrot.lane.b32.xlu0 %v215, 96
      %v1288 = vpop.permute.xlu0 %1287
      %1289 = vrot.lane.b32.xlu0 %v217, 96
      %v1290 = vpop.permute.xlu0 %1289
      %1291 = vrot.lane.b32.xlu0 %v218, 96
      %v1292 = vpop.permute.xlu0 %1291
      %1293 = vrot.lane.b32.xlu0 %v220, 96
      %v1294 = vpop.permute.xlu0 %1293
      %1295 = vrot.lane.b32.xlu0 %v221, 96
      %v1296 = vpop.permute.xlu0 %1295
      %1297 = vrot.lane.b32.xlu0 %v223, 96
      %v1298 = vpop.permute.xlu0 %1297
      %1299 = vrot.lane.b32.xlu0 %v224, 96
      %v1300 = vpop.permute.xlu0 %1299
      %1301 = vrot.lane.b32.xlu0 %v226, 96
      %v1302 = vpop.permute.xlu0 %1301
      %1303 = vrot.lane.b32.xlu0 %v227, 96
      %v1304 = vpop.permute.xlu0 %1303
      %1305 = vrot.lane.b32.xlu0 %v229, 96
      %v1306 = vpop.permute.xlu0 %1305
      %1307 = vrot.lane.b32.xlu0 %v230, 96
      %v1308 = vpop.permute.xlu0 %1307
      %1309 = vrot.lane.b32.xlu0 %v232, 96
      %v1310 = vpop.permute.xlu0 %1309
      %1311 = vrot.lane.b32.xlu0 %v233, 96
      %v1312 = vpop.permute.xlu0 %1311
      %1313 = vrot.lane.b32.xlu0 %v235, 96
      %v1314 = vpop.permute.xlu0 %1313
      %1315 = vrot.lane.b32.xlu0 %v236, 96
      %v1316 = vpop.permute.xlu0 %1315
      %1317 = vrot.lane.b32.xlu0 %v238, 96
      %v1318 = vpop.permute.xlu0 %1317
      %1319 = vrot.lane.b32.xlu0 %v239, 96
      %v1320 = vpop.permute.xlu0 %1319
      %1321 = vrot.lane.b32.xlu0 %v241, 96
      %v1322 = vpop.permute.xlu0 %1321
      %1323 = vrot.lane.b32.xlu0 %v242, 96
      %v1324 = vpop.permute.xlu0 %1323
      %1325 = vrot.lane.b32.xlu0 %v244, 96
      %v1326 = vpop.permute.xlu0 %1325
      %1327 = vrot.lane.b32.xlu0 %v245, 96
      %v1328 = vpop.permute.xlu0 %1327
      %1329 = vrot.lane.b32.xlu0 %v247, 96
      %v1330 = vpop.permute.xlu0 %1329
      %1331 = vrot.lane.b32.xlu0 %v248, 96
      %v1332 = vpop.permute.xlu0 %1331
      %1333 = vrot.lane.b32.xlu0 %v250, 96
      %v1334 = vpop.permute.xlu0 %1333
      %1335 = vrot.lane.b32.xlu0 %v251, 96
      %v1336 = vpop.permute.xlu0 %1335
      %1369 = vrot.lane.b32.xlu0 %v317, 108
      %v1370 = vpop.permute.xlu0 %1369
      %1371 = vrot.lane.b32.xlu0 %v319, 108
      %v1372 = vpop.permute.xlu0 %1371
      %1373 = vrot.lane.b32.xlu0 %v322, 108
      %v1374 = vpop.permute.xlu0 %1373
      %1375 = vrot.lane.b32.xlu0 %v324, 108
      %v1376 = vpop.permute.xlu0 %1375
      %1377 = vrot.lane.b32.xlu0 %v327, 108
      %v1378 = vpop.permute.xlu0 %1377
      %1379 = vrot.lane.b32.xlu0 %v329, 108
      %v1380 = vpop.permute.xlu0 %1379
      %1381 = vrot.lane.b32.xlu0 %v332, 108
      %v1382 = vpop.permute.xlu0 %1381
      %1383 = vrot.lane.b32.xlu0 %v334, 108
      %v1384 = vpop.permute.xlu0 %1383
      %1385 = vrot.lane.b32.xlu0 %v337, 108
      %v1386 = vpop.permute.xlu0 %1385
      %1387 = vrot.lane.b32.xlu0 %v339, 108
      %v1388 = vpop.permute.xlu0 %1387
      %1389 = vrot.lane.b32.xlu0 %v342, 108
      %v1390 = vpop.permute.xlu0 %1389
      %1391 = vrot.lane.b32.xlu0 %v344, 108
      %v1392 = vpop.permute.xlu0 %1391
      %1393 = vrot.lane.b32.xlu0 %v347, 108
      %v1394 = vpop.permute.xlu0 %1393
      %1395 = vrot.lane.b32.xlu0 %v349, 108
      %v1396 = vpop.permute.xlu0 %1395
      %1397 = vrot.lane.b32.xlu0 %v352, 108
      %v1398 = vpop.permute.xlu0 %1397
      %1399 = vrot.lane.b32.xlu0 %v354, 108
      %v1400 = vpop.permute.xlu0 %1399
      %1401 = vrot.lane.b32.xlu0 %v357, 108
      %v1402 = vpop.permute.xlu0 %1401
      %1403 = vrot.lane.b32.xlu0 %v359, 108
      %v1404 = vpop.permute.xlu0 %1403
      %1405 = vrot.lane.b32.xlu0 %v362, 108
      %v1406 = vpop.permute.xlu0 %1405
      %1407 = vrot.lane.b32.xlu0 %v364, 108
      %v1408 = vpop.permute.xlu0 %1407
      %1409 = vrot.lane.b32.xlu0 %v367, 108
      %v1410 = vpop.permute.xlu0 %1409
      %1411 = vrot.lane.b32.xlu0 %v369, 108
      %v1412 = vpop.permute.xlu0 %1411
      %1413 = vrot.lane.b32.xlu0 %v372, 108
      %v1414 = vpop.permute.xlu0 %1413
      %1415 = vrot.lane.b32.xlu0 %v374, 108
      %v1416 = vpop.permute.xlu0 %1415
      %1417 = vrot.lane.b32.xlu0 %v377, 108
      %v1418 = vpop.permute.xlu0 %1417
      %1419 = vrot.lane.b32.xlu0 %v379, 108
      %v1420 = vpop.permute.xlu0 %1419
      %1421 = vrot.lane.b32.xlu0 %v382, 108
      %v1422 = vpop.permute.xlu0 %1421
      %1423 = vrot.lane.b32.xlu0 %v384, 108
      %v1424 = vpop.permute.xlu0 %1423
      %1425 = vrot.lane.b32.xlu0 %v552, 108
      %v1426 = vpop.permute.xlu0 %1425
      %1427 = vrot.lane.b32.xlu0 %v554, 108
      %v1428 = vpop.permute.xlu0 %1427
      %1429 = vrot.lane.b32.xlu0 %v570, 108
      %v1430 = vpop.permute.xlu0 %1429
      %1431 = vrot.lane.b32.xlu0 %v572, 108
      %v1432 = vpop.permute.xlu0 %1431
      %1465 = vrot.lane.b32.xlu0 %v398, 120
      %v1466 = vpop.permute.xlu0 %1465
      %1467 = vrot.lane.b32.xlu0 %v400, 120
      %v1468 = vpop.permute.xlu0 %1467
      %1469 = vrot.lane.b32.xlu0 %v403, 120
      %v1470 = vpop.permute.xlu0 %1469
      %1471 = vrot.lane.b32.xlu0 %v405, 120
      %v1472 = vpop.permute.xlu0 %1471
      %1473 = vrot.lane.b32.xlu0 %v408, 120
      %v1474 = vpop.permute.xlu0 %1473
      %1475 = vrot.lane.b32.xlu0 %v410, 120
      %v1476 = vpop.permute.xlu0 %1475
      %1477 = vrot.lane.b32.xlu0 %v413, 120
      %v1478 = vpop.permute.xlu0 %1477
      %1479 = vrot.lane.b32.xlu0 %v415, 120
      %v1480 = vpop.permute.xlu0 %1479
      %1481 = vrot.lane.b32.xlu0 %v418, 120
      %v1482 = vpop.permute.xlu0 %1481
      %1483 = vrot.lane.b32.xlu0 %v420, 120
      %v1484 = vpop.permute.xlu0 %1483
      %1485 = vrot.lane.b32.xlu0 %v423, 120
      %v1486 = vpop.permute.xlu0 %1485
      %1487 = vrot.lane.b32.xlu0 %v425, 120
      %v1488 = vpop.permute.xlu0 %1487
      %1489 = vrot.lane.b32.xlu0 %v428, 120
      %v1490 = vpop.permute.xlu0 %1489
      %1491 = vrot.lane.b32.xlu0 %v430, 120
      %v1492 = vpop.permute.xlu0 %1491
      %1493 = vrot.lane.b32.xlu0 %v433, 120
      %v1494 = vpop.permute.xlu0 %1493
      %1495 = vrot.lane.b32.xlu0 %v435, 120
      %v1496 = vpop.permute.xlu0 %1495
      %1497 = vrot.lane.b32.xlu0 %v438, 120
      %v1498 = vpop.permute.xlu0 %1497
      %1499 = vrot.lane.b32.xlu0 %v440, 120
      %v1500 = vpop.permute.xlu0 %1499
      %1501 = vrot.lane.b32.xlu0 %v443, 120
      %v1502 = vpop.permute.xlu0 %1501
      %1503 = vrot.lane.b32.xlu0 %v445, 120
      %v1504 = vpop.permute.xlu0 %1503
      %1505 = vrot.lane.b32.xlu0 %v448, 120
      %v1506 = vpop.permute.xlu0 %1505
      %1507 = vrot.lane.b32.xlu0 %v450, 120
      %v1508 = vpop.permute.xlu0 %1507
      %1509 = vrot.lane.b32.xlu0 %v453, 120
      %v1510 = vpop.permute.xlu0 %1509
      %1511 = vrot.lane.b32.xlu0 %v455, 120
      %v1512 = vpop.permute.xlu0 %1511
      %1513 = vrot.lane.b32.xlu0 %v458, 120
      %v1514 = vpop.permute.xlu0 %1513
      %1515 = vrot.lane.b32.xlu0 %v460, 120
      %v1516 = vpop.permute.xlu0 %1515
      %1517 = vrot.lane.b32.xlu0 %v463, 120
      %v1518 = vpop.permute.xlu0 %1517
      %1519 = vrot.lane.b32.xlu0 %v465, 120
      %v1520 = vpop.permute.xlu0 %1519
      %1521 = vrot.lane.b32.xlu0 %v557, 120
      %v1522 = vpop.permute.xlu0 %1521
      %1523 = vrot.lane.b32.xlu0 %v559, 120
      %v1524 = vpop.permute.xlu0 %1523
      %1525 = vrot.lane.b32.xlu0 %v575, 120
      %v1526 = vpop.permute.xlu0 %1525
      %1527 = vrot.lane.b32.xlu0 %v577, 120
      %v1528 = vpop.permute.xlu0 %1527
      %1561 = vrot.lane.b32.xlu0 %v479, 4
      %v1562 = vpop.permute.xlu0 %1561
      %1563 = vrot.lane.b32.xlu0 %v481, 4
      %v1564 = vpop.permute.xlu0 %1563
      %1565 = vrot.lane.b32.xlu0 %v484, 4
      %v1566 = vpop.permute.xlu0 %1565
      %1567 = vrot.lane.b32.xlu0 %v486, 4
      %v1568 = vpop.permute.xlu0 %1567
      %1569 = vrot.lane.b32.xlu0 %v489, 4
      %v1570 = vpop.permute.xlu0 %1569
      %1571 = vrot.lane.b32.xlu0 %v491, 4
      %v1572 = vpop.permute.xlu0 %1571
      %1573 = vrot.lane.b32.xlu0 %v494, 4
      %v1574 = vpop.permute.xlu0 %1573
      %1575 = vrot.lane.b32.xlu0 %v496, 4
      %v1576 = vpop.permute.xlu0 %1575
      %1577 = vrot.lane.b32.xlu0 %v499, 4
      %v1578 = vpop.permute.xlu0 %1577
      %1579 = vrot.lane.b32.xlu0 %v501, 4
      %v1580 = vpop.permute.xlu0 %1579
      %1581 = vrot.lane.b32.xlu0 %v504, 4
      %v1582 = vpop.permute.xlu0 %1581
      %1583 = vrot.lane.b32.xlu0 %v506, 4
      %v1584 = vpop.permute.xlu0 %1583
      %1585 = vrot.lane.b32.xlu0 %v509, 4
      %v1586 = vpop.permute.xlu0 %1585
      %1587 = vrot.lane.b32.xlu0 %v511, 4
      %v1588 = vpop.permute.xlu0 %1587
      %1589 = vrot.lane.b32.xlu0 %v514, 4
      %v1590 = vpop.permute.xlu0 %1589
      %1591 = vrot.lane.b32.xlu0 %v516, 4
      %v1592 = vpop.permute.xlu0 %1591
      %1593 = vrot.lane.b32.xlu0 %v519, 4
      %v1594 = vpop.permute.xlu0 %1593
      %1595 = vrot.lane.b32.xlu0 %v521, 4
      %v1596 = vpop.permute.xlu0 %1595
      %1597 = vrot.lane.b32.xlu0 %v524, 4
      %v1598 = vpop.permute.xlu0 %1597
      %1599 = vrot.lane.b32.xlu0 %v526, 4
      %v1600 = vpop.permute.xlu0 %1599
      %1601 = vrot.lane.b32.xlu0 %v529, 4
      %v1602 = vpop.permute.xlu0 %1601
      %1603 = vrot.lane.b32.xlu0 %v531, 4
      %v1604 = vpop.permute.xlu0 %1603
      %1605 = vrot.lane.b32.xlu0 %v534, 4
      %v1606 = vpop.permute.xlu0 %1605
      %1607 = vrot.lane.b32.xlu0 %v536, 4
      %v1608 = vpop.permute.xlu0 %1607
      %1609 = vrot.lane.b32.xlu0 %v539, 4
      %v1610 = vpop.permute.xlu0 %1609
      %1611 = vrot.lane.b32.xlu0 %v541, 4
      %v1612 = vpop.permute.xlu0 %1611
      %1613 = vrot.lane.b32.xlu0 %v544, 4
      %v1614 = vpop.permute.xlu0 %1613
      %1615 = vrot.lane.b32.xlu0 %v546, 4
      %v1616 = vpop.permute.xlu0 %1615
      %1617 = vrot.lane.b32.xlu0 %v562, 4
      %v1618 = vpop.permute.xlu0 %1617
      %1619 = vrot.lane.b32.xlu0 %v564, 4
      %v1620 = vpop.permute.xlu0 %1619
      %1621 = vrot.lane.b32.xlu0 %v580, 4
      %v1622 = vpop.permute.xlu0 %1621
      %1623 = vrot.lane.b32.xlu0 %v582, 4
      %v1624 = vpop.permute.xlu0 %1623
      %1657 = vrot.lane.b32.xlu0 %v208, 16
      %v1658 = vpop.permute.xlu0 %1657
      %1659 = vrot.lane.b32.xlu0 %v209, 16
      %v1660 = vpop.permute.xlu0 %1659
      %1661 = vrot.lane.b32.xlu0 %v211, 16
      %v1662 = vpop.permute.xlu0 %1661
      %1663 = vrot.lane.b32.xlu0 %v212, 16
      %v1664 = vpop.permute.xlu0 %1663
      %1665 = vrot.lane.b32.xlu0 %v214, 16
      %v1666 = vpop.permute.xlu0 %1665
      %1667 = vrot.lane.b32.xlu0 %v215, 16
      %v1668 = vpop.permute.xlu0 %1667
      %1669 = vrot.lane.b32.xlu0 %v217, 16
      %v1670 = vpop.permute.xlu0 %1669
      %1671 = vrot.lane.b32.xlu0 %v218, 16
      %v1672 = vpop.permute.xlu0 %1671
      %1673 = vrot.lane.b32.xlu0 %v220, 16
      %v1674 = vpop.permute.xlu0 %1673
      %1675 = vrot.lane.b32.xlu0 %v221, 16
      %v1676 = vpop.permute.xlu0 %1675
      %1677 = vrot.lane.b32.xlu0 %v223, 16
      %v1678 = vpop.permute.xlu0 %1677
      %1679 = vrot.lane.b32.xlu0 %v224, 16
      %v1680 = vpop.permute.xlu0 %1679
      %1681 = vrot.lane.b32.xlu0 %v226, 16
      %v1682 = vpop.permute.xlu0 %1681
      %1683 = vrot.lane.b32.xlu0 %v227, 16
      %v1684 = vpop.permute.xlu0 %1683
      %1685 = vrot.lane.b32.xlu0 %v229, 16
      %v1686 = vpop.permute.xlu0 %1685
      %1687 = vrot.lane.b32.xlu0 %v230, 16
      %v1688 = vpop.permute.xlu0 %1687
      %1689 = vrot.lane.b32.xlu0 %v232, 16
      %v1690 = vpop.permute.xlu0 %1689
      %1691 = vrot.lane.b32.xlu0 %v233, 16
      %v1692 = vpop.permute.xlu0 %1691
      %1693 = vrot.lane.b32.xlu0 %v235, 16
      %v1694 = vpop.permute.xlu0 %1693
      %1695 = vrot.lane.b32.xlu0 %v236, 16
      %v1696 = vpop.permute.xlu0 %1695
      %1697 = vrot.lane.b32.xlu0 %v238, 16
      %v1698 = vpop.permute.xlu0 %1697
      %1699 = vrot.lane.b32.xlu0 %v239, 16
      %v1700 = vpop.permute.xlu0 %1699
      %1701 = vrot.lane.b32.xlu0 %v241, 16
      %v1702 = vpop.permute.xlu0 %1701
      %1703 = vrot.lane.b32.xlu0 %v242, 16
      %v1704 = vpop.permute.xlu0 %1703
      %1705 = vrot.lane.b32.xlu0 %v244, 16
      %v1706 = vpop.permute.xlu0 %1705
      %1707 = vrot.lane.b32.xlu0 %v245, 16
      %v1708 = vpop.permute.xlu0 %1707
      %1709 = vrot.lane.b32.xlu0 %v247, 16
      %v1710 = vpop.permute.xlu0 %1709
      %1711 = vrot.lane.b32.xlu0 %v248, 16
      %v1712 = vpop.permute.xlu0 %1711
      %1713 = vrot.lane.b32.xlu0 %v250, 16
      %v1714 = vpop.permute.xlu0 %1713
      %1715 = vrot.lane.b32.xlu0 %v251, 16
      %v1716 = vpop.permute.xlu0 %1715
      %1717 = vrot.lane.b32.xlu0 %v253, 16
      %v1718 = vpop.permute.xlu0 %1717
      %1719 = vrot.lane.b32.xlu0 %v254, 16
      %v1720 = vpop.permute.xlu0 %1719
      %1753 = vrot.lane.b32.xlu0 %v322, 28
      %v1754 = vpop.permute.xlu0 %1753
      %1755 = vrot.lane.b32.xlu0 %v324, 28
      %v1756 = vpop.permute.xlu0 %1755
      %1757 = vrot.lane.b32.xlu0 %v327, 28
      %v1758 = vpop.permute.xlu0 %1757
      %1759 = vrot.lane.b32.xlu0 %v329, 28
      %v1760 = vpop.permute.xlu0 %1759
      %1761 = vrot.lane.b32.xlu0 %v332, 28
      %v1762 = vpop.permute.xlu0 %1761
      %1763 = vrot.lane.b32.xlu0 %v334, 28
      %v1764 = vpop.permute.xlu0 %1763
      %1765 = vrot.lane.b32.xlu0 %v337, 28
      %v1766 = vpop.permute.xlu0 %1765
      %1767 = vrot.lane.b32.xlu0 %v339, 28
      %v1768 = vpop.permute.xlu0 %1767
      %1769 = vrot.lane.b32.xlu0 %v342, 28
      %v1770 = vpop.permute.xlu0 %1769
      %1771 = vrot.lane.b32.xlu0 %v344, 28
      %v1772 = vpop.permute.xlu0 %1771
      %1773 = vrot.lane.b32.xlu0 %v347, 28
      %v1774 = vpop.permute.xlu0 %1773
      %1775 = vrot.lane.b32.xlu0 %v349, 28
      %v1776 = vpop.permute.xlu0 %1775
      %1777 = vrot.lane.b32.xlu0 %v352, 28
      %v1778 = vpop.permute.xlu0 %1777
      %1779 = vrot.lane.b32.xlu0 %v354, 28
      %v1780 = vpop.permute.xlu0 %1779
      %1781 = vrot.lane.b32.xlu0 %v357, 28
      %v1782 = vpop.permute.xlu0 %1781
      %1783 = vrot.lane.b32.xlu0 %v359, 28
      %v1784 = vpop.permute.xlu0 %1783
      %1785 = vrot.lane.b32.xlu0 %v362, 28
      %v1786 = vpop.permute.xlu0 %1785
      %1787 = vrot.lane.b32.xlu0 %v364, 28
      %v1788 = vpop.permute.xlu0 %1787
      %1789 = vrot.lane.b32.xlu0 %v367, 28
      %v1790 = vpop.permute.xlu0 %1789
      %1791 = vrot.lane.b32.xlu0 %v369, 28
      %v1792 = vpop.permute.xlu0 %1791
      %1793 = vrot.lane.b32.xlu0 %v372, 28
      %v1794 = vpop.permute.xlu0 %1793
      %1795 = vrot.lane.b32.xlu0 %v374, 28
      %v1796 = vpop.permute.xlu0 %1795
      %1797 = vrot.lane.b32.xlu0 %v377, 28
      %v1798 = vpop.permute.xlu0 %1797
      %1799 = vrot.lane.b32.xlu0 %v379, 28
      %v1800 = vpop.permute.xlu0 %1799
      %1801 = vrot.lane.b32.xlu0 %v382, 28
      %v1802 = vpop.permute.xlu0 %1801
      %1803 = vrot.lane.b32.xlu0 %v384, 28
      %v1804 = vpop.permute.xlu0 %1803
      %1805 = vrot.lane.b32.xlu0 %v552, 28
      %v1806 = vpop.permute.xlu0 %1805
      %1807 = vrot.lane.b32.xlu0 %v554, 28
      %v1808 = vpop.permute.xlu0 %1807
      %1809 = vrot.lane.b32.xlu0 %v570, 28
      %v1810 = vpop.permute.xlu0 %1809
      %1811 = vrot.lane.b32.xlu0 %v572, 28
      %v1812 = vpop.permute.xlu0 %1811
      %1813 = vrot.lane.b32.xlu0 %v588, 28
      %v1814 = vpop.permute.xlu0 %1813
      %1815 = vrot.lane.b32.xlu0 %v590, 28
      %v1816 = vpop.permute.xlu0 %1815
      %1849 = vrot.lane.b32.xlu0 %v403, 40
      %v1850 = vpop.permute.xlu0 %1849
      %1851 = vrot.lane.b32.xlu0 %v405, 40
      %v1852 = vpop.permute.xlu0 %1851
      %1853 = vrot.lane.b32.xlu0 %v408, 40
      %v1854 = vpop.permute.xlu0 %1853
      %1855 = vrot.lane.b32.xlu0 %v410, 40
      %v1856 = vpop.permute.xlu0 %1855
      %1857 = vrot.lane.b32.xlu0 %v413, 40
      %v1858 = vpop.permute.xlu0 %1857
      %1859 = vrot.lane.b32.xlu0 %v415, 40
      %v1860 = vpop.permute.xlu0 %1859
      %1861 = vrot.lane.b32.xlu0 %v418, 40
      %v1862 = vpop.permute.xlu0 %1861
      %1863 = vrot.lane.b32.xlu0 %v420, 40
      %v1864 = vpop.permute.xlu0 %1863
      %1865 = vrot.lane.b32.xlu0 %v423, 40
      %v1866 = vpop.permute.xlu0 %1865
      %1867 = vrot.lane.b32.xlu0 %v425, 40
      %v1868 = vpop.permute.xlu0 %1867
      %1869 = vrot.lane.b32.xlu0 %v428, 40
      %v1870 = vpop.permute.xlu0 %1869
      %1871 = vrot.lane.b32.xlu0 %v430, 40
      %v1872 = vpop.permute.xlu0 %1871
      %1873 = vrot.lane.b32.xlu0 %v433, 40
      %v1874 = vpop.permute.xlu0 %1873
      %1875 = vrot.lane.b32.xlu0 %v435, 40
      %v1876 = vpop.permute.xlu0 %1875
      %1877 = vrot.lane.b32.xlu0 %v438, 40
      %v1878 = vpop.permute.xlu0 %1877
      %1879 = vrot.lane.b32.xlu0 %v440, 40
      %v1880 = vpop.permute.xlu0 %1879
      %1881 = vrot.lane.b32.xlu0 %v443, 40
      %v1882 = vpop.permute.xlu0 %1881
      %1883 = vrot.lane.b32.xlu0 %v445, 40
      %v1884 = vpop.permute.xlu0 %1883
      %1885 = vrot.lane.b32.xlu0 %v448, 40
      %v1886 = vpop.permute.xlu0 %1885
      %1887 = vrot.lane.b32.xlu0 %v450, 40
      %v1888 = vpop.permute.xlu0 %1887
      %1889 = vrot.lane.b32.xlu0 %v453, 40
      %v1890 = vpop.permute.xlu0 %1889
      %1891 = vrot.lane.b32.xlu0 %v455, 40
      %v1892 = vpop.permute.xlu0 %1891
      %1893 = vrot.lane.b32.xlu0 %v458, 40
      %v1894 = vpop.permute.xlu0 %1893
      %1895 = vrot.lane.b32.xlu0 %v460, 40
      %v1896 = vpop.permute.xlu0 %1895
      %1897 = vrot.lane.b32.xlu0 %v463, 40
      %v1898 = vpop.permute.xlu0 %1897
      %1899 = vrot.lane.b32.xlu0 %v465, 40
      %v1900 = vpop.permute.xlu0 %1899
      %1901 = vrot.lane.b32.xlu0 %v557, 40
      %v1902 = vpop.permute.xlu0 %1901
      %1903 = vrot.lane.b32.xlu0 %v559, 40
      %v1904 = vpop.permute.xlu0 %1903
      %1905 = vrot.lane.b32.xlu0 %v575, 40
      %v1906 = vpop.permute.xlu0 %1905
      %1907 = vrot.lane.b32.xlu0 %v577, 40
      %v1908 = vpop.permute.xlu0 %1907
      %1909 = vrot.lane.b32.xlu0 %v593, 40
      %v1910 = vpop.permute.xlu0 %1909
      %1911 = vrot.lane.b32.xlu0 %v595, 40
      %v1912 = vpop.permute.xlu0 %1911
      %1945 = vrot.lane.b32.xlu0 %v484, 52
      %v1946 = vpop.permute.xlu0 %1945
      %1947 = vrot.lane.b32.xlu0 %v486, 52
      %v1948 = vpop.permute.xlu0 %1947
      %1949 = vrot.lane.b32.xlu0 %v489, 52
      %v1950 = vpop.permute.xlu0 %1949
      %1951 = vrot.lane.b32.xlu0 %v491, 52
      %v1952 = vpop.permute.xlu0 %1951
      %1953 = vrot.lane.b32.xlu0 %v494, 52
      %v1954 = vpop.permute.xlu0 %1953
      %1955 = vrot.lane.b32.xlu0 %v496, 52
      %v1956 = vpop.permute.xlu0 %1955
      %1957 = vrot.lane.b32.xlu0 %v499, 52
      %v1958 = vpop.permute.xlu0 %1957
      %1959 = vrot.lane.b32.xlu0 %v501, 52
      %v1960 = vpop.permute.xlu0 %1959
      %1961 = vrot.lane.b32.xlu0 %v504, 52
      %v1962 = vpop.permute.xlu0 %1961
      %1963 = vrot.lane.b32.xlu0 %v506, 52
      %v1964 = vpop.permute.xlu0 %1963
      %1965 = vrot.lane.b32.xlu0 %v509, 52
      %v1966 = vpop.permute.xlu0 %1965
      %1967 = vrot.lane.b32.xlu0 %v511, 52
      %v1968 = vpop.permute.xlu0 %1967
      %1969 = vrot.lane.b32.xlu0 %v514, 52
      %v1970 = vpop.permute.xlu0 %1969
      %1971 = vrot.lane.b32.xlu0 %v516, 52
      %v1972 = vpop.permute.xlu0 %1971
      %1973 = vrot.lane.b32.xlu0 %v519, 52
      %v1974 = vpop.permute.xlu0 %1973
      %1975 = vrot.lane.b32.xlu0 %v521, 52
      %v1976 = vpop.permute.xlu0 %1975
      %1977 = vrot.lane.b32.xlu0 %v524, 52
      %v1978 = vpop.permute.xlu0 %1977
      %1979 = vrot.lane.b32.xlu0 %v526, 52
      %v1980 = vpop.permute.xlu0 %1979
      %1981 = vrot.lane.b32.xlu0 %v529, 52
      %v1982 = vpop.permute.xlu0 %1981
      %1983 = vrot.lane.b32.xlu0 %v531, 52
      %v1984 = vpop.permute.xlu0 %1983
      %1985 = vrot.lane.b32.xlu0 %v534, 52
      %v1986 = vpop.permute.xlu0 %1985
      %1987 = vrot.lane.b32.xlu0 %v536, 52
      %v1988 = vpop.permute.xlu0 %1987
      %1989 = vrot.lane.b32.xlu0 %v539, 52
      %v1990 = vpop.permute.xlu0 %1989
      %1991 = vrot.lane.b32.xlu0 %v541, 52
      %v1992 = vpop.permute.xlu0 %1991
      %1993 = vrot.lane.b32.xlu0 %v544, 52
      %v1994 = vpop.permute.xlu0 %1993
      %1995 = vrot.lane.b32.xlu0 %v546, 52
      %v1996 = vpop.permute.xlu0 %1995
      %1997 = vrot.lane.b32.xlu0 %v562, 52
      %v1998 = vpop.permute.xlu0 %1997
      %1999 = vrot.lane.b32.xlu0 %v564, 52
      %v2000 = vpop.permute.xlu0 %1999
      %2001 = vrot.lane.b32.xlu0 %v580, 52
      %v2002 = vpop.permute.xlu0 %2001
      %2003 = vrot.lane.b32.xlu0 %v582, 52
      %v2004 = vpop.permute.xlu0 %2003
      %2005 = vrot.lane.b32.xlu0 %v598, 52
      %v2006 = vpop.permute.xlu0 %2005
      %2007 = vrot.lane.b32.xlu0 %v600, 52
      %v2008 = vpop.permute.xlu0 %2007
      %vm2041 = vcmask 97280
      %v2042 = vsel %vm2041, %v199, %v602
      %v2043 = vsel %vm2041, %v200, %v604
      %v2044 = vsel %vm2041, %v202, %v606
      %v2045 = vsel %vm2041, %v203, %v608
      %v2046 = vsel %vm2041, %v205, %v610
      %v2047 = vsel %vm2041, %v206, %v612
      %v2048 = vsel %vm2041, %v208, %v614
      %v2049 = vsel %vm2041, %v209, %v616
      %v2050 = vsel %vm2041, %v211, %v618
      %v2051 = vsel %vm2041, %v212, %v620
      %v2052 = vsel %vm2041, %v214, %v622
      %v2053 = vsel %vm2041, %v215, %v624
      %v2054 = vsel %vm2041, %v217, %v626
      %v2055 = vsel %vm2041, %v218, %v628
      %v2056 = vsel %vm2041, %v220, %v630
      %v2057 = vsel %vm2041, %v221, %v632
      %v2058 = vsel %vm2041, %v223, %v634
      %v2059 = vsel %vm2041, %v224, %v636
      %v2060 = vsel %vm2041, %v226, %v638
      %v2061 = vsel %vm2041, %v227, %v640
      %v2062 = vsel %vm2041, %v229, %v642
      %v2063 = vsel %vm2041, %v230, %v644
      %v2064 = vsel %vm2041, %v232, %v646
      %v2065 = vsel %vm2041, %v233, %v648
      %v2066 = vsel %vm2041, %v235, %v650
      %v2067 = vsel %vm2041, %v236, %v652
      %v2068 = vsel %vm2041, %v238, %v654
      %v2069 = vsel %vm2041, %v239, %v656
      %v2070 = vsel %vm2041, %v241, %v658
      %v2071 = vsel %vm2041, %v242, %v660
      %v2072 = vsel %vm2041, %v244, %v662
      %v2073 = vsel %vm2041, %v245, %v664
      %vm2074 = vcmask 195584
      %v2075 = vsel %vm2074, %v2042, %v698
      %v2076 = vsel %vm2074, %v2043, %v700
      %v2077 = vsel %vm2074, %v2044, %v702
      %v2078 = vsel %vm2074, %v2045, %v704
      %v2079 = vsel %vm2074, %v2046, %v706
      %v2080 = vsel %vm2074, %v2047, %v708
      %v2081 = vsel %vm2074, %v2048, %v710
      %v2082 = vsel %vm2074, %v2049, %v712
      %v2083 = vsel %vm2074, %v2050, %v714
      %v2084 = vsel %vm2074, %v2051, %v716
      %v2085 = vsel %vm2074, %v2052, %v718
      %v2086 = vsel %vm2074, %v2053, %v720
      %v2087 = vsel %vm2074, %v2054, %v722
      %v2088 = vsel %vm2074, %v2055, %v724
      %v2089 = vsel %vm2074, %v2056, %v726
      %v2090 = vsel %vm2074, %v2057, %v728
      %v2091 = vsel %vm2074, %v2058, %v730
      %v2092 = vsel %vm2074, %v2059, %v732
      %v2093 = vsel %vm2074, %v2060, %v734
      %v2094 = vsel %vm2074, %v2061, %v736
      %v2095 = vsel %vm2074, %v2062, %v738
      %v2096 = vsel %vm2074, %v2063, %v740
      %v2097 = vsel %vm2074, %v2064, %v742
      %v2098 = vsel %vm2074, %v2065, %v744
      %v2099 = vsel %vm2074, %v2066, %v746
      %v2100 = vsel %vm2074, %v2067, %v748
      %v2101 = vsel %vm2074, %v2068, %v750
      %v2102 = vsel %vm2074, %v2069, %v752
      %v2103 = vsel %vm2074, %v2070, %v754
      %v2104 = vsel %vm2074, %v2071, %v756
      %v2105 = vsel %vm2074, %v2072, %v758
      %v2106 = vsel %vm2074, %v2073, %v760
      %vm2107 = vcmask 293888
      %v2108 = vsel %vm2107, %v2075, %v794
      %v2109 = vsel %vm2107, %v2076, %v796
      %v2110 = vsel %vm2107, %v2077, %v798
      %v2111 = vsel %vm2107, %v2078, %v800
      %v2112 = vsel %vm2107, %v2079, %v802
      %v2113 = vsel %vm2107, %v2080, %v804
      %v2114 = vsel %vm2107, %v2081, %v806
      %v2115 = vsel %vm2107, %v2082, %v808
      %v2116 = vsel %vm2107, %v2083, %v810
      %v2117 = vsel %vm2107, %v2084, %v812
      %v2118 = vsel %vm2107, %v2085, %v814
      %v2119 = vsel %vm2107, %v2086, %v816
      %v2120 = vsel %vm2107, %v2087, %v818
      %v2121 = vsel %vm2107, %v2088, %v820
      %v2122 = vsel %vm2107, %v2089, %v822
      %v2123 = vsel %vm2107, %v2090, %v824
      %v2124 = vsel %vm2107, %v2091, %v826
      %v2125 = vsel %vm2107, %v2092, %v828
      %v2126 = vsel %vm2107, %v2093, %v830
      %v2127 = vsel %vm2107, %v2094, %v832
      %v2128 = vsel %vm2107, %v2095, %v834
      %v2129 = vsel %vm2107, %v2096, %v836
      %v2130 = vsel %vm2107, %v2097, %v838
      %v2131 = vsel %vm2107, %v2098, %v840
      %v2132 = vsel %vm2107, %v2099, %v842
      %v2133 = vsel %vm2107, %v2100, %v844
      %v2134 = vsel %vm2107, %v2101, %v846
      %v2135 = vsel %vm2107, %v2102, %v848
      %v2136 = vsel %vm2107, %v2103, %v850
      %v2137 = vsel %vm2107, %v2104, %v852
      %v2138 = vsel %vm2107, %v2105, %v854
      %v2139 = vsel %vm2107, %v2106, %v856
      %vm2140 = vcmask 392192
      %v2141 = vsel %vm2140, %v2108, %v890
      %v2142 = vsel %vm2140, %v2109, %v892
      %v2143 = vsel %vm2140, %v2110, %v894
      %v2144 = vsel %vm2140, %v2111, %v896
      %v2145 = vsel %vm2140, %v2112, %v898
      %v2146 = vsel %vm2140, %v2113, %v900
      %v2147 = vsel %vm2140, %v2114, %v902
      %v2148 = vsel %vm2140, %v2115, %v904
      %v2149 = vsel %vm2140, %v2116, %v906
      %v2150 = vsel %vm2140, %v2117, %v908
      %v2151 = vsel %vm2140, %v2118, %v910
      %v2152 = vsel %vm2140, %v2119, %v912
      %v2153 = vsel %vm2140, %v2120, %v914
      %v2154 = vsel %vm2140, %v2121, %v916
      %v2155 = vsel %vm2140, %v2122, %v918
      %v2156 = vsel %vm2140, %v2123, %v920
      %v2157 = vsel %vm2140, %v2124, %v922
      %v2158 = vsel %vm2140, %v2125, %v924
      %v2159 = vsel %vm2140, %v2126, %v926
      %v2160 = vsel %vm2140, %v2127, %v928
      %v2161 = vsel %vm2140, %v2128, %v930
      %v2162 = vsel %vm2140, %v2129, %v932
      %v2163 = vsel %vm2140, %v2130, %v934
      %v2164 = vsel %vm2140, %v2131, %v936
      %v2165 = vsel %vm2140, %v2132, %v938
      %v2166 = vsel %vm2140, %v2133, %v940
      %v2167 = vsel %vm2140, %v2134, %v942
      %v2168 = vsel %vm2140, %v2135, %v944
      %v2169 = vsel %vm2140, %v2136, %v946
      %v2170 = vsel %vm2140, %v2137, %v948
      %v2171 = vsel %vm2140, %v2138, %v950
      %v2172 = vsel %vm2140, %v2139, %v952
      %vm2173 = vcmask 490496
      %v2174 = vsel %vm2173, %v2141, %v986
      %v2175 = vsel %vm2173, %v2142, %v988
      %v2176 = vsel %vm2173, %v2143, %v990
      %v2177 = vsel %vm2173, %v2144, %v992
      %v2178 = vsel %vm2173, %v2145, %v994
      %v2179 = vsel %vm2173, %v2146, %v996
      %v2180 = vsel %vm2173, %v2147, %v998
      %v2181 = vsel %vm2173, %v2148, %v1000
      %v2182 = vsel %vm2173, %v2149, %v1002
      %v2183 = vsel %vm2173, %v2150, %v1004
      %v2184 = vsel %vm2173, %v2151, %v1006
      %v2185 = vsel %vm2173, %v2152, %v1008
      %v2186 = vsel %vm2173, %v2153, %v1010
      %v2187 = vsel %vm2173, %v2154, %v1012
      %v2188 = vsel %vm2173, %v2155, %v1014
      %v2189 = vsel %vm2173, %v2156, %v1016
      %v2190 = vsel %vm2173, %v2157, %v1018
      %v2191 = vsel %vm2173, %v2158, %v1020
      %v2192 = vsel %vm2173, %v2159, %v1022
      %v2193 = vsel %vm2173, %v2160, %v1024
      %v2194 = vsel %vm2173, %v2161, %v1026
      %v2195 = vsel %vm2173, %v2162, %v1028
      %v2196 = vsel %vm2173, %v2163, %v1030
      %v2197 = vsel %vm2173, %v2164, %v1032
      %v2198 = vsel %vm2173, %v2165, %v1034
      %v2199 = vsel %vm2173, %v2166, %v1036
      %v2200 = vsel %vm2173, %v2167, %v1038
      %v2201 = vsel %vm2173, %v2168, %v1040
      %v2202 = vsel %vm2173, %v2169, %v1042
      %v2203 = vsel %vm2173, %v2170, %v1044
      %v2204 = vsel %vm2173, %v2171, %v1046
      %v2205 = vsel %vm2173, %v2172, %v1048
      %vm2206 = vcmask 588800
      %v2207 = vsel %vm2206, %v2174, %v1082
      %v2208 = vsel %vm2206, %v2175, %v1084
      %v2209 = vsel %vm2206, %v2176, %v1086
      %v2210 = vsel %vm2206, %v2177, %v1088
      %v2211 = vsel %vm2206, %v2178, %v1090
      %v2212 = vsel %vm2206, %v2179, %v1092
      %v2213 = vsel %vm2206, %v2180, %v1094
      %v2214 = vsel %vm2206, %v2181, %v1096
      %v2215 = vsel %vm2206, %v2182, %v1098
      %v2216 = vsel %vm2206, %v2183, %v1100
      %v2217 = vsel %vm2206, %v2184, %v1102
      %v2218 = vsel %vm2206, %v2185, %v1104
      %v2219 = vsel %vm2206, %v2186, %v1106
      %v2220 = vsel %vm2206, %v2187, %v1108
      %v2221 = vsel %vm2206, %v2188, %v1110
      %v2222 = vsel %vm2206, %v2189, %v1112
      %v2223 = vsel %vm2206, %v2190, %v1114
      %v2224 = vsel %vm2206, %v2191, %v1116
      %v2225 = vsel %vm2206, %v2192, %v1118
      %v2226 = vsel %vm2206, %v2193, %v1120
      %v2227 = vsel %vm2206, %v2194, %v1122
      %v2228 = vsel %vm2206, %v2195, %v1124
      %v2229 = vsel %vm2206, %v2196, %v1126
      %v2230 = vsel %vm2206, %v2197, %v1128
      %v2231 = vsel %vm2206, %v2198, %v1130
      %v2232 = vsel %vm2206, %v2199, %v1132
      %v2233 = vsel %vm2206, %v2200, %v1134
      %v2234 = vsel %vm2206, %v2201, %v1136
      %v2235 = vsel %vm2206, %v2202, %v1138
      %v2236 = vsel %vm2206, %v2203, %v1140
      %v2237 = vsel %vm2206, %v2204, %v1142
      %v2238 = vsel %vm2206, %v2205, %v1144
      %vm2239 = vcmask 687104
      %v2240 = vsel %vm2239, %v2207, %v1178
      %v2241 = vsel %vm2239, %v2208, %v1180
      %v2242 = vsel %vm2239, %v2209, %v1182
      %v2243 = vsel %vm2239, %v2210, %v1184
      %v2244 = vsel %vm2239, %v2211, %v1186
      %v2245 = vsel %vm2239, %v2212, %v1188
      %v2246 = vsel %vm2239, %v2213, %v1190
      %v2247 = vsel %vm2239, %v2214, %v1192
      %v2248 = vsel %vm2239, %v2215, %v1194
      %v2249 = vsel %vm2239, %v2216, %v1196
      %v2250 = vsel %vm2239, %v2217, %v1198
      %v2251 = vsel %vm2239, %v2218, %v1200
      %v2252 = vsel %vm2239, %v2219, %v1202
      %v2253 = vsel %vm2239, %v2220, %v1204
      %v2254 = vsel %vm2239, %v2221, %v1206
      %v2255 = vsel %vm2239, %v2222, %v1208
      %v2256 = vsel %vm2239, %v2223, %v1210
      %v2257 = vsel %vm2239, %v2224, %v1212
      %v2258 = vsel %vm2239, %v2225, %v1214
      %v2259 = vsel %vm2239, %v2226, %v1216
      %v2260 = vsel %vm2239, %v2227, %v1218
      %v2261 = vsel %vm2239, %v2228, %v1220
      %v2262 = vsel %vm2239, %v2229, %v1222
      %v2263 = vsel %vm2239, %v2230, %v1224
      %v2264 = vsel %vm2239, %v2231, %v1226
      %v2265 = vsel %vm2239, %v2232, %v1228
      %v2266 = vsel %vm2239, %v2233, %v1230
      %v2267 = vsel %vm2239, %v2234, %v1232
      %v2268 = vsel %vm2239, %v2235, %v1234
      %v2269 = vsel %vm2239, %v2236, %v1236
      %v2270 = vsel %vm2239, %v2237, %v1238
      %v2271 = vsel %vm2239, %v2238, %v1240
      %vm2272 = vcmask 785408
      %v2273 = vsel %vm2272, %v2240, %v1274
      %v2274 = vsel %vm2272, %v2241, %v1276
      %v2275 = vsel %vm2272, %v2242, %v1278
      %v2276 = vsel %vm2272, %v2243, %v1280
      %v2277 = vsel %vm2272, %v2244, %v1282
      %v2278 = vsel %vm2272, %v2245, %v1284
      %v2279 = vsel %vm2272, %v2246, %v1286
      %v2280 = vsel %vm2272, %v2247, %v1288
      %v2281 = vsel %vm2272, %v2248, %v1290
      %v2282 = vsel %vm2272, %v2249, %v1292
      %v2283 = vsel %vm2272, %v2250, %v1294
      %v2284 = vsel %vm2272, %v2251, %v1296
      %v2285 = vsel %vm2272, %v2252, %v1298
      %v2286 = vsel %vm2272, %v2253, %v1300
      %v2287 = vsel %vm2272, %v2254, %v1302
      %v2288 = vsel %vm2272, %v2255, %v1304
      %v2289 = vsel %vm2272, %v2256, %v1306
      %v2290 = vsel %vm2272, %v2257, %v1308
      %v2291 = vsel %vm2272, %v2258, %v1310
      %v2292 = vsel %vm2272, %v2259, %v1312
      %v2293 = vsel %vm2272, %v2260, %v1314
      %v2294 = vsel %vm2272, %v2261, %v1316
      %v2295 = vsel %vm2272, %v2262, %v1318
      %v2296 = vsel %vm2272, %v2263, %v1320
      %v2297 = vsel %vm2272, %v2264, %v1322
      %v2298 = vsel %vm2272, %v2265, %v1324
      %v2299 = vsel %vm2272, %v2266, %v1326
      %v2300 = vsel %vm2272, %v2267, %v1328
      %v2301 = vsel %vm2272, %v2268, %v1330
      %v2302 = vsel %vm2272, %v2269, %v1332
      %v2303 = vsel %vm2272, %v2270, %v1334
      %v2304 = vsel %vm2272, %v2271, %v1336
      %vm2305 = vcmask 883712
      %v2306 = vsel %vm2305, %v2273, %v1370
      %v2307 = vsel %vm2305, %v2274, %v1372
      %v2308 = vsel %vm2305, %v2275, %v1374
      %v2309 = vsel %vm2305, %v2276, %v1376
      %v2310 = vsel %vm2305, %v2277, %v1378
      %v2311 = vsel %vm2305, %v2278, %v1380
      %v2312 = vsel %vm2305, %v2279, %v1382
      %v2313 = vsel %vm2305, %v2280, %v1384
      %v2314 = vsel %vm2305, %v2281, %v1386
      %v2315 = vsel %vm2305, %v2282, %v1388
      %v2316 = vsel %vm2305, %v2283, %v1390
      %v2317 = vsel %vm2305, %v2284, %v1392
      %v2318 = vsel %vm2305, %v2285, %v1394
      %v2319 = vsel %vm2305, %v2286, %v1396
      %v2320 = vsel %vm2305, %v2287, %v1398
      %v2321 = vsel %vm2305, %v2288, %v1400
      %v2322 = vsel %vm2305, %v2289, %v1402
      %v2323 = vsel %vm2305, %v2290, %v1404
      %v2324 = vsel %vm2305, %v2291, %v1406
      %v2325 = vsel %vm2305, %v2292, %v1408
      %v2326 = vsel %vm2305, %v2293, %v1410
      %v2327 = vsel %vm2305, %v2294, %v1412
      %v2328 = vsel %vm2305, %v2295, %v1414
      %v2329 = vsel %vm2305, %v2296, %v1416
      %v2330 = vsel %vm2305, %v2297, %v1418
      %v2331 = vsel %vm2305, %v2298, %v1420
      %v2332 = vsel %vm2305, %v2299, %v1422
      %v2333 = vsel %vm2305, %v2300, %v1424
      %v2334 = vsel %vm2305, %v2301, %v1426
      %v2335 = vsel %vm2305, %v2302, %v1428
      %v2336 = vsel %vm2305, %v2303, %v1430
      %v2337 = vsel %vm2305, %v2304, %v1432
      %vm2338 = vcmask 982016
      %v2339 = vsel %vm2338, %v2306, %v1466
      %v2340 = vsel %vm2338, %v2307, %v1468
      %v2341 = vsel %vm2338, %v2308, %v1470
      %v2342 = vsel %vm2338, %v2309, %v1472
      %v2343 = vsel %vm2338, %v2310, %v1474
      %v2344 = vsel %vm2338, %v2311, %v1476
      %v2345 = vsel %vm2338, %v2312, %v1478
      %v2346 = vsel %vm2338, %v2313, %v1480
      %v2347 = vsel %vm2338, %v2314, %v1482
      %v2348 = vsel %vm2338, %v2315, %v1484
      %v2349 = vsel %vm2338, %v2316, %v1486
      %v2350 = vsel %vm2338, %v2317, %v1488
      %v2351 = vsel %vm2338, %v2318, %v1490
      %v2352 = vsel %vm2338, %v2319, %v1492
      %v2353 = vsel %vm2338, %v2320, %v1494
      %v2354 = vsel %vm2338, %v2321, %v1496
      %v2355 = vsel %vm2338, %v2322, %v1498
      %v2356 = vsel %vm2338, %v2323, %v1500
      %v2357 = vsel %vm2338, %v2324, %v1502
      %v2358 = vsel %vm2338, %v2325, %v1504
      %v2359 = vsel %vm2338, %v2326, %v1506
      %v2360 = vsel %vm2338, %v2327, %v1508
      %v2361 = vsel %vm2338, %v2328, %v1510
      %v2362 = vsel %vm2338, %v2329, %v1512
      %v2363 = vsel %vm2338, %v2330, %v1514
      %v2364 = vsel %vm2338, %v2331, %v1516
      %v2365 = vsel %vm2338, %v2332, %v1518
      %v2366 = vsel %vm2338, %v2333, %v1520
      %v2367 = vsel %vm2338, %v2334, %v1522
      %v2368 = vsel %vm2338, %v2335, %v1524
      %v2369 = vsel %vm2338, %v2336, %v1526
      %v2370 = vsel %vm2338, %v2337, %v1528
      %vm2371 = vcmask 31744
      %v2372 = vsel %vm2371, %v1466, %v1562
      %v2373 = vsel %vm2371, %v1468, %v1564
      %v2374 = vsel %vm2371, %v1470, %v1566
      %v2375 = vsel %vm2371, %v1472, %v1568
      %v2376 = vsel %vm2371, %v1474, %v1570
      %v2377 = vsel %vm2371, %v1476, %v1572
      %v2378 = vsel %vm2371, %v1478, %v1574
      %v2379 = vsel %vm2371, %v1480, %v1576
      %v2380 = vsel %vm2371, %v1482, %v1578
      %v2381 = vsel %vm2371, %v1484, %v1580
      %v2382 = vsel %vm2371, %v1486, %v1582
      %v2383 = vsel %vm2371, %v1488, %v1584
      %v2384 = vsel %vm2371, %v1490, %v1586
      %v2385 = vsel %vm2371, %v1492, %v1588
      %v2386 = vsel %vm2371, %v1494, %v1590
      %v2387 = vsel %vm2371, %v1496, %v1592
      %v2388 = vsel %vm2371, %v1498, %v1594
      %v2389 = vsel %vm2371, %v1500, %v1596
      %v2390 = vsel %vm2371, %v1502, %v1598
      %v2391 = vsel %vm2371, %v1504, %v1600
      %v2392 = vsel %vm2371, %v1506, %v1602
      %v2393 = vsel %vm2371, %v1508, %v1604
      %v2394 = vsel %vm2371, %v1510, %v1606
      %v2395 = vsel %vm2371, %v1512, %v1608
      %v2396 = vsel %vm2371, %v1514, %v1610
      %v2397 = vsel %vm2371, %v1516, %v1612
      %v2398 = vsel %vm2371, %v1518, %v1614
      %v2399 = vsel %vm2371, %v1520, %v1616
      %v2400 = vsel %vm2371, %v1522, %v1618
      %v2401 = vsel %vm2371, %v1524, %v1620
      %v2402 = vsel %vm2371, %v1526, %v1622
      %v2403 = vsel %vm2371, %v1528, %v1624
      %vm2404 = vcmask 130048
      %v2405 = vsel %vm2404, %v2372, %v1658
      %v2406 = vsel %vm2404, %v2373, %v1660
      %v2407 = vsel %vm2404, %v2374, %v1662
      %v2408 = vsel %vm2404, %v2375, %v1664
      %v2409 = vsel %vm2404, %v2376, %v1666
      %v2410 = vsel %vm2404, %v2377, %v1668
      %v2411 = vsel %vm2404, %v2378, %v1670
      %v2412 = vsel %vm2404, %v2379, %v1672
      %v2413 = vsel %vm2404, %v2380, %v1674
      %v2414 = vsel %vm2404, %v2381, %v1676
      %v2415 = vsel %vm2404, %v2382, %v1678
      %v2416 = vsel %vm2404, %v2383, %v1680
      %v2417 = vsel %vm2404, %v2384, %v1682
      %v2418 = vsel %vm2404, %v2385, %v1684
      %v2419 = vsel %vm2404, %v2386, %v1686
      %v2420 = vsel %vm2404, %v2387, %v1688
      %v2421 = vsel %vm2404, %v2388, %v1690
      %v2422 = vsel %vm2404, %v2389, %v1692
      %v2423 = vsel %vm2404, %v2390, %v1694
      %v2424 = vsel %vm2404, %v2391, %v1696
      %v2425 = vsel %vm2404, %v2392, %v1698
      %v2426 = vsel %vm2404, %v2393, %v1700
      %v2427 = vsel %vm2404, %v2394, %v1702
      %v2428 = vsel %vm2404, %v2395, %v1704
      %v2429 = vsel %vm2404, %v2396, %v1706
      %v2430 = vsel %vm2404, %v2397, %v1708
      %v2431 = vsel %vm2404, %v2398, %v1710
      %v2432 = vsel %vm2404, %v2399, %v1712
      %v2433 = vsel %vm2404, %v2400, %v1714
      %v2434 = vsel %vm2404, %v2401, %v1716
      %v2435 = vsel %vm2404, %v2402, %v1718
      %v2436 = vsel %vm2404, %v2403, %v1720
      %vm2437 = vcmask 228352
      %v2438 = vsel %vm2437, %v2405, %v1754
      %v2439 = vsel %vm2437, %v2406, %v1756
      %v2440 = vsel %vm2437, %v2407, %v1758
      %v2441 = vsel %vm2437, %v2408, %v1760
      %v2442 = vsel %vm2437, %v2409, %v1762
      %v2443 = vsel %vm2437, %v2410, %v1764
      %v2444 = vsel %vm2437, %v2411, %v1766
      %v2445 = vsel %vm2437, %v2412, %v1768
      %v2446 = vsel %vm2437, %v2413, %v1770
      %v2447 = vsel %vm2437, %v2414, %v1772
      %v2448 = vsel %vm2437, %v2415, %v1774
      %v2449 = vsel %vm2437, %v2416, %v1776
      %v2450 = vsel %vm2437, %v2417, %v1778
      %v2451 = vsel %vm2437, %v2418, %v1780
      %v2452 = vsel %vm2437, %v2419, %v1782
      %v2453 = vsel %vm2437, %v2420, %v1784
      %v2454 = vsel %vm2437, %v2421, %v1786
      %v2455 = vsel %vm2437, %v2422, %v1788
      %v2456 = vsel %vm2437, %v2423, %v1790
      %v2457 = vsel %vm2437, %v2424, %v1792
      %v2458 = vsel %vm2437, %v2425, %v1794
      %v2459 = vsel %vm2437, %v2426, %v1796
      %v2460 = vsel %vm2437, %v2427, %v1798
      %v2461 = vsel %vm2437, %v2428, %v1800
      %v2462 = vsel %vm2437, %v2429, %v1802
      %v2463 = vsel %vm2437, %v2430, %v1804
      %v2464 = vsel %vm2437, %v2431, %v1806
      %v2465 = vsel %vm2437, %v2432, %v1808
      %v2466 = vsel %vm2437, %v2433, %v1810
      %v2467 = vsel %vm2437, %v2434, %v1812
      %v2468 = vsel %vm2437, %v2435, %v1814
      %v2469 = vsel %vm2437, %v2436, %v1816
      %vm2470 = vcmask 326656
      %v2471 = vsel %vm2470, %v2438, %v1850
      %v2472 = vsel %vm2470, %v2439, %v1852
      %v2473 = vsel %vm2470, %v2440, %v1854
      %v2474 = vsel %vm2470, %v2441, %v1856
      %v2475 = vsel %vm2470, %v2442, %v1858
      %v2476 = vsel %vm2470, %v2443, %v1860
      %v2477 = vsel %vm2470, %v2444, %v1862
      %v2478 = vsel %vm2470, %v2445, %v1864
      %v2479 = vsel %vm2470, %v2446, %v1866
      %v2480 = vsel %vm2470, %v2447, %v1868
      %v2481 = vsel %vm2470, %v2448, %v1870
      %v2482 = vsel %vm2470, %v2449, %v1872
      %v2483 = vsel %vm2470, %v2450, %v1874
      %v2484 = vsel %vm2470, %v2451, %v1876
      %v2485 = vsel %vm2470, %v2452, %v1878
      %v2486 = vsel %vm2470, %v2453, %v1880
      %v2487 = vsel %vm2470, %v2454, %v1882
      %v2488 = vsel %vm2470, %v2455, %v1884
      %v2489 = vsel %vm2470, %v2456, %v1886
      %v2490 = vsel %vm2470, %v2457, %v1888
      %v2491 = vsel %vm2470, %v2458, %v1890
      %v2492 = vsel %vm2470, %v2459, %v1892
      %v2493 = vsel %vm2470, %v2460, %v1894
      %v2494 = vsel %vm2470, %v2461, %v1896
      %v2495 = vsel %vm2470, %v2462, %v1898
      %v2496 = vsel %vm2470, %v2463, %v1900
      %v2497 = vsel %vm2470, %v2464, %v1902
      %v2498 = vsel %vm2470, %v2465, %v1904
      %v2499 = vsel %vm2470, %v2466, %v1906
      %v2500 = vsel %vm2470, %v2467, %v1908
      %v2501 = vsel %vm2470, %v2468, %v1910
      %v2502 = vsel %vm2470, %v2469, %v1912
      %vm2503 = vcmask 424960
      %v2504 = vsel %vm2503, %v2471, %v1946
      %v2505 = vsel %vm2503, %v2472, %v1948
      %v2506 = vsel %vm2503, %v2473, %v1950
      %v2507 = vsel %vm2503, %v2474, %v1952
      %v2508 = vsel %vm2503, %v2475, %v1954
      %v2509 = vsel %vm2503, %v2476, %v1956
      %v2510 = vsel %vm2503, %v2477, %v1958
      %v2511 = vsel %vm2503, %v2478, %v1960
      %v2512 = vsel %vm2503, %v2479, %v1962
      %v2513 = vsel %vm2503, %v2480, %v1964
      %v2514 = vsel %vm2503, %v2481, %v1966
      %v2515 = vsel %vm2503, %v2482, %v1968
      %v2516 = vsel %vm2503, %v2483, %v1970
      %v2517 = vsel %vm2503, %v2484, %v1972
      %v2518 = vsel %vm2503, %v2485, %v1974
      %v2519 = vsel %vm2503, %v2486, %v1976
      %v2520 = vsel %vm2503, %v2487, %v1978
      %v2521 = vsel %vm2503, %v2488, %v1980
      %v2522 = vsel %vm2503, %v2489, %v1982
      %v2523 = vsel %vm2503, %v2490, %v1984
      %v2524 = vsel %vm2503, %v2491, %v1986
      %v2525 = vsel %vm2503, %v2492, %v1988
      %v2526 = vsel %vm2503, %v2493, %v1990
      %v2527 = vsel %vm2503, %v2494, %v1992
      %v2528 = vsel %vm2503, %v2495, %v1994
      %v2529 = vsel %vm2503, %v2496, %v1996
      %v2530 = vsel %vm2503, %v2497, %v1998
      %v2531 = vsel %vm2503, %v2498, %v2000
      %v2532 = vsel %vm2503, %v2499, %v2002
      %v2533 = vsel %vm2503, %v2500, %v2004
      %v2534 = vsel %vm2503, %v2501, %v2006
      %v2535 = vsel %vm2503, %v2502, %v2008
      %v2536 = vpack.c.bf16 %v2340, %v2339
      %v2537 = vpack.c.bf16 %v2505, %v2504
      %v2538 = vpack.c.bf16 %v2342, %v2341
      %v2539 = vpack.c.bf16 %v2507, %v2506
      %v2540 = vpack.c.bf16 %v2344, %v2343
      %v2541 = vpack.c.bf16 %v2509, %v2508
      %v2542 = vpack.c.bf16 %v2346, %v2345
      %v2543 = vpack.c.bf16 %v2511, %v2510
      %v2544 = vpack.c.bf16 %v2348, %v2347
      %v2545 = vpack.c.bf16 %v2513, %v2512
      %v2546 = vpack.c.bf16 %v2350, %v2349
      %v2547 = vpack.c.bf16 %v2515, %v2514
      %v2548 = vpack.c.bf16 %v2352, %v2351
      %v2549 = vpack.c.bf16 %v2517, %v2516
      %v2550 = vpack.c.bf16 %v2354, %v2353
      %v2551 = vpack.c.bf16 %v2519, %v2518
      %v2552 = vpack.c.bf16 %v2356, %v2355
      %v2553 = vpack.c.bf16 %v2521, %v2520
      %v2554 = vpack.c.bf16 %v2358, %v2357
      %v2555 = vpack.c.bf16 %v2523, %v2522
      %v2556 = vpack.c.bf16 %v2360, %v2359
      %v2557 = vpack.c.bf16 %v2525, %v2524
      %v2558 = vpack.c.bf16 %v2362, %v2361
      %v2559 = vpack.c.bf16 %v2527, %v2526
      %v2560 = vpack.c.bf16 %v2364, %v2363
      %v2561 = vpack.c.bf16 %v2529, %v2528
      %v2562 = vpack.c.bf16 %v2366, %v2365
      %v2563 = vpack.c.bf16 %v2531, %v2530
      %v2564 = vpack.c.bf16 %v2368, %v2367
      %v2565 = vpack.c.bf16 %v2533, %v2532
      %v2566 = vpack.c.bf16 %v2370, %v2369
      %v2567 = vpack.c.bf16 %v2535, %v2534
      %v2568 = vld [vmem:[%s1] sm:$0xf]
      %v2569 = vld [vmem:[%s1 + $0x4] sm:$0xf]
      %v2570 = vld [vmem:[%s1 + $0x8] sm:$0xf]
      %v2571 = vld [vmem:[%s1 + $0xc] sm:$0xf]
      %v2572 = vld [vmem:[%s1 + $0x10] sm:$0xf]
      %v2573 = vld [vmem:[%s1 + $0x14] sm:$0xf]
      %v2574 = vld [vmem:[%s1 + $0x18] sm:$0xf]
      %v2575 = vld [vmem:[%s1 + $0x1c] sm:$0xf]
      %v2576 = vld [vmem:[%s1 + $0x20] sm:$0xf]
      %v2577 = vld [vmem:[%s1 + $0x24] sm:$0xf]
      %v2578 = vld [vmem:[%s1 + $0x28] sm:$0xf]
      %v2579 = vld [vmem:[%s1 + $0x2c] sm:$0xf]
      %v2580 = vld [vmem:[%s1 + $0x30] sm:$0xf]
      %v2581 = vld [vmem:[%s1 + $0x34] sm:$0xf]
      %v2582 = vld [vmem:[%s1 + $0x38] sm:$0xf]
      %v2583 = vld [vmem:[%s1 + $0x3c] sm:$0xf]
      %v2584 = vld [vmem:[%s1 + $0x40] sm:$0xf]
      %v2585 = vld [vmem:[%s1 + $0x44] sm:$0xf]
      %v2586 = vld [vmem:[%s1 + $0x48] sm:$0xf]
      %v2587 = vld [vmem:[%s1 + $0x4c] sm:$0xf]
      %v2588 = vld [vmem:[%s1 + $0x50] sm:$0xf]
      %v2589 = vld [vmem:[%s1 + $0x54] sm:$0xf]
      %v2590 = vld [vmem:[%s1 + $0x58] sm:$0xf]
      %v2591 = vld [vmem:[%s1 + $0x5c] sm:$0xf]
      %v2616 = vunpack.c.l.b16 %v2568
      %v2617 = vunpack.c.l.b16 %v2569
      %v2618 = vunpack.c.l.b16 %v2570
      %v2619 = vunpack.c.l.b16 %v2571
      %v2620 = vunpack.c.l.b16 %v2572
      %v2621 = vunpack.c.l.b16 %v2573
      %v2622 = vunpack.c.l.b16 %v2574
      %v2623 = vunpack.c.l.b16 %v2575
      %v2624 = vunpack.c.l.b16 %v2576
      %v2625 = vunpack.c.l.b16 %v2577
      %v2626 = vunpack.c.l.b16 %v2578
      %v2627 = vunpack.c.l.b16 %v2579
      %v2628 = vunpack.c.l.b16 %v2580
      %v2629 = vunpack.c.l.b16 %v2581
      %v2630 = vunpack.c.l.b16 %v2582
      %v2631 = vunpack.c.l.b16 %v2583
      %v2632 = vunpack.c.l.b16 %v2584
      %v2633 = vunpack.c.l.b16 %v2585
      %v2634 = vunpack.c.l.b16 %v2586
      %v2635 = vunpack.c.l.b16 %v2587
      %v2636 = vunpack.c.l.b16 %v2588
      %v2637 = vunpack.c.l.b16 %v2589
      %v2638 = vunpack.c.l.b16 %v2590
      %v2639 = vunpack.c.l.b16 %v2591
      %v2640 = vpack.c.b16 %v2617, %v2616
      %v2641 = vpack.c.b16 %v2619, %v2618
      %v2642 = vpack.c.b16 %v2621, %v2620
      %v2643 = vpack.c.b16 %v2623, %v2622
      %v2644 = vpack.c.b16 %v2625, %v2624
      %v2645 = vpack.c.b16 %v2627, %v2626
      %v2646 = vpack.c.b16 %v2629, %v2628
      %v2647 = vpack.c.b16 %v2631, %v2630
      %v2648 = vpack.c.b16 %v2633, %v2632
      %v2649 = vpack.c.b16 %v2635, %v2634
      %v2650 = vpack.c.b16 %v2637, %v2636
      %v2651 = vpack.c.b16 %v2639, %v2638
      %vm2664 = vcmask 523264
      %v2666 = vsel %vm2664, %v2537, 0
      %v2669 = vsel %vm2664, %v2539, 0
      %v2672 = vsel %vm2664, %v2541, 0
      %v2675 = vsel %vm2664, %v2543, 0
      %v2678 = vsel %vm2664, %v2545, 0
      %v2681 = vsel %vm2664, %v2547, 0
      %v2684 = vsel %vm2664, %v2549, 0
      %v2687 = vsel %vm2664, %v2551, 0
      %v2690 = vsel %vm2664, %v2553, 0
      %v2693 = vsel %vm2664, %v2555, 0
      %v2696 = vsel %vm2664, %v2557, 0
      %v2699 = vsel %vm2664, %v2559, 0
      %v2702 = vsel %vm2664, %v2561, 0
      %v2705 = vsel %vm2664, %v2563, 0
      %v2708 = vsel %vm2664, %v2565, 0
      %v2711 = vsel %vm2664, %v2567, 0
      %2713 = vmatpush.bf16.msra.mxu0 %v2647
      %2714 = vmatpush.bf16.msra.mxu0 %v2646
      %2715 = vmatpush.bf16.msra.mxu0 %v2645
      %2716 = vmatpush.bf16.msra.mxu0 %v2644
      %2717 = vmatpush.bf16.msra.mxu0 %v2643
      %2718 = vmatpush.bf16.msra.mxu0 %v2642
      %2719 = vmatpush.bf16.msra.mxu0 %v2641
      %2720 = vmatpush.bf16.msra.mxu0 %v2640
      %2721 = vmatmul.bf16.gmra.mxu0 %v2536
      %v2722 = vpop.f32.mrf.mxu0
      %v2723 = vadd.f32 0.0, %v2722
      %v2724 = vpop.f32.mrf.mxu0
      %v2725 = vadd.f32 0.0, %v2724
      %2726 = vmatmul.bf16.gmra.mxu0 %v2538
      %v2727 = vpop.f32.mrf.mxu0
      %v2728 = vadd.f32 0.0, %v2727
      %v2729 = vpop.f32.mrf.mxu0
      %v2730 = vadd.f32 0.0, %v2729
      %2731 = vmatmul.bf16.gmra.mxu0 %v2540
      %v2732 = vpop.f32.mrf.mxu0
      %v2733 = vadd.f32 0.0, %v2732
      %v2734 = vpop.f32.mrf.mxu0
      %v2735 = vadd.f32 0.0, %v2734
      %2736 = vmatmul.bf16.gmra.mxu0 %v2542
      %v2737 = vpop.f32.mrf.mxu0
      %v2738 = vadd.f32 0.0, %v2737
      %v2739 = vpop.f32.mrf.mxu0
      %v2740 = vadd.f32 0.0, %v2739
      %2741 = vmatmul.bf16.gmra.mxu0 %v2544
      %v2742 = vpop.f32.mrf.mxu0
      %v2743 = vadd.f32 0.0, %v2742
      %v2744 = vpop.f32.mrf.mxu0
      %v2745 = vadd.f32 0.0, %v2744
      %2746 = vmatmul.bf16.gmra.mxu0 %v2546
      %v2747 = vpop.f32.mrf.mxu0
      %v2748 = vadd.f32 0.0, %v2747
      %v2749 = vpop.f32.mrf.mxu0
      %v2750 = vadd.f32 0.0, %v2749
      %2751 = vmatmul.bf16.gmra.mxu0 %v2548
      %v2752 = vpop.f32.mrf.mxu0
      %v2753 = vadd.f32 0.0, %v2752
      %v2754 = vpop.f32.mrf.mxu0
      %v2755 = vadd.f32 0.0, %v2754
      %2756 = vmatmul.bf16.gmra.mxu0 %v2550
      %v2757 = vpop.f32.mrf.mxu0
      %v2758 = vadd.f32 0.0, %v2757
      %v2759 = vpop.f32.mrf.mxu0
      %v2760 = vadd.f32 0.0, %v2759
      %2761 = vmatmul.bf16.gmra.mxu0 %v2552
      %v2762 = vpop.f32.mrf.mxu0
      %v2763 = vadd.f32 0.0, %v2762
      %v2764 = vpop.f32.mrf.mxu0
      %v2765 = vadd.f32 0.0, %v2764
      %2766 = vmatmul.bf16.gmra.mxu0 %v2554
      %v2767 = vpop.f32.mrf.mxu0
      %v2768 = vadd.f32 0.0, %v2767
      %v2769 = vpop.f32.mrf.mxu0
      %v2770 = vadd.f32 0.0, %v2769
      %2771 = vmatmul.bf16.gmra.mxu0 %v2556
      %v2772 = vpop.f32.mrf.mxu0
      %v2773 = vadd.f32 0.0, %v2772
      %v2774 = vpop.f32.mrf.mxu0
      %v2775 = vadd.f32 0.0, %v2774
      %2776 = vmatmul.bf16.gmra.mxu0 %v2558
      %v2777 = vpop.f32.mrf.mxu0
      %v2778 = vadd.f32 0.0, %v2777
      %v2779 = vpop.f32.mrf.mxu0
      %v2780 = vadd.f32 0.0, %v2779
      %2781 = vmatmul.bf16.gmra.mxu0 %v2560
      %v2782 = vpop.f32.mrf.mxu0
      %v2783 = vadd.f32 0.0, %v2782
      %v2784 = vpop.f32.mrf.mxu0
      %v2785 = vadd.f32 0.0, %v2784
      %2786 = vmatmul.bf16.gmra.mxu0 %v2562
      %v2787 = vpop.f32.mrf.mxu0
      %v2788 = vadd.f32 0.0, %v2787
      %v2789 = vpop.f32.mrf.mxu0
      %v2790 = vadd.f32 0.0, %v2789
      %2791 = vmatmul.bf16.gmra.mxu0 %v2564
      %v2792 = vpop.f32.mrf.mxu0
      %v2793 = vadd.f32 0.0, %v2792
      %v2794 = vpop.f32.mrf.mxu0
      %v2795 = vadd.f32 0.0, %v2794
      %2796 = vmatmul.bf16.gmra.mxu0 %v2566
      %v2797 = vpop.f32.mrf.mxu0
      %v2798 = vadd.f32 0.0, %v2797
      %v2799 = vpop.f32.mrf.mxu0
      %v2800 = vadd.f32 0.0, %v2799
      %2801 = vdwg.mxu0
      %2802 = vmatpush.bf16.msra.mxu0 0
      %2803 = vmatpush.bf16.msra.mxu0 0
      %2804 = vmatpush.bf16.msra.mxu0 0
      %2805 = vmatpush.bf16.msra.mxu0 0
      %2806 = vmatpush.bf16.msra.mxu0 %v2651
      %2807 = vmatpush.bf16.msra.mxu0 %v2650
      %2808 = vmatpush.bf16.msra.mxu0 %v2649
      %2809 = vmatpush.bf16.msra.mxu0 %v2648
      %2810 = vmatmul.bf16.gmra.mxu0 %v2666
      %v2811 = vpop.f32.mrf.mxu0
      %v2812 = vadd.f32 %v2723, %v2811
      %v2813 = vpop.f32.mrf.mxu0
      %v2814 = vadd.f32 %v2725, %v2813
      %2815 = vmatmul.bf16.gmra.mxu0 %v2669
      %v2816 = vpop.f32.mrf.mxu0
      %v2817 = vadd.f32 %v2728, %v2816
      %v2818 = vpop.f32.mrf.mxu0
      %v2819 = vadd.f32 %v2730, %v2818
      %2820 = vmatmul.bf16.gmra.mxu0 %v2672
      %v2821 = vpop.f32.mrf.mxu0
      %v2822 = vadd.f32 %v2733, %v2821
      %v2823 = vpop.f32.mrf.mxu0
      %v2824 = vadd.f32 %v2735, %v2823
      %2825 = vmatmul.bf16.gmra.mxu0 %v2675
      %v2826 = vpop.f32.mrf.mxu0
      %v2827 = vadd.f32 %v2738, %v2826
      %v2828 = vpop.f32.mrf.mxu0
      %v2829 = vadd.f32 %v2740, %v2828
      %2830 = vmatmul.bf16.gmra.mxu0 %v2678
      %v2831 = vpop.f32.mrf.mxu0
      %v2832 = vadd.f32 %v2743, %v2831
      %v2833 = vpop.f32.mrf.mxu0
      %v2834 = vadd.f32 %v2745, %v2833
      %2835 = vmatmul.bf16.gmra.mxu0 %v2681
      %v2836 = vpop.f32.mrf.mxu0
      %v2837 = vadd.f32 %v2748, %v2836
      %v2838 = vpop.f32.mrf.mxu0
      %v2839 = vadd.f32 %v2750, %v2838
      %2840 = vmatmul.bf16.gmra.mxu0 %v2684
      %v2841 = vpop.f32.mrf.mxu0
      %v2842 = vadd.f32 %v2753, %v2841
      %v2843 = vpop.f32.mrf.mxu0
      %v2844 = vadd.f32 %v2755, %v2843
      %2845 = vmatmul.bf16.gmra.mxu0 %v2687
      %v2846 = vpop.f32.mrf.mxu0
      %v2847 = vadd.f32 %v2758, %v2846
      %v2848 = vpop.f32.mrf.mxu0
      %v2849 = vadd.f32 %v2760, %v2848
      %2850 = vmatmul.bf16.gmra.mxu0 %v2690
      %v2851 = vpop.f32.mrf.mxu0
      %v2852 = vadd.f32 %v2763, %v2851
      %v2853 = vpop.f32.mrf.mxu0
      %v2854 = vadd.f32 %v2765, %v2853
      %2855 = vmatmul.bf16.gmra.mxu0 %v2693
      %v2856 = vpop.f32.mrf.mxu0
      %v2857 = vadd.f32 %v2768, %v2856
      %v2858 = vpop.f32.mrf.mxu0
      %v2859 = vadd.f32 %v2770, %v2858
      %2860 = vmatmul.bf16.gmra.mxu0 %v2696
      %v2861 = vpop.f32.mrf.mxu0
      %v2862 = vadd.f32 %v2773, %v2861
      %v2863 = vpop.f32.mrf.mxu0
      %v2864 = vadd.f32 %v2775, %v2863
      %2865 = vmatmul.bf16.gmra.mxu0 %v2699
      %v2866 = vpop.f32.mrf.mxu0
      %v2867 = vadd.f32 %v2778, %v2866
      %v2868 = vpop.f32.mrf.mxu0
      %v2869 = vadd.f32 %v2780, %v2868
      %2870 = vmatmul.bf16.gmra.mxu0 %v2702
      %v2871 = vpop.f32.mrf.mxu0
      %v2872 = vadd.f32 %v2783, %v2871
      %v2873 = vpop.f32.mrf.mxu0
      %v2874 = vadd.f32 %v2785, %v2873
      %2875 = vmatmul.bf16.gmra.mxu0 %v2705
      %v2876 = vpop.f32.mrf.mxu0
      %v2877 = vadd.f32 %v2788, %v2876
      %v2878 = vpop.f32.mrf.mxu0
      %v2879 = vadd.f32 %v2790, %v2878
      %2880 = vmatmul.bf16.gmra.mxu0 %v2708
      %v2881 = vpop.f32.mrf.mxu0
      %v2882 = vadd.f32 %v2793, %v2881
      %v2883 = vpop.f32.mrf.mxu0
      %v2884 = vadd.f32 %v2795, %v2883
      %2885 = vmatmul.bf16.gmra.mxu0 %v2711
      %v2886 = vpop.f32.mrf.mxu0
      %v2887 = vadd.f32 %v2798, %v2886
      %v2888 = vpop.f32.mrf.mxu0
      %v2889 = vadd.f32 %v2800, %v2888
      %2890 = vdwg.mxu0
      %v2891 = vld [vmem:[%s2] sm:$0x1]
      %v2893 = vperm.slane %v2891, 0
      %v2895 = vmul.f32 %v2812, %v2893
      %v2896 = vmul.f32 %v2814, %v2893
      %v2897 = vmul.f32 %v2817, %v2893
      %v2898 = vmul.f32 %v2819, %v2893
      %v2899 = vmul.f32 %v2822, %v2893
      %v2900 = vmul.f32 %v2824, %v2893
      %v2901 = vmul.f32 %v2827, %v2893
      %v2902 = vmul.f32 %v2829, %v2893
      %v2903 = vmul.f32 %v2832, %v2893
      %v2904 = vmul.f32 %v2834, %v2893
      %v2905 = vmul.f32 %v2837, %v2893
      %v2906 = vmul.f32 %v2839, %v2893
      %v2907 = vmul.f32 %v2842, %v2893
      %v2908 = vmul.f32 %v2844, %v2893
      %v2909 = vmul.f32 %v2847, %v2893
      %v2910 = vmul.f32 %v2849, %v2893
      %v2911 = vmul.f32 %v2852, %v2893
      %v2912 = vmul.f32 %v2854, %v2893
      %v2913 = vmul.f32 %v2857, %v2893
      %v2914 = vmul.f32 %v2859, %v2893
      %v2915 = vmul.f32 %v2862, %v2893
      %v2916 = vmul.f32 %v2864, %v2893
      %v2917 = vmul.f32 %v2867, %v2893
      %v2918 = vmul.f32 %v2869, %v2893
      %v2919 = vmul.f32 %v2872, %v2893
      %v2920 = vmul.f32 %v2874, %v2893
      %v2921 = vmul.f32 %v2877, %v2893
      %v2922 = vmul.f32 %v2879, %v2893
      %v2923 = vmul.f32 %v2882, %v2893
      %v2924 = vmul.f32 %v2884, %v2893
      %v2925 = vmul.f32 %v2887, %v2893
      %v2926 = vmul.f32 %v2889, %v2893
      %v2927 = vld [vmem:[%s3] sm:$0x1]
      %v2929 = vperm.slane %v2927, 0
      %v2931 = vadd.f32 %v2895, %v2929
      %v2932 = vadd.f32 %v2896, %v2929
      %v2933 = vadd.f32 %v2897, %v2929
      %v2934 = vadd.f32 %v2898, %v2929
      %v2935 = vadd.f32 %v2899, %v2929
      %v2936 = vadd.f32 %v2900, %v2929
      %v2937 = vadd.f32 %v2901, %v2929
      %v2938 = vadd.f32 %v2902, %v2929
      %v2939 = vadd.f32 %v2903, %v2929
      %v2940 = vadd.f32 %v2904, %v2929
      %v2941 = vadd.f32 %v2905, %v2929
      %v2942 = vadd.f32 %v2906, %v2929
      %v2943 = vadd.f32 %v2907, %v2929
      %v2944 = vadd.f32 %v2908, %v2929
      %v2945 = vadd.f32 %v2909, %v2929
      %v2946 = vadd.f32 %v2910, %v2929
      %v2947 = vadd.f32 %v2911, %v2929
      %v2948 = vadd.f32 %v2912, %v2929
      %v2949 = vadd.f32 %v2913, %v2929
      %v2950 = vadd.f32 %v2914, %v2929
      %v2951 = vadd.f32 %v2915, %v2929
      %v2952 = vadd.f32 %v2916, %v2929
      %v2953 = vadd.f32 %v2917, %v2929
      %v2954 = vadd.f32 %v2918, %v2929
      %v2955 = vadd.f32 %v2919, %v2929
      %v2956 = vadd.f32 %v2920, %v2929
      %v2957 = vadd.f32 %v2921, %v2929
      %v2958 = vadd.f32 %v2922, %v2929
      %v2959 = vadd.f32 %v2923, %v2929
      %v2960 = vadd.f32 %v2924, %v2929
      %v2961 = vadd.f32 %v2925, %v2929
      %v2962 = vadd.f32 %v2926, %v2929
      %v2963 = vmax.f32 %v2931, 0.0
      %v2964 = vmax.f32 %v2932, 0.0
      %v2965 = vmax.f32 %v2933, 0.0
      %v2966 = vmax.f32 %v2934, 0.0
      %v2967 = vmax.f32 %v2935, 0.0
      %v2968 = vmax.f32 %v2936, 0.0
      %v2969 = vmax.f32 %v2937, 0.0
      %v2970 = vmax.f32 %v2938, 0.0
      %v2971 = vmax.f32 %v2939, 0.0
      %v2972 = vmax.f32 %v2940, 0.0
      %v2973 = vmax.f32 %v2941, 0.0
      %v2974 = vmax.f32 %v2942, 0.0
      %v2975 = vmax.f32 %v2943, 0.0
      %v2976 = vmax.f32 %v2944, 0.0
      %v2977 = vmax.f32 %v2945, 0.0
      %v2978 = vmax.f32 %v2946, 0.0
      %v2979 = vmax.f32 %v2947, 0.0
      %v2980 = vmax.f32 %v2948, 0.0
      %v2981 = vmax.f32 %v2949, 0.0
      %v2982 = vmax.f32 %v2950, 0.0
      %v2983 = vmax.f32 %v2951, 0.0
      %v2984 = vmax.f32 %v2952, 0.0
      %v2985 = vmax.f32 %v2953, 0.0
      %v2986 = vmax.f32 %v2954, 0.0
      %v2987 = vmax.f32 %v2955, 0.0
      %v2988 = vmax.f32 %v2956, 0.0
      %v2989 = vmax.f32 %v2957, 0.0
      %v2990 = vmax.f32 %v2958, 0.0
      %v2991 = vmax.f32 %v2959, 0.0
      %v2992 = vmax.f32 %v2960, 0.0
      %v2993 = vmax.f32 %v2961, 0.0
      %v2994 = vmax.f32 %v2962, 0.0
      %vm2995 = vcmask 261120
      %2996 = vst.msk [vmem:[%s197] sm:$0xff] %vm2995, %v2963
      %2997 = vst.msk [vmem:[%s197 + $0x8] sm:$0xff] %vm2995, %v2964
      %2998 = vst.msk [vmem:[%s197 + $0x10] sm:$0xff] %vm2995, %v2965
      %2999 = vst.msk [vmem:[%s197 + $0x18] sm:$0xff] %vm2995, %v2966
      %3000 = vst.msk [vmem:[%s197 + $0x20] sm:$0xff] %vm2995, %v2967
      %3001 = vst.msk [vmem:[%s197 + $0x28] sm:$0xff] %vm2995, %v2968
      %3002 = vst.msk [vmem:[%s197 + $0x30] sm:$0xff] %vm2995, %v2969
      %3003 = vst.msk [vmem:[%s197 + $0x38] sm:$0xff] %vm2995, %v2970
      %3004 = vst.msk [vmem:[%s197 + $0x40] sm:$0xff] %vm2995, %v2971
      %3005 = vst.msk [vmem:[%s197 + $0x48] sm:$0xff] %vm2995, %v2972
      %3006 = vst.msk [vmem:[%s197 + $0x50] sm:$0xff] %vm2995, %v2973
      %3007 = vst.msk [vmem:[%s197 + $0x58] sm:$0xff] %vm2995, %v2974
      %3008 = vst.msk [vmem:[%s197 + $0x60] sm:$0xff] %vm2995, %v2975
      %3009 = vst.msk [vmem:[%s197 + $0x68] sm:$0xff] %vm2995, %v2976
      %3010 = vst.msk [vmem:[%s197 + $0x70] sm:$0xff] %vm2995, %v2977
      %3011 = vst.msk [vmem:[%s197 + $0x78] sm:$0xff] %vm2995, %v2978
      %3012 = vst.msk [vmem:[%s197 + $0x80] sm:$0xff] %vm2995, %v2979
      %3013 = vst.msk [vmem:[%s197 + $0x88] sm:$0xff] %vm2995, %v2980
      %3014 = vst.msk [vmem:[%s197 + $0x90] sm:$0xff] %vm2995, %v2981
      %3015 = vst.msk [vmem:[%s197 + $0x98] sm:$0xff] %vm2995, %v2982
      %3016 = vst.msk [vmem:[%s197 + $0xa0] sm:$0xff] %vm2995, %v2983
      %3017 = vst.msk [vmem:[%s197 + $0xa8] sm:$0xff] %vm2995, %v2984
      %3018 = vst.msk [vmem:[%s197 + $0xb0] sm:$0xff] %vm2995, %v2985
      %3019 = vst.msk [vmem:[%s197 + $0xb8] sm:$0xff] %vm2995, %v2986
      %3020 = vst.msk [vmem:[%s197 + $0xc0] sm:$0xff] %vm2995, %v2987
      %3021 = vst.msk [vmem:[%s197 + $0xc8] sm:$0xff] %vm2995, %v2988
      %3022 = vst.msk [vmem:[%s197 + $0xd0] sm:$0xff] %vm2995, %v2989
      %3023 = vst.msk [vmem:[%s197 + $0xd8] sm:$0xff] %vm2995, %v2990
      %3024 = vst.msk [vmem:[%s197 + $0xe0] sm:$0xff] %vm2995, %v2991
      %3025 = vst.msk [vmem:[%s197 + $0xe8] sm:$0xff] %vm2995, %v2992
      %3026 = vst.msk [vmem:[%s197 + $0xf0] sm:$0xff] %vm2995, %v2993
      %3027 = vst.msk [vmem:[%s197 + $0xf8] sm:$0xff] %vm2995, %v2994
      %p3028 = scmp.lt.s32.totalorder %s15, 1
      %s3029 = scalar_select %p3028, %s15, 1
      %s3030 = smul.addr %s3029, 32
      %s3031 = smul.addr %s3030, 8
      %s3032 = scalar_lea.vmem %s4, %s3031
      // Predicated region
      $region37: #{small_encoder_forward.7} parent=35 // pred_check
        %p3033 = pneg %p122
      $region38: #{small_encoder_forward.7} parent=35 // pred_check_branch
        %3035 = sbr.rel (%p3033) target = $region40
      $region39: #{small_encoder_forward.7} parent=35 // pred_region
        _
      $region40: #{small_encoder_forward.7} parent=35 // pred_fallthru
        _
    $region36: #{small_encoder_forward.7} parent=5 // pred_fallthru
      _
    %p3036 = scmp.le.s32.totalorder 2, %s10
    // Predicated region
    $region41: #{small_encoder_forward.7} parent=5 // pred_check
      %p3037 = pneg %p3036
    $region42: #{small_encoder_forward.7} parent=5 // pred_check_branch
      %3039 = sbr.rel (%p3037) target = $region44
    $region43: #{small_encoder_forward.7} parent=5 // pred_region
      %s3040 = ssub.s32 %s10, 2
      // Predicated region
      $region45: #{small_encoder_forward.7} parent=43 // pred_check
        %p3041 = pneg %p128
      $region46: #{small_encoder_forward.7} parent=43 // pred_check_branch
        %3043 = sbr.rel (%p3041) target = $region48
      $region47: #{small_encoder_forward.7} parent=43 // pred_region
        %p3044 = scmp.lt.s32.totalorder %s16, 1
        %s3045 = scalar_select %p3044, %s16, 1
        %s3046 = smul.addr %s3045, 32
        %s3047 = smul.addr %s3046, 8
        %s3048 = scalar_lea.vmem %s4, %s3047
      $region48: #{small_encoder_forward.7} parent=43 // pred_fallthru
        _
    $region44: #{small_encoder_forward.7} parent=5 // pred_fallthru
      _
  $region6: #{small_encoder_forward.7} parent=0 // loop_footer
    %s14 = sadd.s32 1, %s10
  $region7: #{small_encoder_forward.7} parent=0 // loop_footer_branch
    %9 = sbr.rel target = $region3
  $region8: #{small_encoder_forward.7} parent=0 // loop_exit
    _

// kernel: small_encoder_forward.8
$region0: #{small_encoder_forward.8}
  #allocation0 [shape = 'u32[]', space=smem, size = 0x4, offset = 0x4, fixed_abs, tag = 'smem constant byte address 0x4 - core index']
  #allocation1 [shape = 'u32[72,128]{1,0:T(1,128)}', space=vmem, size = 0x9000, scoped, tag = 'internal scratch']
  #allocation2 [shape = 'f32[18,18,8]{2,1,0:T(8,128)}', space=vmem, size = 0x36000, scoped, tag = 'scratch operand']
  %s0 = inlined_call_operand.vmem [shape: f32[2,16,16,32], index: 0, kind: input, shape index: {}]
  %s1 = inlined_call_operand.vmem [shape: bf16[32,8], index: 1, kind: input, shape index: {}]
  %s2 = inlined_call_operand.vmem [shape: f32[1,8], index: 2, kind: input, shape index: {}]
  %s3 = inlined_call_operand.vmem [shape: f32[1,8], index: 3, kind: input, shape index: {}]
  %s4 = inlined_call_operand.vmem [shape: bf16[72,8], index: 4, kind: input, shape index: {}]
  %s5 = inlined_call_operand.vmem [shape: f32[1,8], index: 5, kind: input, shape index: {}]
  %s6 = inlined_call_operand.vmem [shape: f32[1,8], index: 6, kind: input, shape index: {}]
  %s7 = inlined_call_operand.vmem [shape: bf16[8,32], index: 7, kind: input, shape index: {}]
  %s8 = inlined_call_operand.vmem [shape: f32[1,32], index: 8, kind: input, shape index: {}]
  %s9 = inlined_call_operand.vmem [shape: f32[1,32], index: 9, kind: input, shape index: {}]
  %s10 = inlined_call_operand.vmem [shape: f32[2,16,16,32], index: 10, kind: output, shape index: {}]
  %s11 = sld [smem:[#allocation0]]
  $region73: #{small_encoder_forward.8} parent=0
    _
  %s13 = ssub.s32 1, %s11
  %s14 = scalar_select 0, %s13, %s11
  loop: start=0, step=1, limit=4
  $region2: #{small_encoder_forward.8} parent=0 // loop_pre_header
    _
  $region3: #{small_encoder_forward.8} parent=0 // loop_header
    %s16 = sphi 0, %s20
    %p17 = scmp.ge.s32.totalorder %s16, 4
    %s26 = sphi 0, %s28
    %s29 = sphi 0, %s26
    %s30 = sphi 0, %s29
    %s46 = sphi 0, %s30
    %s50 = sphi 0, %s50
    %s52 = sphi 0, %s50
    %s53 = sphi 0, %s52
    %s67 = sphi 0, %s53
    %s71 = sphi 0, %s71
    %s73 = sphi 0, %s71
    %s74 = sphi 0, %s73
    %s88 = sphi 0, %s74
    %s92 = sphi 0, %s92
    %s94 = sphi 0, %s92
    %s95 = sphi 0, %s94
    %s109 = sphi 0, %s95
    %s113 = sphi 0, %s113
    %s115 = sphi 0, %s113
    %s116 = sphi 0, %s115
    %s130 = sphi 0, %s116
    %s134 = sphi 0, %s134
    %s136 = sphi 0, %s134
    %s137 = sphi 0, %s136
    %s151 = sphi 0, %s137
    %s155 = sphi 0, %s155
    %s157 = sphi 0, %s155
    %s158 = sphi 0, %s157
    %s172 = sphi 0, %s158
    %s176 = sphi 0, %s176
    %s178 = sphi 0, %s176
    %s179 = sphi 0, %s178
    %s193 = sphi 0, %s179
    %s197 = sphi 0, %s197
    %s199 = sphi 0, %s197
    %s200 = sphi 0, %s199
    %s214 = sphi 0, %s200
    %s218 = sphi 0, %s218
    %s220 = sphi 0, %s218
    %s221 = sphi 0, %s220
    %s235 = sphi 0, %s221
    %s241 = sphi 0, %s243
    %s244 = sphi 0, %s241
    %s245 = sphi 0, %s244
    %s261 = sphi 0, %s245
  $region4: #{small_encoder_forward.8} parent=0 // loop_header_branch
    %19 = sbr.rel (%p17) target = $region8
  $region5: #{small_encoder_forward.8} parent=0 // loop_body
    %s21 = ssub.s32 %s16, 1
    %s22 = ssub.s32 %s16, 2
    %s23 = sadd.s32 %s16, 1
    %s24 = ssub.s32 %s16, %s23
    %p25 = scmp.eq.s32.totalorder %s24, 0
    %s27 = sadd.s32 %s26, 1
    %s28 = scalar_select %p25, %s26, %s27
    %p31 = pneg %p25
    %p32 = scmp.eq.s32.totalorder %s16, 1
    %p33 = por %p31, %p32
    %p34 = scmp.ne.s32.totalorder %s26, %s29
    %p35 = scmp.eq.s32.totalorder %s16, 0
    %p36 = por %p34, %p35
    %p37 = scmp.ne.s32.totalorder %s26, %s29
    %p38 = scmp.eq.s32.totalorder %s21, 1
    %p39 = por %p37, %p38
    %p40 = scmp.ne.s32.totalorder %s29, %s30
    %p41 = scmp.eq.s32.totalorder %s21, 0
    %p42 = por %p40, %p41
    %p43 = scmp.ne.s32.totalorder %s29, %s30
    %p44 = scmp.eq.s32.totalorder %s22, 1
    %p45 = por %p43, %p44
    %p47 = scmp.ne.s32.totalorder %s30, %s46
    %p48 = scmp.eq.s32.totalorder %s22, 0
    %p49 = por %p47, %p48
    %s51 = sadd.s32 %s50, 1
    %p54 = scmp.eq.s32.totalorder %s16, 1
    %p55 = scmp.ne.s32.totalorder %s50, %s52
    %p56 = scmp.eq.s32.totalorder %s16, 0
    %p57 = por %p55, %p56
    %p58 = scmp.ne.s32.totalorder %s50, %s52
    %p59 = scmp.eq.s32.totalorder %s21, 1
    %p60 = por %p58, %p59
    %p61 = scmp.ne.s32.totalorder %s52, %s53
    %p62 = scmp.eq.s32.totalorder %s21, 0
    %p63 = por %p61, %p62
    %p64 = scmp.ne.s32.totalorder %s52, %s53
    %p65 = scmp.eq.s32.totalorder %s22, 1
    %p66 = por %p64, %p65
    %p68 = scmp.ne.s32.totalorder %s53, %s67
    %p69 = scmp.eq.s32.totalorder %s22, 0
    %p70 = por %p68, %p69
    %s72 = sadd.s32 %s71, 1
    %p75 = scmp.eq.s32.totalorder %s16, 1
    %p76 = scmp.ne.s32.totalorder %s71, %s73
    %p77 = scmp.eq.s32.totalorder %s16, 0
    %p78 = por %p76, %p77
    %p79 = scmp.ne.s32.totalorder %s71, %s73
    %p80 = scmp.eq.s32.totalorder %s21, 1
    %p81 = por %p79, %p80
    %p82 = scmp.ne.s32.totalorder %s73, %s74
    %p83 = scmp.eq.s32.totalorder %s21, 0
    %p84 = por %p82, %p83
    %p85 = scmp.ne.s32.totalorder %s73, %s74
    %p86 = scmp.eq.s32.totalorder %s22, 1
    %p87 = por %p85, %p86
    %p89 = scmp.ne.s32.totalorder %s74, %s88
    %p90 = scmp.eq.s32.totalorder %s22, 0
    %p91 = por %p89, %p90
    %s93 = sadd.s32 %s92, 1
    %p96 = scmp.eq.s32.totalorder %s16, 1
    %p97 = scmp.ne.s32.totalorder %s92, %s94
    %p98 = scmp.eq.s32.totalorder %s16, 0
    %p99 = por %p97, %p98
    %p100 = scmp.ne.s32.totalorder %s92, %s94
    %p101 = scmp.eq.s32.totalorder %s21, 1
    %p102 = por %p100, %p101
    %p103 = scmp.ne.s32.totalorder %s94, %s95
    %p104 = scmp.eq.s32.totalorder %s21, 0
    %p105 = por %p103, %p104
    %p106 = scmp.ne.s32.totalorder %s94, %s95
    %p107 = scmp.eq.s32.totalorder %s22, 1
    %p108 = por %p106, %p107
    %p110 = scmp.ne.s32.totalorder %s95, %s109
    %p111 = scmp.eq.s32.totalorder %s22, 0
    %p112 = por %p110, %p111
    %s114 = sadd.s32 %s113, 1
    %p117 = scmp.eq.s32.totalorder %s16, 1
    %p118 = scmp.ne.s32.totalorder %s113, %s115
    %p119 = scmp.eq.s32.totalorder %s16, 0
    %p120 = por %p118, %p119
    %p121 = scmp.ne.s32.totalorder %s113, %s115
    %p122 = scmp.eq.s32.totalorder %s21, 1
    %p123 = por %p121, %p122
    %p124 = scmp.ne.s32.totalorder %s115, %s116
    %p125 = scmp.eq.s32.totalorder %s21, 0
    %p126 = por %p124, %p125
    %p127 = scmp.ne.s32.totalorder %s115, %s116
    %p128 = scmp.eq.s32.totalorder %s22, 1
    %p129 = por %p127, %p128
    %p131 = scmp.ne.s32.totalorder %s116, %s130
    %p132 = scmp.eq.s32.totalorder %s22, 0
    %p133 = por %p131, %p132
    %s135 = sadd.s32 %s134, 1
    %p138 = scmp.eq.s32.totalorder %s16, 1
    %p139 = scmp.ne.s32.totalorder %s134, %s136
    %p140 = scmp.eq.s32.totalorder %s16, 0
    %p141 = por %p139, %p140
    %p142 = scmp.ne.s32.totalorder %s134, %s136
    %p143 = scmp.eq.s32.totalorder %s21, 1
    %p144 = por %p142, %p143
    %p145 = scmp.ne.s32.totalorder %s136, %s137
    %p146 = scmp.eq.s32.totalorder %s21, 0
    %p147 = por %p145, %p146
    %p148 = scmp.ne.s32.totalorder %s136, %s137
    %p149 = scmp.eq.s32.totalorder %s22, 1
    %p150 = por %p148, %p149
    %p152 = scmp.ne.s32.totalorder %s137, %s151
    %p153 = scmp.eq.s32.totalorder %s22, 0
    %p154 = por %p152, %p153
    %s156 = sadd.s32 %s155, 1
    %p159 = scmp.eq.s32.totalorder %s16, 1
    %p160 = scmp.ne.s32.totalorder %s155, %s157
    %p161 = scmp.eq.s32.totalorder %s16, 0
    %p162 = por %p160, %p161
    %p163 = scmp.ne.s32.totalorder %s155, %s157
    %p164 = scmp.eq.s32.totalorder %s21, 1
    %p165 = por %p163, %p164
    %p166 = scmp.ne.s32.totalorder %s157, %s158
    %p167 = scmp.eq.s32.totalorder %s21, 0
    %p168 = por %p166, %p167
    %p169 = scmp.ne.s32.totalorder %s157, %s158
    %p170 = scmp.eq.s32.totalorder %s22, 1
    %p171 = por %p169, %p170
    %p173 = scmp.ne.s32.totalorder %s158, %s172
    %p174 = scmp.eq.s32.totalorder %s22, 0
    %p175 = por %p173, %p174
    %s177 = sadd.s32 %s176, 1
    %p180 = scmp.eq.s32.totalorder %s16, 1
    %p181 = scmp.ne.s32.totalorder %s176, %s178
    %p182 = scmp.eq.s32.totalorder %s16, 0
    %p183 = por %p181, %p182
    %p184 = scmp.ne.s32.totalorder %s176, %s178
    %p185 = scmp.eq.s32.totalorder %s21, 1
    %p186 = por %p184, %p185
    %p187 = scmp.ne.s32.totalorder %s178, %s179
    %p188 = scmp.eq.s32.totalorder %s21, 0
    %p189 = por %p187, %p188
    %p190 = scmp.ne.s32.totalorder %s178, %s179
    %p191 = scmp.eq.s32.totalorder %s22, 1
    %p192 = por %p190, %p191
    %p194 = scmp.ne.s32.totalorder %s179, %s193
    %p195 = scmp.eq.s32.totalorder %s22, 0
    %p196 = por %p194, %p195
    %s198 = sadd.s32 %s197, 1
    %p201 = scmp.eq.s32.totalorder %s16, 1
    %p202 = scmp.ne.s32.totalorder %s197, %s199
    %p203 = scmp.eq.s32.totalorder %s16, 0
    %p204 = por %p202, %p203
    %p205 = scmp.ne.s32.totalorder %s197, %s199
    %p206 = scmp.eq.s32.totalorder %s21, 1
    %p207 = por %p205, %p206
    %p208 = scmp.ne.s32.totalorder %s199, %s200
    %p209 = scmp.eq.s32.totalorder %s21, 0
    %p210 = por %p208, %p209
    %p211 = scmp.ne.s32.totalorder %s199, %s200
    %p212 = scmp.eq.s32.totalorder %s22, 1
    %p213 = por %p211, %p212
    %p215 = scmp.ne.s32.totalorder %s200, %s214
    %p216 = scmp.eq.s32.totalorder %s22, 0
    %p217 = por %p215, %p216
    %s219 = sadd.s32 %s218, 1
    %p222 = scmp.eq.s32.totalorder %s16, 1
    %p223 = scmp.ne.s32.totalorder %s218, %s220
    %p224 = scmp.eq.s32.totalorder %s16, 0
    %p225 = por %p223, %p224
    %p226 = scmp.ne.s32.totalorder %s218, %s220
    %p227 = scmp.eq.s32.totalorder %s21, 1
    %p228 = por %p226, %p227
    %p229 = scmp.ne.s32.totalorder %s220, %s221
    %p230 = scmp.eq.s32.totalorder %s21, 0
    %p231 = por %p229, %p230
    %p232 = scmp.ne.s32.totalorder %s220, %s221
    %p233 = scmp.eq.s32.totalorder %s22, 1
    %p234 = por %p232, %p233
    %p236 = scmp.ne.s32.totalorder %s221, %s235
    %p237 = scmp.eq.s32.totalorder %s22, 0
    %p238 = por %p236, %p237
    %s239 = ssub.s32 %s16, %s23
    %p240 = scmp.eq.s32.totalorder %s239, 0
    %s242 = sadd.s32 %s241, 1
    %s243 = scalar_select %p240, %s241, %s242
    %p246 = pneg %p240
    %p247 = scmp.eq.s32.totalorder %s16, 1
    %p248 = por %p246, %p247
    %p249 = scmp.ne.s32.totalorder %s241, %s244
    %p250 = scmp.eq.s32.totalorder %s16, 0
    %p251 = por %p249, %p250
    %p252 = scmp.ne.s32.totalorder %s241, %s244
    %p253 = scmp.eq.s32.totalorder %s21, 1
    %p254 = por %p252, %p253
    %p255 = scmp.ne.s32.totalorder %s244, %s245
    %p256 = scmp.eq.s32.totalorder %s21, 0
    %p257 = por %p255, %p256
    %p258 = scmp.ne.s32.totalorder %s244, %s245
    %p259 = scmp.eq.s32.totalorder %s22, 1
    %p260 = por %p258, %p259
    %p262 = scmp.ne.s32.totalorder %s245, %s261
    %p263 = scmp.eq.s32.totalorder %s22, 0
    %p264 = por %p262, %p263
    %p265 = scmp.le.s32.totalorder 1, %s16
    %p266 = scmp.lt.s32.totalorder %s16, 3
    %p267 = pnand %p265, %p266
    %p268 = pneg %p267
    // Predicated region
    $region9: #{small_encoder_forward.8} parent=5 // pred_check
      _
    $region10: #{small_encoder_forward.8} parent=5 // pred_check_branch
      %270 = sbr.rel (%p267) target = $region12
    $region11: #{small_encoder_forward.8} parent=5 // pred_region
      %s271 = ssub.s32 %s16, 1
      // Predicated region
      $region13: #{small_encoder_forward.8} parent=11 // pred_check
        %p272 = pneg %p63
      $region14: #{small_encoder_forward.8} parent=11 // pred_check_branch
        %274 = sbr.rel (%p272) target = $region16
      $region15: #{small_encoder_forward.8} parent=11 // pred_region
        _
      $region16: #{small_encoder_forward.8} parent=11 // pred_fallthru
        _
      // Predicated region
      $region17: #{small_encoder_forward.8} parent=11 // pred_check
        %p275 = pneg %p84
      $region18: #{small_encoder_forward.8} parent=11 // pred_check_branch
        %277 = sbr.rel (%p275) target = $region20
      $region19: #{small_encoder_forward.8} parent=11 // pred_region
        _
      $region20: #{small_encoder_forward.8} parent=11 // pred_fallthru
        _
      // Predicated region
      $region21: #{small_encoder_forward.8} parent=11 // pred_check
        %p278 = pneg %p105
      $region22: #{small_encoder_forward.8} parent=11 // pred_check_branch
        %280 = sbr.rel (%p278) target = $region24
      $region23: #{small_encoder_forward.8} parent=11 // pred_region
        _
      $region24: #{small_encoder_forward.8} parent=11 // pred_fallthru
        _
      // Predicated region
      $region25: #{small_encoder_forward.8} parent=11 // pred_check
        %p281 = pneg %p126
      $region26: #{small_encoder_forward.8} parent=11 // pred_check_branch
        %283 = sbr.rel (%p281) target = $region28
      $region27: #{small_encoder_forward.8} parent=11 // pred_region
        _
      $region28: #{small_encoder_forward.8} parent=11 // pred_fallthru
        _
      // Predicated region
      $region29: #{small_encoder_forward.8} parent=11 // pred_check
        %p284 = pneg %p147
      $region30: #{small_encoder_forward.8} parent=11 // pred_check_branch
        %286 = sbr.rel (%p284) target = $region32
      $region31: #{small_encoder_forward.8} parent=11 // pred_region
        _
      $region32: #{small_encoder_forward.8} parent=11 // pred_fallthru
        _
      // Predicated region
      $region33: #{small_encoder_forward.8} parent=11 // pred_check
        %p287 = pneg %p168
      $region34: #{small_encoder_forward.8} parent=11 // pred_check_branch
        %289 = sbr.rel (%p287) target = $region36
      $region35: #{small_encoder_forward.8} parent=11 // pred_region
        _
      $region36: #{small_encoder_forward.8} parent=11 // pred_fallthru
        _
      // Predicated region
      $region37: #{small_encoder_forward.8} parent=11 // pred_check
        %p290 = pneg %p189
      $region38: #{small_encoder_forward.8} parent=11 // pred_check_branch
        %292 = sbr.rel (%p290) target = $region40
      $region39: #{small_encoder_forward.8} parent=11 // pred_region
        _
      $region40: #{small_encoder_forward.8} parent=11 // pred_fallthru
        _
      // Predicated region
      $region41: #{small_encoder_forward.8} parent=11 // pred_check
        %p293 = pneg %p210
      $region42: #{small_encoder_forward.8} parent=11 // pred_check_branch
        %295 = sbr.rel (%p293) target = $region44
      $region43: #{small_encoder_forward.8} parent=11 // pred_region
        _
      $region44: #{small_encoder_forward.8} parent=11 // pred_fallthru
        _
      // Predicated region
      $region45: #{small_encoder_forward.8} parent=11 // pred_check
        %p296 = pneg %p231
      $region46: #{small_encoder_forward.8} parent=11 // pred_check_branch
        %298 = sbr.rel (%p296) target = $region48
      $region47: #{small_encoder_forward.8} parent=11 // pred_region
        _
      $region48: #{small_encoder_forward.8} parent=11 // pred_fallthru
        _
    $region12: #{small_encoder_forward.8} parent=5 // pred_fallthru
      _
    %p299 = scmp.lt.s32.totalorder %s16, 2
    // Predicated region
    $region49: #{small_encoder_forward.8} parent=5 // pred_check
      %p300 = pneg %p299
    $region50: #{small_encoder_forward.8} parent=5 // pred_check_branch
      %302 = sbr.rel (%p300) target = $region52
    $region51: #{small_encoder_forward.8} parent=5 // pred_region
      // Predicated region
      $region53: #{small_encoder_forward.8} parent=51 // pred_check
        %p303 = pneg %p36
      $region54: #{small_encoder_forward.8} parent=51 // pred_check_branch
        %305 = sbr.rel (%p303) target = $region56
      $region55: #{small_encoder_forward.8} parent=51 // pred_region
        %p306 = scmp.lt.s32.totalorder %s16, 1
        %s307 = scalar_select %p306, %s16, 1
        %s308 = smul.addr %s307, 32
        %s309 = smul.addr %s308, 8
        %s310 = scalar_lea.vmem %s0, %s309
      $region56: #{small_encoder_forward.8} parent=51 // pred_fallthru
        _
    $region52: #{small_encoder_forward.8} parent=5 // pred_fallthru
      _
    %p311 = scmp.le.s32.totalorder 1, %s16
    %p312 = scmp.lt.s32.totalorder %s16, 3
    %p313 = pnand %p311, %p312
    %p314 = pneg %p313
    // Predicated region
    $region57: #{small_encoder_forward.8} parent=5 // pred_check
      _
    $region58: #{small_encoder_forward.8} parent=5 // pred_check_branch
      %316 = sbr.rel (%p313) target = $region60
    $region59: #{small_encoder_forward.8} parent=5 // pred_region
      %s317 = ssub.s32 %s16, 1
      %p318 = scmp.lt.s32.totalorder %s21, 1
      %s319 = scalar_select %p318, %s21, 1
      %s320 = smul.addr %s319, 32
      %s321 = smul.addr %s320, 8
      %s322 = scalar_lea.vmem %s0, %s321
      %p323 = pneg %p42
      %p324 = pneg %p39
      %p325 = pneg %p63
      %p326 = pneg %p60
      %p327 = pneg %p84
      %p328 = pneg %p81
      %p329 = pneg %p105
      %p330 = pneg %p102
      %p331 = pneg %p126
      %p332 = pneg %p123
      %p333 = pneg %p147
      %p334 = pneg %p144
      %p335 = pneg %p168
      %p336 = pneg %p165
      %p337 = pneg %p189
      %p338 = pneg %p186
      %p339 = pneg %p210
      %p340 = pneg %p207
      %p341 = pneg %p231
      %p342 = pneg %p228
      %p343 = pneg %p257
      %p344 = pneg %p254
      %p345 = scmp.lt.s32.totalorder %s21, 1
      %s346 = scalar_select %p345, %s21, 1
      %s347 = smul.addr %s346, 32
      %s348 = smul.addr %s347, 8
      %s349 = scalar_lea.vmem %s10, %s348
      %p350 = scmp.lt.s32.totalorder %s21, 1
      %s351 = scalar_select %p350, %s21, 1
      %s352 = smul.addr %s351, 32
      %s353 = smul.addr %s352, 8
      %s354 = scalar_lea.vmem %s0, %s353
      %p355 = scmp.lt.s32.totalorder %s21, 1
      %s356 = scalar_select %p355, %s21, 1
      %s357 = smul.addr %s356, 32
      %s358 = smul.addr %s357, 8
      %s359 = scalar_lea.vmem %s10, %s358
      %v361 = vld [vmem:[%s354] sm:$0xff]
      %v362 = vld [vmem:[%s354 + $0x8] sm:$0xff]
      %v363 = vld [vmem:[%s354 + $0x10] sm:$0xff]
      %v364 = vld [vmem:[%s354 + $0x18] sm:$0xff]
      %v365 = vld [vmem:[%s354 + $0x20] sm:$0xff]
      %v366 = vld [vmem:[%s354 + $0x28] sm:$0xff]
      %v367 = vld [vmem:[%s354 + $0x30] sm:$0xff]
      %v368 = vld [vmem:[%s354 + $0x38] sm:$0xff]
      %v369 = vld [vmem:[%s354 + $0x40] sm:$0xff]
      %v370 = vld [vmem:[%s354 + $0x48] sm:$0xff]
      %v371 = vld [vmem:[%s354 + $0x50] sm:$0xff]
      %v372 = vld [vmem:[%s354 + $0x58] sm:$0xff]
      %v373 = vld [vmem:[%s354 + $0x60] sm:$0xff]
      %v374 = vld [vmem:[%s354 + $0x68] sm:$0xff]
      %v375 = vld [vmem:[%s354 + $0x70] sm:$0xff]
      %v376 = vld [vmem:[%s354 + $0x78] sm:$0xff]
      %v377 = vld [vmem:[%s354 + $0x80] sm:$0xff]
      %v378 = vld [vmem:[%s354 + $0x88] sm:$0xff]
      %v379 = vld [vmem:[%s354 + $0x90] sm:$0xff]
      %v380 = vld [vmem:[%s354 + $0x98] sm:$0xff]
      %v381 = vld [vmem:[%s354 + $0xa0] sm:$0xff]
      %v382 = vld [vmem:[%s354 + $0xa8] sm:$0xff]
      %v383 = vld [vmem:[%s354 + $0xb0] sm:$0xff]
      %v384 = vld [vmem:[%s354 + $0xb8] sm:$0xff]
      %v385 = vld [vmem:[%s354 + $0xc0] sm:$0xff]
      %v386 = vld [vmem:[%s354 + $0xc8] sm:$0xff]
      %v387 = vld [vmem:[%s354 + $0xd0] sm:$0xff]
      %v388 = vld [vmem:[%s354 + $0xd8] sm:$0xff]
      %v389 = vld [vmem:[%s354 + $0xe0] sm:$0xff]
      %v390 = vld [vmem:[%s354 + $0xe8] sm:$0xff]
      %v391 = vld [vmem:[%s354 + $0xf0] sm:$0xff]
      %v392 = vld [vmem:[%s354 + $0xf8] sm:$0xff]
      %v393 = vpack.c.bf16 %v362, %v361
      %v394 = vpack.c.bf16 %v364, %v363
      %v395 = vpack.c.bf16 %v366, %v365
      %v396 = vpack.c.bf16 %v368, %v367
      %v397 = vpack.c.bf16 %v370, %v369
      %v398 = vpack.c.bf16 %v372, %v371
      %v399 = vpack.c.bf16 %v374, %v373
      %v400 = vpack.c.bf16 %v376, %v375
      %v401 = vpack.c.bf16 %v378, %v377
      %v402 = vpack.c.bf16 %v380, %v379
      %v403 = vpack.c.bf16 %v382, %v381
      %v404 = vpack.c.bf16 %v384, %v383
      %v405 = vpack.c.bf16 %v386, %v385
      %v406 = vpack.c.bf16 %v388, %v387
      %v407 = vpack.c.bf16 %v390, %v389
      %v408 = vpack.c.bf16 %v392, %v391
      %v409 = vld [vmem:[%s1] sm:$0xf]
      %v410 = vld [vmem:[%s1 + $0x4] sm:$0xf]
      %v411 = vld [vmem:[%s1 + $0x8] sm:$0xf]
      %v412 = vld [vmem:[%s1 + $0xc] sm:$0xf]
      %v417 = vunpack.c.l.b16 %v409
      %v418 = vunpack.c.l.b16 %v410
      %v419 = vunpack.c.l.b16 %v411
      %v420 = vunpack.c.l.b16 %v412
      %v421 = vpack.c.b16 %v418, %v417
      %v422 = vpack.c.b16 %v420, %v419
      %vm425 = vcmask 261120
      %v427 = vsel %vm425, %v393, 0
      %v430 = vsel %vm425, %v394, 0
      %v433 = vsel %vm425, %v395, 0
      %v436 = vsel %vm425, %v396, 0
      %v439 = vsel %vm425, %v397, 0
      %v442 = vsel %vm425, %v398, 0
      %v445 = vsel %vm425, %v399, 0
      %v448 = vsel %vm425, %v400, 0
      %v451 = vsel %vm425, %v401, 0
      %v454 = vsel %vm425, %v402, 0
      %v457 = vsel %vm425, %v403, 0
      %v460 = vsel %vm425, %v404, 0
      %v463 = vsel %vm425, %v405, 0
      %v466 = vsel %vm425, %v406, 0
      %v469 = vsel %vm425, %v407, 0
      %v472 = vsel %vm425, %v408, 0
      %474 = vmatpush.bf16.msra.mxu0 0
      %475 = vmatpush.bf16.msra.mxu0 0
      %476 = vmatpush.bf16.msra.mxu0 0
      %477 = vmatpush.bf16.msra.mxu0 0
      %478 = vmatpush.bf16.msra.mxu0 0
      %479 = vmatpush.bf16.msra.mxu0 0
      %480 = vmatpush.bf16.msra.mxu0 %v422
      %481 = vmatpush.bf16.msra.mxu0 %v421
      %482 = vmatmul.bf16.gmra.mxu0 %v427
      %v483 = vpop.f32.mrf.mxu0
      %v484 = vadd.f32 0.0, %v483
      %v485 = vpop.f32.mrf.mxu0
      %v486 = vadd.f32 0.0, %v485
      %487 = vmatmul.bf16.gmra.mxu0 %v430
      %v488 = vpop.f32.mrf.mxu0
      %v489 = vadd.f32 0.0, %v488
      %v490 = vpop.f32.mrf.mxu0
      %v491 = vadd.f32 0.0, %v490
      %492 = vmatmul.bf16.gmra.mxu0 %v433
      %v493 = vpop.f32.mrf.mxu0
      %v494 = vadd.f32 0.0, %v493
      %v495 = vpop.f32.mrf.mxu0
      %v496 = vadd.f32 0.0, %v495
      %497 = vmatmul.bf16.gmra.mxu0 %v436
      %v498 = vpop.f32.mrf.mxu0
      %v499 = vadd.f32 0.0, %v498
      %v500 = vpop.f32.mrf.mxu0
      %v501 = vadd.f32 0.0, %v500
      %502 = vmatmul.bf16.gmra.mxu0 %v439
      %v503 = vpop.f32.mrf.mxu0
      %v504 = vadd.f32 0.0, %v503
      %v505 = vpop.f32.mrf.mxu0
      %v506 = vadd.f32 0.0, %v505
      %507 = vmatmul.bf16.gmra.mxu0 %v442
      %v508 = vpop.f32.mrf.mxu0
      %v509 = vadd.f32 0.0, %v508
      %v510 = vpop.f32.mrf.mxu0
      %v511 = vadd.f32 0.0, %v510
      %512 = vmatmul.bf16.gmra.mxu0 %v445
      %v513 = vpop.f32.mrf.mxu0
      %v514 = vadd.f32 0.0, %v513
      %v515 = vpop.f32.mrf.mxu0
      %v516 = vadd.f32 0.0, %v515
      %517 = vmatmul.bf16.gmra.mxu0 %v448
      %v518 = vpop.f32.mrf.mxu0
      %v519 = vadd.f32 0.0, %v518
      %v520 = vpop.f32.mrf.mxu0
      %v521 = vadd.f32 0.0, %v520
      %522 = vmatmul.bf16.gmra.mxu0 %v451
      %v523 = vpop.f32.mrf.mxu0
      %v524 = vadd.f32 0.0, %v523
      %v525 = vpop.f32.mrf.mxu0
      %v526 = vadd.f32 0.0, %v525
      %527 = vmatmul.bf16.gmra.mxu0 %v454
      %v528 = vpop.f32.mrf.mxu0
      %v529 = vadd.f32 0.0, %v528
      %v530 = vpop.f32.mrf.mxu0
      %v531 = vadd.f32 0.0, %v530
      %532 = vmatmul.bf16.gmra.mxu0 %v457
      %v533 = vpop.f32.mrf.mxu0
      %v534 = vadd.f32 0.0, %v533
      %v535 = vpop.f32.mrf.mxu0
      %v536 = vadd.f32 0.0, %v535
      %537 = vmatmul.bf16.gmra.mxu0 %v460
      %v538 = vpop.f32.mrf.mxu0
      %v539 = vadd.f32 0.0, %v538
      %v540 = vpop.f32.mrf.mxu0
      %v541 = vadd.f32 0.0, %v540
      %542 = vmatmul.bf16.gmra.mxu0 %v463
      %v543 = vpop.f32.mrf.mxu0
      %v544 = vadd.f32 0.0, %v543
      %v545 = vpop.f32.mrf.mxu0
      %v546 = vadd.f32 0.0, %v545
      %547 = vmatmul.bf16.gmra.mxu0 %v466
      %v548 = vpop.f32.mrf.mxu0
      %v549 = vadd.f32 0.0, %v548
      %v550 = vpop.f32.mrf.mxu0
      %v551 = vadd.f32 0.0, %v550
      %552 = vmatmul.bf16.gmra.mxu0 %v469
      %v553 = vpop.f32.mrf.mxu0
      %v554 = vadd.f32 0.0, %v553
      %v555 = vpop.f32.mrf.mxu0
      %v556 = vadd.f32 0.0, %v555
      %557 = vmatmul.bf16.gmra.mxu0 %v472
      %v558 = vpop.f32.mrf.mxu0
      %v559 = vadd.f32 0.0, %v558
      %v560 = vpop.f32.mrf.mxu0
      %v561 = vadd.f32 0.0, %v560
      %562 = vdwg.mxu0
      %v563 = vld [vmem:[%s2] sm:$0x1]
      %v565 = vperm.slane %v563, 0
      %v567 = vmul.f32 %v484, %v565
      %v568 = vmul.f32 %v486, %v565
      %v569 = vmul.f32 %v489, %v565
      %v570 = vmul.f32 %v491, %v565
      %v571 = vmul.f32 %v494, %v565
      %v572 = vmul.f32 %v496, %v565
      %v573 = vmul.f32 %v499, %v565
      %v574 = vmul.f32 %v501, %v565
      %v575 = vmul.f32 %v504, %v565
      %v576 = vmul.f32 %v506, %v565
      %v577 = vmul.f32 %v509, %v565
      %v578 = vmul.f32 %v511, %v565
      %v579 = vmul.f32 %v514, %v565
      %v580 = vmul.f32 %v516, %v565
      %v581 = vmul.f32 %v519, %v565
      %v582 = vmul.f32 %v521, %v565
      %v583 = vmul.f32 %v524, %v565
      %v584 = vmul.f32 %v526, %v565
      %v585 = vmul.f32 %v529, %v565
      %v586 = vmul.f32 %v531, %v565
      %v587 = vmul.f32 %v534, %v565
      %v588 = vmul.f32 %v536, %v565
      %v589 = vmul.f32 %v539, %v565
      %v590 = vmul.f32 %v541, %v565
      %v591 = vmul.f32 %v544, %v565
      %v592 = vmul.f32 %v546, %v565
      %v593 = vmul.f32 %v549, %v565
      %v594 = vmul.f32 %v551, %v565
      %v595 = vmul.f32 %v554, %v565
      %v596 = vmul.f32 %v556, %v565
      %v597 = vmul.f32 %v559, %v565
      %v598 = vmul.f32 %v561, %v565
      %v599 = vld [vmem:[%s3] sm:$0x1]
      %v601 = vperm.slane %v599, 0
      %v603 = vadd.f32 %v567, %v601
      %v604 = vadd.f32 %v568, %v601
      %v605 = vadd.f32 %v569, %v601
      %v606 = vadd.f32 %v570, %v601
      %v607 = vadd.f32 %v571, %v601
      %v608 = vadd.f32 %v572, %v601
      %v609 = vadd.f32 %v573, %v601
      %v610 = vadd.f32 %v574, %v601
      %v611 = vadd.f32 %v575, %v601
      %v612 = vadd.f32 %v576, %v601
      %v613 = vadd.f32 %v577, %v601
      %v614 = vadd.f32 %v578, %v601
      %v615 = vadd.f32 %v579, %v601
      %v616 = vadd.f32 %v580, %v601
      %v617 = vadd.f32 %v581, %v601
      %v618 = vadd.f32 %v582, %v601
      %v619 = vadd.f32 %v583, %v601
      %v620 = vadd.f32 %v584, %v601
      %v621 = vadd.f32 %v585, %v601
      %v622 = vadd.f32 %v586, %v601
      %v623 = vadd.f32 %v587, %v601
      %v624 = vadd.f32 %v588, %v601
      %v625 = vadd.f32 %v589, %v601
      %v626 = vadd.f32 %v590, %v601
      %v627 = vadd.f32 %v591, %v601
      %v628 = vadd.f32 %v592, %v601
      %v629 = vadd.f32 %v593, %v601
      %v630 = vadd.f32 %v594, %v601
      %v631 = vadd.f32 %v595, %v601
      %v632 = vadd.f32 %v596, %v601
      %v633 = vadd.f32 %v597, %v601
      %v634 = vadd.f32 %v598, %v601
      %v635 = vmax.f32 %v603, 0.0
      %v636 = vmax.f32 %v604, 0.0
      %v637 = vmax.f32 %v605, 0.0
      %v638 = vmax.f32 %v606, 0.0
      %v639 = vmax.f32 %v607, 0.0
      %v640 = vmax.f32 %v608, 0.0
      %v641 = vmax.f32 %v609, 0.0
      %v642 = vmax.f32 %v610, 0.0
      %v643 = vmax.f32 %v611, 0.0
      %v644 = vmax.f32 %v612, 0.0
      %v645 = vmax.f32 %v613, 0.0
      %v646 = vmax.f32 %v614, 0.0
      %v647 = vmax.f32 %v615, 0.0
      %v648 = vmax.f32 %v616, 0.0
      %v649 = vmax.f32 %v617, 0.0
      %v650 = vmax.f32 %v618, 0.0
      %v651 = vmax.f32 %v619, 0.0
      %v652 = vmax.f32 %v620, 0.0
      %v653 = vmax.f32 %v621, 0.0
      %v654 = vmax.f32 %v622, 0.0
      %v655 = vmax.f32 %v623, 0.0
      %v656 = vmax.f32 %v624, 0.0
      %v657 = vmax.f32 %v625, 0.0
      %v658 = vmax.f32 %v626, 0.0
      %v659 = vmax.f32 %v627, 0.0
      %v660 = vmax.f32 %v628, 0.0
      %v661 = vmax.f32 %v629, 0.0
      %v662 = vmax.f32 %v630, 0.0
      %v663 = vmax.f32 %v631, 0.0
      %v664 = vmax.f32 %v632, 0.0
      %v665 = vmax.f32 %v633, 0.0
      %v666 = vmax.f32 %v634, 0.0
      %vm667 = vcmask 64512
      %668 = vst.msk [vmem:[#allocation2] sm:$0xff] %vm667, 0.0
      %669 = vst.msk [vmem:[#allocation2 + $0x8] sm:$0xff] %vm667, 0.0
      %vm670 = vcmask 58368
      %671 = vst.msk [vmem:[#allocation2 + $0x10] sm:$0x3] %vm670, 0.0
      %vm672 = vcmask 57344
      %673 = vst.msk [vmem:[#allocation2] sm:$0x1] %vm672, 0.0
      %674 = vst.msk [vmem:[#allocation2 + $0x18] sm:$0x1] %vm672, 0.0
      %675 = vst.msk [vmem:[#allocation2 + $0x30] sm:$0x1] %vm672, 0.0
      %676 = vst.msk [vmem:[#allocation2 + $0x48] sm:$0x1] %vm672, 0.0
      %677 = vst.msk [vmem:[#allocation2 + $0x60] sm:$0x1] %vm672, 0.0
      %678 = vst.msk [vmem:[#allocation2 + $0x78] sm:$0x1] %vm672, 0.0
      %679 = vst.msk [vmem:[#allocation2 + $0x90] sm:$0x1] %vm672, 0.0
      %680 = vst.msk [vmem:[#allocation2 + $0xa8] sm:$0x1] %vm672, 0.0
      %681 = vst.msk [vmem:[#allocation2 + $0xc0] sm:$0x1] %vm672, 0.0
      %682 = vst.msk [vmem:[#allocation2 + $0xd8] sm:$0x1] %vm672, 0.0
      %683 = vst.msk [vmem:[#allocation2 + $0xf0] sm:$0x1] %vm672, 0.0
      %684 = vst.msk [vmem:[#allocation2 + $0x108] sm:$0x1] %vm672, 0.0
      %685 = vst.msk [vmem:[#allocation2 + $0x120] sm:$0x1] %vm672, 0.0
      %686 = vst.msk [vmem:[#allocation2 + $0x138] sm:$0x1] %vm672, 0.0
      %687 = vst.msk [vmem:[#allocation2 + $0x150] sm:$0x1] %vm672, 0.0
      %688 = vst.msk [vmem:[#allocation2 + $0x168] sm:$0x1] %vm672, 0.0
      %689 = vst.msk [vmem:[#allocation2 + $0x180] sm:$0x1] %vm672, 0.0
      %690 = vst.msk [vmem:[#allocation2 + $0x198] sm:$0x1] %vm672, 0.0
      %s691 = scalar_lea.vmem [#allocation2], 408
      %692 = vst.msk [vmem:[%s691] sm:$0xff] %vm667, 0.0
      %693 = vst.msk [vmem:[%s691 + $0x8] sm:$0xff] %vm667, 0.0
      %694 = vst.msk [vmem:[%s691 + $0x10] sm:$0x3] %vm670, 0.0
      %695 = vst.msk [vmem:[#allocation2 + $0x11] sm:$0x1] %vm672, 0.0
      %696 = vst.msk [vmem:[#allocation2 + $0x29] sm:$0x1] %vm672, 0.0
      %697 = vst.msk [vmem:[#allocation2 + $0x41] sm:$0x1] %vm672, 0.0
      %698 = vst.msk [vmem:[#allocation2 + $0x59] sm:$0x1] %vm672, 0.0
      %699 = vst.msk [vmem:[#allocation2 + $0x71] sm:$0x1] %vm672, 0.0
      %700 = vst.msk [vmem:[#allocation2 + $0x89] sm:$0x1] %vm672, 0.0
      %701 = vst.msk [vmem:[#allocation2 + $0xa1] sm:$0x1] %vm672, 0.0
      %702 = vst.msk [vmem:[#allocation2 + $0xb9] sm:$0x1] %vm672, 0.0
      %703 = vst.msk [vmem:[#allocation2 + $0xd1] sm:$0x1] %vm672, 0.0
      %704 = vst.msk [vmem:[#allocation2 + $0xe9] sm:$0x1] %vm672, 0.0
      %705 = vst.msk [vmem:[#allocation2 + $0x101] sm:$0x1] %vm672, 0.0
      %706 = vst.msk [vmem:[#allocation2 + $0x119] sm:$0x1] %vm672, 0.0
      %707 = vst.msk [vmem:[#allocation2 + $0x131] sm:$0x1] %vm672, 0.0
      %708 = vst.msk [vmem:[#allocation2 + $0x149] sm:$0x1] %vm672, 0.0
      %709 = vst.msk [vmem:[#allocation2 + $0x161] sm:$0x1] %vm672, 0.0
      %710 = vst.msk [vmem:[#allocation2 + $0x179] sm:$0x1] %vm672, 0.0
      %711 = vst.msk [vmem:[#allocation2 + $0x191] sm:$0x1] %vm672, 0.0
      %712 = vst.msk [vmem:[#allocation2 + $0x1a9] sm:$0x1] %vm672, 0.0
      %s713 = scalar_lea.vmem [#allocation2], 24
      %714 = vst.msk [vmem:[%s713 + $0x1] sm:$0xff] %vm667, %v635
      %715 = vst.msk [vmem:[%s713 + $0x9] sm:$0xff] %vm667, %v636
      %716 = vst.msk [vmem:[%s713 + $0x19] sm:$0xff] %vm667, %v637
      %717 = vst.msk [vmem:[%s713 + $0x21] sm:$0xff] %vm667, %v638
      %718 = vst.msk [vmem:[%s713 + $0x31] sm:$0xff] %vm667, %v639
      %719 = vst.msk [vmem:[%s713 + $0x39] sm:$0xff] %vm667, %v640
      %720 = vst.msk [vmem:[%s713 + $0x49] sm:$0xff] %vm667, %v641
      %721 = vst.msk [vmem:[%s713 + $0x51] sm:$0xff] %vm667, %v642
      %722 = vst.msk [vmem:[%s713 + $0x61] sm:$0xff] %vm667, %v643
      %723 = vst.msk [vmem:[%s713 + $0x69] sm:$0xff] %vm667, %v644
      %724 = vst.msk [vmem:[%s713 + $0x79] sm:$0xff] %vm667, %v645
      %725 = vst.msk [vmem:[%s713 + $0x81] sm:$0xff] %vm667, %v646
      %726 = vst.msk [vmem:[%s713 + $0x91] sm:$0xff] %vm667, %v647
      %727 = vst.msk [vmem:[%s713 + $0x99] sm:$0xff] %vm667, %v648
      %728 = vst.msk [vmem:[%s713 + $0xa9] sm:$0xff] %vm667, %v649
      %729 = vst.msk [vmem:[%s713 + $0xb1] sm:$0xff] %vm667, %v650
      %730 = vst.msk [vmem:[%s713 + $0xc1] sm:$0xff] %vm667, %v651
      %731 = vst.msk [vmem:[%s713 + $0xc9] sm:$0xff] %vm667, %v652
      %732 = vst.msk [vmem:[%s713 + $0xd9] sm:$0xff] %vm667, %v653
      %733 = vst.msk [vmem:[%s713 + $0xe1] sm:$0xff] %vm667, %v654
      %734 = vst.msk [vmem:[%s713 + $0xf1] sm:$0xff] %vm667, %v655
      %735 = vst.msk [vmem:[%s713 + $0xf9] sm:$0xff] %vm667, %v656
      %736 = vst.msk [vmem:[%s713 + $0x109] sm:$0xff] %vm667, %v657
      %737 = vst.msk [vmem:[%s713 + $0x111] sm:$0xff] %vm667, %v658
      %738 = vst.msk [vmem:[%s713 + $0x121] sm:$0xff] %vm667, %v659
      %739 = vst.msk [vmem:[%s713 + $0x129] sm:$0xff] %vm667, %v660
      %740 = vst.msk [vmem:[%s713 + $0x139] sm:$0xff] %vm667, %v661
      %741 = vst.msk [vmem:[%s713 + $0x141] sm:$0xff] %vm667, %v662
      %742 = vst.msk [vmem:[%s713 + $0x151] sm:$0xff] %vm667, %v663
      %743 = vst.msk [vmem:[%s713 + $0x159] sm:$0xff] %vm667, %v664
      %744 = vst.msk [vmem:[%s713 + $0x169] sm:$0xff] %vm667, %v665
      %745 = vst.msk [vmem:[%s713 + $0x171] sm:$0xff] %vm667, %v666
      %v746 = vld [vmem:[#allocation2] sm:$0xff]
      %v747 = vld [vmem:[#allocation2 + $0x8] sm:$0xff]
      %v748 = vld [vmem:[#allocation2 + $0x10] sm:$0x3]
      %v749 = vld [vmem:[#allocation2 + $0x18] sm:$0xff]
      %v750 = vld [vmem:[#allocation2 + $0x20] sm:$0xff]
      %v751 = vld [vmem:[#allocation2 + $0x28] sm:$0x3]
      %v752 = vld [vmem:[#allocation2 + $0x30] sm:$0xff]
      %v753 = vld [vmem:[#allocation2 + $0x38] sm:$0xff]
      %v754 = vld [vmem:[#allocation2 + $0x40] sm:$0x3]
      %v755 = vld [vmem:[#allocation2 + $0x48] sm:$0xff]
      %v756 = vld [vmem:[#allocation2 + $0x50] sm:$0xff]
      %v757 = vld [vmem:[#allocation2 + $0x58] sm:$0x3]
      %v758 = vld [vmem:[#allocation2 + $0x60] sm:$0xff]
      %v759 = vld [vmem:[#allocation2 + $0x68] sm:$0xff]
      %v760 = vld [vmem:[#allocation2 + $0x70] sm:$0x3]
      %v761 = vld [vmem:[#allocation2 + $0x78] sm:$0xff]
      %v762 = vld [vmem:[#allocation2 + $0x80] sm:$0xff]
      %v763 = vld [vmem:[#allocation2 + $0x88] sm:$0x3]
      %v764 = vld [vmem:[#allocation2 + $0x90] sm:$0xff]
      %v765 = vld [vmem:[#allocation2 + $0x98] sm:$0xff]
      %v766 = vld [vmem:[#allocation2 + $0xa0] sm:$0x3]
      %v767 = vld [vmem:[#allocation2 + $0xa8] sm:$0xff]
      %v768 = vld [vmem:[#allocation2 + $0xb0] sm:$0xff]
      %v769 = vld [vmem:[#allocation2 + $0xb8] sm:$0x3]
      %v770 = vld [vmem:[#allocation2 + $0xc0] sm:$0xff]
      %v771 = vld [vmem:[#allocation2 + $0xc8] sm:$0xff]
      %v772 = vld [vmem:[#allocation2 + $0xd0] sm:$0x3]
      %v773 = vld [vmem:[#allocation2 + $0xd8] sm:$0xff]
      %v774 = vld [vmem:[#allocation2 + $0xe0] sm:$0xff]
      %v775 = vld [vmem:[#allocation2 + $0xe8] sm:$0x3]
      %v776 = vld [vmem:[#allocation2 + $0xf0] sm:$0xff]
      %v777 = vld [vmem:[#allocation2 + $0xf8] sm:$0xff]
      %v778 = vld [vmem:[#allocation2 + $0x100] sm:$0x3]
      %v779 = vld [vmem:[#allocation2 + $0x108] sm:$0xff]
      %v780 = vld [vmem:[#allocation2 + $0x110] sm:$0xff]
      %v781 = vld [vmem:[#allocation2 + $0x118] sm:$0x3]
      %v782 = vld [vmem:[#allocation2 + $0x120] sm:$0xff]
      %v783 = vld [vmem:[#allocation2 + $0x128] sm:$0xff]
      %v784 = vld [vmem:[#allocation2 + $0x130] sm:$0x3]
      %v785 = vld [vmem:[#allocation2 + $0x138] sm:$0xff]
      %v786 = vld [vmem:[#allocation2 + $0x140] sm:$0xff]
      %v787 = vld [vmem:[#allocation2 + $0x148] sm:$0x3]
      %v788 = vld [vmem:[#allocation2 + $0x150] sm:$0xff]
      %v789 = vld [vmem:[#allocation2 + $0x158] sm:$0xff]
      %v790 = vld [vmem:[#allocation2 + $0x160] sm:$0x3]
      %v791 = vld [vmem:[#allocation2 + $0x168] sm:$0xff]
      %v792 = vld [vmem:[#allocation2 + $0x170] sm:$0xff]
      %v793 = vld [vmem:[#allocation2 + $0x178] sm:$0x3]
      %v794 = vld [vmem:[#allocation2 + $0x180] sm:$0xff]
      %v795 = vld [vmem:[#allocation2 + $0x188] sm:$0xff]
      %v796 = vld [vmem:[#allocation2 + $0x190] sm:$0x3]
      %v797 = vld [vmem:[#allocation2 + $0x198] sm:$0xff]
      %v798 = vld [vmem:[#allocation2 + $0x1a0] sm:$0xff]
      %v799 = vld [vmem:[#allocation2 + $0x1a8] sm:$0x3]
      %vm848 = vcmask 1046528
      %v849 = vrot.slane %v746, 1
      %v850 = vrot.slane %v747, 1
      %v851 = vsel %vm848, %v849, %v850
      %v852 = vrot.slane %v748, 1
      %v853 = vsel %vm848, %v850, %v852
      %v854 = vrot.slane %v749, 1
      %v855 = vrot.slane %v750, 1
      %v856 = vsel %vm848, %v854, %v855
      %v857 = vrot.slane %v751, 1
      %v858 = vsel %vm848, %v855, %v857
      %v859 = vrot.slane %v752, 1
      %v860 = vrot.slane %v753, 1
      %v861 = vsel %vm848, %v859, %v860
      %v862 = vrot.slane %v754, 1
      %v863 = vsel %vm848, %v860, %v862
      %v864 = vrot.slane %v755, 1
      %v865 = vrot.slane %v756, 1
      %v866 = vsel %vm848, %v864, %v865
      %v867 = vrot.slane %v757, 1
      %v868 = vsel %vm848, %v865, %v867
      %v869 = vrot.slane %v758, 1
      %v870 = vrot.slane %v759, 1
      %v871 = vsel %vm848, %v869, %v870
      %v872 = vrot.slane %v760, 1
      %v873 = vsel %vm848, %v870, %v872
      %v874 = vrot.slane %v761, 1
      %v875 = vrot.slane %v762, 1
      %v876 = vsel %vm848, %v874, %v875
      %v877 = vrot.slane %v763, 1
      %v878 = vsel %vm848, %v875, %v877
      %v879 = vrot.slane %v764, 1
      %v880 = vrot.slane %v765, 1
      %v881 = vsel %vm848, %v879, %v880
      %v882 = vrot.slane %v766, 1
      %v883 = vsel %vm848, %v880, %v882
      %v884 = vrot.slane %v767, 1
      %v885 = vrot.slane %v768, 1
      %v886 = vsel %vm848, %v884, %v885
      %v887 = vrot.slane %v769, 1
      %v888 = vsel %vm848, %v885, %v887
      %v889 = vrot.slane %v770, 1
      %v890 = vrot.slane %v771, 1
      %v891 = vsel %vm848, %v889, %v890
      %v892 = vrot.slane %v772, 1
      %v893 = vsel %vm848, %v890, %v892
      %v894 = vrot.slane %v773, 1
      %v895 = vrot.slane %v774, 1
      %v896 = vsel %vm848, %v894, %v895
      %v897 = vrot.slane %v775, 1
      %v898 = vsel %vm848, %v895, %v897
      %v899 = vrot.slane %v776, 1
      %v900 = vrot.slane %v777, 1
      %v901 = vsel %vm848, %v899, %v900
      %v902 = vrot.slane %v778, 1
      %v903 = vsel %vm848, %v900, %v902
      %v904 = vrot.slane %v779, 1
      %v905 = vrot.slane %v780, 1
      %v906 = vsel %vm848, %v904, %v905
      %v907 = vrot.slane %v781, 1
      %v908 = vsel %vm848, %v905, %v907
      %v909 = vrot.slane %v782, 1
      %v910 = vrot.slane %v783, 1
      %v911 = vsel %vm848, %v909, %v910
      %v912 = vrot.slane %v784, 1
      %v913 = vsel %vm848, %v910, %v912
      %v914 = vrot.slane %v785, 1
      %v915 = vrot.slane %v786, 1
      %v916 = vsel %vm848, %v914, %v915
      %v917 = vrot.slane %v787, 1
      %v918 = vsel %vm848, %v915, %v917
      %v919 = vrot.slane %v788, 1
      %v920 = vrot.slane %v789, 1
      %v921 = vsel %vm848, %v919, %v920
      %v922 = vrot.slane %v790, 1
      %v923 = vsel %vm848, %v920, %v922
      %v924 = vrot.slane %v791, 1
      %v925 = vrot.slane %v792, 1
      %v926 = vsel %vm848, %v924, %v925
      %v927 = vrot.slane %v793, 1
      %v928 = vsel %vm848, %v925, %v927
      %vm929 = vcmask 1045504
      %v930 = vrot.slane %v746, 2
      %v931 = vrot.slane %v747, 2
      %v932 = vsel %vm929, %v930, %v931
      %v933 = vrot.slane %v748, 2
      %v934 = vsel %vm929, %v931, %v933
      %v935 = vrot.slane %v749, 2
      %v936 = vrot.slane %v750, 2
      %v937 = vsel %vm929, %v935, %v936
      %v938 = vrot.slane %v751, 2
      %v939 = vsel %vm929, %v936, %v938
      %v940 = vrot.slane %v752, 2
      %v941 = vrot.slane %v753, 2
      %v942 = vsel %vm929, %v940, %v941
      %v943 = vrot.slane %v754, 2
      %v944 = vsel %vm929, %v941, %v943
      %v945 = vrot.slane %v755, 2
      %v946 = vrot.slane %v756, 2
      %v947 = vsel %vm929, %v945, %v946
      %v948 = vrot.slane %v757, 2
      %v949 = vsel %vm929, %v946, %v948
      %v950 = vrot.slane %v758, 2
      %v951 = vrot.slane %v759, 2
      %v952 = vsel %vm929, %v950, %v951
      %v953 = vrot.slane %v760, 2
      %v954 = vsel %vm929, %v951, %v953
      %v955 = vrot.slane %v761, 2
      %v956 = vrot.slane %v762, 2
      %v957 = vsel %vm929, %v955, %v956
      %v958 = vrot.slane %v763, 2
      %v959 = vsel %vm929, %v956, %v958
      %v960 = vrot.slane %v764, 2
      %v961 = vrot.slane %v765, 2
      %v962 = vsel %vm929, %v960, %v961
      %v963 = vrot.slane %v766, 2
      %v964 = vsel %vm929, %v961, %v963
      %v965 = vrot.slane %v767, 2
      %v966 = vrot.slane %v768, 2
      %v967 = vsel %vm929, %v965, %v966
      %v968 = vrot.slane %v769, 2
      %v969 = vsel %vm929, %v966, %v968
      %v970 = vrot.slane %v770, 2
      %v971 = vrot.slane %v771, 2
      %v972 = vsel %vm929, %v970, %v971
      %v973 = vrot.slane %v772, 2
      %v974 = vsel %vm929, %v971, %v973
      %v975 = vrot.slane %v773, 2
      %v976 = vrot.slane %v774, 2
      %v977 = vsel %vm929, %v975, %v976
      %v978 = vrot.slane %v775, 2
      %v979 = vsel %vm929, %v976, %v978
      %v980 = vrot.slane %v776, 2
      %v981 = vrot.slane %v777, 2
      %v982 = vsel %vm929, %v980, %v981
      %v983 = vrot.slane %v778, 2
      %v984 = vsel %vm929, %v981, %v983
      %v985 = vrot.slane %v779, 2
      %v986 = vrot.slane %v780, 2
      %v987 = vsel %vm929, %v985, %v986
      %v988 = vrot.slane %v781, 2
      %v989 = vsel %vm929, %v986, %v988
      %v990 = vrot.slane %v782, 2
      %v991 = vrot.slane %v783, 2
      %v992 = vsel %vm929, %v990, %v991
      %v993 = vrot.slane %v784, 2
      %v994 = vsel %vm929, %v991, %v993
      %v995 = vrot.slane %v785, 2
      %v996 = vrot.slane %v786, 2
      %v997 = vsel %vm929, %v995, %v996
      %v998 = vrot.slane %v787, 2
      %v999 = vsel %vm929, %v996, %v998
      %v1000 = vrot.slane %v788, 2
      %v1001 = vrot.slane %v789, 2
      %v1002 = vsel %vm929, %v1000, %v1001
      %v1003 = vrot.slane %v790, 2
      %v1004 = vsel %vm929, %v1001, %v1003
      %v1005 = vrot.slane %v791, 2
      %v1006 = vrot.slane %v792, 2
      %v1007 = vsel %vm929, %v1005, %v1006
      %v1008 = vrot.slane %v793, 2
      %v1009 = vsel %vm929, %v1006, %v1008
      %v1013 = vrot.slane %v794, 1
      %v1014 = vrot.slane %v795, 1
      %v1015 = vsel %vm848, %v1013, %v1014
      %v1016 = vrot.slane %v796, 1
      %v1017 = vsel %vm848, %v1014, %v1016
      %v1018 = vrot.slane %v794, 2
      %v1019 = vrot.slane %v795, 2
      %v1020 = vsel %vm929, %v1018, %v1019
      %v1021 = vrot.slane %v796, 2
      %v1022 = vsel %vm929, %v1019, %v1021
      %v1026 = vrot.slane %v797, 1
      %v1027 = vrot.slane %v798, 1
      %v1028 = vsel %vm848, %v1026, %v1027
      %v1029 = vrot.slane %v799, 1
      %v1030 = vsel %vm848, %v1027, %v1029
      %v1031 = vrot.slane %v797, 2
      %v1032 = vrot.slane %v798, 2
      %v1033 = vsel %vm929, %v1031, %v1032
      %v1034 = vrot.slane %v799, 2
      %v1035 = vsel %vm929, %v1032, %v1034
      %1036 = vrot.lane.b32.xlu0 %v851, 8
      %v1037 = vpop.permute.xlu0 %1036
      %1038 = vrot.lane.b32.xlu0 %v853, 8
      %v1039 = vpop.permute.xlu0 %1038
      %1040 = vrot.lane.b32.xlu0 %v856, 8
      %v1041 = vpop.permute.xlu0 %1040
      %1042 = vrot.lane.b32.xlu0 %v858, 8
      %v1043 = vpop.permute.xlu0 %1042
      %1044 = vrot.lane.b32.xlu0 %v861, 8
      %v1045 = vpop.permute.xlu0 %1044
      %1046 = vrot.lane.b32.xlu0 %v863, 8
      %v1047 = vpop.permute.xlu0 %1046
      %1048 = vrot.lane.b32.xlu0 %v866, 8
      %v1049 = vpop.permute.xlu0 %1048
      %1050 = vrot.lane.b32.xlu0 %v868, 8
      %v1051 = vpop.permute.xlu0 %1050
      %1052 = vrot.lane.b32.xlu0 %v871, 8
      %v1053 = vpop.permute.xlu0 %1052
      %1054 = vrot.lane.b32.xlu0 %v873, 8
      %v1055 = vpop.permute.xlu0 %1054
      %1056 = vrot.lane.b32.xlu0 %v876, 8
      %v1057 = vpop.permute.xlu0 %1056
      %1058 = vrot.lane.b32.xlu0 %v878, 8
      %v1059 = vpop.permute.xlu0 %1058
      %1060 = vrot.lane.b32.xlu0 %v881, 8
      %v1061 = vpop.permute.xlu0 %1060
      %1062 = vrot.lane.b32.xlu0 %v883, 8
      %v1063 = vpop.permute.xlu0 %1062
      %1064 = vrot.lane.b32.xlu0 %v886, 8
      %v1065 = vpop.permute.xlu0 %1064
      %1066 = vrot.lane.b32.xlu0 %v888, 8
      %v1067 = vpop.permute.xlu0 %1066
      %1068 = vrot.lane.b32.xlu0 %v891, 8
      %v1069 = vpop.permute.xlu0 %1068
      %1070 = vrot.lane.b32.xlu0 %v893, 8
      %v1071 = vpop.permute.xlu0 %1070
      %1072 = vrot.lane.b32.xlu0 %v896, 8
      %v1073 = vpop.permute.xlu0 %1072
      %1074 = vrot.lane.b32.xlu0 %v898, 8
      %v1075 = vpop.permute.xlu0 %1074
      %1076 = vrot.lane.b32.xlu0 %v901, 8
      %v1077 = vpop.permute.xlu0 %1076
      %1078 = vrot.lane.b32.xlu0 %v903, 8
      %v1079 = vpop.permute.xlu0 %1078
      %1080 = vrot.lane.b32.xlu0 %v906, 8
      %v1081 = vpop.permute.xlu0 %1080
      %1082 = vrot.lane.b32.xlu0 %v908, 8
      %v1083 = vpop.permute.xlu0 %1082
      %1084 = vrot.lane.b32.xlu0 %v911, 8
      %v1085 = vpop.permute.xlu0 %1084
      %1086 = vrot.lane.b32.xlu0 %v913, 8
      %v1087 = vpop.permute.xlu0 %1086
      %1088 = vrot.lane.b32.xlu0 %v916, 8
      %v1089 = vpop.permute.xlu0 %1088
      %1090 = vrot.lane.b32.xlu0 %v918, 8
      %v1091 = vpop.permute.xlu0 %1090
      %1092 = vrot.lane.b32.xlu0 %v921, 8
      %v1093 = vpop.permute.xlu0 %1092
      %1094 = vrot.lane.b32.xlu0 %v923, 8
      %v1095 = vpop.permute.xlu0 %1094
      %1096 = vrot.lane.b32.xlu0 %v926, 8
      %v1097 = vpop.permute.xlu0 %1096
      %1098 = vrot.lane.b32.xlu0 %v928, 8
      %v1099 = vpop.permute.xlu0 %1098
      %1132 = vrot.lane.b32.xlu0 %v932, 16
      %v1133 = vpop.permute.xlu0 %1132
      %1134 = vrot.lane.b32.xlu0 %v934, 16
      %v1135 = vpop.permute.xlu0 %1134
      %1136 = vrot.lane.b32.xlu0 %v937, 16
      %v1137 = vpop.permute.xlu0 %1136
      %1138 = vrot.lane.b32.xlu0 %v939, 16
      %v1139 = vpop.permute.xlu0 %1138
      %1140 = vrot.lane.b32.xlu0 %v942, 16
      %v1141 = vpop.permute.xlu0 %1140
      %1142 = vrot.lane.b32.xlu0 %v944, 16
      %v1143 = vpop.permute.xlu0 %1142
      %1144 = vrot.lane.b32.xlu0 %v947, 16
      %v1145 = vpop.permute.xlu0 %1144
      %1146 = vrot.lane.b32.xlu0 %v949, 16
      %v1147 = vpop.permute.xlu0 %1146
      %1148 = vrot.lane.b32.xlu0 %v952, 16
      %v1149 = vpop.permute.xlu0 %1148
      %1150 = vrot.lane.b32.xlu0 %v954, 16
      %v1151 = vpop.permute.xlu0 %1150
      %1152 = vrot.lane.b32.xlu0 %v957, 16
      %v1153 = vpop.permute.xlu0 %1152
      %1154 = vrot.lane.b32.xlu0 %v959, 16
      %v1155 = vpop.permute.xlu0 %1154
      %1156 = vrot.lane.b32.xlu0 %v962, 16
      %v1157 = vpop.permute.xlu0 %1156
      %1158 = vrot.lane.b32.xlu0 %v964, 16
      %v1159 = vpop.permute.xlu0 %1158
      %1160 = vrot.lane.b32.xlu0 %v967, 16
      %v1161 = vpop.permute.xlu0 %1160
      %1162 = vrot.lane.b32.xlu0 %v969, 16
      %v1163 = vpop.permute.xlu0 %1162
      %1164 = vrot.lane.b32.xlu0 %v972, 16
      %v1165 = vpop.permute.xlu0 %1164
      %1166 = vrot.lane.b32.xlu0 %v974, 16
      %v1167 = vpop.permute.xlu0 %1166
      %1168 = vrot.lane.b32.xlu0 %v977, 16
      %v1169 = vpop.permute.xlu0 %1168
      %1170 = vrot.lane.b32.xlu0 %v979, 16
      %v1171 = vpop.permute.xlu0 %1170
      %1172 = vrot.lane.b32.xlu0 %v982, 16
      %v1173 = vpop.permute.xlu0 %1172
      %1174 = vrot.lane.b32.xlu0 %v984, 16
      %v1175 = vpop.permute.xlu0 %1174
      %1176 = vrot.lane.b32.xlu0 %v987, 16
      %v1177 = vpop.permute.xlu0 %1176
      %1178 = vrot.lane.b32.xlu0 %v989, 16
      %v1179 = vpop.permute.xlu0 %1178
      %1180 = vrot.lane.b32.xlu0 %v992, 16
      %v1181 = vpop.permute.xlu0 %1180
      %1182 = vrot.lane.b32.xlu0 %v994, 16
      %v1183 = vpop.permute.xlu0 %1182
      %1184 = vrot.lane.b32.xlu0 %v997, 16
      %v1185 = vpop.permute.xlu0 %1184
      %1186 = vrot.lane.b32.xlu0 %v999, 16
      %v1187 = vpop.permute.xlu0 %1186
      %1188 = vrot.lane.b32.xlu0 %v1002, 16
      %v1189 = vpop.permute.xlu0 %1188
      %1190 = vrot.lane.b32.xlu0 %v1004, 16
      %v1191 = vpop.permute.xlu0 %1190
      %1192 = vrot.lane.b32.xlu0 %v1007, 16
      %v1193 = vpop.permute.xlu0 %1192
      %1194 = vrot.lane.b32.xlu0 %v1009, 16
      %v1195 = vpop.permute.xlu0 %1194
      %1228 = vrot.lane.b32.xlu0 %v749, 24
      %v1229 = vpop.permute.xlu0 %1228
      %1230 = vrot.lane.b32.xlu0 %v750, 24
      %v1231 = vpop.permute.xlu0 %1230
      %1232 = vrot.lane.b32.xlu0 %v752, 24
      %v1233 = vpop.permute.xlu0 %1232
      %1234 = vrot.lane.b32.xlu0 %v753, 24
      %v1235 = vpop.permute.xlu0 %1234
      %1236 = vrot.lane.b32.xlu0 %v755, 24
      %v1237 = vpop.permute.xlu0 %1236
      %1238 = vrot.lane.b32.xlu0 %v756, 24
      %v1239 = vpop.permute.xlu0 %1238
      %1240 = vrot.lane.b32.xlu0 %v758, 24
      %v1241 = vpop.permute.xlu0 %1240
      %1242 = vrot.lane.b32.xlu0 %v759, 24
      %v1243 = vpop.permute.xlu0 %1242
      %1244 = vrot.lane.b32.xlu0 %v761, 24
      %v1245 = vpop.permute.xlu0 %1244
      %1246 = vrot.lane.b32.xlu0 %v762, 24
      %v1247 = vpop.permute.xlu0 %1246
      %1248 = vrot.lane.b32.xlu0 %v764, 24
      %v1249 = vpop.permute.xlu0 %1248
      %1250 = vrot.lane.b32.xlu0 %v765, 24
      %v1251 = vpop.permute.xlu0 %1250
      %1252 = vrot.lane.b32.xlu0 %v767, 24
      %v1253 = vpop.permute.xlu0 %1252
      %1254 = vrot.lane.b32.xlu0 %v768, 24
      %v1255 = vpop.permute.xlu0 %1254
      %1256 = vrot.lane.b32.xlu0 %v770, 24
      %v1257 = vpop.permute.xlu0 %1256
      %1258 = vrot.lane.b32.xlu0 %v771, 24
      %v1259 = vpop.permute.xlu0 %1258
      %1260 = vrot.lane.b32.xlu0 %v773, 24
      %v1261 = vpop.permute.xlu0 %1260
      %1262 = vrot.lane.b32.xlu0 %v774, 24
      %v1263 = vpop.permute.xlu0 %1262
      %1264 = vrot.lane.b32.xlu0 %v776, 24
      %v1265 = vpop.permute.xlu0 %1264
      %1266 = vrot.lane.b32.xlu0 %v777, 24
      %v1267 = vpop.permute.xlu0 %1266
      %1268 = vrot.lane.b32.xlu0 %v779, 24
      %v1269 = vpop.permute.xlu0 %1268
      %1270 = vrot.lane.b32.xlu0 %v780, 24
      %v1271 = vpop.permute.xlu0 %1270
      %1272 = vrot.lane.b32.xlu0 %v782, 24
      %v1273 = vpop.permute.xlu0 %1272
      %1274 = vrot.lane.b32.xlu0 %v783, 24
      %v1275 = vpop.permute.xlu0 %1274
      %1276 = vrot.lane.b32.xlu0 %v785, 24
      %v1277 = vpop.permute.xlu0 %1276
      %1278 = vrot.lane.b32.xlu0 %v786, 24
      %v1279 = vpop.permute.xlu0 %1278
      %1280 = vrot.lane.b32.xlu0 %v788, 24
      %v1281 = vpop.permute.xlu0 %1280
      %1282 = vrot.lane.b32.xlu0 %v789, 24
      %v1283 = vpop.permute.xlu0 %1282
      %1284 = vrot.lane.b32.xlu0 %v791, 24
      %v1285 = vpop.permute.xlu0 %1284
      %1286 = vrot.lane.b32.xlu0 %v792, 24
      %v1287 = vpop.permute.xlu0 %1286
      %1288 = vrot.lane.b32.xlu0 %v794, 24
      %v1289 = vpop.permute.xlu0 %1288
      %1290 = vrot.lane.b32.xlu0 %v795, 24
      %v1291 = vpop.permute.xlu0 %1290
      %1324 = vrot.lane.b32.xlu0 %v856, 32
      %v1325 = vpop.permute.xlu0 %1324
      %1326 = vrot.lane.b32.xlu0 %v858, 32
      %v1327 = vpop.permute.xlu0 %1326
      %1328 = vrot.lane.b32.xlu0 %v861, 32
      %v1329 = vpop.permute.xlu0 %1328
      %1330 = vrot.lane.b32.xlu0 %v863, 32
      %v1331 = vpop.permute.xlu0 %1330
      %1332 = vrot.lane.b32.xlu0 %v866, 32
      %v1333 = vpop.permute.xlu0 %1332
      %1334 = vrot.lane.b32.xlu0 %v868, 32
      %v1335 = vpop.permute.xlu0 %1334
      %1336 = vrot.lane.b32.xlu0 %v871, 32
      %v1337 = vpop.permute.xlu0 %1336
      %1338 = vrot.lane.b32.xlu0 %v873, 32
      %v1339 = vpop.permute.xlu0 %1338
      %1340 = vrot.lane.b32.xlu0 %v876, 32
      %v1341 = vpop.permute.xlu0 %1340
      %1342 = vrot.lane.b32.xlu0 %v878, 32
      %v1343 = vpop.permute.xlu0 %1342
      %1344 = vrot.lane.b32.xlu0 %v881, 32
      %v1345 = vpop.permute.xlu0 %1344
      %1346 = vrot.lane.b32.xlu0 %v883, 32
      %v1347 = vpop.permute.xlu0 %1346
      %1348 = vrot.lane.b32.xlu0 %v886, 32
      %v1349 = vpop.permute.xlu0 %1348
      %1350 = vrot.lane.b32.xlu0 %v888, 32
      %v1351 = vpop.permute.xlu0 %1350
      %1352 = vrot.lane.b32.xlu0 %v891, 32
      %v1353 = vpop.permute.xlu0 %1352
      %1354 = vrot.lane.b32.xlu0 %v893, 32
      %v1355 = vpop.permute.xlu0 %1354
      %1356 = vrot.lane.b32.xlu0 %v896, 32
      %v1357 = vpop.permute.xlu0 %1356
      %1358 = vrot.lane.b32.xlu0 %v898, 32
      %v1359 = vpop.permute.xlu0 %1358
      %1360 = vrot.lane.b32.xlu0 %v901, 32
      %v1361 = vpop.permute.xlu0 %1360
      %1362 = vrot.lane.b32.xlu0 %v903, 32
      %v1363 = vpop.permute.xlu0 %1362
      %1364 = vrot.lane.b32.xlu0 %v906, 32
      %v1365 = vpop.permute.xlu0 %1364
      %1366 = vrot.lane.b32.xlu0 %v908, 32
      %v1367 = vpop.permute.xlu0 %1366
      %1368 = vrot.lane.b32.xlu0 %v911, 32
      %v1369 = vpop.permute.xlu0 %1368
      %1370 = vrot.lane.b32.xlu0 %v913, 32
      %v1371 = vpop.permute.xlu0 %1370
      %1372 = vrot.lane.b32.xlu0 %v916, 32
      %v1373 = vpop.permute.xlu0 %1372
      %1374 = vrot.lane.b32.xlu0 %v918, 32
      %v1375 = vpop.permute.xlu0 %1374
      %1376 = vrot.lane.b32.xlu0 %v921, 32
      %v1377 = vpop.permute.xlu0 %1376
      %1378 = vrot.lane.b32.xlu0 %v923, 32
      %v1379 = vpop.permute.xlu0 %1378
      %1380 = vrot.lane.b32.xlu0 %v926, 32
      %v1381 = vpop.permute.xlu0 %1380
      %1382 = vrot.lane.b32.xlu0 %v928, 32
      %v1383 = vpop.permute.xlu0 %1382
      %1384 = vrot.lane.b32.xlu0 %v1015, 32
      %v1385 = vpop.permute.xlu0 %1384
      %1386 = vrot.lane.b32.xlu0 %v1017, 32
      %v1387 = vpop.permute.xlu0 %1386
      %1420 = vrot.lane.b32.xlu0 %v937, 40
      %v1421 = vpop.permute.xlu0 %1420
      %1422 = vrot.lane.b32.xlu0 %v939, 40
      %v1423 = vpop.permute.xlu0 %1422
      %1424 = vrot.lane.b32.xlu0 %v942, 40
      %v1425 = vpop.permute.xlu0 %1424
      %1426 = vrot.lane.b32.xlu0 %v944, 40
      %v1427 = vpop.permute.xlu0 %1426
      %1428 = vrot.lane.b32.xlu0 %v947, 40
      %v1429 = vpop.permute.xlu0 %1428
      %1430 = vrot.lane.b32.xlu0 %v949, 40
      %v1431 = vpop.permute.xlu0 %1430
      %1432 = vrot.lane.b32.xlu0 %v952, 40
      %v1433 = vpop.permute.xlu0 %1432
      %1434 = vrot.lane.b32.xlu0 %v954, 40
      %v1435 = vpop.permute.xlu0 %1434
      %1436 = vrot.lane.b32.xlu0 %v957, 40
      %v1437 = vpop.permute.xlu0 %1436
      %1438 = vrot.lane.b32.xlu0 %v959, 40
      %v1439 = vpop.permute.xlu0 %1438
      %1440 = vrot.lane.b32.xlu0 %v962, 40
      %v1441 = vpop.permute.xlu0 %1440
      %1442 = vrot.lane.b32.xlu0 %v964, 40
      %v1443 = vpop.permute.xlu0 %1442
      %1444 = vrot.lane.b32.xlu0 %v967, 40
      %v1445 = vpop.permute.xlu0 %1444
      %1446 = vrot.lane.b32.xlu0 %v969, 40
      %v1447 = vpop.permute.xlu0 %1446
      %1448 = vrot.lane.b32.xlu0 %v972, 40
      %v1449 = vpop.permute.xlu0 %1448
      %1450 = vrot.lane.b32.xlu0 %v974, 40
      %v1451 = vpop.permute.xlu0 %1450
      %1452 = vrot.lane.b32.xlu0 %v977, 40
      %v1453 = vpop.permute.xlu0 %1452
      %1454 = vrot.lane.b32.xlu0 %v979, 40
      %v1455 = vpop.permute.xlu0 %1454
      %1456 = vrot.lane.b32.xlu0 %v982, 40
      %v1457 = vpop.permute.xlu0 %1456
      %1458 = vrot.lane.b32.xlu0 %v984, 40
      %v1459 = vpop.permute.xlu0 %1458
      %1460 = vrot.lane.b32.xlu0 %v987, 40
      %v1461 = vpop.permute.xlu0 %1460
      %1462 = vrot.lane.b32.xlu0 %v989, 40
      %v1463 = vpop.permute.xlu0 %1462
      %1464 = vrot.lane.b32.xlu0 %v992, 40
      %v1465 = vpop.permute.xlu0 %1464
      %1466 = vrot.lane.b32.xlu0 %v994, 40
      %v1467 = vpop.permute.xlu0 %1466
      %1468 = vrot.lane.b32.xlu0 %v997, 40
      %v1469 = vpop.permute.xlu0 %1468
      %1470 = vrot.lane.b32.xlu0 %v999, 40
      %v1471 = vpop.permute.xlu0 %1470
      %1472 = vrot.lane.b32.xlu0 %v1002, 40
      %v1473 = vpop.permute.xlu0 %1472
      %1474 = vrot.lane.b32.xlu0 %v1004, 40
      %v1475 = vpop.permute.xlu0 %1474
      %1476 = vrot.lane.b32.xlu0 %v1007, 40
      %v1477 = vpop.permute.xlu0 %1476
      %1478 = vrot.lane.b32.xlu0 %v1009, 40
      %v1479 = vpop.permute.xlu0 %1478
      %1480 = vrot.lane.b32.xlu0 %v1020, 40
      %v1481 = vpop.permute.xlu0 %1480
      %1482 = vrot.lane.b32.xlu0 %v1022, 40
      %v1483 = vpop.permute.xlu0 %1482
      %1516 = vrot.lane.b32.xlu0 %v752, 48
      %v1517 = vpop.permute.xlu0 %1516
      %1518 = vrot.lane.b32.xlu0 %v753, 48
      %v1519 = vpop.permute.xlu0 %1518
      %1520 = vrot.lane.b32.xlu0 %v755, 48
      %v1521 = vpop.permute.xlu0 %1520
      %1522 = vrot.lane.b32.xlu0 %v756, 48
      %v1523 = vpop.permute.xlu0 %1522
      %1524 = vrot.lane.b32.xlu0 %v758, 48
      %v1525 = vpop.permute.xlu0 %1524
      %1526 = vrot.lane.b32.xlu0 %v759, 48
      %v1527 = vpop.permute.xlu0 %1526
      %1528 = vrot.lane.b32.xlu0 %v761, 48
      %v1529 = vpop.permute.xlu0 %1528
      %1530 = vrot.lane.b32.xlu0 %v762, 48
      %v1531 = vpop.permute.xlu0 %1530
      %1532 = vrot.lane.b32.xlu0 %v764, 48
      %v1533 = vpop.permute.xlu0 %1532
      %1534 = vrot.lane.b32.xlu0 %v765, 48
      %v1535 = vpop.permute.xlu0 %1534
      %1536 = vrot.lane.b32.xlu0 %v767, 48
      %v1537 = vpop.permute.xlu0 %1536
      %1538 = vrot.lane.b32.xlu0 %v768, 48
      %v1539 = vpop.permute.xlu0 %1538
      %1540 = vrot.lane.b32.xlu0 %v770, 48
      %v1541 = vpop.permute.xlu0 %1540
      %1542 = vrot.lane.b32.xlu0 %v771, 48
      %v1543 = vpop.permute.xlu0 %1542
      %1544 = vrot.lane.b32.xlu0 %v773, 48
      %v1545 = vpop.permute.xlu0 %1544
      %1546 = vrot.lane.b32.xlu0 %v774, 48
      %v1547 = vpop.permute.xlu0 %1546
      %1548 = vrot.lane.b32.xlu0 %v776, 48
      %v1549 = vpop.permute.xlu0 %1548
      %1550 = vrot.lane.b32.xlu0 %v777, 48
      %v1551 = vpop.permute.xlu0 %1550
      %1552 = vrot.lane.b32.xlu0 %v779, 48
      %v1553 = vpop.permute.xlu0 %1552
      %1554 = vrot.lane.b32.xlu0 %v780, 48
      %v1555 = vpop.permute.xlu0 %1554
      %1556 = vrot.lane.b32.xlu0 %v782, 48
      %v1557 = vpop.permute.xlu0 %1556
      %1558 = vrot.lane.b32.xlu0 %v783, 48
      %v1559 = vpop.permute.xlu0 %1558
      %1560 = vrot.lane.b32.xlu0 %v785, 48
      %v1561 = vpop.permute.xlu0 %1560
      %1562 = vrot.lane.b32.xlu0 %v786, 48
      %v1563 = vpop.permute.xlu0 %1562
      %1564 = vrot.lane.b32.xlu0 %v788, 48
      %v1565 = vpop.permute.xlu0 %1564
      %1566 = vrot.lane.b32.xlu0 %v789, 48
      %v1567 = vpop.permute.xlu0 %1566
      %1568 = vrot.lane.b32.xlu0 %v791, 48
      %v1569 = vpop.permute.xlu0 %1568
      %1570 = vrot.lane.b32.xlu0 %v792, 48
      %v1571 = vpop.permute.xlu0 %1570
      %1572 = vrot.lane.b32.xlu0 %v794, 48
      %v1573 = vpop.permute.xlu0 %1572
      %1574 = vrot.lane.b32.xlu0 %v795, 48
      %v1575 = vpop.permute.xlu0 %1574
      %1576 = vrot.lane.b32.xlu0 %v797, 48
      %v1577 = vpop.permute.xlu0 %1576
      %1578 = vrot.lane.b32.xlu0 %v798, 48
      %v1579 = vpop.permute.xlu0 %1578
      %1612 = vrot.lane.b32.xlu0 %v861, 56
      %v1613 = vpop.permute.xlu0 %1612
      %1614 = vrot.lane.b32.xlu0 %v863, 56
      %v1615 = vpop.permute.xlu0 %1614
      %1616 = vrot.lane.b32.xlu0 %v866, 56
      %v1617 = vpop.permute.xlu0 %1616
      %1618 = vrot.lane.b32.xlu0 %v868, 56
      %v1619 = vpop.permute.xlu0 %1618
      %1620 = vrot.lane.b32.xlu0 %v871, 56
      %v1621 = vpop.permute.xlu0 %1620
      %1622 = vrot.lane.b32.xlu0 %v873, 56
      %v1623 = vpop.permute.xlu0 %1622
      %1624 = vrot.lane.b32.xlu0 %v876, 56
      %v1625 = vpop.permute.xlu0 %1624
      %1626 = vrot.lane.b32.xlu0 %v878, 56
      %v1627 = vpop.permute.xlu0 %1626
      %1628 = vrot.lane.b32.xlu0 %v881, 56
      %v1629 = vpop.permute.xlu0 %1628
      %1630 = vrot.lane.b32.xlu0 %v883, 56
      %v1631 = vpop.permute.xlu0 %1630
      %1632 = vrot.lane.b32.xlu0 %v886, 56
      %v1633 = vpop.permute.xlu0 %1632
      %1634 = vrot.lane.b32.xlu0 %v888, 56
      %v1635 = vpop.permute.xlu0 %1634
      %1636 = vrot.lane.b32.xlu0 %v891, 56
      %v1637 = vpop.permute.xlu0 %1636
      %1638 = vrot.lane.b32.xlu0 %v893, 56
      %v1639 = vpop.permute.xlu0 %1638
      %1640 = vrot.lane.b32.xlu0 %v896, 56
      %v1641 = vpop.permute.xlu0 %1640
      %1642 = vrot.lane.b32.xlu0 %v898, 56
      %v1643 = vpop.permute.xlu0 %1642
      %1644 = vrot.lane.b32.xlu0 %v901, 56
      %v1645 = vpop.permute.xlu0 %1644
      %1646 = vrot.lane.b32.xlu0 %v903, 56
      %v1647 = vpop.permute.xlu0 %1646
      %1648 = vrot.lane.b32.xlu0 %v906, 56
      %v1649 = vpop.permute.xlu0 %1648
      %1650 = vrot.lane.b32.xlu0 %v908, 56
      %v1651 = vpop.permute.xlu0 %1650
      %1652 = vrot.lane.b32.xlu0 %v911, 56
      %v1653 = vpop.permute.xlu0 %1652
      %1654 = vrot.lane.b32.xlu0 %v913, 56
      %v1655 = vpop.permute.xlu0 %1654
      %1656 = vrot.lane.b32.xlu0 %v916, 56
      %v1657 = vpop.permute.xlu0 %1656
      %1658 = vrot.lane.b32.xlu0 %v918, 56
      %v1659 = vpop.permute.xlu0 %1658
      %1660 = vrot.lane.b32.xlu0 %v921, 56
      %v1661 = vpop.permute.xlu0 %1660
      %1662 = vrot.lane.b32.xlu0 %v923, 56
      %v1663 = vpop.permute.xlu0 %1662
      %1664 = vrot.lane.b32.xlu0 %v926, 56
      %v1665 = vpop.permute.xlu0 %1664
      %1666 = vrot.lane.b32.xlu0 %v928, 56
      %v1667 = vpop.permute.xlu0 %1666
      %1668 = vrot.lane.b32.xlu0 %v1015, 56
      %v1669 = vpop.permute.xlu0 %1668
      %1670 = vrot.lane.b32.xlu0 %v1017, 56
      %v1671 = vpop.permute.xlu0 %1670
      %1672 = vrot.lane.b32.xlu0 %v1028, 56
      %v1673 = vpop.permute.xlu0 %1672
      %1674 = vrot.lane.b32.xlu0 %v1030, 56
      %v1675 = vpop.permute.xlu0 %1674
      %1708 = vrot.lane.b32.xlu0 %v942, 64
      %v1709 = vpop.permute.xlu0 %1708
      %1710 = vrot.lane.b32.xlu0 %v944, 64
      %v1711 = vpop.permute.xlu0 %1710
      %1712 = vrot.lane.b32.xlu0 %v947, 64
      %v1713 = vpop.permute.xlu0 %1712
      %1714 = vrot.lane.b32.xlu0 %v949, 64
      %v1715 = vpop.permute.xlu0 %1714
      %1716 = vrot.lane.b32.xlu0 %v952, 64
      %v1717 = vpop.permute.xlu0 %1716
      %1718 = vrot.lane.b32.xlu0 %v954, 64
      %v1719 = vpop.permute.xlu0 %1718
      %1720 = vrot.lane.b32.xlu0 %v957, 64
      %v1721 = vpop.permute.xlu0 %1720
      %1722 = vrot.lane.b32.xlu0 %v959, 64
      %v1723 = vpop.permute.xlu0 %1722
      %1724 = vrot.lane.b32.xlu0 %v962, 64
      %v1725 = vpop.permute.xlu0 %1724
      %1726 = vrot.lane.b32.xlu0 %v964, 64
      %v1727 = vpop.permute.xlu0 %1726
      %1728 = vrot.lane.b32.xlu0 %v967, 64
      %v1729 = vpop.permute.xlu0 %1728
      %1730 = vrot.lane.b32.xlu0 %v969, 64
      %v1731 = vpop.permute.xlu0 %1730
      %1732 = vrot.lane.b32.xlu0 %v972, 64
      %v1733 = vpop.permute.xlu0 %1732
      %1734 = vrot.lane.b32.xlu0 %v974, 64
      %v1735 = vpop.permute.xlu0 %1734
      %1736 = vrot.lane.b32.xlu0 %v977, 64
      %v1737 = vpop.permute.xlu0 %1736
      %1738 = vrot.lane.b32.xlu0 %v979, 64
      %v1739 = vpop.permute.xlu0 %1738
      %1740 = vrot.lane.b32.xlu0 %v982, 64
      %v1741 = vpop.permute.xlu0 %1740
      %1742 = vrot.lane.b32.xlu0 %v984, 64
      %v1743 = vpop.permute.xlu0 %1742
      %1744 = vrot.lane.b32.xlu0 %v987, 64
      %v1745 = vpop.permute.xlu0 %1744
      %1746 = vrot.lane.b32.xlu0 %v989, 64
      %v1747 = vpop.permute.xlu0 %1746
      %1748 = vrot.lane.b32.xlu0 %v992, 64
      %v1749 = vpop.permute.xlu0 %1748
      %1750 = vrot.lane.b32.xlu0 %v994, 64
      %v1751 = vpop.permute.xlu0 %1750
      %1752 = vrot.lane.b32.xlu0 %v997, 64
      %v1753 = vpop.permute.xlu0 %1752
      %1754 = vrot.lane.b32.xlu0 %v999, 64
      %v1755 = vpop.permute.xlu0 %1754
      %1756 = vrot.lane.b32.xlu0 %v1002, 64
      %v1757 = vpop.permute.xlu0 %1756
      %1758 = vrot.lane.b32.xlu0 %v1004, 64
      %v1759 = vpop.permute.xlu0 %1758
      %1760 = vrot.lane.b32.xlu0 %v1007, 64
      %v1761 = vpop.permute.xlu0 %1760
      %1762 = vrot.lane.b32.xlu0 %v1009, 64
      %v1763 = vpop.permute.xlu0 %1762
      %1764 = vrot.lane.b32.xlu0 %v1020, 64
      %v1765 = vpop.permute.xlu0 %1764
      %1766 = vrot.lane.b32.xlu0 %v1022, 64
      %v1767 = vpop.permute.xlu0 %1766
      %1768 = vrot.lane.b32.xlu0 %v1033, 64
      %v1769 = vpop.permute.xlu0 %1768
      %1770 = vrot.lane.b32.xlu0 %v1035, 64
      %v1771 = vpop.permute.xlu0 %1770
      %v1804 = vsel %vm667, %v746, %v1037
      %v1805 = vsel %vm667, %v747, %v1039
      %v1806 = vsel %vm667, %v749, %v1041
      %v1807 = vsel %vm667, %v750, %v1043
      %v1808 = vsel %vm667, %v752, %v1045
      %v1809 = vsel %vm667, %v753, %v1047
      %v1810 = vsel %vm667, %v755, %v1049
      %v1811 = vsel %vm667, %v756, %v1051
      %v1812 = vsel %vm667, %v758, %v1053
      %v1813 = vsel %vm667, %v759, %v1055
      %v1814 = vsel %vm667, %v761, %v1057
      %v1815 = vsel %vm667, %v762, %v1059
      %v1816 = vsel %vm667, %v764, %v1061
      %v1817 = vsel %vm667, %v765, %v1063
      %v1818 = vsel %vm667, %v767, %v1065
      %v1819 = vsel %vm667, %v768, %v1067
      %v1820 = vsel %vm667, %v770, %v1069
      %v1821 = vsel %vm667, %v771, %v1071
      %v1822 = vsel %vm667, %v773, %v1073
      %v1823 = vsel %vm667, %v774, %v1075
      %v1824 = vsel %vm667, %v776, %v1077
      %v1825 = vsel %vm667, %v777, %v1079
      %v1826 = vsel %vm667, %v779, %v1081
      %v1827 = vsel %vm667, %v780, %v1083
      %v1828 = vsel %vm667, %v782, %v1085
      %v1829 = vsel %vm667, %v783, %v1087
      %v1830 = vsel %vm667, %v785, %v1089
      %v1831 = vsel %vm667, %v786, %v1091
      %v1832 = vsel %vm667, %v788, %v1093
      %v1833 = vsel %vm667, %v789, %v1095
      %v1834 = vsel %vm667, %v791, %v1097
      %v1835 = vsel %vm667, %v792, %v1099
      %vm1836 = vcmask 130048
      %v1837 = vsel %vm1836, %v1804, %v1133
      %v1838 = vsel %vm1836, %v1805, %v1135
      %v1839 = vsel %vm1836, %v1806, %v1137
      %v1840 = vsel %vm1836, %v1807, %v1139
      %v1841 = vsel %vm1836, %v1808, %v1141
      %v1842 = vsel %vm1836, %v1809, %v1143
      %v1843 = vsel %vm1836, %v1810, %v1145
      %v1844 = vsel %vm1836, %v1811, %v1147
      %v1845 = vsel %vm1836, %v1812, %v1149
      %v1846 = vsel %vm1836, %v1813, %v1151
      %v1847 = vsel %vm1836, %v1814, %v1153
      %v1848 = vsel %vm1836, %v1815, %v1155
      %v1849 = vsel %vm1836, %v1816, %v1157
      %v1850 = vsel %vm1836, %v1817, %v1159
      %v1851 = vsel %vm1836, %v1818, %v1161
      %v1852 = vsel %vm1836, %v1819, %v1163
      %v1853 = vsel %vm1836, %v1820, %v1165
      %v1854 = vsel %vm1836, %v1821, %v1167
      %v1855 = vsel %vm1836, %v1822, %v1169
      %v1856 = vsel %vm1836, %v1823, %v1171
      %v1857 = vsel %vm1836, %v1824, %v1173
      %v1858 = vsel %vm1836, %v1825, %v1175
      %v1859 = vsel %vm1836, %v1826, %v1177
      %v1860 = vsel %vm1836, %v1827, %v1179
      %v1861 = vsel %vm1836, %v1828, %v1181
      %v1862 = vsel %vm1836, %v1829, %v1183
      %v1863 = vsel %vm1836, %v1830, %v1185
      %v1864 = vsel %vm1836, %v1831, %v1187
      %v1865 = vsel %vm1836, %v1832, %v1189
      %v1866 = vsel %vm1836, %v1833, %v1191
      %v1867 = vsel %vm1836, %v1834, %v1193
      %v1868 = vsel %vm1836, %v1835, %v1195
      %vm1869 = vcmask 195584
      %v1870 = vsel %vm1869, %v1837, %v1229
      %v1871 = vsel %vm1869, %v1838, %v1231
      %v1872 = vsel %vm1869, %v1839, %v1233
      %v1873 = vsel %vm1869, %v1840, %v1235
      %v1874 = vsel %vm1869, %v1841, %v1237
      %v1875 = vsel %vm1869, %v1842, %v1239
      %v1876 = vsel %vm1869, %v1843, %v1241
      %v1877 = vsel %vm1869, %v1844, %v1243
      %v1878 = vsel %vm1869, %v1845, %v1245
      %v1879 = vsel %vm1869, %v1846, %v1247
      %v1880 = vsel %vm1869, %v1847, %v1249
      %v1881 = vsel %vm1869, %v1848, %v1251
      %v1882 = vsel %vm1869, %v1849, %v1253
      %v1883 = vsel %vm1869, %v1850, %v1255
      %v1884 = vsel %vm1869, %v1851, %v1257
      %v1885 = vsel %vm1869, %v1852, %v1259
      %v1886 = vsel %vm1869, %v1853, %v1261
      %v1887 = vsel %vm1869, %v1854, %v1263
      %v1888 = vsel %vm1869, %v1855, %v1265
      %v1889 = vsel %vm1869, %v1856, %v1267
      %v1890 = vsel %vm1869, %v1857, %v1269
      %v1891 = vsel %vm1869, %v1858, %v1271
      %v1892 = vsel %vm1869, %v1859, %v1273
      %v1893 = vsel %vm1869, %v1860, %v1275
      %v1894 = vsel %vm1869, %v1861, %v1277
      %v1895 = vsel %vm1869, %v1862, %v1279
      %v1896 = vsel %vm1869, %v1863, %v1281
      %v1897 = vsel %vm1869, %v1864, %v1283
      %v1898 = vsel %vm1869, %v1865, %v1285
      %v1899 = vsel %vm1869, %v1866, %v1287
      %v1900 = vsel %vm1869, %v1867, %v1289
      %v1901 = vsel %vm1869, %v1868, %v1291
      %v1902 = vsel %vm425, %v1870, %v1325
      %v1903 = vsel %vm425, %v1871, %v1327
      %v1904 = vsel %vm425, %v1872, %v1329
      %v1905 = vsel %vm425, %v1873, %v1331
      %v1906 = vsel %vm425, %v1874, %v1333
      %v1907 = vsel %vm425, %v1875, %v1335
      %v1908 = vsel %vm425, %v1876, %v1337
      %v1909 = vsel %vm425, %v1877, %v1339
      %v1910 = vsel %vm425, %v1878, %v1341
      %v1911 = vsel %vm425, %v1879, %v1343
      %v1912 = vsel %vm425, %v1880, %v1345
      %v1913 = vsel %vm425, %v1881, %v1347
      %v1914 = vsel %vm425, %v1882, %v1349
      %v1915 = vsel %vm425, %v1883, %v1351
      %v1916 = vsel %vm425, %v1884, %v1353
      %v1917 = vsel %vm425, %v1885, %v1355
      %v1918 = vsel %vm425, %v1886, %v1357
      %v1919 = vsel %vm425, %v1887, %v1359
      %v1920 = vsel %vm425, %v1888, %v1361
      %v1921 = vsel %vm425, %v1889, %v1363
      %v1922 = vsel %vm425, %v1890, %v1365
      %v1923 = vsel %vm425, %v1891, %v1367
      %v1924 = vsel %vm425, %v1892, %v1369
      %v1925 = vsel %vm425, %v1893, %v1371
      %v1926 = vsel %vm425, %v1894, %v1373
      %v1927 = vsel %vm425, %v1895, %v1375
      %v1928 = vsel %vm425, %v1896, %v1377
      %v1929 = vsel %vm425, %v1897, %v1379
      %v1930 = vsel %vm425, %v1898, %v1381
      %v1931 = vsel %vm425, %v1899, %v1383
      %v1932 = vsel %vm425, %v1900, %v1385
      %v1933 = vsel %vm425, %v1901, %v1387
      %vm1934 = vcmask 326656
      %v1935 = vsel %vm1934, %v1902, %v1421
      %v1936 = vsel %vm1934, %v1903, %v1423
      %v1937 = vsel %vm1934, %v1904, %v1425
      %v1938 = vsel %vm1934, %v1905, %v1427
      %v1939 = vsel %vm1934, %v1906, %v1429
      %v1940 = vsel %vm1934, %v1907, %v1431
      %v1941 = vsel %vm1934, %v1908, %v1433
      %v1942 = vsel %vm1934, %v1909, %v1435
      %v1943 = vsel %vm1934, %v1910, %v1437
      %v1944 = vsel %vm1934, %v1911, %v1439
      %v1945 = vsel %vm1934, %v1912, %v1441
      %v1946 = vsel %vm1934, %v1913, %v1443
      %v1947 = vsel %vm1934, %v1914, %v1445
      %v1948 = vsel %vm1934, %v1915, %v1447
      %v1949 = vsel %vm1934, %v1916, %v1449
      %v1950 = vsel %vm1934, %v1917, %v1451
      %v1951 = vsel %vm1934, %v1918, %v1453
      %v1952 = vsel %vm1934, %v1919, %v1455
      %v1953 = vsel %vm1934, %v1920, %v1457
      %v1954 = vsel %vm1934, %v1921, %v1459
      %v1955 = vsel %vm1934, %v1922, %v1461
      %v1956 = vsel %vm1934, %v1923, %v1463
      %v1957 = vsel %vm1934, %v1924, %v1465
      %v1958 = vsel %vm1934, %v1925, %v1467
      %v1959 = vsel %vm1934, %v1926, %v1469
      %v1960 = vsel %vm1934, %v1927, %v1471
      %v1961 = vsel %vm1934, %v1928, %v1473
      %v1962 = vsel %vm1934, %v1929, %v1475
      %v1963 = vsel %vm1934, %v1930, %v1477
      %v1964 = vsel %vm1934, %v1931, %v1479
      %v1965 = vsel %vm1934, %v1932, %v1481
      %v1966 = vsel %vm1934, %v1933, %v1483
      %vm1967 = vcmask 392192
      %v1968 = vsel %vm1967, %v1935, %v1517
      %v1969 = vsel %vm1967, %v1936, %v1519
      %v1970 = vsel %vm1967, %v1937, %v1521
      %v1971 = vsel %vm1967, %v1938, %v1523
      %v1972 = vsel %vm1967, %v1939, %v1525
      %v1973 = vsel %vm1967, %v1940, %v1527
      %v1974 = vsel %vm1967, %v1941, %v1529
      %v1975 = vsel %vm1967, %v1942, %v1531
      %v1976 = vsel %vm1967, %v1943, %v1533
      %v1977 = vsel %vm1967, %v1944, %v1535
      %v1978 = vsel %vm1967, %v1945, %v1537
      %v1979 = vsel %vm1967, %v1946, %v1539
      %v1980 = vsel %vm1967, %v1947, %v1541
      %v1981 = vsel %vm1967, %v1948, %v1543
      %v1982 = vsel %vm1967, %v1949, %v1545
      %v1983 = vsel %vm1967, %v1950, %v1547
      %v1984 = vsel %vm1967, %v1951, %v1549
      %v1985 = vsel %vm1967, %v1952, %v1551
      %v1986 = vsel %vm1967, %v1953, %v1553
      %v1987 = vsel %vm1967, %v1954, %v1555
      %v1988 = vsel %vm1967, %v1955, %v1557
      %v1989 = vsel %vm1967, %v1956, %v1559
      %v1990 = vsel %vm1967, %v1957, %v1561
      %v1991 = vsel %vm1967, %v1958, %v1563
      %v1992 = vsel %vm1967, %v1959, %v1565
      %v1993 = vsel %vm1967, %v1960, %v1567
      %v1994 = vsel %vm1967, %v1961, %v1569
      %v1995 = vsel %vm1967, %v1962, %v1571
      %v1996 = vsel %vm1967, %v1963, %v1573
      %v1997 = vsel %vm1967, %v1964, %v1575
      %v1998 = vsel %vm1967, %v1965, %v1577
      %v1999 = vsel %vm1967, %v1966, %v1579
      %vm2000 = vcmask 457728
      %v2001 = vsel %vm2000, %v1968, %v1613
      %v2002 = vsel %vm2000, %v1969, %v1615
      %v2003 = vsel %vm2000, %v1970, %v1617
      %v2004 = vsel %vm2000, %v1971, %v1619
      %v2005 = vsel %vm2000, %v1972, %v1621
      %v2006 = vsel %vm2000, %v1973, %v1623
      %v2007 = vsel %vm2000, %v1974, %v1625
      %v2008 = vsel %vm2000, %v1975, %v1627
      %v2009 = vsel %vm2000, %v1976, %v1629
      %v2010 = vsel %vm2000, %v1977, %v1631
      %v2011 = vsel %vm2000, %v1978, %v1633
      %v2012 = vsel %vm2000, %v1979, %v1635
      %v2013 = vsel %vm2000, %v1980, %v1637
      %v2014 = vsel %vm2000, %v1981, %v1639
      %v2015 = vsel %vm2000, %v1982, %v1641
      %v2016 = vsel %vm2000, %v1983, %v1643
      %v2017 = vsel %vm2000, %v1984, %v1645
      %v2018 = vsel %vm2000, %v1985, %v1647
      %v2019 = vsel %vm2000, %v1986, %v1649
      %v2020 = vsel %vm2000, %v1987, %v1651
      %v2021 = vsel %vm2000, %v1988, %v1653
      %v2022 = vsel %vm2000, %v1989, %v1655
      %v2023 = vsel %vm2000, %v1990, %v1657
      %v2024 = vsel %vm2000, %v1991, %v1659
      %v2025 = vsel %vm2000, %v1992, %v1661
      %v2026 = vsel %vm2000, %v1993, %v1663
      %v2027 = vsel %vm2000, %v1994, %v1665
      %v2028 = vsel %vm2000, %v1995, %v1667
      %v2029 = vsel %vm2000, %v1996, %v1669
      %v2030 = vsel %vm2000, %v1997, %v1671
      %v2031 = vsel %vm2000, %v1998, %v1673
      %v2032 = vsel %vm2000, %v1999, %v1675
      %vm2033 = vcmask 523264
      %v2034 = vsel %vm2033, %v2001, %v1709
      %v2035 = vsel %vm2033, %v2002, %v1711
      %v2036 = vsel %vm2033, %v2003, %v1713
      %v2037 = vsel %vm2033, %v2004, %v1715
      %v2038 = vsel %vm2033, %v2005, %v1717
      %v2039 = vsel %vm2033, %v2006, %v1719
      %v2040 = vsel %vm2033, %v2007, %v1721
      %v2041 = vsel %vm2033, %v2008, %v1723
      %v2042 = vsel %vm2033, %v2009, %v1725
      %v2043 = vsel %vm2033, %v2010, %v1727
      %v2044 = vsel %vm2033, %v2011, %v1729
      %v2045 = vsel %vm2033, %v2012, %v1731
      %v2046 = vsel %vm2033, %v2013, %v1733
      %v2047 = vsel %vm2033, %v2014, %v1735
      %v2048 = vsel %vm2033, %v2015, %v1737
      %v2049 = vsel %vm2033, %v2016, %v1739
      %v2050 = vsel %vm2033, %v2017, %v1741
      %v2051 = vsel %vm2033, %v2018, %v1743
      %v2052 = vsel %vm2033, %v2019, %v1745
      %v2053 = vsel %vm2033, %v2020, %v1747
      %v2054 = vsel %vm2033, %v2021, %v1749
      %v2055 = vsel %vm2033, %v2022, %v1751
      %v2056 = vsel %vm2033, %v2023, %v1753
      %v2057 = vsel %vm2033, %v2024, %v1755
      %v2058 = vsel %vm2033, %v2025, %v1757
      %v2059 = vsel %vm2033, %v2026, %v1759
      %v2060 = vsel %vm2033, %v2027, %v1761
      %v2061 = vsel %vm2033, %v2028, %v1763
      %v2062 = vsel %vm2033, %v2029, %v1765
      %v2063 = vsel %vm2033, %v2030, %v1767
      %v2064 = vsel %vm2033, %v2031, %v1769
      %v2065 = vsel %vm2033, %v2032, %v1771
      %v2066 = vpack.c.bf16 %v2035, %v2034
      %v2067 = vpack.c.bf16 %v2037, %v2036
      %v2068 = vpack.c.bf16 %v2039, %v2038
      %v2069 = vpack.c.bf16 %v2041, %v2040
      %v2070 = vpack.c.bf16 %v2043, %v2042
      %v2071 = vpack.c.bf16 %v2045, %v2044
      %v2072 = vpack.c.bf16 %v2047, %v2046
      %v2073 = vpack.c.bf16 %v2049, %v2048
      %v2074 = vpack.c.bf16 %v2051, %v2050
      %v2075 = vpack.c.bf16 %v2053, %v2052
      %v2076 = vpack.c.bf16 %v2055, %v2054
      %v2077 = vpack.c.bf16 %v2057, %v2056
      %v2078 = vpack.c.bf16 %v2059, %v2058
      %v2079 = vpack.c.bf16 %v2061, %v2060
      %v2080 = vpack.c.bf16 %v2063, %v2062
      %v2081 = vpack.c.bf16 %v2065, %v2064
      %v2082 = vld [vmem:[%s4] sm:$0xf]
      %v2083 = vld [vmem:[%s4 + $0x4] sm:$0xf]
      %v2084 = vld [vmem:[%s4 + $0x8] sm:$0xf]
      %v2085 = vld [vmem:[%s4 + $0xc] sm:$0xf]
      %v2086 = vld [vmem:[%s4 + $0x10] sm:$0xf]
      %v2087 = vld [vmem:[%s4 + $0x14] sm:$0xf]
      %v2088 = vld [vmem:[%s4 + $0x18] sm:$0xf]
      %v2089 = vld [vmem:[%s4 + $0x1c] sm:$0xf]
      %v2090 = vld [vmem:[%s4 + $0x20] sm:$0xf]
      %v2100 = vunpack.c.l.b16 %v2082
      %v2101 = vunpack.c.l.b16 %v2083
      %v2102 = vunpack.c.l.b16 %v2084
      %v2103 = vunpack.c.l.b16 %v2085
      %v2104 = vunpack.c.l.b16 %v2086
      %v2105 = vunpack.c.l.b16 %v2087
      %v2106 = vunpack.c.l.b16 %v2088
      %v2107 = vunpack.c.l.b16 %v2089
      %v2108 = vunpack.c.l.b16 %v2090
      %v2109 = vpack.c.b16 %v2101, %v2100
      %v2110 = vpack.c.b16 %v2103, %v2102
      %v2111 = vpack.c.b16 %v2105, %v2104
      %v2112 = vpack.c.b16 %v2107, %v2106
      %v2113 = vpack.c.b16 %v2108, %v2108
      %vm2118 = vcmask 588800
      %v2120 = vsel %vm2118, %v2066, 0
      %v2123 = vsel %vm2118, %v2067, 0
      %v2126 = vsel %vm2118, %v2068, 0
      %v2129 = vsel %vm2118, %v2069, 0
      %v2132 = vsel %vm2118, %v2070, 0
      %v2135 = vsel %vm2118, %v2071, 0
      %v2138 = vsel %vm2118, %v2072, 0
      %v2141 = vsel %vm2118, %v2073, 0
      %v2144 = vsel %vm2118, %v2074, 0
      %v2147 = vsel %vm2118, %v2075, 0
      %v2150 = vsel %vm2118, %v2076, 0
      %v2153 = vsel %vm2118, %v2077, 0
      %v2156 = vsel %vm2118, %v2078, 0
      %v2159 = vsel %vm2118, %v2079, 0
      %v2162 = vsel %vm2118, %v2080, 0
      %v2165 = vsel %vm2118, %v2081, 0
      %vm2167 = vcmask 1043456
      %v2169 = vsel %vm2167, %v2113, 0
      %2171 = vmatpush.bf16.msra.mxu0 0
      %2172 = vmatpush.bf16.msra.mxu0 0
      %2173 = vmatpush.bf16.msra.mxu0 0
      %2174 = vmatpush.bf16.msra.mxu0 %v2169
      %2175 = vmatpush.bf16.msra.mxu0 %v2112
      %2176 = vmatpush.bf16.msra.mxu0 %v2111
      %2177 = vmatpush.bf16.msra.mxu0 %v2110
      %2178 = vmatpush.bf16.msra.mxu0 %v2109
      %2179 = vmatmul.bf16.gmra.mxu0 %v2120
      %v2180 = vpop.f32.mrf.mxu0
      %v2181 = vadd.f32 0.0, %v2180
      %v2182 = vpop.f32.mrf.mxu0
      %v2183 = vadd.f32 0.0, %v2182
      %2184 = vmatmul.bf16.gmra.mxu0 %v2123
      %v2185 = vpop.f32.mrf.mxu0
      %v2186 = vadd.f32 0.0, %v2185
      %v2187 = vpop.f32.mrf.mxu0
      %v2188 = vadd.f32 0.0, %v2187
      %2189 = vmatmul.bf16.gmra.mxu0 %v2126
      %v2190 = vpop.f32.mrf.mxu0
      %v2191 = vadd.f32 0.0, %v2190
      %v2192 = vpop.f32.mrf.mxu0
      %v2193 = vadd.f32 0.0, %v2192
      %2194 = vmatmul.bf16.gmra.mxu0 %v2129
      %v2195 = vpop.f32.mrf.mxu0
      %v2196 = vadd.f32 0.0, %v2195
      %v2197 = vpop.f32.mrf.mxu0
      %v2198 = vadd.f32 0.0, %v2197
      %2199 = vmatmul.bf16.gmra.mxu0 %v2132
      %v2200 = vpop.f32.mrf.mxu0
      %v2201 = vadd.f32 0.0, %v2200
      %v2202 = vpop.f32.mrf.mxu0
      %v2203 = vadd.f32 0.0, %v2202
      %2204 = vmatmul.bf16.gmra.mxu0 %v2135
      %v2205 = vpop.f32.mrf.mxu0
      %v2206 = vadd.f32 0.0, %v2205
      %v2207 = vpop.f32.mrf.mxu0
      %v2208 = vadd.f32 0.0, %v2207
      %2209 = vmatmul.bf16.gmra.mxu0 %v2138
      %v2210 = vpop.f32.mrf.mxu0
      %v2211 = vadd.f32 0.0, %v2210
      %v2212 = vpop.f32.mrf.mxu0
      %v2213 = vadd.f32 0.0, %v2212
      %2214 = vmatmul.bf16.gmra.mxu0 %v2141
      %v2215 = vpop.f32.mrf.mxu0
      %v2216 = vadd.f32 0.0, %v2215
      %v2217 = vpop.f32.mrf.mxu0
      %v2218 = vadd.f32 0.0, %v2217
      %2219 = vmatmul.bf16.gmra.mxu0 %v2144
      %v2220 = vpop.f32.mrf.mxu0
      %v2221 = vadd.f32 0.0, %v2220
      %v2222 = vpop.f32.mrf.mxu0
      %v2223 = vadd.f32 0.0, %v2222
      %2224 = vmatmul.bf16.gmra.mxu0 %v2147
      %v2225 = vpop.f32.mrf.mxu0
      %v2226 = vadd.f32 0.0, %v2225
      %v2227 = vpop.f32.mrf.mxu0
      %v2228 = vadd.f32 0.0, %v2227
      %2229 = vmatmul.bf16.gmra.mxu0 %v2150
      %v2230 = vpop.f32.mrf.mxu0
      %v2231 = vadd.f32 0.0, %v2230
      %v2232 = vpop.f32.mrf.mxu0
      %v2233 = vadd.f32 0.0, %v2232
      %2234 = vmatmul.bf16.gmra.mxu0 %v2153
      %v2235 = vpop.f32.mrf.mxu0
      %v2236 = vadd.f32 0.0, %v2235
      %v2237 = vpop.f32.mrf.mxu0
      %v2238 = vadd.f32 0.0, %v2237
      %2239 = vmatmul.bf16.gmra.mxu0 %v2156
      %v2240 = vpop.f32.mrf.mxu0
      %v2241 = vadd.f32 0.0, %v2240
      %v2242 = vpop.f32.mrf.mxu0
      %v2243 = vadd.f32 0.0, %v2242
      %2244 = vmatmul.bf16.gmra.mxu0 %v2159
      %v2245 = vpop.f32.mrf.mxu0
      %v2246 = vadd.f32 0.0, %v2245
      %v2247 = vpop.f32.mrf.mxu0
      %v2248 = vadd.f32 0.0, %v2247
      %2249 = vmatmul.bf16.gmra.mxu0 %v2162
      %v2250 = vpop.f32.mrf.mxu0
      %v2251 = vadd.f32 0.0, %v2250
      %v2252 = vpop.f32.mrf.mxu0
      %v2253 = vadd.f32 0.0, %v2252
      %2254 = vmatmul.bf16.gmra.mxu0 %v2165
      %v2255 = vpop.f32.mrf.mxu0
      %v2256 = vadd.f32 0.0, %v2255
      %v2257 = vpop.f32.mrf.mxu0
      %v2258 = vadd.f32 0.0, %v2257
      %2259 = vdwg.mxu0
      %v2260 = vld [vmem:[%s5] sm:$0x1]
      %v2262 = vperm.slane %v2260, 0
      %v2264 = vmul.f32 %v2181, %v2262
      %v2265 = vmul.f32 %v2183, %v2262
      %v2266 = vmul.f32 %v2186, %v2262
      %v2267 = vmul.f32 %v2188, %v2262
      %v2268 = vmul.f32 %v2191, %v2262
      %v2269 = vmul.f32 %v2193, %v2262
      %v2270 = vmul.f32 %v2196, %v2262
      %v2271 = vmul.f32 %v2198, %v2262
      %v2272 = vmul.f32 %v2201, %v2262
      %v2273 = vmul.f32 %v2203, %v2262
      %v2274 = vmul.f32 %v2206, %v2262
      %v2275 = vmul.f32 %v2208, %v2262
      %v2276 = vmul.f32 %v2211, %v2262
      %v2277 = vmul.f32 %v2213, %v2262
      %v2278 = vmul.f32 %v2216, %v2262
      %v2279 = vmul.f32 %v2218, %v2262
      %v2280 = vmul.f32 %v2221, %v2262
      %v2281 = vmul.f32 %v2223, %v2262
      %v2282 = vmul.f32 %v2226, %v2262
      %v2283 = vmul.f32 %v2228, %v2262
      %v2284 = vmul.f32 %v2231, %v2262
      %v2285 = vmul.f32 %v2233, %v2262
      %v2286 = vmul.f32 %v2236, %v2262
      %v2287 = vmul.f32 %v2238, %v2262
      %v2288 = vmul.f32 %v2241, %v2262
      %v2289 = vmul.f32 %v2243, %v2262
      %v2290 = vmul.f32 %v2246, %v2262
      %v2291 = vmul.f32 %v2248, %v2262
      %v2292 = vmul.f32 %v2251, %v2262
      %v2293 = vmul.f32 %v2253, %v2262
      %v2294 = vmul.f32 %v2256, %v2262
      %v2295 = vmul.f32 %v2258, %v2262
      %v2296 = vld [vmem:[%s6] sm:$0x1]
      %v2298 = vperm.slane %v2296, 0
      %v2300 = vadd.f32 %v2264, %v2298
      %v2301 = vadd.f32 %v2265, %v2298
      %v2302 = vadd.f32 %v2266, %v2298
      %v2303 = vadd.f32 %v2267, %v2298
      %v2304 = vadd.f32 %v2268, %v2298
      %v2305 = vadd.f32 %v2269, %v2298
      %v2306 = vadd.f32 %v2270, %v2298
      %v2307 = vadd.f32 %v2271, %v2298
      %v2308 = vadd.f32 %v2272, %v2298
      %v2309 = vadd.f32 %v2273, %v2298
      %v2310 = vadd.f32 %v2274, %v2298
      %v2311 = vadd.f32 %v2275, %v2298
      %v2312 = vadd.f32 %v2276, %v2298
      %v2313 = vadd.f32 %v2277, %v2298
      %v2314 = vadd.f32 %v2278, %v2298
      %v2315 = vadd.f32 %v2279, %v2298
      %v2316 = vadd.f32 %v2280, %v2298
      %v2317 = vadd.f32 %v2281, %v2298
      %v2318 = vadd.f32 %v2282, %v2298
      %v2319 = vadd.f32 %v2283, %v2298
      %v2320 = vadd.f32 %v2284, %v2298
      %v2321 = vadd.f32 %v2285, %v2298
      %v2322 = vadd.f32 %v2286, %v2298
      %v2323 = vadd.f32 %v2287, %v2298
      %v2324 = vadd.f32 %v2288, %v2298
      %v2325 = vadd.f32 %v2289, %v2298
      %v2326 = vadd.f32 %v2290, %v2298
      %v2327 = vadd.f32 %v2291, %v2298
      %v2328 = vadd.f32 %v2292, %v2298
      %v2329 = vadd.f32 %v2293, %v2298
      %v2330 = vadd.f32 %v2294, %v2298
      %v2331 = vadd.f32 %v2295, %v2298
      %v2332 = vmax.f32 %v2300, 0.0
      %v2333 = vmax.f32 %v2301, 0.0
      %v2334 = vmax.f32 %v2302, 0.0
      %v2335 = vmax.f32 %v2303, 0.0
      %v2336 = vmax.f32 %v2304, 0.0
      %v2337 = vmax.f32 %v2305, 0.0
      %v2338 = vmax.f32 %v2306, 0.0
      %v2339 = vmax.f32 %v2307, 0.0
      %v2340 = vmax.f32 %v2308, 0.0
      %v2341 = vmax.f32 %v2309, 0.0
      %v2342 = vmax.f32 %v2310, 0.0
      %v2343 = vmax.f32 %v2311, 0.0
      %v2344 = vmax.f32 %v2312, 0.0
      %v2345 = vmax.f32 %v2313, 0.0
      %v2346 = vmax.f32 %v2314, 0.0
      %v2347 = vmax.f32 %v2315, 0.0
      %v2348 = vmax.f32 %v2316, 0.0
      %v2349 = vmax.f32 %v2317, 0.0
      %v2350 = vmax.f32 %v2318, 0.0
      %v2351 = vmax.f32 %v2319, 0.0
      %v2352 = vmax.f32 %v2320, 0.0
      %v2353 = vmax.f32 %v2321, 0.0
      %v2354 = vmax.f32 %v2322, 0.0
      %v2355 = vmax.f32 %v2323, 0.0
      %v2356 = vmax.f32 %v2324, 0.0
      %v2357 = vmax.f32 %v2325, 0.0
      %v2358 = vmax.f32 %v2326, 0.0
      %v2359 = vmax.f32 %v2327, 0.0
      %v2360 = vmax.f32 %v2328, 0.0
      %v2361 = vmax.f32 %v2329, 0.0
      %v2362 = vmax.f32 %v2330, 0.0
      %v2363 = vmax.f32 %v2331, 0.0
      %v2364 = vpack.c.bf16 %v2333, %v2332
      %v2365 = vpack.c.bf16 %v2335, %v2334
      %v2366 = vpack.c.bf16 %v2337, %v2336
      %v2367 = vpack.c.bf16 %v2339, %v2338
      %v2368 = vpack.c.bf16 %v2341, %v2340
      %v2369 = vpack.c.bf16 %v2343, %v2342
      %v2370 = vpack.c.bf16 %v2345, %v2344
      %v2371 = vpack.c.bf16 %v2347, %v2346
      %v2372 = vpack.c.bf16 %v2349, %v2348
      %v2373 = vpack.c.bf16 %v2351, %v2350
      %v2374 = vpack.c.bf16 %v2353, %v2352
      %v2375 = vpack.c.bf16 %v2355, %v2354
      %v2376 = vpack.c.bf16 %v2357, %v2356
      %v2377 = vpack.c.bf16 %v2359, %v2358
      %v2378 = vpack.c.bf16 %v2361, %v2360
      %v2379 = vpack.c.bf16 %v2363, %v2362
      %v2380 = vld [vmem:[%s7] sm:$0xf]
      %v2382 = vsel %vm667, %v2364, 0
      %v2385 = vsel %vm667, %v2365, 0
      %v2388 = vsel %vm667, %v2366, 0
      %v2391 = vsel %vm667, %v2367, 0
      %v2394 = vsel %vm667, %v2368, 0
      %v2397 = vsel %vm667, %v2369, 0
      %v2400 = vsel %vm667, %v2370, 0
      %v2403 = vsel %vm667, %v2371, 0
      %v2406 = vsel %vm667, %v2372, 0
      %v2409 = vsel %vm667, %v2373, 0
      %v2412 = vsel %vm667, %v2374, 0
      %v2415 = vsel %vm667, %v2375, 0
      %v2418 = vsel %vm667, %v2376, 0
      %v2421 = vsel %vm667, %v2377, 0
      %v2424 = vsel %vm667, %v2378, 0
      %v2427 = vsel %vm667, %v2379, 0
      %v2430 = vsel %vm2167, %v2380, 0
      %2432 = vmatpush.bf16.msra.mxu0 0
      %2433 = vmatpush.bf16.msra.mxu0 0
      %2434 = vmatpush.bf16.msra.mxu0 0
      %2435 = vmatpush.bf16.msra.mxu0 0
      %2436 = vmatpush.bf16.msra.mxu0 0
      %2437 = vmatpush.bf16.msra.mxu0 0
      %2438 = vmatpush.bf16.msra.mxu0 0
      %2439 = vmatpush.bf16.msra.mxu0 %v2430
      %2440 = vmatmul.bf16.gmra.mxu0 %v2382
      %v2441 = vpop.f32.mrf.mxu0
      %v2442 = vadd.f32 0.0, %v2441
      %v2443 = vpop.f32.mrf.mxu0
      %v2444 = vadd.f32 0.0, %v2443
      %2445 = vmatmul.bf16.gmra.mxu0 %v2385
      %v2446 = vpop.f32.mrf.mxu0
      %v2447 = vadd.f32 0.0, %v2446
      %v2448 = vpop.f32.mrf.mxu0
      %v2449 = vadd.f32 0.0, %v2448
      %2450 = vmatmul.bf16.gmra.mxu0 %v2388
      %v2451 = vpop.f32.mrf.mxu0
      %v2452 = vadd.f32 0.0, %v2451
      %v2453 = vpop.f32.mrf.mxu0
      %v2454 = vadd.f32 0.0, %v2453
      %2455 = vmatmul.bf16.gmra.mxu0 %v2391
      %v2456 = vpop.f32.mrf.mxu0
      %v2457 = vadd.f32 0.0, %v2456
      %v2458 = vpop.f32.mrf.mxu0
      %v2459 = vadd.f32 0.0, %v2458
      %2460 = vmatmul.bf16.gmra.mxu0 %v2394
      %v2461 = vpop.f32.mrf.mxu0
      %v2462 = vadd.f32 0.0, %v2461
      %v2463 = vpop.f32.mrf.mxu0
      %v2464 = vadd.f32 0.0, %v2463
      %2465 = vmatmul.bf16.gmra.mxu0 %v2397
      %v2466 = vpop.f32.mrf.mxu0
      %v2467 = vadd.f32 0.0, %v2466
      %v2468 = vpop.f32.mrf.mxu0
      %v2469 = vadd.f32 0.0, %v2468
      %2470 = vmatmul.bf16.gmra.mxu0 %v2400
      %v2471 = vpop.f32.mrf.mxu0
      %v2472 = vadd.f32 0.0, %v2471
      %v2473 = vpop.f32.mrf.mxu0
      %v2474 = vadd.f32 0.0, %v2473
      %2475 = vmatmul.bf16.gmra.mxu0 %v2403
      %v2476 = vpop.f32.mrf.mxu0
      %v2477 = vadd.f32 0.0, %v2476
      %v2478 = vpop.f32.mrf.mxu0
      %v2479 = vadd.f32 0.0, %v2478
      %2480 = vmatmul.bf16.gmra.mxu0 %v2406
      %v2481 = vpop.f32.mrf.mxu0
      %v2482 = vadd.f32 0.0, %v2481
      %v2483 = vpop.f32.mrf.mxu0
      %v2484 = vadd.f32 0.0, %v2483
      %2485 = vmatmul.bf16.gmra.mxu0 %v2409
      %v2486 = vpop.f32.mrf.mxu0
      %v2487 = vadd.f32 0.0, %v2486
      %v2488 = vpop.f32.mrf.mxu0
      %v2489 = vadd.f32 0.0, %v2488
      %2490 = vmatmul.bf16.gmra.mxu0 %v2412
      %v2491 = vpop.f32.mrf.mxu0
      %v2492 = vadd.f32 0.0, %v2491
      %v2493 = vpop.f32.mrf.mxu0
      %v2494 = vadd.f32 0.0, %v2493
      %2495 = vmatmul.bf16.gmra.mxu0 %v2415
      %v2496 = vpop.f32.mrf.mxu0
      %v2497 = vadd.f32 0.0, %v2496
      %v2498 = vpop.f32.mrf.mxu0
      %v2499 = vadd.f32 0.0, %v2498
      %2500 = vmatmul.bf16.gmra.mxu0 %v2418
      %v2501 = vpop.f32.mrf.mxu0
      %v2502 = vadd.f32 0.0, %v2501
      %v2503 = vpop.f32.mrf.mxu0
      %v2504 = vadd.f32 0.0, %v2503
      %2505 = vmatmul.bf16.gmra.mxu0 %v2421
      %v2506 = vpop.f32.mrf.mxu0
      %v2507 = vadd.f32 0.0, %v2506
      %v2508 = vpop.f32.mrf.mxu0
      %v2509 = vadd.f32 0.0, %v2508
      %2510 = vmatmul.bf16.gmra.mxu0 %v2424
      %v2511 = vpop.f32.mrf.mxu0
      %v2512 = vadd.f32 0.0, %v2511
      %v2513 = vpop.f32.mrf.mxu0
      %v2514 = vadd.f32 0.0, %v2513
      %2515 = vmatmul.bf16.gmra.mxu0 %v2427
      %v2516 = vpop.f32.mrf.mxu0
      %v2517 = vadd.f32 0.0, %v2516
      %v2518 = vpop.f32.mrf.mxu0
      %v2519 = vadd.f32 0.0, %v2518
      %2520 = vdwg.mxu0
      %v2521 = vld [vmem:[%s8] sm:$0x1]
      %v2523 = vperm.slane %v2521, 0
      %v2525 = vmul.f32 %v2442, %v2523
      %v2526 = vmul.f32 %v2444, %v2523
      %v2527 = vmul.f32 %v2447, %v2523
      %v2528 = vmul.f32 %v2449, %v2523
      %v2529 = vmul.f32 %v2452, %v2523
      %v2530 = vmul.f32 %v2454, %v2523
      %v2531 = vmul.f32 %v2457, %v2523
      %v2532 = vmul.f32 %v2459, %v2523
      %v2533 = vmul.f32 %v2462, %v2523
      %v2534 = vmul.f32 %v2464, %v2523
      %v2535 = vmul.f32 %v2467, %v2523
      %v2536 = vmul.f32 %v2469, %v2523
      %v2537 = vmul.f32 %v2472, %v2523
      %v2538 = vmul.f32 %v2474, %v2523
      %v2539 = vmul.f32 %v2477, %v2523
      %v2540 = vmul.f32 %v2479, %v2523
      %v2541 = vmul.f32 %v2482, %v2523
      %v2542 = vmul.f32 %v2484, %v2523
      %v2543 = vmul.f32 %v2487, %v2523
      %v2544 = vmul.f32 %v2489, %v2523
      %v2545 = vmul.f32 %v2492, %v2523
      %v2546 = vmul.f32 %v2494, %v2523
      %v2547 = vmul.f32 %v2497, %v2523
      %v2548 = vmul.f32 %v2499, %v2523
      %v2549 = vmul.f32 %v2502, %v2523
      %v2550 = vmul.f32 %v2504, %v2523
      %v2551 = vmul.f32 %v2507, %v2523
      %v2552 = vmul.f32 %v2509, %v2523
      %v2553 = vmul.f32 %v2512, %v2523
      %v2554 = vmul.f32 %v2514, %v2523
      %v2555 = vmul.f32 %v2517, %v2523
      %v2556 = vmul.f32 %v2519, %v2523
      %v2557 = vld [vmem:[%s9] sm:$0x1]
      %v2559 = vperm.slane %v2557, 0
      %v2561 = vadd.f32 %v2525, %v2559
      %v2562 = vadd.f32 %v2526, %v2559
      %v2563 = vadd.f32 %v2527, %v2559
      %v2564 = vadd.f32 %v2528, %v2559
      %v2565 = vadd.f32 %v2529, %v2559
      %v2566 = vadd.f32 %v2530, %v2559
      %v2567 = vadd.f32 %v2531, %v2559
      %v2568 = vadd.f32 %v2532, %v2559
      %v2569 = vadd.f32 %v2533, %v2559
      %v2570 = vadd.f32 %v2534, %v2559
      %v2571 = vadd.f32 %v2535, %v2559
      %v2572 = vadd.f32 %v2536, %v2559
      %v2573 = vadd.f32 %v2537, %v2559
      %v2574 = vadd.f32 %v2538, %v2559
      %v2575 = vadd.f32 %v2539, %v2559
      %v2576 = vadd.f32 %v2540, %v2559
      %v2577 = vadd.f32 %v2541, %v2559
      %v2578 = vadd.f32 %v2542, %v2559
      %v2579 = vadd.f32 %v2543, %v2559
      %v2580 = vadd.f32 %v2544, %v2559
      %v2581 = vadd.f32 %v2545, %v2559
      %v2582 = vadd.f32 %v2546, %v2559
      %v2583 = vadd.f32 %v2547, %v2559
      %v2584 = vadd.f32 %v2548, %v2559
      %v2585 = vadd.f32 %v2549, %v2559
      %v2586 = vadd.f32 %v2550, %v2559
      %v2587 = vadd.f32 %v2551, %v2559
      %v2588 = vadd.f32 %v2552, %v2559
      %v2589 = vadd.f32 %v2553, %v2559
      %v2590 = vadd.f32 %v2554, %v2559
      %v2591 = vadd.f32 %v2555, %v2559
      %v2592 = vadd.f32 %v2556, %v2559
      %v2593 = vmax.f32 %v2561, 0.0
      %v2594 = vmax.f32 %v2562, 0.0
      %v2595 = vmax.f32 %v2563, 0.0
      %v2596 = vmax.f32 %v2564, 0.0
      %v2597 = vmax.f32 %v2565, 0.0
      %v2598 = vmax.f32 %v2566, 0.0
      %v2599 = vmax.f32 %v2567, 0.0
      %v2600 = vmax.f32 %v2568, 0.0
      %v2601 = vmax.f32 %v2569, 0.0
      %v2602 = vmax.f32 %v2570, 0.0
      %v2603 = vmax.f32 %v2571, 0.0
      %v2604 = vmax.f32 %v2572, 0.0
      %v2605 = vmax.f32 %v2573, 0.0
      %v2606 = vmax.f32 %v2574, 0.0
      %v2607 = vmax.f32 %v2575, 0.0
      %v2608 = vmax.f32 %v2576, 0.0
      %v2609 = vmax.f32 %v2577, 0.0
      %v2610 = vmax.f32 %v2578, 0.0
      %v2611 = vmax.f32 %v2579, 0.0
      %v2612 = vmax.f32 %v2580, 0.0
      %v2613 = vmax.f32 %v2581, 0.0
      %v2614 = vmax.f32 %v2582, 0.0
      %v2615 = vmax.f32 %v2583, 0.0
      %v2616 = vmax.f32 %v2584, 0.0
      %v2617 = vmax.f32 %v2585, 0.0
      %v2618 = vmax.f32 %v2586, 0.0
      %v2619 = vmax.f32 %v2587, 0.0
      %v2620 = vmax.f32 %v2588, 0.0
      %v2621 = vmax.f32 %v2589, 0.0
      %v2622 = vmax.f32 %v2590, 0.0
      %v2623 = vmax.f32 %v2591, 0.0
      %v2624 = vmax.f32 %v2592, 0.0
      %v2625 = vadd.f32 %v361, %v2593
      %v2626 = vadd.f32 %v362, %v2594
      %v2627 = vadd.f32 %v363, %v2595
      %v2628 = vadd.f32 %v364, %v2596
      %v2629 = vadd.f32 %v365, %v2597
      %v2630 = vadd.f32 %v366, %v2598
      %v2631 = vadd.f32 %v367, %v2599
      %v2632 = vadd.f32 %v368, %v2600
      %v2633 = vadd.f32 %v369, %v2601
      %v2634 = vadd.f32 %v370, %v2602
      %v2635 = vadd.f32 %v371, %v2603
      %v2636 = vadd.f32 %v372, %v2604
      %v2637 = vadd.f32 %v373, %v2605
      %v2638 = vadd.f32 %v374, %v2606
      %v2639 = vadd.f32 %v375, %v2607
      %v2640 = vadd.f32 %v376, %v2608
      %v2641 = vadd.f32 %v377, %v2609
      %v2642 = vadd.f32 %v378, %v2610
      %v2643 = vadd.f32 %v379, %v2611
      %v2644 = vadd.f32 %v380, %v2612
      %v2645 = vadd.f32 %v381, %v2613
      %v2646 = vadd.f32 %v382, %v2614
      %v2647 = vadd.f32 %v383, %v2615
      %v2648 = vadd.f32 %v384, %v2616
      %v2649 = vadd.f32 %v385, %v2617
      %v2650 = vadd.f32 %v386, %v2618
      %v2651 = vadd.f32 %v387, %v2619
      %v2652 = vadd.f32 %v388, %v2620
      %v2653 = vadd.f32 %v389, %v2621
      %v2654 = vadd.f32 %v390, %v2622
      %v2655 = vadd.f32 %v391, %v2623
      %v2656 = vadd.f32 %v392, %v2624
      %v2657 = vmax.f32 %v2625, 0.0
      %v2658 = vmax.f32 %v2626, 0.0
      %v2659 = vmax.f32 %v2627, 0.0
      %v2660 = vmax.f32 %v2628, 0.0
      %v2661 = vmax.f32 %v2629, 0.0
      %v2662 = vmax.f32 %v2630, 0.0
      %v2663 = vmax.f32 %v2631, 0.0
      %v2664 = vmax.f32 %v2632, 0.0
      %v2665 = vmax.f32 %v2633, 0.0
      %v2666 = vmax.f32 %v2634, 0.0
      %v2667 = vmax.f32 %v2635, 0.0
      %v2668 = vmax.f32 %v2636, 0.0
      %v2669 = vmax.f32 %v2637, 0.0
      %v2670 = vmax.f32 %v2638, 0.0
      %v2671 = vmax.f32 %v2639, 0.0
      %v2672 = vmax.f32 %v2640, 0.0
      %v2673 = vmax.f32 %v2641, 0.0
      %v2674 = vmax.f32 %v2642, 0.0
      %v2675 = vmax.f32 %v2643, 0.0
      %v2676 = vmax.f32 %v2644, 0.0
      %v2677 = vmax.f32 %v2645, 0.0
      %v2678 = vmax.f32 %v2646, 0.0
      %v2679 = vmax.f32 %v2647, 0.0
      %v2680 = vmax.f32 %v2648, 0.0
      %v2681 = vmax.f32 %v2649, 0.0
      %v2682 = vmax.f32 %v2650, 0.0
      %v2683 = vmax.f32 %v2651, 0.0
      %v2684 = vmax.f32 %v2652, 0.0
      %v2685 = vmax.f32 %v2653, 0.0
      %v2686 = vmax.f32 %v2654, 0.0
      %v2687 = vmax.f32 %v2655, 0.0
      %v2688 = vmax.f32 %v2656, 0.0
      %2689 = vst.msk [vmem:[%s359] sm:$0xff] %vm425, %v2657
      %2690 = vst.msk [vmem:[%s359 + $0x8] sm:$0xff] %vm425, %v2658
      %2691 = vst.msk [vmem:[%s359 + $0x10] sm:$0xff] %vm425, %v2659
      %2692 = vst.msk [vmem:[%s359 + $0x18] sm:$0xff] %vm425, %v2660
      %2693 = vst.msk [vmem:[%s359 + $0x20] sm:$0xff] %vm425, %v2661
      %2694 = vst.msk [vmem:[%s359 + $0x28] sm:$0xff] %vm425, %v2662
      %2695 = vst.msk [vmem:[%s359 + $0x30] sm:$0xff] %vm425, %v2663
      %2696 = vst.msk [vmem:[%s359 + $0x38] sm:$0xff] %vm425, %v2664
      %2697 = vst.msk [vmem:[%s359 + $0x40] sm:$0xff] %vm425, %v2665
      %2698 = vst.msk [vmem:[%s359 + $0x48] sm:$0xff] %vm425, %v2666
      %2699 = vst.msk [vmem:[%s359 + $0x50] sm:$0xff] %vm425, %v2667
      %2700 = vst.msk [vmem:[%s359 + $0x58] sm:$0xff] %vm425, %v2668
      %2701 = vst.msk [vmem:[%s359 + $0x60] sm:$0xff] %vm425, %v2669
      %2702 = vst.msk [vmem:[%s359 + $0x68] sm:$0xff] %vm425, %v2670
      %2703 = vst.msk [vmem:[%s359 + $0x70] sm:$0xff] %vm425, %v2671
      %2704 = vst.msk [vmem:[%s359 + $0x78] sm:$0xff] %vm425, %v2672
      %2705 = vst.msk [vmem:[%s359 + $0x80] sm:$0xff] %vm425, %v2673
      %2706 = vst.msk [vmem:[%s359 + $0x88] sm:$0xff] %vm425, %v2674
      %2707 = vst.msk [vmem:[%s359 + $0x90] sm:$0xff] %vm425, %v2675
      %2708 = vst.msk [vmem:[%s359 + $0x98] sm:$0xff] %vm425, %v2676
      %2709 = vst.msk [vmem:[%s359 + $0xa0] sm:$0xff] %vm425, %v2677
      %2710 = vst.msk [vmem:[%s359 + $0xa8] sm:$0xff] %vm425, %v2678
      %2711 = vst.msk [vmem:[%s359 + $0xb0] sm:$0xff] %vm425, %v2679
      %2712 = vst.msk [vmem:[%s359 + $0xb8] sm:$0xff] %vm425, %v2680
      %2713 = vst.msk [vmem:[%s359 + $0xc0] sm:$0xff] %vm425, %v2681
      %2714 = vst.msk [vmem:[%s359 + $0xc8] sm:$0xff] %vm425, %v2682
      %2715 = vst.msk [vmem:[%s359 + $0xd0] sm:$0xff] %vm425, %v2683
      %2716 = vst.msk [vmem:[%s359 + $0xd8] sm:$0xff] %vm425, %v2684
      %2717 = vst.msk [vmem:[%s359 + $0xe0] sm:$0xff] %vm425, %v2685
      %2718 = vst.msk [vmem:[%s359 + $0xe8] sm:$0xff] %vm425, %v2686
      %2719 = vst.msk [vmem:[%s359 + $0xf0] sm:$0xff] %vm425, %v2687
      %2720 = vst.msk [vmem:[%s359 + $0xf8] sm:$0xff] %vm425, %v2688
      %p2721 = scmp.lt.s32.totalorder %s21, 1
      %s2722 = scalar_select %p2721, %s21, 1
      %s2723 = smul.addr %s2722, 32
      %s2724 = smul.addr %s2723, 8
      %s2725 = scalar_lea.vmem %s10, %s2724
      // Predicated region
      $region61: #{small_encoder_forward.8} parent=59 // pred_check
        %p2726 = pneg %p254
      $region62: #{small_encoder_forward.8} parent=59 // pred_check_branch
        %2728 = sbr.rel (%p2726) target = $region64
      $region63: #{small_encoder_forward.8} parent=59 // pred_region
        _
      $region64: #{small_encoder_forward.8} parent=59 // pred_fallthru
        _
    $region60: #{small_encoder_forward.8} parent=5 // pred_fallthru
      _
    %p2729 = scmp.le.s32.totalorder 2, %s16
    // Predicated region
    $region65: #{small_encoder_forward.8} parent=5 // pred_check
      %p2730 = pneg %p2729
    $region66: #{small_encoder_forward.8} parent=5 // pred_check_branch
      %2732 = sbr.rel (%p2730) target = $region68
    $region67: #{small_encoder_forward.8} parent=5 // pred_region
      %s2733 = ssub.s32 %s16, 2
      // Predicated region
      $region69: #{small_encoder_forward.8} parent=67 // pred_check
        %p2734 = pneg %p260
      $region70: #{small_encoder_forward.8} parent=67 // pred_check_branch
        %2736 = sbr.rel (%p2734) target = $region72
      $region71: #{small_encoder_forward.8} parent=67 // pred_region
        %p2737 = scmp.lt.s32.totalorder %s22, 1
        %s2738 = scalar_select %p2737, %s22, 1
        %s2739 = smul.addr %s2738, 32
        %s2740 = smul.addr %s2739, 8
        %s2741 = scalar_lea.vmem %s10, %s2740
      $region72: #{small_encoder_forward.8} parent=67 // pred_fallthru
        _
    $region68: #{small_encoder_forward.8} parent=5 // pred_fallthru
      _
  $region6: #{small_encoder_forward.8} parent=0 // loop_footer
    %s20 = sadd.s32 1, %s16
  $region7: #{small_encoder_forward.8} parent=0 // loop_footer_branch
    %15 = sbr.rel target = $region3
  $region8: #{small_encoder_forward.8} parent=0 // loop_exit
    _

// kernel: small_encoder_forward.10
$region0: #{small_encoder_forward.10}
  #allocation0 [shape = 'u32[]', space=smem, size = 0x4, offset = 0x4, fixed_abs, tag = 'smem constant byte address 0x4 - core index']
  #allocation1 [shape = 'u32[72,128]{1,0:T(1,128)}', space=vmem, size = 0x9000, scoped, tag = 'internal scratch']
  #allocation2 [shape = 'f32[9,9,64]{2,1,0:T(8,128)}', space=vmem, size = 0x12000, scoped, tag = 'scratch operand']
  %s0 = inlined_call_operand.vmem [shape: f32[2,8,8,128], index: 0, kind: input, shape index: {}]
  %s1 = inlined_call_operand.vmem [shape: bf16[128,64], index: 1, kind: input, shape index: {}]
  %s2 = inlined_call_operand.vmem [shape: f32[1,64], index: 2, kind: input, shape index: {}]
  %s3 = inlined_call_operand.vmem [shape: f32[1,64], index: 3, kind: input, shape index: {}]
  %s4 = inlined_call_operand.vmem [shape: bf16[256,16], index: 4, kind: input, shape index: {}]
  %s5 = inlined_call_operand.vmem [shape: f32[1,16], index: 5, kind: input, shape index: {}]
  %s6 = inlined_call_operand.vmem [shape: f32[1,16], index: 6, kind: input, shape index: {}]
  %s7 = inlined_call_operand.vmem [shape: bf16[16,64], index: 7, kind: input, shape index: {}]
  %s8 = inlined_call_operand.vmem [shape: f32[1,64], index: 8, kind: input, shape index: {}]
  %s9 = inlined_call_operand.vmem [shape: f32[1,64], index: 9, kind: input, shape index: {}]
  %s10 = inlined_call_operand.vmem [shape: bf16[128,64], index: 10, kind: input, shape index: {}]
  %s11 = inlined_call_operand.vmem [shape: f32[1,64], index: 11, kind: input, shape index: {}]
  %s12 = inlined_call_operand.vmem [shape: f32[1,64], index: 12, kind: input, shape index: {}]
  %s13 = inlined_call_operand.vmem [shape: f32[2,8,8,64], index: 13, kind: output, shape index: {}]
  %s14 = sld [smem:[#allocation0]]
  $region85: #{small_encoder_forward.10} parent=0
    _
  %s16 = ssub.s32 1, %s14
  %s17 = scalar_select 0, %s16, %s14
  loop: start=0, step=1, limit=4
  $region2: #{small_encoder_forward.10} parent=0 // loop_pre_header
    _
  $region3: #{small_encoder_forward.10} parent=0 // loop_header
    %s19 = sphi 0, %s23
    %p20 = scmp.ge.s32.totalorder %s19, 4
    %s29 = sphi 0, %s31
    %s32 = sphi 0, %s29
    %s33 = sphi 0, %s32
    %s49 = sphi 0, %s33
    %s53 = sphi 0, %s53
    %s55 = sphi 0, %s53
    %s56 = sphi 0, %s55
    %s70 = sphi 0, %s56
    %s74 = sphi 0, %s74
    %s76 = sphi 0, %s74
    %s77 = sphi 0, %s76
    %s91 = sphi 0, %s77
    %s95 = sphi 0, %s95
    %s97 = sphi 0, %s95
    %s98 = sphi 0, %s97
    %s112 = sphi 0, %s98
    %s116 = sphi 0, %s116
    %s118 = sphi 0, %s116
    %s119 = sphi 0, %s118
    %s133 = sphi 0, %s119
    %s137 = sphi 0, %s137
    %s139 = sphi 0, %s137
    %s140 = sphi 0, %s139
    %s154 = sphi 0, %s140
    %s158 = sphi 0, %s158
    %s160 = sphi 0, %s158
    %s161 = sphi 0, %s160
    %s175 = sphi 0, %s161
    %s179 = sphi 0, %s179
    %s181 = sphi 0, %s179
    %s182 = sphi 0, %s181
    %s196 = sphi 0, %s182
    %s200 = sphi 0, %s200
    %s202 = sphi 0, %s200
    %s203 = sphi 0, %s202
    %s217 = sphi 0, %s203
    %s221 = sphi 0, %s221
    %s223 = sphi 0, %s221
    %s224 = sphi 0, %s223
    %s238 = sphi 0, %s224
    %s242 = sphi 0, %s242
    %s244 = sphi 0, %s242
    %s245 = sphi 0, %s244
    %s259 = sphi 0, %s245
    %s263 = sphi 0, %s263
    %s265 = sphi 0, %s263
    %s266 = sphi 0, %s265
    %s280 = sphi 0, %s266
    %s284 = sphi 0, %s284
    %s286 = sphi 0, %s284
    %s287 = sphi 0, %s286
    %s301 = sphi 0, %s287
    %s307 = sphi 0, %s309
    %s310 = sphi 0, %s307
    %s311 = sphi 0, %s310
    %s327 = sphi 0, %s311
  $region4: #{small_encoder_forward.10} parent=0 // loop_header_branch
    %22 = sbr.rel (%p20) target = $region8
  $region5: #{small_encoder_forward.10} parent=0 // loop_body
    %s24 = ssub.s32 %s19, 1
    %s25 = ssub.s32 %s19, 2
    %s26 = sadd.s32 %s19, 1
    %s27 = ssub.s32 %s19, %s26
    %p28 = scmp.eq.s32.totalorder %s27, 0
    %s30 = sadd.s32 %s29, 1
    %s31 = scalar_select %p28, %s29, %s30
    %p34 = pneg %p28
    %p35 = scmp.eq.s32.totalorder %s19, 1
    %p36 = por %p34, %p35
    %p37 = scmp.ne.s32.totalorder %s29, %s32
    %p38 = scmp.eq.s32.totalorder %s19, 0
    %p39 = por %p37, %p38
    %p40 = scmp.ne.s32.totalorder %s29, %s32
    %p41 = scmp.eq.s32.totalorder %s24, 1
    %p42 = por %p40, %p41
    %p43 = scmp.ne.s32.totalorder %s32, %s33
    %p44 = scmp.eq.s32.totalorder %s24, 0
    %p45 = por %p43, %p44
    %p46 = scmp.ne.s32.totalorder %s32, %s33
    %p47 = scmp.eq.s32.totalorder %s25, 1
    %p48 = por %p46, %p47
    %p50 = scmp.ne.s32.totalorder %s33, %s49
    %p51 = scmp.eq.s32.totalorder %s25, 0
    %p52 = por %p50, %p51
    %s54 = sadd.s32 %s53, 1
    %p57 = scmp.eq.s32.totalorder %s19, 1
    %p58 = scmp.ne.s32.totalorder %s53, %s55
    %p59 = scmp.eq.s32.totalorder %s19, 0
    %p60 = por %p58, %p59
    %p61 = scmp.ne.s32.totalorder %s53, %s55
    %p62 = scmp.eq.s32.totalorder %s24, 1
    %p63 = por %p61, %p62
    %p64 = scmp.ne.s32.totalorder %s55, %s56
    %p65 = scmp.eq.s32.totalorder %s24, 0
    %p66 = por %p64, %p65
    %p67 = scmp.ne.s32.totalorder %s55, %s56
    %p68 = scmp.eq.s32.totalorder %s25, 1
    %p69 = por %p67, %p68
    %p71 = scmp.ne.s32.totalorder %s56, %s70
    %p72 = scmp.eq.s32.totalorder %s25, 0
    %p73 = por %p71, %p72
    %s75 = sadd.s32 %s74, 1
    %p78 = scmp.eq.s32.totalorder %s19, 1
    %p79 = scmp.ne.s32.totalorder %s74, %s76
    %p80 = scmp.eq.s32.totalorder %s19, 0
    %p81 = por %p79, %p80
    %p82 = scmp.ne.s32.totalorder %s74, %s76
    %p83 = scmp.eq.s32.totalorder %s24, 1
    %p84 = por %p82, %p83
    %p85 = scmp.ne.s32.totalorder %s76, %s77
    %p86 = scmp.eq.s32.totalorder %s24, 0
    %p87 = por %p85, %p86
    %p88 = scmp.ne.s32.totalorder %s76, %s77
    %p89 = scmp.eq.s32.totalorder %s25, 1
    %p90 = por %p88, %p89
    %p92 = scmp.ne.s32.totalorder %s77, %s91
    %p93 = scmp.eq.s32.totalorder %s25, 0
    %p94 = por %p92, %p93
    %s96 = sadd.s32 %s95, 1
    %p99 = scmp.eq.s32.totalorder %s19, 1
    %p100 = scmp.ne.s32.totalorder %s95, %s97
    %p101 = scmp.eq.s32.totalorder %s19, 0
    %p102 = por %p100, %p101
    %p103 = scmp.ne.s32.totalorder %s95, %s97
    %p104 = scmp.eq.s32.totalorder %s24, 1
    %p105 = por %p103, %p104
    %p106 = scmp.ne.s32.totalorder %s97, %s98
    %p107 = scmp.eq.s32.totalorder %s24, 0
    %p108 = por %p106, %p107
    %p109 = scmp.ne.s32.totalorder %s97, %s98
    %p110 = scmp.eq.s32.totalorder %s25, 1
    %p111 = por %p109, %p110
    %p113 = scmp.ne.s32.totalorder %s98, %s112
    %p114 = scmp.eq.s32.totalorder %s25, 0
    %p115 = por %p113, %p114
    %s117 = sadd.s32 %s116, 1
    %p120 = scmp.eq.s32.totalorder %s19, 1
    %p121 = scmp.ne.s32.totalorder %s116, %s118
    %p122 = scmp.eq.s32.totalorder %s19, 0
    %p123 = por %p121, %p122
    %p124 = scmp.ne.s32.totalorder %s116, %s118
    %p125 = scmp.eq.s32.totalorder %s24, 1
    %p126 = por %p124, %p125
    %p127 = scmp.ne.s32.totalorder %s118, %s119
    %p128 = scmp.eq.s32.totalorder %s24, 0
    %p129 = por %p127, %p128
    %p130 = scmp.ne.s32.totalorder %s118, %s119
    %p131 = scmp.eq.s32.totalorder %s25, 1
    %p132 = por %p130, %p131
    %p134 = scmp.ne.s32.totalorder %s119, %s133
    %p135 = scmp.eq.s32.totalorder %s25, 0
    %p136 = por %p134, %p135
    %s138 = sadd.s32 %s137, 1
    %p141 = scmp.eq.s32.totalorder %s19, 1
    %p142 = scmp.ne.s32.totalorder %s137, %s139
    %p143 = scmp.eq.s32.totalorder %s19, 0
    %p144 = por %p142, %p143
    %p145 = scmp.ne.s32.totalorder %s137, %s139
    %p146 = scmp.eq.s32.totalorder %s24, 1
    %p147 = por %p145, %p146
    %p148 = scmp.ne.s32.totalorder %s139, %s140
    %p149 = scmp.eq.s32.totalorder %s24, 0
    %p150 = por %p148, %p149
    %p151 = scmp.ne.s32.totalorder %s139, %s140
    %p152 = scmp.eq.s32.totalorder %s25, 1
    %p153 = por %p151, %p152
    %p155 = scmp.ne.s32.totalorder %s140, %s154
    %p156 = scmp.eq.s32.totalorder %s25, 0
    %p157 = por %p155, %p156
    %s159 = sadd.s32 %s158, 1
    %p162 = scmp.eq.s32.totalorder %s19, 1
    %p163 = scmp.ne.s32.totalorder %s158, %s160
    %p164 = scmp.eq.s32.totalorder %s19, 0
    %p165 = por %p163, %p164
    %p166 = scmp.ne.s32.totalorder %s158, %s160
    %p167 = scmp.eq.s32.totalorder %s24, 1
    %p168 = por %p166, %p167
    %p169 = scmp.ne.s32.totalorder %s160, %s161
    %p170 = scmp.eq.s32.totalorder %s24, 0
    %p171 = por %p169, %p170
    %p172 = scmp.ne.s32.totalorder %s160, %s161
    %p173 = scmp.eq.s32.totalorder %s25, 1
    %p174 = por %p172, %p173
    %p176 = scmp.ne.s32.totalorder %s161, %s175
    %p177 = scmp.eq.s32.totalorder %s25, 0
    %p178 = por %p176, %p177
    %s180 = sadd.s32 %s179, 1
    %p183 = scmp.eq.s32.totalorder %s19, 1
    %p184 = scmp.ne.s32.totalorder %s179, %s181
    %p185 = scmp.eq.s32.totalorder %s19, 0
    %p186 = por %p184, %p185
    %p187 = scmp.ne.s32.totalorder %s179, %s181
    %p188 = scmp.eq.s32.totalorder %s24, 1
    %p189 = por %p187, %p188
    %p190 = scmp.ne.s32.totalorder %s181, %s182
    %p191 = scmp.eq.s32.totalorder %s24, 0
    %p192 = por %p190, %p191
    %p193 = scmp.ne.s32.totalorder %s181, %s182
    %p194 = scmp.eq.s32.totalorder %s25, 1
    %p195 = por %p193, %p194
    %p197 = scmp.ne.s32.totalorder %s182, %s196
    %p198 = scmp.eq.s32.totalorder %s25, 0
    %p199 = por %p197, %p198
    %s201 = sadd.s32 %s200, 1
    %p204 = scmp.eq.s32.totalorder %s19, 1
    %p205 = scmp.ne.s32.totalorder %s200, %s202
    %p206 = scmp.eq.s32.totalorder %s19, 0
    %p207 = por %p205, %p206
    %p208 = scmp.ne.s32.totalorder %s200, %s202
    %p209 = scmp.eq.s32.totalorder %s24, 1
    %p210 = por %p208, %p209
    %p211 = scmp.ne.s32.totalorder %s202, %s203
    %p212 = scmp.eq.s32.totalorder %s24, 0
    %p213 = por %p211, %p212
    %p214 = scmp.ne.s32.totalorder %s202, %s203
    %p215 = scmp.eq.s32.totalorder %s25, 1
    %p216 = por %p214, %p215
    %p218 = scmp.ne.s32.totalorder %s203, %s217
    %p219 = scmp.eq.s32.totalorder %s25, 0
    %p220 = por %p218, %p219
    %s222 = sadd.s32 %s221, 1
    %p225 = scmp.eq.s32.totalorder %s19, 1
    %p226 = scmp.ne.s32.totalorder %s221, %s223
    %p227 = scmp.eq.s32.totalorder %s19, 0
    %p228 = por %p226, %p227
    %p229 = scmp.ne.s32.totalorder %s221, %s223
    %p230 = scmp.eq.s32.totalorder %s24, 1
    %p231 = por %p229, %p230
    %p232 = scmp.ne.s32.totalorder %s223, %s224
    %p233 = scmp.eq.s32.totalorder %s24, 0
    %p234 = por %p232, %p233
    %p235 = scmp.ne.s32.totalorder %s223, %s224
    %p236 = scmp.eq.s32.totalorder %s25, 1
    %p237 = por %p235, %p236
    %p239 = scmp.ne.s32.totalorder %s224, %s238
    %p240 = scmp.eq.s32.totalorder %s25, 0
    %p241 = por %p239, %p240
    %s243 = sadd.s32 %s242, 1
    %p246 = scmp.eq.s32.totalorder %s19, 1
    %p247 = scmp.ne.s32.totalorder %s242, %s244
    %p248 = scmp.eq.s32.totalorder %s19, 0
    %p249 = por %p247, %p248
    %p250 = scmp.ne.s32.totalorder %s242, %s244
    %p251 = scmp.eq.s32.totalorder %s24, 1
    %p252 = por %p250, %p251
    %p253 = scmp.ne.s32.totalorder %s244, %s245
    %p254 = scmp.eq.s32.totalorder %s24, 0
    %p255 = por %p253, %p254
    %p256 = scmp.ne.s32.totalorder %s244, %s245
    %p257 = scmp.eq.s32.totalorder %s25, 1
    %p258 = por %p256, %p257
    %p260 = scmp.ne.s32.totalorder %s245, %s259
    %p261 = scmp.eq.s32.totalorder %s25, 0
    %p262 = por %p260, %p261
    %s264 = sadd.s32 %s263, 1
    %p267 = scmp.eq.s32.totalorder %s19, 1
    %p268 = scmp.ne.s32.totalorder %s263, %s265
    %p269 = scmp.eq.s32.totalorder %s19, 0
    %p270 = por %p268, %p269
    %p271 = scmp.ne.s32.totalorder %s263, %s265
    %p272 = scmp.eq.s32.totalorder %s24, 1
    %p273 = por %p271, %p272
    %p274 = scmp.ne.s32.totalorder %s265, %s266
    %p275 = scmp.eq.s32.totalorder %s24, 0
    %p276 = por %p274, %p275
    %p277 = scmp.ne.s32.totalorder %s265, %s266
    %p278 = scmp.eq.s32.totalorder %s25, 1
    %p279 = por %p277, %p278
    %p281 = scmp.ne.s32.totalorder %s266, %s280
    %p282 = scmp.eq.s32.totalorder %s25, 0
    %p283 = por %p281, %p282
    %s285 = sadd.s32 %s284, 1
    %p288 = scmp.eq.s32.totalorder %s19, 1
    %p289 = scmp.ne.s32.totalorder %s284, %s286
    %p290 = scmp.eq.s32.totalorder %s19, 0
    %p291 = por %p289, %p290
    %p292 = scmp.ne.s32.totalorder %s284, %s286
    %p293 = scmp.eq.s32.totalorder %s24, 1
    %p294 = por %p292, %p293
    %p295 = scmp.ne.s32.totalorder %s286, %s287
    %p296 = scmp.eq.s32.totalorder %s24, 0
    %p297 = por %p295, %p296
    %p298 = scmp.ne.s32.totalorder %s286, %s287
    %p299 = scmp.eq.s32.totalorder %s25, 1
    %p300 = por %p298, %p299
    %p302 = scmp.ne.s32.totalorder %s287, %s301
    %p303 = scmp.eq.s32.totalorder %s25, 0
    %p304 = por %p302, %p303
    %s305 = ssub.s32 %s19, %s26
    %p306 = scmp.eq.s32.totalorder %s305, 0
    %s308 = sadd.s32 %s307, 1
    %s309 = scalar_select %p306, %s307, %s308
    %p312 = pneg %p306
    %p313 = scmp.eq.s32.totalorder %s19, 1
    %p314 = por %p312, %p313
    %p315 = scmp.ne.s32.totalorder %s307, %s310
    %p316 = scmp.eq.s32.totalorder %s19, 0
    %p317 = por %p315, %p316
    %p318 = scmp.ne.s32.totalorder %s307, %s310
    %p319 = scmp.eq.s32.totalorder %s24, 1
    %p320 = por %p318, %p319
    %p321 = scmp.ne.s32.totalorder %s310, %s311
    %p322 = scmp.eq.s32.totalorder %s24, 0
    %p323 = por %p321, %p322
    %p324 = scmp.ne.s32.totalorder %s310, %s311
    %p325 = scmp.eq.s32.totalorder %s25, 1
    %p326 = por %p324, %p325
    %p328 = scmp.ne.s32.totalorder %s311, %s327
    %p329 = scmp.eq.s32.totalorder %s25, 0
    %p330 = por %p328, %p329
    %p331 = scmp.le.s32.totalorder 1, %s19
    %p332 = scmp.lt.s32.totalorder %s19, 3
    %p333 = pnand %p331, %p332
    %p334 = pneg %p333
    // Predicated region
    $region9: #{small_encoder_forward.10} parent=5 // pred_check
      _
    $region10: #{small_encoder_forward.10} parent=5 // pred_check_branch
      %336 = sbr.rel (%p333) target = $region12
    $region11: #{small_encoder_forward.10} parent=5 // pred_region
      %s337 = ssub.s32 %s19, 1
      // Predicated region
      $region13: #{small_encoder_forward.10} parent=11 // pred_check
        %p338 = pneg %p66
      $region14: #{small_encoder_forward.10} parent=11 // pred_check_branch
        %340 = sbr.rel (%p338) target = $region16
      $region15: #{small_encoder_forward.10} parent=11 // pred_region
        _
      $region16: #{small_encoder_forward.10} parent=11 // pred_fallthru
        _
      // Predicated region
      $region17: #{small_encoder_forward.10} parent=11 // pred_check
        %p341 = pneg %p87
      $region18: #{small_encoder_forward.10} parent=11 // pred_check_branch
        %343 = sbr.rel (%p341) target = $region20
      $region19: #{small_encoder_forward.10} parent=11 // pred_region
        _
      $region20: #{small_encoder_forward.10} parent=11 // pred_fallthru
        _
      // Predicated region
      $region21: #{small_encoder_forward.10} parent=11 // pred_check
        %p344 = pneg %p108
      $region22: #{small_encoder_forward.10} parent=11 // pred_check_branch
        %346 = sbr.rel (%p344) target = $region24
      $region23: #{small_encoder_forward.10} parent=11 // pred_region
        _
      $region24: #{small_encoder_forward.10} parent=11 // pred_fallthru
        _
      // Predicated region
      $region25: #{small_encoder_forward.10} parent=11 // pred_check
        %p347 = pneg %p129
      $region26: #{small_encoder_forward.10} parent=11 // pred_check_branch
        %349 = sbr.rel (%p347) target = $region28
      $region27: #{small_encoder_forward.10} parent=11 // pred_region
        _
      $region28: #{small_encoder_forward.10} parent=11 // pred_fallthru
        _
      // Predicated region
      $region29: #{small_encoder_forward.10} parent=11 // pred_check
        %p350 = pneg %p150
      $region30: #{small_encoder_forward.10} parent=11 // pred_check_branch
        %352 = sbr.rel (%p350) target = $region32
      $region31: #{small_encoder_forward.10} parent=11 // pred_region
        _
      $region32: #{small_encoder_forward.10} parent=11 // pred_fallthru
        _
      // Predicated region
      $region33: #{small_encoder_forward.10} parent=11 // pred_check
        %p353 = pneg %p171
      $region34: #{small_encoder_forward.10} parent=11 // pred_check_branch
        %355 = sbr.rel (%p353) target = $region36
      $region35: #{small_encoder_forward.10} parent=11 // pred_region
        _
      $region36: #{small_encoder_forward.10} parent=11 // pred_fallthru
        _
      // Predicated region
      $region37: #{small_encoder_forward.10} parent=11 // pred_check
        %p356 = pneg %p192
      $region38: #{small_encoder_forward.10} parent=11 // pred_check_branch
        %358 = sbr.rel (%p356) target = $region40
      $region39: #{small_encoder_forward.10} parent=11 // pred_region
        _
      $region40: #{small_encoder_forward.10} parent=11 // pred_fallthru
        _
      // Predicated region
      $region41: #{small_encoder_forward.10} parent=11 // pred_check
        %p359 = pneg %p213
      $region42: #{small_encoder_forward.10} parent=11 // pred_check_branch
        %361 = sbr.rel (%p359) target = $region44
      $region43: #{small_encoder_forward.10} parent=11 // pred_region
        _
      $region44: #{small_encoder_forward.10} parent=11 // pred_fallthru
        _
      // Predicated region
      $region45: #{small_encoder_forward.10} parent=11 // pred_check
        %p362 = pneg %p234
      $region46: #{small_encoder_forward.10} parent=11 // pred_check_branch
        %364 = sbr.rel (%p362) target = $region48
      $region47: #{small_encoder_forward.10} parent=11 // pred_region
        _
      $region48: #{small_encoder_forward.10} parent=11 // pred_fallthru
        _
      // Predicated region
      $region49: #{small_encoder_forward.10} parent=11 // pred_check
        %p365 = pneg %p255
      $region50: #{small_encoder_forward.10} parent=11 // pred_check_branch
        %367 = sbr.rel (%p365) target = $region52
      $region51: #{small_encoder_forward.10} parent=11 // pred_region
        _
      $region52: #{small_encoder_forward.10} parent=11 // pred_fallthru
        _
      // Predicated region
      $region53: #{small_encoder_forward.10} parent=11 // pred_check
        %p368 = pneg %p276
      $region54: #{small_encoder_forward.10} parent=11 // pred_check_branch
        %370 = sbr.rel (%p368) target = $region56
      $region55: #{small_encoder_forward.10} parent=11 // pred_region
        _
      $region56: #{small_encoder_forward.10} parent=11 // pred_fallthru
        _
      // Predicated region
      $region57: #{small_encoder_forward.10} parent=11 // pred_check
        %p371 = pneg %p297
      $region58: #{small_encoder_forward.10} parent=11 // pred_check_branch
        %373 = sbr.rel (%p371) target = $region60
      $region59: #{small_encoder_forward.10} parent=11 // pred_region
        _
      $region60: #{small_encoder_forward.10} parent=11 // pred_fallthru
        _
    $region12: #{small_encoder_forward.10} parent=5 // pred_fallthru
      _
    %p374 = scmp.lt.s32.totalorder %s19, 2
    // Predicated region
    $region61: #{small_encoder_forward.10} parent=5 // pred_check
      %p375 = pneg %p374
    $region62: #{small_encoder_forward.10} parent=5 // pred_check_branch
      %377 = sbr.rel (%p375) target = $region64
    $region63: #{small_encoder_forward.10} parent=5 // pred_region
      // Predicated region
      $region65: #{small_encoder_forward.10} parent=63 // pred_check
        %p378 = pneg %p39
      $region66: #{small_encoder_forward.10} parent=63 // pred_check_branch
        %380 = sbr.rel (%p378) target = $region68
      $region67: #{small_encoder_forward.10} parent=63 // pred_region
        %p381 = scmp.lt.s32.totalorder %s19, 1
        %s382 = scalar_select %p381, %s19, 1
        %s383 = smul.addr %s382, 8
        %s384 = smul.addr %s383, 8
        %s385 = scalar_lea.vmem %s0, %s384
      $region68: #{small_encoder_forward.10} parent=63 // pred_fallthru
        _
    $region64: #{small_encoder_forward.10} parent=5 // pred_fallthru
      _
    %p386 = scmp.le.s32.totalorder 1, %s19
    %p387 = scmp.lt.s32.totalorder %s19, 3
    %p388 = pnand %p386, %p387
    %p389 = pneg %p388
    // Predicated region
    $region69: #{small_encoder_forward.10} parent=5 // pred_check
      _
    $region70: #{small_encoder_forward.10} parent=5 // pred_check_branch
      %391 = sbr.rel (%p388) target = $region72
    $region71: #{small_encoder_forward.10} parent=5 // pred_region
      %s392 = ssub.s32 %s19, 1
      %p393 = scmp.lt.s32.totalorder %s24, 1
      %s394 = scalar_select %p393, %s24, 1
      %s395 = smul.addr %s394, 8
      %s396 = smul.addr %s395, 8
      %s397 = scalar_lea.vmem %s0, %s396
      %p398 = pneg %p45
      %p399 = pneg %p42
      %p400 = pneg %p66
      %p401 = pneg %p63
      %p402 = pneg %p87
      %p403 = pneg %p84
      %p404 = pneg %p108
      %p405 = pneg %p105
      %p406 = pneg %p129
      %p407 = pneg %p126
      %p408 = pneg %p150
      %p409 = pneg %p147
      %p410 = pneg %p171
      %p411 = pneg %p168
      %p412 = pneg %p192
      %p413 = pneg %p189
      %p414 = pneg %p213
      %p415 = pneg %p210
      %p416 = pneg %p234
      %p417 = pneg %p231
      %p418 = pneg %p255
      %p419 = pneg %p252
      %p420 = pneg %p276
      %p421 = pneg %p273
      %p422 = pneg %p297
      %p423 = pneg %p294
      %p424 = pneg %p323
      %p425 = pneg %p320
      %p426 = scmp.lt.s32.totalorder %s24, 1
      %s427 = scalar_select %p426, %s24, 1
      %s428 = smul.addr %s427, 8
      %s429 = smul.addr %s428, 8
      %s430 = scalar_lea.vmem %s13, %s429
      %p431 = scmp.lt.s32.totalorder %s24, 1
      %s432 = scalar_select %p431, %s24, 1
      %s433 = smul.addr %s432, 8
      %s434 = smul.addr %s433, 8
      %s435 = scalar_lea.vmem %s0, %s434
      %p436 = scmp.lt.s32.totalorder %s24, 1
      %s437 = scalar_select %p436, %s24, 1
      %s438 = smul.addr %s437, 8
      %s439 = smul.addr %s438, 8
      %s440 = scalar_lea.vmem %s13, %s439
      %v442 = vld [vmem:[%s435] sm:$0xff]
      %v443 = vld [vmem:[%s435 + $0x8] sm:$0xff]
      %v444 = vld [vmem:[%s435 + $0x10] sm:$0xff]
      %v445 = vld [vmem:[%s435 + $0x18] sm:$0xff]
      %v446 = vld [vmem:[%s435 + $0x20] sm:$0xff]
      %v447 = vld [vmem:[%s435 + $0x28] sm:$0xff]
      %v448 = vld [vmem:[%s435 + $0x30] sm:$0xff]
      %v449 = vld [vmem:[%s435 + $0x38] sm:$0xff]
      %v450 = vpack.c.bf16 %v443, %v442
      %v451 = vpack.c.bf16 %v445, %v444
      %v452 = vpack.c.bf16 %v447, %v446
      %v453 = vpack.c.bf16 %v449, %v448
      %v454 = vld [vmem:[%s1] sm:$0xf]
      %v455 = vld [vmem:[%s1 + $0x4] sm:$0xf]
      %v456 = vld [vmem:[%s1 + $0x8] sm:$0xf]
      %v457 = vld [vmem:[%s1 + $0xc] sm:$0xf]
      %v458 = vld [vmem:[%s1 + $0x10] sm:$0xf]
      %v459 = vld [vmem:[%s1 + $0x14] sm:$0xf]
      %v460 = vld [vmem:[%s1 + $0x18] sm:$0xf]
      %v461 = vld [vmem:[%s1 + $0x1c] sm:$0xf]
      %v462 = vld [vmem:[%s1 + $0x20] sm:$0xf]
      %v463 = vld [vmem:[%s1 + $0x24] sm:$0xf]
      %v464 = vld [vmem:[%s1 + $0x28] sm:$0xf]
      %v465 = vld [vmem:[%s1 + $0x2c] sm:$0xf]
      %v466 = vld [vmem:[%s1 + $0x30] sm:$0xf]
      %v467 = vld [vmem:[%s1 + $0x34] sm:$0xf]
      %v468 = vld [vmem:[%s1 + $0x38] sm:$0xf]
      %v469 = vld [vmem:[%s1 + $0x3c] sm:$0xf]
      %v486 = vunpack.c.l.b16 %v454
      %v487 = vunpack.c.l.b16 %v455
      %v488 = vunpack.c.l.b16 %v456
      %v489 = vunpack.c.l.b16 %v457
      %v490 = vunpack.c.l.b16 %v458
      %v491 = vunpack.c.l.b16 %v459
      %v492 = vunpack.c.l.b16 %v460
      %v493 = vunpack.c.l.b16 %v461
      %v494 = vunpack.c.l.b16 %v462
      %v495 = vunpack.c.l.b16 %v463
      %v496 = vunpack.c.l.b16 %v464
      %v497 = vunpack.c.l.b16 %v465
      %v498 = vunpack.c.l.b16 %v466
      %v499 = vunpack.c.l.b16 %v467
      %v500 = vunpack.c.l.b16 %v468
      %v501 = vunpack.c.l.b16 %v469
      %v502 = vpack.c.b16 %v487, %v486
      %v503 = vpack.c.b16 %v489, %v488
      %v504 = vpack.c.b16 %v491, %v490
      %v505 = vpack.c.b16 %v493, %v492
      %v506 = vpack.c.b16 %v495, %v494
      %v507 = vpack.c.b16 %v497, %v496
      %v508 = vpack.c.b16 %v499, %v498
      %v509 = vpack.c.b16 %v501, %v500
      %518 = vmatpush.bf16.msra.mxu0 %v509
      %519 = vmatpush.bf16.msra.mxu0 %v508
      %520 = vmatpush.bf16.msra.mxu0 %v507
      %521 = vmatpush.bf16.msra.mxu0 %v506
      %522 = vmatpush.bf16.msra.mxu0 %v505
      %523 = vmatpush.bf16.msra.mxu0 %v504
      %524 = vmatpush.bf16.msra.mxu0 %v503
      %525 = vmatpush.bf16.msra.mxu0 %v502
      %526 = vmatmul.bf16.gmra.mxu0 %v450
      %v527 = vpop.f32.mrf.mxu0
      %v528 = vadd.f32 0.0, %v527
      %v529 = vpop.f32.mrf.mxu0
      %v530 = vadd.f32 0.0, %v529
      %531 = vmatmul.bf16.gmra.mxu0 %v451
      %v532 = vpop.f32.mrf.mxu0
      %v533 = vadd.f32 0.0, %v532
      %v534 = vpop.f32.mrf.mxu0
      %v535 = vadd.f32 0.0, %v534
      %536 = vmatmul.bf16.gmra.mxu0 %v452
      %v537 = vpop.f32.mrf.mxu0
      %v538 = vadd.f32 0.0, %v537
      %v539 = vpop.f32.mrf.mxu0
      %v540 = vadd.f32 0.0, %v539
      %541 = vmatmul.bf16.gmra.mxu0 %v453
      %v542 = vpop.f32.mrf.mxu0
      %v543 = vadd.f32 0.0, %v542
      %v544 = vpop.f32.mrf.mxu0
      %v545 = vadd.f32 0.0, %v544
      %546 = vdwg.mxu0
      %v547 = vld [vmem:[%s2] sm:$0x1]
      %v549 = vperm.slane %v547, 0
      %v551 = vmul.f32 %v528, %v549
      %v552 = vmul.f32 %v530, %v549
      %v553 = vmul.f32 %v533, %v549
      %v554 = vmul.f32 %v535, %v549
      %v555 = vmul.f32 %v538, %v549
      %v556 = vmul.f32 %v540, %v549
      %v557 = vmul.f32 %v543, %v549
      %v558 = vmul.f32 %v545, %v549
      %v559 = vld [vmem:[%s3] sm:$0x1]
      %v561 = vperm.slane %v559, 0
      %v563 = vadd.f32 %v551, %v561
      %v564 = vadd.f32 %v552, %v561
      %v565 = vadd.f32 %v553, %v561
      %v566 = vadd.f32 %v554, %v561
      %v567 = vadd.f32 %v555, %v561
      %v568 = vadd.f32 %v556, %v561
      %v569 = vadd.f32 %v557, %v561
      %v570 = vadd.f32 %v558, %v561
      %v571 = vmax.f32 %v563, 0.0
      %v572 = vmax.f32 %v564, 0.0
      %v573 = vmax.f32 %v565, 0.0
      %v574 = vmax.f32 %v566, 0.0
      %v575 = vmax.f32 %v567, 0.0
      %v576 = vmax.f32 %v568, 0.0
      %v577 = vmax.f32 %v569, 0.0
      %v578 = vmax.f32 %v570, 0.0
      %vm579 = vcmask 523264
      %580 = vst.msk [vmem:[#allocation2] sm:$0xff] %vm579, 0.0
      %vm581 = vcmask 516096
      %582 = vst.msk [vmem:[#allocation2 + $0x8] sm:$0x1] %vm581, 0.0
      %583 = vst.msk [vmem:[#allocation2] sm:$0x1] %vm581, 0.0
      %584 = vst.msk [vmem:[#allocation2 + $0x10] sm:$0x1] %vm581, 0.0
      %585 = vst.msk [vmem:[#allocation2 + $0x20] sm:$0x1] %vm581, 0.0
      %586 = vst.msk [vmem:[#allocation2 + $0x30] sm:$0x1] %vm581, 0.0
      %587 = vst.msk [vmem:[#allocation2 + $0x40] sm:$0x1] %vm581, 0.0
      %588 = vst.msk [vmem:[#allocation2 + $0x50] sm:$0x1] %vm581, 0.0
      %589 = vst.msk [vmem:[#allocation2 + $0x60] sm:$0x1] %vm581, 0.0
      %590 = vst.msk [vmem:[#allocation2 + $0x70] sm:$0x1] %vm581, 0.0
      %591 = vst.msk [vmem:[#allocation2 + $0x80] sm:$0x1] %vm581, 0.0
      %s592 = scalar_lea.vmem [#allocation2], 16
      %593 = vst.msk [vmem:[%s592 + $0x1] sm:$0xff] %vm579, %v571
      %594 = vst.msk [vmem:[%s592 + $0x11] sm:$0xff] %vm579, %v572
      %595 = vst.msk [vmem:[%s592 + $0x21] sm:$0xff] %vm579, %v573
      %596 = vst.msk [vmem:[%s592 + $0x31] sm:$0xff] %vm579, %v574
      %597 = vst.msk [vmem:[%s592 + $0x41] sm:$0xff] %vm579, %v575
      %598 = vst.msk [vmem:[%s592 + $0x51] sm:$0xff] %vm579, %v576
      %599 = vst.msk [vmem:[%s592 + $0x61] sm:$0xff] %vm579, %v577
      %600 = vst.msk [vmem:[%s592 + $0x71] sm:$0xff] %vm579, %v578
      %v601 = vld [vmem:[#allocation2] sm:$0xff]
      %v602 = vld [vmem:[#allocation2 + $0x8] sm:$0x1]
      %v603 = vld [vmem:[#allocation2 + $0x10] sm:$0xff]
      %v604 = vld [vmem:[#allocation2 + $0x18] sm:$0x1]
      %v605 = vld [vmem:[#allocation2 + $0x20] sm:$0xff]
      %v606 = vld [vmem:[#allocation2 + $0x28] sm:$0x1]
      %v607 = vld [vmem:[#allocation2 + $0x30] sm:$0xff]
      %v608 = vld [vmem:[#allocation2 + $0x38] sm:$0x1]
      %v609 = vld [vmem:[#allocation2 + $0x40] sm:$0xff]
      %v610 = vld [vmem:[#allocation2 + $0x48] sm:$0x1]
      %v611 = vld [vmem:[#allocation2 + $0x50] sm:$0xff]
      %v612 = vld [vmem:[#allocation2 + $0x58] sm:$0x1]
      %v613 = vld [vmem:[#allocation2 + $0x60] sm:$0xff]
      %v614 = vld [vmem:[#allocation2 + $0x68] sm:$0x1]
      %v615 = vld [vmem:[#allocation2 + $0x70] sm:$0xff]
      %v616 = vld [vmem:[#allocation2 + $0x78] sm:$0x1]
      %v617 = vld [vmem:[#allocation2 + $0x80] sm:$0xff]
      %v618 = vld [vmem:[#allocation2 + $0x88] sm:$0x1]
      %vm635 = vcmask 1046528
      %v636 = vrot.slane %v601, 1
      %v637 = vrot.slane %v602, 1
      %v638 = vsel %vm635, %v636, %v637
      %v639 = vrot.slane %v603, 1
      %v640 = vrot.slane %v604, 1
      %v641 = vsel %vm635, %v639, %v640
      %v642 = vrot.slane %v605, 1
      %v643 = vrot.slane %v606, 1
      %v644 = vsel %vm635, %v642, %v643
      %v645 = vrot.slane %v607, 1
      %v646 = vrot.slane %v608, 1
      %v647 = vsel %vm635, %v645, %v646
      %v648 = vrot.slane %v609, 1
      %v649 = vrot.slane %v610, 1
      %v650 = vsel %vm635, %v648, %v649
      %v651 = vrot.slane %v611, 1
      %v652 = vrot.slane %v612, 1
      %v653 = vsel %vm635, %v651, %v652
      %v654 = vrot.slane %v613, 1
      %v655 = vrot.slane %v614, 1
      %v656 = vsel %vm635, %v654, %v655
      %v657 = vrot.slane %v615, 1
      %v658 = vrot.slane %v616, 1
      %v659 = vsel %vm635, %v657, %v658
      %v662 = vrot.slane %v617, 1
      %v663 = vrot.slane %v618, 1
      %v664 = vsel %vm635, %v662, %v663
      %665 = vrot.lane.b32.xlu0 %v638, 64
      %v666 = vpop.permute.xlu0 %665
      %667 = vrot.lane.b32.xlu0 %v641, 64
      %v668 = vpop.permute.xlu0 %667
      %669 = vrot.lane.b32.xlu0 %v644, 64
      %v670 = vpop.permute.xlu0 %669
      %671 = vrot.lane.b32.xlu0 %v647, 64
      %v672 = vpop.permute.xlu0 %671
      %673 = vrot.lane.b32.xlu0 %v650, 64
      %v674 = vpop.permute.xlu0 %673
      %675 = vrot.lane.b32.xlu0 %v653, 64
      %v676 = vpop.permute.xlu0 %675
      %677 = vrot.lane.b32.xlu0 %v656, 64
      %v678 = vpop.permute.xlu0 %677
      %679 = vrot.lane.b32.xlu0 %v659, 64
      %v680 = vpop.permute.xlu0 %679
      %689 = vrot.lane.b32.xlu0 %v664, 64
      %v690 = vpop.permute.xlu0 %689
      %v692 = vsel %vm579, %v601, %v666
      %v693 = vsel %vm579, %v603, %v668
      %v694 = vsel %vm579, %v605, %v670
      %v695 = vsel %vm579, %v607, %v672
      %v696 = vsel %vm579, %v609, %v674
      %v697 = vsel %vm579, %v611, %v676
      %v698 = vsel %vm579, %v613, %v678
      %v699 = vsel %vm579, %v615, %v680
      %v700 = vsel %vm579, %v617, %v690
      %v701 = vpack.c.bf16 %v693, %v692
      %v702 = vpack.c.bf16 %v694, %v693
      %v703 = vpack.c.bf16 %v695, %v694
      %v704 = vpack.c.bf16 %v696, %v695
      %v705 = vpack.c.bf16 %v697, %v696
      %v706 = vpack.c.bf16 %v698, %v697
      %v707 = vpack.c.bf16 %v699, %v698
      %v708 = vpack.c.bf16 %v700, %v699
      %v709 = vld [vmem:[%s4] sm:$0xf]
      %v710 = vld [vmem:[%s4 + $0x4] sm:$0xf]
      %v711 = vld [vmem:[%s4 + $0x8] sm:$0xf]
      %v712 = vld [vmem:[%s4 + $0xc] sm:$0xf]
      %v713 = vld [vmem:[%s4 + $0x10] sm:$0xf]
      %v714 = vld [vmem:[%s4 + $0x14] sm:$0xf]
      %v715 = vld [vmem:[%s4 + $0x18] sm:$0xf]
      %v716 = vld [vmem:[%s4 + $0x1c] sm:$0xf]
      %v717 = vld [vmem:[%s4 + $0x20] sm:$0xf]
      %v718 = vld [vmem:[%s4 + $0x24] sm:$0xf]
      %v719 = vld [vmem:[%s4 + $0x28] sm:$0xf]
      %v720 = vld [vmem:[%s4 + $0x2c] sm:$0xf]
      %v721 = vld [vmem:[%s4 + $0x30] sm:$0xf]
      %v722 = vld [vmem:[%s4 + $0x34] sm:$0xf]
      %v723 = vld [vmem:[%s4 + $0x38] sm:$0xf]
      %v724 = vld [vmem:[%s4 + $0x3c] sm:$0xf]
      %v725 = vld [vmem:[%s4 + $0x40] sm:$0xf]
      %v726 = vld [vmem:[%s4 + $0x44] sm:$0xf]
      %v727 = vld [vmem:[%s4 + $0x48] sm:$0xf]
      %v728 = vld [vmem:[%s4 + $0x4c] sm:$0xf]
      %v729 = vld [vmem:[%s4 + $0x50] sm:$0xf]
      %v730 = vld [vmem:[%s4 + $0x54] sm:$0xf]
      %v731 = vld [vmem:[%s4 + $0x58] sm:$0xf]
      %v732 = vld [vmem:[%s4 + $0x5c] sm:$0xf]
      %v733 = vld [vmem:[%s4 + $0x60] sm:$0xf]
      %v734 = vld [vmem:[%s4 + $0x64] sm:$0xf]
      %v735 = vld [vmem:[%s4 + $0x68] sm:$0xf]
      %v736 = vld [vmem:[%s4 + $0x6c] sm:$0xf]
      %v737 = vld [vmem:[%s4 + $0x70] sm:$0xf]
      %v738 = vld [vmem:[%s4 + $0x74] sm:$0xf]
      %v739 = vld [vmem:[%s4 + $0x78] sm:$0xf]
      %v740 = vld [vmem:[%s4 + $0x7c] sm:$0xf]
      %v773 = vunpack.c.l.b16 %v709
      %v774 = vunpack.c.l.b16 %v710
      %v775 = vunpack.c.l.b16 %v711
      %v776 = vunpack.c.l.b16 %v712
      %v777 = vunpack.c.l.b16 %v713
      %v778 = vunpack.c.l.b16 %v714
      %v779 = vunpack.c.l.b16 %v715
      %v780 = vunpack.c.l.b16 %v716
      %v781 = vunpack.c.l.b16 %v717
      %v782 = vunpack.c.l.b16 %v718
      %v783 = vunpack.c.l.b16 %v719
      %v784 = vunpack.c.l.b16 %v720
      %v785 = vunpack.c.l.b16 %v721
      %v786 = vunpack.c.l.b16 %v722
      %v787 = vunpack.c.l.b16 %v723
      %v788 = vunpack.c.l.b16 %v724
      %v789 = vunpack.c.l.b16 %v725
      %v790 = vunpack.c.l.b16 %v726
      %v791 = vunpack.c.l.b16 %v727
      %v792 = vunpack.c.l.b16 %v728
      %v793 = vunpack.c.l.b16 %v729
      %v794 = vunpack.c.l.b16 %v730
      %v795 = vunpack.c.l.b16 %v731
      %v796 = vunpack.c.l.b16 %v732
      %v797 = vunpack.c.l.b16 %v733
      %v798 = vunpack.c.l.b16 %v734
      %v799 = vunpack.c.l.b16 %v735
      %v800 = vunpack.c.l.b16 %v736
      %v801 = vunpack.c.l.b16 %v737
      %v802 = vunpack.c.l.b16 %v738
      %v803 = vunpack.c.l.b16 %v739
      %v804 = vunpack.c.l.b16 %v740
      %v805 = vpack.c.b16 %v774, %v773
      %v806 = vpack.c.b16 %v776, %v775
      %v807 = vpack.c.b16 %v778, %v777
      %v808 = vpack.c.b16 %v780, %v779
      %v809 = vpack.c.b16 %v782, %v781
      %v810 = vpack.c.b16 %v784, %v783
      %v811 = vpack.c.b16 %v786, %v785
      %v812 = vpack.c.b16 %v788, %v787
      %v813 = vpack.c.b16 %v790, %v789
      %v814 = vpack.c.b16 %v792, %v791
      %v815 = vpack.c.b16 %v794, %v793
      %v816 = vpack.c.b16 %v796, %v795
      %v817 = vpack.c.b16 %v798, %v797
      %v818 = vpack.c.b16 %v800, %v799
      %v819 = vpack.c.b16 %v802, %v801
      %v820 = vpack.c.b16 %v804, %v803
      %837 = vmatpush.bf16.msra.mxu0 %v812
      %838 = vmatpush.bf16.msra.mxu0 %v811
      %839 = vmatpush.bf16.msra.mxu0 %v810
      %840 = vmatpush.bf16.msra.mxu0 %v809
      %841 = vmatpush.bf16.msra.mxu0 %v808
      %842 = vmatpush.bf16.msra.mxu0 %v807
      %843 = vmatpush.bf16.msra.mxu0 %v806
      %844 = vmatpush.bf16.msra.mxu0 %v805
      %845 = vmatmul.bf16.gmra.mxu0 %v701
      %v846 = vpop.f32.mrf.mxu0
      %v847 = vadd.f32 0.0, %v846
      %v848 = vpop.f32.mrf.mxu0
      %v849 = vadd.f32 0.0, %v848
      %850 = vmatmul.bf16.gmra.mxu0 %v703
      %v851 = vpop.f32.mrf.mxu0
      %v852 = vadd.f32 0.0, %v851
      %v853 = vpop.f32.mrf.mxu0
      %v854 = vadd.f32 0.0, %v853
      %855 = vmatmul.bf16.gmra.mxu0 %v705
      %v856 = vpop.f32.mrf.mxu0
      %v857 = vadd.f32 0.0, %v856
      %v858 = vpop.f32.mrf.mxu0
      %v859 = vadd.f32 0.0, %v858
      %860 = vmatmul.bf16.gmra.mxu0 %v707
      %v861 = vpop.f32.mrf.mxu0
      %v862 = vadd.f32 0.0, %v861
      %v863 = vpop.f32.mrf.mxu0
      %v864 = vadd.f32 0.0, %v863
      %865 = vdwg.mxu0
      %866 = vmatpush.bf16.msra.mxu0 %v820
      %867 = vmatpush.bf16.msra.mxu0 %v819
      %868 = vmatpush.bf16.msra.mxu0 %v818
      %869 = vmatpush.bf16.msra.mxu0 %v817
      %870 = vmatpush.bf16.msra.mxu0 %v816
      %871 = vmatpush.bf16.msra.mxu0 %v815
      %872 = vmatpush.bf16.msra.mxu0 %v814
      %873 = vmatpush.bf16.msra.mxu0 %v813
      %874 = vmatmul.bf16.gmra.mxu0 %v702
      %v875 = vpop.f32.mrf.mxu0
      %v876 = vadd.f32 %v847, %v875
      %v877 = vpop.f32.mrf.mxu0
      %v878 = vadd.f32 %v849, %v877
      %879 = vmatmul.bf16.gmra.mxu0 %v704
      %v880 = vpop.f32.mrf.mxu0
      %v881 = vadd.f32 %v852, %v880
      %v882 = vpop.f32.mrf.mxu0
      %v883 = vadd.f32 %v854, %v882
      %884 = vmatmul.bf16.gmra.mxu0 %v706
      %v885 = vpop.f32.mrf.mxu0
      %v886 = vadd.f32 %v857, %v885
      %v887 = vpop.f32.mrf.mxu0
      %v888 = vadd.f32 %v859, %v887
      %889 = vmatmul.bf16.gmra.mxu0 %v708
      %v890 = vpop.f32.mrf.mxu0
      %v891 = vadd.f32 %v862, %v890
      %v892 = vpop.f32.mrf.mxu0
      %v893 = vadd.f32 %v864, %v892
      %894 = vdwg.mxu0
      %v895 = vld [vmem:[%s5] sm:$0x1]
      %v897 = vperm.slane %v895, 0
      %v899 = vmul.f32 %v876, %v897
      %v900 = vmul.f32 %v878, %v897
      %v901 = vmul.f32 %v881, %v897
      %v902 = vmul.f32 %v883, %v897
      %v903 = vmul.f32 %v886, %v897
      %v904 = vmul.f32 %v888, %v897
      %v905 = vmul.f32 %v891, %v897
      %v906 = vmul.f32 %v893, %v897
      %v907 = vld [vmem:[%s6] sm:$0x1]
      %v909 = vperm.slane %v907, 0
      %v911 = vadd.f32 %v899, %v909
      %v912 = vadd.f32 %v900, %v909
      %v913 = vadd.f32 %v901, %v909
      %v914 = vadd.f32 %v902, %v909
      %v915 = vadd.f32 %v903, %v909
      %v916 = vadd.f32 %v904, %v909
      %v917 = vadd.f32 %v905, %v909
      %v918 = vadd.f32 %v906, %v909
      %v919 = vmax.f32 %v911, 0.0
      %v920 = vmax.f32 %v912, 0.0
      %v921 = vmax.f32 %v913, 0.0
      %v922 = vmax.f32 %v914, 0.0
      %v923 = vmax.f32 %v915, 0.0
      %v924 = vmax.f32 %v916, 0.0
      %v925 = vmax.f32 %v917, 0.0
      %v926 = vmax.f32 %v918, 0.0
      %v927 = vpack.c.bf16 %v920, %v919
      %v928 = vpack.c.bf16 %v922, %v921
      %v929 = vpack.c.bf16 %v924, %v923
      %v930 = vpack.c.bf16 %v926, %v925
      %v931 = vld [vmem:[%s7] sm:$0xf]
      %v932 = vld [vmem:[%s7 + $0x4] sm:$0xf]
      %v935 = vunpack.c.l.b16 %v931
      %v936 = vunpack.c.l.b16 %v932
      %v937 = vpack.c.b16 %v936, %v935
      %vm939 = vcmask 130048
      %v941 = vsel %vm939, %v927, 0
      %v944 = vsel %vm939, %v928, 0
      %v947 = vsel %vm939, %v929, 0
      %v950 = vsel %vm939, %v930, 0
      %952 = vmatpush.bf16.msra.mxu0 0
      %953 = vmatpush.bf16.msra.mxu0 0
      %954 = vmatpush.bf16.msra.mxu0 0
      %955 = vmatpush.bf16.msra.mxu0 0
      %956 = vmatpush.bf16.msra.mxu0 0
      %957 = vmatpush.bf16.msra.mxu0 0
      %958 = vmatpush.bf16.msra.mxu0 0
      %959 = vmatpush.bf16.msra.mxu0 %v937
      %960 = vmatmul.bf16.gmra.mxu0 %v941
      %v961 = vpop.f32.mrf.mxu0
      %v962 = vadd.f32 0.0, %v961
      %v963 = vpop.f32.mrf.mxu0
      %v964 = vadd.f32 0.0, %v963
      %965 = vmatmul.bf16.gmra.mxu0 %v944
      %v966 = vpop.f32.mrf.mxu0
      %v967 = vadd.f32 0.0, %v966
      %v968 = vpop.f32.mrf.mxu0
      %v969 = vadd.f32 0.0, %v968
      %970 = vmatmul.bf16.gmra.mxu0 %v947
      %v971 = vpop.f32.mrf.mxu0
      %v972 = vadd.f32 0.0, %v971
      %v973 = vpop.f32.mrf.mxu0
      %v974 = vadd.f32 0.0, %v973
      %975 = vmatmul.bf16.gmra.mxu0 %v950
      %v976 = vpop.f32.mrf.mxu0
      %v977 = vadd.f32 0.0, %v976
      %v978 = vpop.f32.mrf.mxu0
      %v979 = vadd.f32 0.0, %v978
      %980 = vdwg.mxu0
      %v981 = vld [vmem:[%s8] sm:$0x1]
      %v983 = vperm.slane %v981, 0
      %v985 = vmul.f32 %v962, %v983
      %v986 = vmul.f32 %v964, %v983
      %v987 = vmul.f32 %v967, %v983
      %v988 = vmul.f32 %v969, %v983
      %v989 = vmul.f32 %v972, %v983
      %v990 = vmul.f32 %v974, %v983
      %v991 = vmul.f32 %v977, %v983
      %v992 = vmul.f32 %v979, %v983
      %v993 = vld [vmem:[%s9] sm:$0x1]
      %v995 = vperm.slane %v993, 0
      %v997 = vadd.f32 %v985, %v995
      %v998 = vadd.f32 %v986, %v995
      %v999 = vadd.f32 %v987, %v995
      %v1000 = vadd.f32 %v988, %v995
      %v1001 = vadd.f32 %v989, %v995
      %v1002 = vadd.f32 %v990, %v995
      %v1003 = vadd.f32 %v991, %v995
      %v1004 = vadd.f32 %v992, %v995
      %v1005 = vmax.f32 %v997, 0.0
      %v1006 = vmax.f32 %v998, 0.0
      %v1007 = vmax.f32 %v999, 0.0
      %v1008 = vmax.f32 %v1000, 0.0
      %v1009 = vmax.f32 %v1001, 0.0
      %v1010 = vmax.f32 %v1002, 0.0
      %v1011 = vmax.f32 %v1003, 0.0
      %v1012 = vmax.f32 %v1004, 0.0
      %v1013 = vld [vmem:[%s10] sm:$0xf]
      %v1014 = vld [vmem:[%s10 + $0x4] sm:$0xf]
      %v1015 = vld [vmem:[%s10 + $0x8] sm:$0xf]
      %v1016 = vld [vmem:[%s10 + $0xc] sm:$0xf]
      %v1017 = vld [vmem:[%s10 + $0x10] sm:$0xf]
      %v1018 = vld [vmem:[%s10 + $0x14] sm:$0xf]
      %v1019 = vld [vmem:[%s10 + $0x18] sm:$0xf]
      %v1020 = vld [vmem:[%s10 + $0x1c] sm:$0xf]
      %v1021 = vld [vmem:[%s10 + $0x20] sm:$0xf]
      %v1022 = vld [vmem:[%s10 + $0x24] sm:$0xf]
      %v1023 = vld [vmem:[%s10 + $0x28] sm:$0xf]
      %v1024 = vld [vmem:[%s10 + $0x2c] sm:$0xf]
      %v1025 = vld [vmem:[%s10 + $0x30] sm:$0xf]
      %v1026 = vld [vmem:[%s10 + $0x34] sm:$0xf]
      %v1027 = vld [vmem:[%s10 + $0x38] sm:$0xf]
      %v1028 = vld [vmem:[%s10 + $0x3c] sm:$0xf]
      %v1045 = vunpack.c.l.b16 %v1013
      %v1046 = vunpack.c.l.b16 %v1014
      %v1047 = vunpack.c.l.b16 %v1015
      %v1048 = vunpack.c.l.b16 %v1016
      %v1049 = vunpack.c.l.b16 %v1017
      %v1050 = vunpack.c.l.b16 %v1018
      %v1051 = vunpack.c.l.b16 %v1019
      %v1052 = vunpack.c.l.b16 %v1020
      %v1053 = vunpack.c.l.b16 %v1021
      %v1054 = vunpack.c.l.b16 %v1022
      %v1055 = vunpack.c.l.b16 %v1023
      %v1056 = vunpack.c.l.b16 %v1024
      %v1057 = vunpack.c.l.b16 %v1025
      %v1058 = vunpack.c.l.b16 %v1026
      %v1059 = vunpack.c.l.b16 %v1027
      %v1060 = vunpack.c.l.b16 %v1028
      %v1061 = vpack.c.b16 %v1046, %v1045
      %v1062 = vpack.c.b16 %v1048, %v1047
      %v1063 = vpack.c.b16 %v1050, %v1049
      %v1064 = vpack.c.b16 %v1052, %v1051
      %v1065 = vpack.c.b16 %v1054, %v1053
      %v1066 = vpack.c.b16 %v1056, %v1055
      %v1067 = vpack.c.b16 %v1058, %v1057
      %v1068 = vpack.c.b16 %v1060, %v1059
      %1077 = vmatpush.bf16.msra.mxu0 %v1068
      %1078 = vmatpush.bf16.msra.mxu0 %v1067
      %1079 = vmatpush.bf16.msra.mxu0 %v1066
      %1080 = vmatpush.bf16.msra.mxu0 %v1065
      %1081 = vmatpush.bf16.msra.mxu0 %v1064
      %1082 = vmatpush.bf16.msra.mxu0 %v1063
      %1083 = vmatpush.bf16.msra.mxu0 %v1062
      %1084 = vmatpush.bf16.msra.mxu0 %v1061
      %1085 = vmatmul.bf16.gmra.mxu0 %v450
      %v1086 = vpop.f32.mrf.mxu0
      %v1087 = vadd.f32 0.0, %v1086
      %v1088 = vpop.f32.mrf.mxu0
      %v1089 = vadd.f32 0.0, %v1088
      %1090 = vmatmul.bf16.gmra.mxu0 %v451
      %v1091 = vpop.f32.mrf.mxu0
      %v1092 = vadd.f32 0.0, %v1091
      %v1093 = vpop.f32.mrf.mxu0
      %v1094 = vadd.f32 0.0, %v1093
      %1095 = vmatmul.bf16.gmra.mxu0 %v452
      %v1096 = vpop.f32.mrf.mxu0
      %v1097 = vadd.f32 0.0, %v1096
      %v1098 = vpop.f32.mrf.mxu0
      %v1099 = vadd.f32 0.0, %v1098
      %1100 = vmatmul.bf16.gmra.mxu0 %v453
      %v1101 = vpop.f32.mrf.mxu0
      %v1102 = vadd.f32 0.0, %v1101
      %v1103 = vpop.f32.mrf.mxu0
      %v1104 = vadd.f32 0.0, %v1103
      %1105 = vdwg.mxu0
      %v1106 = vld [vmem:[%s11] sm:$0x1]
      %v1108 = vperm.slane %v1106, 0
      %v1110 = vmul.f32 %v1087, %v1108
      %v1111 = vmul.f32 %v1089, %v1108
      %v1112 = vmul.f32 %v1092, %v1108
      %v1113 = vmul.f32 %v1094, %v1108
      %v1114 = vmul.f32 %v1097, %v1108
      %v1115 = vmul.f32 %v1099, %v1108
      %v1116 = vmul.f32 %v1102, %v1108
      %v1117 = vmul.f32 %v1104, %v1108
      %v1118 = vld [vmem:[%s12] sm:$0x1]
      %v1120 = vperm.slane %v1118, 0
      %v1122 = vadd.f32 %v1110, %v1120
      %v1123 = vadd.f32 %v1111, %v1120
      %v1124 = vadd.f32 %v1112, %v1120
      %v1125 = vadd.f32 %v1113, %v1120
      %v1126 = vadd.f32 %v1114, %v1120
      %v1127 = vadd.f32 %v1115, %v1120
      %v1128 = vadd.f32 %v1116, %v1120
      %v1129 = vadd.f32 %v1117, %v1120
      %v1130 = vadd.f32 %v1122, %v1005
      %v1131 = vadd.f32 %v1123, %v1006
      %v1132 = vadd.f32 %v1124, %v1007
      %v1133 = vadd.f32 %v1125, %v1008
      %v1134 = vadd.f32 %v1126, %v1009
      %v1135 = vadd.f32 %v1127, %v1010
      %v1136 = vadd.f32 %v1128, %v1011
      %v1137 = vadd.f32 %v1129, %v1012
      %v1138 = vmax.f32 %v1130, 0.0
      %v1139 = vmax.f32 %v1131, 0.0
      %v1140 = vmax.f32 %v1132, 0.0
      %v1141 = vmax.f32 %v1133, 0.0
      %v1142 = vmax.f32 %v1134, 0.0
      %v1143 = vmax.f32 %v1135, 0.0
      %v1144 = vmax.f32 %v1136, 0.0
      %v1145 = vmax.f32 %v1137, 0.0
      %1146 = vst.msk [vmem:[%s440] sm:$0xff] %vm579, %v1138
      %1147 = vst.msk [vmem:[%s440 + $0x8] sm:$0xff] %vm579, %v1139
      %1148 = vst.msk [vmem:[%s440 + $0x10] sm:$0xff] %vm579, %v1140
      %1149 = vst.msk [vmem:[%s440 + $0x18] sm:$0xff] %vm579, %v1141
      %1150 = vst.msk [vmem:[%s440 + $0x20] sm:$0xff] %vm579, %v1142
      %1151 = vst.msk [vmem:[%s440 + $0x28] sm:$0xff] %vm579, %v1143
      %1152 = vst.msk [vmem:[%s440 + $0x30] sm:$0xff] %vm579, %v1144
      %1153 = vst.msk [vmem:[%s440 + $0x38] sm:$0xff] %vm579, %v1145
      %p1154 = scmp.lt.s32.totalorder %s24, 1
      %s1155 = scalar_select %p1154, %s24, 1
      %s1156 = smul.addr %s1155, 8
      %s1157 = smul.addr %s1156, 8
      %s1158 = scalar_lea.vmem %s13, %s1157
      // Predicated region
      $region73: #{small_encoder_forward.10} parent=71 // pred_check
        %p1159 = pneg %p320
      $region74: #{small_encoder_forward.10} parent=71 // pred_check_branch
        %1161 = sbr.rel (%p1159) target = $region76
      $region75: #{small_encoder_forward.10} parent=71 // pred_region
        _
      $region76: #{small_encoder_forward.10} parent=71 // pred_fallthru
        _
    $region72: #{small_encoder_forward.10} parent=5 // pred_fallthru
      _
    %p1162 = scmp.le.s32.totalorder 2, %s19
    // Predicated region
    $region77: #{small_encoder_forward.10} parent=5 // pred_check
      %p1163 = pneg %p1162
    $region78: #{small_encoder_forward.10} parent=5 // pred_check_branch
      %1165 = sbr.rel (%p1163) target = $region80
    $region79: #{small_encoder_forward.10} parent=5 // pred_region
      %s1166 = ssub.s32 %s19, 2
      // Predicated region
      $region81: #{small_encoder_forward.10} parent=79 // pred_check
        %p1167 = pneg %p326
      $region82: #{small_encoder_forward.10} parent=79 // pred_check_branch
        %1169 = sbr.rel (%p1167) target = $region84
      $region83: #{small_encoder_forward.10} parent=79 // pred_region
        %p1170 = scmp.lt.s32.totalorder %s25, 1
        %s1171 = scalar_select %p1170, %s25, 1
        %s1172 = smul.addr %s1171, 8
        %s1173 = smul.addr %s1172, 8
        %s1174 = scalar_lea.vmem %s13, %s1173
      $region84: #{small_encoder_forward.10} parent=79 // pred_fallthru
        _
    $region80: #{small_encoder_forward.10} parent=5 // pred_fallthru
      _
  $region6: #{small_encoder_forward.10} parent=0 // loop_footer
    %s23 = sadd.s32 1, %s19
  $region7: #{small_encoder_forward.10} parent=0 // loop_footer_branch
    %18 = sbr.rel target = $region3
  $region8: #{small_encoder_forward.10} parent=0 // loop_exit
    _

// kernel: small_encoder_forward.11
$region0: #{small_encoder_forward.11}
  #allocation0 [shape = 'u32[]', space=smem, size = 0x4, offset = 0x4, fixed_abs, tag = 'smem constant byte address 0x4 - core index']
  #allocation1 [shape = 'u32[72,128]{1,0:T(1,128)}', space=vmem, size = 0x9000, scoped, tag = 'internal scratch']
  #allocation2 [shape = 'f32[10,10,16]{2,1,0:T(8,128)}', space=vmem, size = 0x14000, scoped, tag = 'scratch operand']
  %s0 = inlined_call_operand.vmem [shape: f32[2,8,8,64], index: 0, kind: input, shape index: {}]
  %s1 = inlined_call_operand.vmem [shape: bf16[64,16], index: 1, kind: input, shape index: {}]
  %s2 = inlined_call_operand.vmem [shape: f32[1,16], index: 2, kind: input, shape index: {}]
  %s3 = inlined_call_operand.vmem [shape: f32[1,16], index: 3, kind: input, shape index: {}]
  %s4 = inlined_call_operand.vmem [shape: bf16[144,16], index: 4, kind: input, shape index: {}]
  %s5 = inlined_call_operand.vmem [shape: f32[1,16], index: 5, kind: input, shape index: {}]
  %s6 = inlined_call_operand.vmem [shape: f32[1,16], index: 6, kind: input, shape index: {}]
  %s7 = inlined_call_operand.vmem [shape: bf16[16,64], index: 7, kind: input, shape index: {}]
  %s8 = inlined_call_operand.vmem [shape: f32[1,64], index: 8, kind: input, shape index: {}]
  %s9 = inlined_call_operand.vmem [shape: f32[1,64], index: 9, kind: input, shape index: {}]
  %s10 = inlined_call_operand.vmem [shape: f32[2,8,8,64], index: 10, kind: output, shape index: {}]
  %s11 = sld [smem:[#allocation0]]
  $region73: #{small_encoder_forward.11} parent=0
    _
  %s13 = ssub.s32 1, %s11
  %s14 = scalar_select 0, %s13, %s11
  loop: start=0, step=1, limit=4
  $region2: #{small_encoder_forward.11} parent=0 // loop_pre_header
    _
  $region3: #{small_encoder_forward.11} parent=0 // loop_header
    %s16 = sphi 0, %s20
    %p17 = scmp.ge.s32.totalorder %s16, 4
    %s26 = sphi 0, %s28
    %s29 = sphi 0, %s26
    %s30 = sphi 0, %s29
    %s46 = sphi 0, %s30
    %s50 = sphi 0, %s50
    %s52 = sphi 0, %s50
    %s53 = sphi 0, %s52
    %s67 = sphi 0, %s53
    %s71 = sphi 0, %s71
    %s73 = sphi 0, %s71
    %s74 = sphi 0, %s73
    %s88 = sphi 0, %s74
    %s92 = sphi 0, %s92
    %s94 = sphi 0, %s92
    %s95 = sphi 0, %s94
    %s109 = sphi 0, %s95
    %s113 = sphi 0, %s113
    %s115 = sphi 0, %s113
    %s116 = sphi 0, %s115
    %s130 = sphi 0, %s116
    %s134 = sphi 0, %s134
    %s136 = sphi 0, %s134
    %s137 = sphi 0, %s136
    %s151 = sphi 0, %s137
    %s155 = sphi 0, %s155
    %s157 = sphi 0, %s155
    %s158 = sphi 0, %s157
    %s172 = sphi 0, %s158
    %s176 = sphi 0, %s176
    %s178 = sphi 0, %s176
    %s179 = sphi 0, %s178
    %s193 = sphi 0, %s179
    %s197 = sphi 0, %s197
    %s199 = sphi 0, %s197
    %s200 = sphi 0, %s199
    %s214 = sphi 0, %s200
    %s218 = sphi 0, %s218
    %s220 = sphi 0, %s218
    %s221 = sphi 0, %s220
    %s235 = sphi 0, %s221
    %s241 = sphi 0, %s243
    %s244 = sphi 0, %s241
    %s245 = sphi 0, %s244
    %s261 = sphi 0, %s245
  $region4: #{small_encoder_forward.11} parent=0 // loop_header_branch
    %19 = sbr.rel (%p17) target = $region8
  $region5: #{small_encoder_forward.11} parent=0 // loop_body
    %s21 = ssub.s32 %s16, 1
    %s22 = ssub.s32 %s16, 2
    %s23 = sadd.s32 %s16, 1
    %s24 = ssub.s32 %s16, %s23
    %p25 = scmp.eq.s32.totalorder %s24, 0
    %s27 = sadd.s32 %s26, 1
    %s28 = scalar_select %p25, %s26, %s27
    %p31 = pneg %p25
    %p32 = scmp.eq.s32.totalorder %s16, 1
    %p33 = por %p31, %p32
    %p34 = scmp.ne.s32.totalorder %s26, %s29
    %p35 = scmp.eq.s32.totalorder %s16, 0
    %p36 = por %p34, %p35
    %p37 = scmp.ne.s32.totalorder %s26, %s29
    %p38 = scmp.eq.s32.totalorder %s21, 1
    %p39 = por %p37, %p38
    %p40 = scmp.ne.s32.totalorder %s29, %s30
    %p41 = scmp.eq.s32.totalorder %s21, 0
    %p42 = por %p40, %p41
    %p43 = scmp.ne.s32.totalorder %s29, %s30
    %p44 = scmp.eq.s32.totalorder %s22, 1
    %p45 = por %p43, %p44
    %p47 = scmp.ne.s32.totalorder %s30, %s46
    %p48 = scmp.eq.s32.totalorder %s22, 0
    %p49 = por %p47, %p48
    %s51 = sadd.s32 %s50, 1
    %p54 = scmp.eq.s32.totalorder %s16, 1
    %p55 = scmp.ne.s32.totalorder %s50, %s52
    %p56 = scmp.eq.s32.totalorder %s16, 0
    %p57 = por %p55, %p56
    %p58 = scmp.ne.s32.totalorder %s50, %s52
    %p59 = scmp.eq.s32.totalorder %s21, 1
    %p60 = por %p58, %p59
    %p61 = scmp.ne.s32.totalorder %s52, %s53
    %p62 = scmp.eq.s32.totalorder %s21, 0
    %p63 = por %p61, %p62
    %p64 = scmp.ne.s32.totalorder %s52, %s53
    %p65 = scmp.eq.s32.totalorder %s22, 1
    %p66 = por %p64, %p65
    %p68 = scmp.ne.s32.totalorder %s53, %s67
    %p69 = scmp.eq.s32.totalorder %s22, 0
    %p70 = por %p68, %p69
    %s72 = sadd.s32 %s71, 1
    %p75 = scmp.eq.s32.totalorder %s16, 1
    %p76 = scmp.ne.s32.totalorder %s71, %s73
    %p77 = scmp.eq.s32.totalorder %s16, 0
    %p78 = por %p76, %p77
    %p79 = scmp.ne.s32.totalorder %s71, %s73
    %p80 = scmp.eq.s32.totalorder %s21, 1
    %p81 = por %p79, %p80
    %p82 = scmp.ne.s32.totalorder %s73, %s74
    %p83 = scmp.eq.s32.totalorder %s21, 0
    %p84 = por %p82, %p83
    %p85 = scmp.ne.s32.totalorder %s73, %s74
    %p86 = scmp.eq.s32.totalorder %s22, 1
    %p87 = por %p85, %p86
    %p89 = scmp.ne.s32.totalorder %s74, %s88
    %p90 = scmp.eq.s32.totalorder %s22, 0
    %p91 = por %p89, %p90
    %s93 = sadd.s32 %s92, 1
    %p96 = scmp.eq.s32.totalorder %s16, 1
    %p97 = scmp.ne.s32.totalorder %s92, %s94
    %p98 = scmp.eq.s32.totalorder %s16, 0
    %p99 = por %p97, %p98
    %p100 = scmp.ne.s32.totalorder %s92, %s94
    %p101 = scmp.eq.s32.totalorder %s21, 1
    %p102 = por %p100, %p101
    %p103 = scmp.ne.s32.totalorder %s94, %s95
    %p104 = scmp.eq.s32.totalorder %s21, 0
    %p105 = por %p103, %p104
    %p106 = scmp.ne.s32.totalorder %s94, %s95
    %p107 = scmp.eq.s32.totalorder %s22, 1
    %p108 = por %p106, %p107
    %p110 = scmp.ne.s32.totalorder %s95, %s109
    %p111 = scmp.eq.s32.totalorder %s22, 0
    %p112 = por %p110, %p111
    %s114 = sadd.s32 %s113, 1
    %p117 = scmp.eq.s32.totalorder %s16, 1
    %p118 = scmp.ne.s32.totalorder %s113, %s115
    %p119 = scmp.eq.s32.totalorder %s16, 0
    %p120 = por %p118, %p119
    %p121 = scmp.ne.s32.totalorder %s113, %s115
    %p122 = scmp.eq.s32.totalorder %s21, 1
    %p123 = por %p121, %p122
    %p124 = scmp.ne.s32.totalorder %s115, %s116
    %p125 = scmp.eq.s32.totalorder %s21, 0
    %p126 = por %p124, %p125
    %p127 = scmp.ne.s32.totalorder %s115, %s116
    %p128 = scmp.eq.s32.totalorder %s22, 1
    %p129 = por %p127, %p128
    %p131 = scmp.ne.s32.totalorder %s116, %s130
    %p132 = scmp.eq.s32.totalorder %s22, 0
    %p133 = por %p131, %p132
    %s135 = sadd.s32 %s134, 1
    %p138 = scmp.eq.s32.totalorder %s16, 1
    %p139 = scmp.ne.s32.totalorder %s134, %s136
    %p140 = scmp.eq.s32.totalorder %s16, 0
    %p141 = por %p139, %p140
    %p142 = scmp.ne.s32.totalorder %s134, %s136
    %p143 = scmp.eq.s32.totalorder %s21, 1
    %p144 = por %p142, %p143
    %p145 = scmp.ne.s32.totalorder %s136, %s137
    %p146 = scmp.eq.s32.totalorder %s21, 0
    %p147 = por %p145, %p146
    %p148 = scmp.ne.s32.totalorder %s136, %s137
    %p149 = scmp.eq.s32.totalorder %s22, 1
    %p150 = por %p148, %p149
    %p152 = scmp.ne.s32.totalorder %s137, %s151
    %p153 = scmp.eq.s32.totalorder %s22, 0
    %p154 = por %p152, %p153
    %s156 = sadd.s32 %s155, 1
    %p159 = scmp.eq.s32.totalorder %s16, 1
    %p160 = scmp.ne.s32.totalorder %s155, %s157
    %p161 = scmp.eq.s32.totalorder %s16, 0
    %p162 = por %p160, %p161
    %p163 = scmp.ne.s32.totalorder %s155, %s157
    %p164 = scmp.eq.s32.totalorder %s21, 1
    %p165 = por %p163, %p164
    %p166 = scmp.ne.s32.totalorder %s157, %s158
    %p167 = scmp.eq.s32.totalorder %s21, 0
    %p168 = por %p166, %p167
    %p169 = scmp.ne.s32.totalorder %s157, %s158
    %p170 = scmp.eq.s32.totalorder %s22, 1
    %p171 = por %p169, %p170
    %p173 = scmp.ne.s32.totalorder %s158, %s172
    %p174 = scmp.eq.s32.totalorder %s22, 0
    %p175 = por %p173, %p174
    %s177 = sadd.s32 %s176, 1
    %p180 = scmp.eq.s32.totalorder %s16, 1
    %p181 = scmp.ne.s32.totalorder %s176, %s178
    %p182 = scmp.eq.s32.totalorder %s16, 0
    %p183 = por %p181, %p182
    %p184 = scmp.ne.s32.totalorder %s176, %s178
    %p185 = scmp.eq.s32.totalorder %s21, 1
    %p186 = por %p184, %p185
    %p187 = scmp.ne.s32.totalorder %s178, %s179
    %p188 = scmp.eq.s32.totalorder %s21, 0
    %p189 = por %p187, %p188
    %p190 = scmp.ne.s32.totalorder %s178, %s179
    %p191 = scmp.eq.s32.totalorder %s22, 1
    %p192 = por %p190, %p191
    %p194 = scmp.ne.s32.totalorder %s179, %s193
    %p195 = scmp.eq.s32.totalorder %s22, 0
    %p196 = por %p194, %p195
    %s198 = sadd.s32 %s197, 1
    %p201 = scmp.eq.s32.totalorder %s16, 1
    %p202 = scmp.ne.s32.totalorder %s197, %s199
    %p203 = scmp.eq.s32.totalorder %s16, 0
    %p204 = por %p202, %p203
    %p205 = scmp.ne.s32.totalorder %s197, %s199
    %p206 = scmp.eq.s32.totalorder %s21, 1
    %p207 = por %p205, %p206
    %p208 = scmp.ne.s32.totalorder %s199, %s200
    %p209 = scmp.eq.s32.totalorder %s21, 0
    %p210 = por %p208, %p209
    %p211 = scmp.ne.s32.totalorder %s199, %s200
    %p212 = scmp.eq.s32.totalorder %s22, 1
    %p213 = por %p211, %p212
    %p215 = scmp.ne.s32.totalorder %s200, %s214
    %p216 = scmp.eq.s32.totalorder %s22, 0
    %p217 = por %p215, %p216
    %s219 = sadd.s32 %s218, 1
    %p222 = scmp.eq.s32.totalorder %s16, 1
    %p223 = scmp.ne.s32.totalorder %s218, %s220
    %p224 = scmp.eq.s32.totalorder %s16, 0
    %p225 = por %p223, %p224
    %p226 = scmp.ne.s32.totalorder %s218, %s220
    %p227 = scmp.eq.s32.totalorder %s21, 1
    %p228 = por %p226, %p227
    %p229 = scmp.ne.s32.totalorder %s220, %s221
    %p230 = scmp.eq.s32.totalorder %s21, 0
    %p231 = por %p229, %p230
    %p232 = scmp.ne.s32.totalorder %s220, %s221
    %p233 = scmp.eq.s32.totalorder %s22, 1
    %p234 = por %p232, %p233
    %p236 = scmp.ne.s32.totalorder %s221, %s235
    %p237 = scmp.eq.s32.totalorder %s22, 0
    %p238 = por %p236, %p237
    %s239 = ssub.s32 %s16, %s23
    %p240 = scmp.eq.s32.totalorder %s239, 0
    %s242 = sadd.s32 %s241, 1
    %s243 = scalar_select %p240, %s241, %s242
    %p246 = pneg %p240
    %p247 = scmp.eq.s32.totalorder %s16, 1
    %p248 = por %p246, %p247
    %p249 = scmp.ne.s32.totalorder %s241, %s244
    %p250 = scmp.eq.s32.totalorder %s16, 0
    %p251 = por %p249, %p250
    %p252 = scmp.ne.s32.totalorder %s241, %s244
    %p253 = scmp.eq.s32.totalorder %s21, 1
    %p254 = por %p252, %p253
    %p255 = scmp.ne.s32.totalorder %s244, %s245
    %p256 = scmp.eq.s32.totalorder %s21, 0
    %p257 = por %p255, %p256
    %p258 = scmp.ne.s32.totalorder %s244, %s245
    %p259 = scmp.eq.s32.totalorder %s22, 1
    %p260 = por %p258, %p259
    %p262 = scmp.ne.s32.totalorder %s245, %s261
    %p263 = scmp.eq.s32.totalorder %s22, 0
    %p264 = por %p262, %p263
    %p265 = scmp.le.s32.totalorder 1, %s16
    %p266 = scmp.lt.s32.totalorder %s16, 3
    %p267 = pnand %p265, %p266
    %p268 = pneg %p267
    // Predicated region
    $region9: #{small_encoder_forward.11} parent=5 // pred_check
      _
    $region10: #{small_encoder_forward.11} parent=5 // pred_check_branch
      %270 = sbr.rel (%p267) target = $region12
    $region11: #{small_encoder_forward.11} parent=5 // pred_region
      %s271 = ssub.s32 %s16, 1
      // Predicated region
      $region13: #{small_encoder_forward.11} parent=11 // pred_check
        %p272 = pneg %p63
      $region14: #{small_encoder_forward.11} parent=11 // pred_check_branch
        %274 = sbr.rel (%p272) target = $region16
      $region15: #{small_encoder_forward.11} parent=11 // pred_region
        _
      $region16: #{small_encoder_forward.11} parent=11 // pred_fallthru
        _
      // Predicated region
      $region17: #{small_encoder_forward.11} parent=11 // pred_check
        %p275 = pneg %p84
      $region18: #{small_encoder_forward.11} parent=11 // pred_check_branch
        %277 = sbr.rel (%p275) target = $region20
      $region19: #{small_encoder_forward.11} parent=11 // pred_region
        _
      $region20: #{small_encoder_forward.11} parent=11 // pred_fallthru
        _
      // Predicated region
      $region21: #{small_encoder_forward.11} parent=11 // pred_check
        %p278 = pneg %p105
      $region22: #{small_encoder_forward.11} parent=11 // pred_check_branch
        %280 = sbr.rel (%p278) target = $region24
      $region23: #{small_encoder_forward.11} parent=11 // pred_region
        _
      $region24: #{small_encoder_forward.11} parent=11 // pred_fallthru
        _
      // Predicated region
      $region25: #{small_encoder_forward.11} parent=11 // pred_check
        %p281 = pneg %p126
      $region26: #{small_encoder_forward.11} parent=11 // pred_check_branch
        %283 = sbr.rel (%p281) target = $region28
      $region27: #{small_encoder_forward.11} parent=11 // pred_region
        _
      $region28: #{small_encoder_forward.11} parent=11 // pred_fallthru
        _
      // Predicated region
      $region29: #{small_encoder_forward.11} parent=11 // pred_check
        %p284 = pneg %p147
      $region30: #{small_encoder_forward.11} parent=11 // pred_check_branch
        %286 = sbr.rel (%p284) target = $region32
      $region31: #{small_encoder_forward.11} parent=11 // pred_region
        _
      $region32: #{small_encoder_forward.11} parent=11 // pred_fallthru
        _
      // Predicated region
      $region33: #{small_encoder_forward.11} parent=11 // pred_check
        %p287 = pneg %p168
      $region34: #{small_encoder_forward.11} parent=11 // pred_check_branch
        %289 = sbr.rel (%p287) target = $region36
      $region35: #{small_encoder_forward.11} parent=11 // pred_region
        _
      $region36: #{small_encoder_forward.11} parent=11 // pred_fallthru
        _
      // Predicated region
      $region37: #{small_encoder_forward.11} parent=11 // pred_check
        %p290 = pneg %p189
      $region38: #{small_encoder_forward.11} parent=11 // pred_check_branch
        %292 = sbr.rel (%p290) target = $region40
      $region39: #{small_encoder_forward.11} parent=11 // pred_region
        _
      $region40: #{small_encoder_forward.11} parent=11 // pred_fallthru
        _
      // Predicated region
      $region41: #{small_encoder_forward.11} parent=11 // pred_check
        %p293 = pneg %p210
      $region42: #{small_encoder_forward.11} parent=11 // pred_check_branch
        %295 = sbr.rel (%p293) target = $region44
      $region43: #{small_encoder_forward.11} parent=11 // pred_region
        _
      $region44: #{small_encoder_forward.11} parent=11 // pred_fallthru
        _
      // Predicated region
      $region45: #{small_encoder_forward.11} parent=11 // pred_check
        %p296 = pneg %p231
      $region46: #{small_encoder_forward.11} parent=11 // pred_check_branch
        %298 = sbr.rel (%p296) target = $region48
      $region47: #{small_encoder_forward.11} parent=11 // pred_region
        _
      $region48: #{small_encoder_forward.11} parent=11 // pred_fallthru
        _
    $region12: #{small_encoder_forward.11} parent=5 // pred_fallthru
      _
    %p299 = scmp.lt.s32.totalorder %s16, 2
    // Predicated region
    $region49: #{small_encoder_forward.11} parent=5 // pred_check
      %p300 = pneg %p299
    $region50: #{small_encoder_forward.11} parent=5 // pred_check_branch
      %302 = sbr.rel (%p300) target = $region52
    $region51: #{small_encoder_forward.11} parent=5 // pred_region
      // Predicated region
      $region53: #{small_encoder_forward.11} parent=51 // pred_check
        %p303 = pneg %p36
      $region54: #{small_encoder_forward.11} parent=51 // pred_check_branch
        %305 = sbr.rel (%p303) target = $region56
      $region55: #{small_encoder_forward.11} parent=51 // pred_region
        %p306 = scmp.lt.s32.totalorder %s16, 1
        %s307 = scalar_select %p306, %s16, 1
        %s308 = smul.addr %s307, 8
        %s309 = smul.addr %s308, 8
        %s310 = scalar_lea.vmem %s0, %s309
      $region56: #{small_encoder_forward.11} parent=51 // pred_fallthru
        _
    $region52: #{small_encoder_forward.11} parent=5 // pred_fallthru
      _
    %p311 = scmp.le.s32.totalorder 1, %s16
    %p312 = scmp.lt.s32.totalorder %s16, 3
    %p313 = pnand %p311, %p312
    %p314 = pneg %p313
    // Predicated region
    $region57: #{small_encoder_forward.11} parent=5 // pred_check
      _
    $region58: #{small_encoder_forward.11} parent=5 // pred_check_branch
      %316 = sbr.rel (%p313) target = $region60
    $region59: #{small_encoder_forward.11} parent=5 // pred_region
      %s317 = ssub.s32 %s16, 1
      %p318 = scmp.lt.s32.totalorder %s21, 1
      %s319 = scalar_select %p318, %s21, 1
      %s320 = smul.addr %s319, 8
      %s321 = smul.addr %s320, 8
      %s322 = scalar_lea.vmem %s0, %s321
      %p323 = pneg %p42
      %p324 = pneg %p39
      %p325 = pneg %p63
      %p326 = pneg %p60
      %p327 = pneg %p84
      %p328 = pneg %p81
      %p329 = pneg %p105
      %p330 = pneg %p102
      %p331 = pneg %p126
      %p332 = pneg %p123
      %p333 = pneg %p147
      %p334 = pneg %p144
      %p335 = pneg %p168
      %p336 = pneg %p165
      %p337 = pneg %p189
      %p338 = pneg %p186
      %p339 = pneg %p210
      %p340 = pneg %p207
      %p341 = pneg %p231
      %p342 = pneg %p228
      %p343 = pneg %p257
      %p344 = pneg %p254
      %p345 = scmp.lt.s32.totalorder %s21, 1
      %s346 = scalar_select %p345, %s21, 1
      %s347 = smul.addr %s346, 8
      %s348 = smul.addr %s347, 8
      %s349 = scalar_lea.vmem %s10, %s348
      %p350 = scmp.lt.s32.totalorder %s21, 1
      %s351 = scalar_select %p350, %s21, 1
      %s352 = smul.addr %s351, 8
      %s353 = smul.addr %s352, 8
      %s354 = scalar_lea.vmem %s0, %s353
      %p355 = scmp.lt.s32.totalorder %s21, 1
      %s356 = scalar_select %p355, %s21, 1
      %s357 = smul.addr %s356, 8
      %s358 = smul.addr %s357, 8
      %s359 = scalar_lea.vmem %s10, %s358
      %v361 = vld [vmem:[%s354] sm:$0xff]
      %v362 = vld [vmem:[%s354 + $0x8] sm:$0xff]
      %v363 = vld [vmem:[%s354 + $0x10] sm:$0xff]
      %v364 = vld [vmem:[%s354 + $0x18] sm:$0xff]
      %v365 = vld [vmem:[%s354 + $0x20] sm:$0xff]
      %v366 = vld [vmem:[%s354 + $0x28] sm:$0xff]
      %v367 = vld [vmem:[%s354 + $0x30] sm:$0xff]
      %v368 = vld [vmem:[%s354 + $0x38] sm:$0xff]
      %v369 = vpack.c.bf16 %v362, %v361
      %v370 = vpack.c.bf16 %v364, %v363
      %v371 = vpack.c.bf16 %v366, %v365
      %v372 = vpack.c.bf16 %v368, %v367
      %v373 = vld [vmem:[%s1] sm:$0xf]
      %v374 = vld [vmem:[%s1 + $0x4] sm:$0xf]
      %v375 = vld [vmem:[%s1 + $0x8] sm:$0xf]
      %v376 = vld [vmem:[%s1 + $0xc] sm:$0xf]
      %v377 = vld [vmem:[%s1 + $0x10] sm:$0xf]
      %v378 = vld [vmem:[%s1 + $0x14] sm:$0xf]
      %v379 = vld [vmem:[%s1 + $0x18] sm:$0xf]
      %v380 = vld [vmem:[%s1 + $0x1c] sm:$0xf]
      %v389 = vunpack.c.l.b16 %v373
      %v390 = vunpack.c.l.b16 %v374
      %v391 = vunpack.c.l.b16 %v375
      %v392 = vunpack.c.l.b16 %v376
      %v393 = vunpack.c.l.b16 %v377
      %v394 = vunpack.c.l.b16 %v378
      %v395 = vunpack.c.l.b16 %v379
      %v396 = vunpack.c.l.b16 %v380
      %v397 = vpack.c.b16 %v390, %v389
      %v398 = vpack.c.b16 %v392, %v391
      %v399 = vpack.c.b16 %v394, %v393
      %v400 = vpack.c.b16 %v396, %v395
      %vm405 = vcmask 523264
      %v407 = vsel %vm405, %v369, 0
      %v410 = vsel %vm405, %v370, 0
      %v413 = vsel %vm405, %v371, 0
      %v416 = vsel %vm405, %v372, 0
      %418 = vmatpush.bf16.msra.mxu0 0
      %419 = vmatpush.bf16.msra.mxu0 0
      %420 = vmatpush.bf16.msra.mxu0 0
      %421 = vmatpush.bf16.msra.mxu0 0
      %422 = vmatpush.bf16.msra.mxu0 %v400
      %423 = vmatpush.bf16.msra.mxu0 %v399
      %424 = vmatpush.bf16.msra.mxu0 %v398
      %425 = vmatpush.bf16.msra.mxu0 %v397
      %426 = vmatmul.bf16.gmra.mxu0 %v407
      %v427 = vpop.f32.mrf.mxu0
      %v428 = vadd.f32 0.0, %v427
      %v429 = vpop.f32.mrf.mxu0
      %v430 = vadd.f32 0.0, %v429
      %431 = vmatmul.bf16.gmra.mxu0 %v410
      %v432 = vpop.f32.mrf.mxu0
      %v433 = vadd.f32 0.0, %v432
      %v434 = vpop.f32.mrf.mxu0
      %v435 = vadd.f32 0.0, %v434
      %436 = vmatmul.bf16.gmra.mxu0 %v413
      %v437 = vpop.f32.mrf.mxu0
      %v438 = vadd.f32 0.0, %v437
      %v439 = vpop.f32.mrf.mxu0
      %v440 = vadd.f32 0.0, %v439
      %441 = vmatmul.bf16.gmra.mxu0 %v416
      %v442 = vpop.f32.mrf.mxu0
      %v443 = vadd.f32 0.0, %v442
      %v444 = vpop.f32.mrf.mxu0
      %v445 = vadd.f32 0.0, %v444
      %446 = vdwg.mxu0
      %v447 = vld [vmem:[%s2] sm:$0x1]
      %v449 = vperm.slane %v447, 0
      %v451 = vmul.f32 %v428, %v449
      %v452 = vmul.f32 %v430, %v449
      %v453 = vmul.f32 %v433, %v449
      %v454 = vmul.f32 %v435, %v449
      %v455 = vmul.f32 %v438, %v449
      %v456 = vmul.f32 %v440, %v449
      %v457 = vmul.f32 %v443, %v449
      %v458 = vmul.f32 %v445, %v449
      %v459 = vld [vmem:[%s3] sm:$0x1]
      %v461 = vperm.slane %v459, 0
      %v463 = vadd.f32 %v451, %v461
      %v464 = vadd.f32 %v452, %v461
      %v465 = vadd.f32 %v453, %v461
      %v466 = vadd.f32 %v454, %v461
      %v467 = vadd.f32 %v455, %v461
      %v468 = vadd.f32 %v456, %v461
      %v469 = vadd.f32 %v457, %v461
      %v470 = vadd.f32 %v458, %v461
      %v471 = vmax.f32 %v463, 0.0
      %v472 = vmax.f32 %v464, 0.0
      %v473 = vmax.f32 %v465, 0.0
      %v474 = vmax.f32 %v466, 0.0
      %v475 = vmax.f32 %v467, 0.0
      %v476 = vmax.f32 %v468, 0.0
      %v477 = vmax.f32 %v469, 0.0
      %v478 = vmax.f32 %v470, 0.0
      %vm479 = vcmask 130048
      %480 = vst.msk [vmem:[#allocation2] sm:$0xff] %vm479, 0.0
      %vm481 = vcmask 123904
      %482 = vst.msk [vmem:[#allocation2 + $0x8] sm:$0x3] %vm481, 0.0
      %vm483 = vcmask 122880
      %484 = vst.msk [vmem:[#allocation2] sm:$0x1] %vm483, 0.0
      %485 = vst.msk [vmem:[#allocation2 + $0x10] sm:$0x1] %vm483, 0.0
      %486 = vst.msk [vmem:[#allocation2 + $0x20] sm:$0x1] %vm483, 0.0
      %487 = vst.msk [vmem:[#allocation2 + $0x30] sm:$0x1] %vm483, 0.0
      %488 = vst.msk [vmem:[#allocation2 + $0x40] sm:$0x1] %vm483, 0.0
      %489 = vst.msk [vmem:[#allocation2 + $0x50] sm:$0x1] %vm483, 0.0
      %490 = vst.msk [vmem:[#allocation2 + $0x60] sm:$0x1] %vm483, 0.0
      %491 = vst.msk [vmem:[#allocation2 + $0x70] sm:$0x1] %vm483, 0.0
      %492 = vst.msk [vmem:[#allocation2 + $0x80] sm:$0x1] %vm483, 0.0
      %493 = vst.msk [vmem:[#allocation2 + $0x90] sm:$0x1] %vm483, 0.0
      %s494 = scalar_lea.vmem [#allocation2], 144
      %495 = vst.msk [vmem:[%s494] sm:$0xff] %vm479, 0.0
      %496 = vst.msk [vmem:[%s494 + $0x8] sm:$0x3] %vm481, 0.0
      %497 = vst.msk [vmem:[#allocation2 + $0x9] sm:$0x1] %vm483, 0.0
      %498 = vst.msk [vmem:[#allocation2 + $0x19] sm:$0x1] %vm483, 0.0
      %499 = vst.msk [vmem:[#allocation2 + $0x29] sm:$0x1] %vm483, 0.0
      %500 = vst.msk [vmem:[#allocation2 + $0x39] sm:$0x1] %vm483, 0.0
      %501 = vst.msk [vmem:[#allocation2 + $0x49] sm:$0x1] %vm483, 0.0
      %502 = vst.msk [vmem:[#allocation2 + $0x59] sm:$0x1] %vm483, 0.0
      %503 = vst.msk [vmem:[#allocation2 + $0x69] sm:$0x1] %vm483, 0.0
      %504 = vst.msk [vmem:[#allocation2 + $0x79] sm:$0x1] %vm483, 0.0
      %505 = vst.msk [vmem:[#allocation2 + $0x89] sm:$0x1] %vm483, 0.0
      %506 = vst.msk [vmem:[#allocation2 + $0x99] sm:$0x1] %vm483, 0.0
      %s507 = scalar_lea.vmem [#allocation2], 16
      %508 = vst.msk [vmem:[%s507 + $0x1] sm:$0xff] %vm479, %v471
      %509 = vst.msk [vmem:[%s507 + $0x11] sm:$0xff] %vm479, %v472
      %510 = vst.msk [vmem:[%s507 + $0x21] sm:$0xff] %vm479, %v473
      %511 = vst.msk [vmem:[%s507 + $0x31] sm:$0xff] %vm479, %v474
      %512 = vst.msk [vmem:[%s507 + $0x41] sm:$0xff] %vm479, %v475
      %513 = vst.msk [vmem:[%s507 + $0x51] sm:$0xff] %vm479, %v476
      %514 = vst.msk [vmem:[%s507 + $0x61] sm:$0xff] %vm479, %v477
      %515 = vst.msk [vmem:[%s507 + $0x71] sm:$0xff] %vm479, %v478
      %v516 = vld [vmem:[#allocation2] sm:$0xff]
      %v517 = vld [vmem:[#allocation2 + $0x8] sm:$0x3]
      %v518 = vld [vmem:[#allocation2 + $0x10] sm:$0xff]
      %v519 = vld [vmem:[#allocation2 + $0x18] sm:$0x3]
      %v520 = vld [vmem:[#allocation2 + $0x20] sm:$0xff]
      %v521 = vld [vmem:[#allocation2 + $0x28] sm:$0x3]
      %v522 = vld [vmem:[#allocation2 + $0x30] sm:$0xff]
      %v523 = vld [vmem:[#allocation2 + $0x38] sm:$0x3]
      %v524 = vld [vmem:[#allocation2 + $0x40] sm:$0xff]
      %v525 = vld [vmem:[#allocation2 + $0x48] sm:$0x3]
      %v526 = vld [vmem:[#allocation2 + $0x50] sm:$0xff]
      %v527 = vld [vmem:[#allocation2 + $0x58] sm:$0x3]
      %v528 = vld [vmem:[#allocation2 + $0x60] sm:$0xff]
      %v529 = vld [vmem:[#allocation2 + $0x68] sm:$0x3]
      %v530 = vld [vmem:[#allocation2 + $0x70] sm:$0xff]
      %v531 = vld [vmem:[#allocation2 + $0x78] sm:$0x3]
      %v532 = vld [vmem:[#allocation2 + $0x80] sm:$0xff]
      %v533 = vld [vmem:[#allocation2 + $0x88] sm:$0x3]
      %v534 = vld [vmem:[#allocation2 + $0x90] sm:$0xff]
      %v535 = vld [vmem:[#allocation2 + $0x98] sm:$0x3]
      %vm552 = vcmask 1046528
      %v553 = vrot.slane %v516, 1
      %v554 = vrot.slane %v517, 1
      %v555 = vsel %vm552, %v553, %v554
      %v556 = vrot.slane %v518, 1
      %v557 = vrot.slane %v519, 1
      %v558 = vsel %vm552, %v556, %v557
      %v559 = vrot.slane %v520, 1
      %v560 = vrot.slane %v521, 1
      %v561 = vsel %vm552, %v559, %v560
      %v562 = vrot.slane %v522, 1
      %v563 = vrot.slane %v523, 1
      %v564 = vsel %vm552, %v562, %v563
      %v565 = vrot.slane %v524, 1
      %v566 = vrot.slane %v525, 1
      %v567 = vsel %vm552, %v565, %v566
      %v568 = vrot.slane %v526, 1
      %v569 = vrot.slane %v527, 1
      %v570 = vsel %vm552, %v568, %v569
      %v571 = vrot.slane %v528, 1
      %v572 = vrot.slane %v529, 1
      %v573 = vsel %vm552, %v571, %v572
      %v574 = vrot.slane %v530, 1
      %v575 = vrot.slane %v531, 1
      %v576 = vsel %vm552, %v574, %v575
      %vm577 = vcmask 1045504
      %v578 = vrot.slane %v516, 2
      %v579 = vrot.slane %v517, 2
      %v580 = vsel %vm577, %v578, %v579
      %v581 = vrot.slane %v518, 2
      %v582 = vrot.slane %v519, 2
      %v583 = vsel %vm577, %v581, %v582
      %v584 = vrot.slane %v520, 2
      %v585 = vrot.slane %v521, 2
      %v586 = vsel %vm577, %v584, %v585
      %v587 = vrot.slane %v522, 2
      %v588 = vrot.slane %v523, 2
      %v589 = vsel %vm577, %v587, %v588
      %v590 = vrot.slane %v524, 2
      %v591 = vrot.slane %v525, 2
      %v592 = vsel %vm577, %v590, %v591
      %v593 = vrot.slane %v526, 2
      %v594 = vrot.slane %v527, 2
      %v595 = vsel %vm577, %v593, %v594
      %v596 = vrot.slane %v528, 2
      %v597 = vrot.slane %v529, 2
      %v598 = vsel %vm577, %v596, %v597
      %v599 = vrot.slane %v530, 2
      %v600 = vrot.slane %v531, 2
      %v601 = vsel %vm577, %v599, %v600
      %v604 = vrot.slane %v532, 1
      %v605 = vrot.slane %v533, 1
      %v606 = vsel %vm552, %v604, %v605
      %v607 = vrot.slane %v532, 2
      %v608 = vrot.slane %v533, 2
      %v609 = vsel %vm577, %v607, %v608
      %v612 = vrot.slane %v534, 1
      %v613 = vrot.slane %v535, 1
      %v614 = vsel %vm552, %v612, %v613
      %v615 = vrot.slane %v534, 2
      %v616 = vrot.slane %v535, 2
      %v617 = vsel %vm577, %v615, %v616
      %626 = vrot.lane.b32.xlu0 %v555, 16
      %v627 = vpop.permute.xlu0 %626
      %628 = vrot.lane.b32.xlu0 %v558, 16
      %v629 = vpop.permute.xlu0 %628
      %630 = vrot.lane.b32.xlu0 %v561, 16
      %v631 = vpop.permute.xlu0 %630
      %632 = vrot.lane.b32.xlu0 %v564, 16
      %v633 = vpop.permute.xlu0 %632
      %634 = vrot.lane.b32.xlu0 %v567, 16
      %v635 = vpop.permute.xlu0 %634
      %636 = vrot.lane.b32.xlu0 %v570, 16
      %v637 = vpop.permute.xlu0 %636
      %638 = vrot.lane.b32.xlu0 %v573, 16
      %v639 = vpop.permute.xlu0 %638
      %640 = vrot.lane.b32.xlu0 %v576, 16
      %v641 = vpop.permute.xlu0 %640
      %650 = vrot.lane.b32.xlu0 %v580, 32
      %v651 = vpop.permute.xlu0 %650
      %652 = vrot.lane.b32.xlu0 %v583, 32
      %v653 = vpop.permute.xlu0 %652
      %654 = vrot.lane.b32.xlu0 %v586, 32
      %v655 = vpop.permute.xlu0 %654
      %656 = vrot.lane.b32.xlu0 %v589, 32
      %v657 = vpop.permute.xlu0 %656
      %658 = vrot.lane.b32.xlu0 %v592, 32
      %v659 = vpop.permute.xlu0 %658
      %660 = vrot.lane.b32.xlu0 %v595, 32
      %v661 = vpop.permute.xlu0 %660
      %662 = vrot.lane.b32.xlu0 %v598, 32
      %v663 = vpop.permute.xlu0 %662
      %664 = vrot.lane.b32.xlu0 %v601, 32
      %v665 = vpop.permute.xlu0 %664
      %674 = vrot.lane.b32.xlu0 %v518, 48
      %v675 = vpop.permute.xlu0 %674
      %676 = vrot.lane.b32.xlu0 %v520, 48
      %v677 = vpop.permute.xlu0 %676
      %678 = vrot.lane.b32.xlu0 %v522, 48
      %v679 = vpop.permute.xlu0 %678
      %680 = vrot.lane.b32.xlu0 %v524, 48
      %v681 = vpop.permute.xlu0 %680
      %682 = vrot.lane.b32.xlu0 %v526, 48
      %v683 = vpop.permute.xlu0 %682
      %684 = vrot.lane.b32.xlu0 %v528, 48
      %v685 = vpop.permute.xlu0 %684
      %686 = vrot.lane.b32.xlu0 %v530, 48
      %v687 = vpop.permute.xlu0 %686
      %688 = vrot.lane.b32.xlu0 %v532, 48
      %v689 = vpop.permute.xlu0 %688
      %698 = vrot.lane.b32.xlu0 %v558, 64
      %v699 = vpop.permute.xlu0 %698
      %700 = vrot.lane.b32.xlu0 %v561, 64
      %v701 = vpop.permute.xlu0 %700
      %702 = vrot.lane.b32.xlu0 %v564, 64
      %v703 = vpop.permute.xlu0 %702
      %704 = vrot.lane.b32.xlu0 %v567, 64
      %v705 = vpop.permute.xlu0 %704
      %706 = vrot.lane.b32.xlu0 %v570, 64
      %v707 = vpop.permute.xlu0 %706
      %708 = vrot.lane.b32.xlu0 %v573, 64
      %v709 = vpop.permute.xlu0 %708
      %710 = vrot.lane.b32.xlu0 %v576, 64
      %v711 = vpop.permute.xlu0 %710
      %712 = vrot.lane.b32.xlu0 %v606, 64
      %v713 = vpop.permute.xlu0 %712
      %722 = vrot.lane.b32.xlu0 %v583, 80
      %v723 = vpop.permute.xlu0 %722
      %724 = vrot.lane.b32.xlu0 %v586, 80
      %v725 = vpop.permute.xlu0 %724
      %726 = vrot.lane.b32.xlu0 %v589, 80
      %v727 = vpop.permute.xlu0 %726
      %728 = vrot.lane.b32.xlu0 %v592, 80
      %v729 = vpop.permute.xlu0 %728
      %730 = vrot.lane.b32.xlu0 %v595, 80
      %v731 = vpop.permute.xlu0 %730
      %732 = vrot.lane.b32.xlu0 %v598, 80
      %v733 = vpop.permute.xlu0 %732
      %734 = vrot.lane.b32.xlu0 %v601, 80
      %v735 = vpop.permute.xlu0 %734
      %736 = vrot.lane.b32.xlu0 %v609, 80
      %v737 = vpop.permute.xlu0 %736
      %746 = vrot.lane.b32.xlu0 %v520, 96
      %v747 = vpop.permute.xlu0 %746
      %748 = vrot.lane.b32.xlu0 %v522, 96
      %v749 = vpop.permute.xlu0 %748
      %750 = vrot.lane.b32.xlu0 %v524, 96
      %v751 = vpop.permute.xlu0 %750
      %752 = vrot.lane.b32.xlu0 %v526, 96
      %v753 = vpop.permute.xlu0 %752
      %754 = vrot.lane.b32.xlu0 %v528, 96
      %v755 = vpop.permute.xlu0 %754
      %756 = vrot.lane.b32.xlu0 %v530, 96
      %v757 = vpop.permute.xlu0 %756
      %758 = vrot.lane.b32.xlu0 %v532, 96
      %v759 = vpop.permute.xlu0 %758
      %760 = vrot.lane.b32.xlu0 %v534, 96
      %v761 = vpop.permute.xlu0 %760
      %770 = vrot.lane.b32.xlu0 %v561, 112
      %v771 = vpop.permute.xlu0 %770
      %772 = vrot.lane.b32.xlu0 %v564, 112
      %v773 = vpop.permute.xlu0 %772
      %774 = vrot.lane.b32.xlu0 %v567, 112
      %v775 = vpop.permute.xlu0 %774
      %776 = vrot.lane.b32.xlu0 %v570, 112
      %v777 = vpop.permute.xlu0 %776
      %778 = vrot.lane.b32.xlu0 %v573, 112
      %v779 = vpop.permute.xlu0 %778
      %780 = vrot.lane.b32.xlu0 %v576, 112
      %v781 = vpop.permute.xlu0 %780
      %782 = vrot.lane.b32.xlu0 %v606, 112
      %v783 = vpop.permute.xlu0 %782
      %784 = vrot.lane.b32.xlu0 %v614, 112
      %v785 = vpop.permute.xlu0 %784
      %v794 = vsel %vm479, %v516, %v627
      %v795 = vsel %vm479, %v518, %v629
      %v796 = vsel %vm479, %v520, %v631
      %v797 = vsel %vm479, %v522, %v633
      %v798 = vsel %vm479, %v524, %v635
      %v799 = vsel %vm479, %v526, %v637
      %v800 = vsel %vm479, %v528, %v639
      %v801 = vsel %vm479, %v530, %v641
      %vm802 = vcmask 261120
      %v803 = vsel %vm802, %v794, %v651
      %v804 = vsel %vm802, %v795, %v653
      %v805 = vsel %vm802, %v796, %v655
      %v806 = vsel %vm802, %v797, %v657
      %v807 = vsel %vm802, %v798, %v659
      %v808 = vsel %vm802, %v799, %v661
      %v809 = vsel %vm802, %v800, %v663
      %v810 = vsel %vm802, %v801, %v665
      %vm811 = vcmask 392192
      %v812 = vsel %vm811, %v803, %v675
      %v813 = vsel %vm811, %v804, %v677
      %v814 = vsel %vm811, %v805, %v679
      %v815 = vsel %vm811, %v806, %v681
      %v816 = vsel %vm811, %v807, %v683
      %v817 = vsel %vm811, %v808, %v685
      %v818 = vsel %vm811, %v809, %v687
      %v819 = vsel %vm811, %v810, %v689
      %v820 = vsel %vm405, %v812, %v699
      %v821 = vsel %vm405, %v813, %v701
      %v822 = vsel %vm405, %v814, %v703
      %v823 = vsel %vm405, %v815, %v705
      %v824 = vsel %vm405, %v816, %v707
      %v825 = vsel %vm405, %v817, %v709
      %v826 = vsel %vm405, %v818, %v711
      %v827 = vsel %vm405, %v819, %v713
      %vm828 = vcmask 654336
      %v829 = vsel %vm828, %v820, %v723
      %v830 = vsel %vm828, %v821, %v725
      %v831 = vsel %vm828, %v822, %v727
      %v832 = vsel %vm828, %v823, %v729
      %v833 = vsel %vm828, %v824, %v731
      %v834 = vsel %vm828, %v825, %v733
      %v835 = vsel %vm828, %v826, %v735
      %v836 = vsel %vm828, %v827, %v737
      %vm837 = vcmask 785408
      %v838 = vsel %vm837, %v829, %v747
      %v839 = vsel %vm837, %v830, %v749
      %v840 = vsel %vm837, %v831, %v751
      %v841 = vsel %vm837, %v832, %v753
      %v842 = vsel %vm837, %v833, %v755
      %v843 = vsel %vm837, %v834, %v757
      %v844 = vsel %vm837, %v835, %v759
      %v845 = vsel %vm837, %v836, %v761
      %vm846 = vcmask 916480
      %v847 = vsel %vm846, %v838, %v771
      %v848 = vsel %vm846, %v839, %v773
      %v849 = vsel %vm846, %v840, %v775
      %v850 = vsel %vm846, %v841, %v777
      %v851 = vsel %vm846, %v842, %v779
      %v852 = vsel %vm846, %v843, %v781
      %v853 = vsel %vm846, %v844, %v783
      %v854 = vsel %vm846, %v845, %v785
      %v855 = vpack.c.bf16 %v848, %v847
      %v856 = vpack.c.bf16 %v589, %v586
      %v857 = vpack.c.bf16 %v850, %v849
      %v858 = vpack.c.bf16 %v595, %v592
      %v859 = vpack.c.bf16 %v852, %v851
      %v860 = vpack.c.bf16 %v601, %v598
      %v861 = vpack.c.bf16 %v854, %v853
      %v862 = vpack.c.bf16 %v617, %v609
      %v863 = vld [vmem:[%s4] sm:$0xf]
      %v864 = vld [vmem:[%s4 + $0x4] sm:$0xf]
      %v865 = vld [vmem:[%s4 + $0x8] sm:$0xf]
      %v866 = vld [vmem:[%s4 + $0xc] sm:$0xf]
      %v867 = vld [vmem:[%s4 + $0x10] sm:$0xf]
      %v868 = vld [vmem:[%s4 + $0x14] sm:$0xf]
      %v869 = vld [vmem:[%s4 + $0x18] sm:$0xf]
      %v870 = vld [vmem:[%s4 + $0x1c] sm:$0xf]
      %v871 = vld [vmem:[%s4 + $0x20] sm:$0xf]
      %v872 = vld [vmem:[%s4 + $0x24] sm:$0xf]
      %v873 = vld [vmem:[%s4 + $0x28] sm:$0xf]
      %v874 = vld [vmem:[%s4 + $0x2c] sm:$0xf]
      %v875 = vld [vmem:[%s4 + $0x30] sm:$0xf]
      %v876 = vld [vmem:[%s4 + $0x34] sm:$0xf]
      %v877 = vld [vmem:[%s4 + $0x38] sm:$0xf]
      %v878 = vld [vmem:[%s4 + $0x3c] sm:$0xf]
      %v879 = vld [vmem:[%s4 + $0x40] sm:$0xf]
      %v880 = vld [vmem:[%s4 + $0x44] sm:$0xf]
      %v899 = vunpack.c.l.b16 %v863
      %v900 = vunpack.c.l.b16 %v864
      %v901 = vunpack.c.l.b16 %v865
      %v902 = vunpack.c.l.b16 %v866
      %v903 = vunpack.c.l.b16 %v867
      %v904 = vunpack.c.l.b16 %v868
      %v905 = vunpack.c.l.b16 %v869
      %v906 = vunpack.c.l.b16 %v870
      %v907 = vunpack.c.l.b16 %v871
      %v908 = vunpack.c.l.b16 %v872
      %v909 = vunpack.c.l.b16 %v873
      %v910 = vunpack.c.l.b16 %v874
      %v911 = vunpack.c.l.b16 %v875
      %v912 = vunpack.c.l.b16 %v876
      %v913 = vunpack.c.l.b16 %v877
      %v914 = vunpack.c.l.b16 %v878
      %v915 = vunpack.c.l.b16 %v879
      %v916 = vunpack.c.l.b16 %v880
      %v917 = vpack.c.b16 %v900, %v899
      %v918 = vpack.c.b16 %v902, %v901
      %v919 = vpack.c.b16 %v904, %v903
      %v920 = vpack.c.b16 %v906, %v905
      %v921 = vpack.c.b16 %v908, %v907
      %v922 = vpack.c.b16 %v910, %v909
      %v923 = vpack.c.b16 %v912, %v911
      %v924 = vpack.c.b16 %v914, %v913
      %v925 = vpack.c.b16 %v916, %v915
      %v936 = vsel %vm479, %v856, 0
      %v939 = vsel %vm479, %v858, 0
      %v942 = vsel %vm479, %v860, 0
      %v945 = vsel %vm479, %v862, 0
      %947 = vmatpush.bf16.msra.mxu0 %v924
      %948 = vmatpush.bf16.msra.mxu0 %v923
      %949 = vmatpush.bf16.msra.mxu0 %v922
      %950 = vmatpush.bf16.msra.mxu0 %v921
      %951 = vmatpush.bf16.msra.mxu0 %v920
      %952 = vmatpush.bf16.msra.mxu0 %v919
      %953 = vmatpush.bf16.msra.mxu0 %v918
      %954 = vmatpush.bf16.msra.mxu0 %v917
      %955 = vmatmul.bf16.gmra.mxu0 %v855
      %v956 = vpop.f32.mrf.mxu0
      %v957 = vadd.f32 0.0, %v956
      %v958 = vpop.f32.mrf.mxu0
      %v959 = vadd.f32 0.0, %v958
      %960 = vmatmul.bf16.gmra.mxu0 %v857
      %v961 = vpop.f32.mrf.mxu0
      %v962 = vadd.f32 0.0, %v961
      %v963 = vpop.f32.mrf.mxu0
      %v964 = vadd.f32 0.0, %v963
      %965 = vmatmul.bf16.gmra.mxu0 %v859
      %v966 = vpop.f32.mrf.mxu0
      %v967 = vadd.f32 0.0, %v966
      %v968 = vpop.f32.mrf.mxu0
      %v969 = vadd.f32 0.0, %v968
      %970 = vmatmul.bf16.gmra.mxu0 %v861
      %v971 = vpop.f32.mrf.mxu0
      %v972 = vadd.f32 0.0, %v971
      %v973 = vpop.f32.mrf.mxu0
      %v974 = vadd.f32 0.0, %v973
      %975 = vdwg.mxu0
      %976 = vmatpush.bf16.msra.mxu0 0
      %977 = vmatpush.bf16.msra.mxu0 0
      %978 = vmatpush.bf16.msra.mxu0 0
      %979 = vmatpush.bf16.msra.mxu0 0
      %980 = vmatpush.bf16.msra.mxu0 0
      %981 = vmatpush.bf16.msra.mxu0 0
      %982 = vmatpush.bf16.msra.mxu0 0
      %983 = vmatpush.bf16.msra.mxu0 %v925
      %984 = vmatmul.bf16.gmra.mxu0 %v936
      %v985 = vpop.f32.mrf.mxu0
      %v986 = vadd.f32 %v957, %v985
      %v987 = vpop.f32.mrf.mxu0
      %v988 = vadd.f32 %v959, %v987
      %989 = vmatmul.bf16.gmra.mxu0 %v939
      %v990 = vpop.f32.mrf.mxu0
      %v991 = vadd.f32 %v962, %v990
      %v992 = vpop.f32.mrf.mxu0
      %v993 = vadd.f32 %v964, %v992
      %994 = vmatmul.bf16.gmra.mxu0 %v942
      %v995 = vpop.f32.mrf.mxu0
      %v996 = vadd.f32 %v967, %v995
      %v997 = vpop.f32.mrf.mxu0
      %v998 = vadd.f32 %v969, %v997
      %999 = vmatmul.bf16.gmra.mxu0 %v945
      %v1000 = vpop.f32.mrf.mxu0
      %v1001 = vadd.f32 %v972, %v1000
      %v1002 = vpop.f32.mrf.mxu0
      %v1003 = vadd.f32 %v974, %v1002
      %1004 = vdwg.mxu0
      %v1005 = vld [vmem:[%s5] sm:$0x1]
      %v1007 = vperm.slane %v1005, 0
      %v1009 = vmul.f32 %v986, %v1007
      %v1010 = vmul.f32 %v988, %v1007
      %v1011 = vmul.f32 %v991, %v1007
      %v1012 = vmul.f32 %v993, %v1007
      %v1013 = vmul.f32 %v996, %v1007
      %v1014 = vmul.f32 %v998, %v1007
      %v1015 = vmul.f32 %v1001, %v1007
      %v1016 = vmul.f32 %v1003, %v1007
      %v1017 = vld [vmem:[%s6] sm:$0x1]
      %v1019 = vperm.slane %v1017, 0
      %v1021 = vadd.f32 %v1009, %v1019
      %v1022 = vadd.f32 %v1010, %v1019
      %v1023 = vadd.f32 %v1011, %v1019
      %v1024 = vadd.f32 %v1012, %v1019
      %v1025 = vadd.f32 %v1013, %v1019
      %v1026 = vadd.f32 %v1014, %v1019
      %v1027 = vadd.f32 %v1015, %v1019
      %v1028 = vadd.f32 %v1016, %v1019
      %v1029 = vmax.f32 %v1021, 0.0
      %v1030 = vmax.f32 %v1022, 0.0
      %v1031 = vmax.f32 %v1023, 0.0
      %v1032 = vmax.f32 %v1024, 0.0
      %v1033 = vmax.f32 %v1025, 0.0
      %v1034 = vmax.f32 %v1026, 0.0
      %v1035 = vmax.f32 %v1027, 0.0
      %v1036 = vmax.f32 %v1028, 0.0
      %v1037 = vpack.c.bf16 %v1030, %v1029
      %v1038 = vpack.c.bf16 %v1032, %v1031
      %v1039 = vpack.c.bf16 %v1034, %v1033
      %v1040 = vpack.c.bf16 %v1036, %v1035
      %v1041 = vld [vmem:[%s7] sm:$0xf]
      %v1042 = vld [vmem:[%s7 + $0x4] sm:$0xf]
      %v1045 = vunpack.c.l.b16 %v1041
      %v1046 = vunpack.c.l.b16 %v1042
      %v1047 = vpack.c.b16 %v1046, %v1045
      %v1050 = vsel %vm479, %v1037, 0
      %v1053 = vsel %vm479, %v1038, 0
      %v1056 = vsel %vm479, %v1039, 0
      %v1059 = vsel %vm479, %v1040, 0
      %1061 = vmatpush.bf16.msra.mxu0 0
      %1062 = vmatpush.bf16.msra.mxu0 0
      %1063 = vmatpush.bf16.msra.mxu0 0
      %1064 = vmatpush.bf16.msra.mxu0 0
      %1065 = vmatpush.bf16.msra.mxu0 0
      %1066 = vmatpush.bf16.msra.mxu0 0
      %1067 = vmatpush.bf16.msra.mxu0 0
      %1068 = vmatpush.bf16.msra.mxu0 %v1047
      %1069 = vmatmul.bf16.gmra.mxu0 %v1050
      %v1070 = vpop.f32.mrf.mxu0
      %v1071 = vadd.f32 0.0, %v1070
      %v1072 = vpop.f32.mrf.mxu0
      %v1073 = vadd.f32 0.0, %v1072
      %1074 = vmatmul.bf16.gmra.mxu0 %v1053
      %v1075 = vpop.f32.mrf.mxu0
      %v1076 = vadd.f32 0.0, %v1075
      %v1077 = vpop.f32.mrf.mxu0
      %v1078 = vadd.f32 0.0, %v1077
      %1079 = vmatmul.bf16.gmra.mxu0 %v1056
      %v1080 = vpop.f32.mrf.mxu0
      %v1081 = vadd.f32 0.0, %v1080
      %v1082 = vpop.f32.mrf.mxu0
      %v1083 = vadd.f32 0.0, %v1082
      %1084 = vmatmul.bf16.gmra.mxu0 %v1059
      %v1085 = vpop.f32.mrf.mxu0
      %v1086 = vadd.f32 0.0, %v1085
      %v1087 = vpop.f32.mrf.mxu0
      %v1088 = vadd.f32 0.0, %v1087
      %1089 = vdwg.mxu0
      %v1090 = vld [vmem:[%s8] sm:$0x1]
      %v1092 = vperm.slane %v1090, 0
      %v1094 = vmul.f32 %v1071, %v1092
      %v1095 = vmul.f32 %v1073, %v1092
      %v1096 = vmul.f32 %v1076, %v1092
      %v1097 = vmul.f32 %v1078, %v1092
      %v1098 = vmul.f32 %v1081, %v1092
      %v1099 = vmul.f32 %v1083, %v1092
      %v1100 = vmul.f32 %v1086, %v1092
      %v1101 = vmul.f32 %v1088, %v1092
      %v1102 = vld [vmem:[%s9] sm:$0x1]
      %v1104 = vperm.slane %v1102, 0
      %v1106 = vadd.f32 %v1094, %v1104
      %v1107 = vadd.f32 %v1095, %v1104
      %v1108 = vadd.f32 %v1096, %v1104
      %v1109 = vadd.f32 %v1097, %v1104
      %v1110 = vadd.f32 %v1098, %v1104
      %v1111 = vadd.f32 %v1099, %v1104
      %v1112 = vadd.f32 %v1100, %v1104
      %v1113 = vadd.f32 %v1101, %v1104
      %v1114 = vmax.f32 %v1106, 0.0
      %v1115 = vmax.f32 %v1107, 0.0
      %v1116 = vmax.f32 %v1108, 0.0
      %v1117 = vmax.f32 %v1109, 0.0
      %v1118 = vmax.f32 %v1110, 0.0
      %v1119 = vmax.f32 %v1111, 0.0
      %v1120 = vmax.f32 %v1112, 0.0
      %v1121 = vmax.f32 %v1113, 0.0
      %v1122 = vadd.f32 %v361, %v1114
      %v1123 = vadd.f32 %v362, %v1115
      %v1124 = vadd.f32 %v363, %v1116
      %v1125 = vadd.f32 %v364, %v1117
      %v1126 = vadd.f32 %v365, %v1118
      %v1127 = vadd.f32 %v366, %v1119
      %v1128 = vadd.f32 %v367, %v1120
      %v1129 = vadd.f32 %v368, %v1121
      %v1130 = vmax.f32 %v1122, 0.0
      %v1131 = vmax.f32 %v1123, 0.0
      %v1132 = vmax.f32 %v1124, 0.0
      %v1133 = vmax.f32 %v1125, 0.0
      %v1134 = vmax.f32 %v1126, 0.0
      %v1135 = vmax.f32 %v1127, 0.0
      %v1136 = vmax.f32 %v1128, 0.0
      %v1137 = vmax.f32 %v1129, 0.0
      %1138 = vst.msk [vmem:[%s359] sm:$0xff] %vm405, %v1130
      %1139 = vst.msk [vmem:[%s359 + $0x8] sm:$0xff] %vm405, %v1131
      %1140 = vst.msk [vmem:[%s359 + $0x10] sm:$0xff] %vm405, %v1132
      %1141 = vst.msk [vmem:[%s359 + $0x18] sm:$0xff] %vm405, %v1133
      %1142 = vst.msk [vmem:[%s359 + $0x20] sm:$0xff] %vm405, %v1134
      %1143 = vst.msk [vmem:[%s359 + $0x28] sm:$0xff] %vm405, %v1135
      %1144 = vst.msk [vmem:[%s359 + $0x30] sm:$0xff] %vm405, %v1136
      %1145 = vst.msk [vmem:[%s359 + $0x38] sm:$0xff] %vm405, %v1137
      %p1146 = scmp.lt.s32.totalorder %s21, 1
      %s1147 = scalar_select %p1146, %s21, 1
      %s1148 = smul.addr %s1147, 8
      %s1149 = smul.addr %s1148, 8
      %s1150 = scalar_lea.vmem %s10, %s1149
      // Predicated region
      $region61: #{small_encoder_forward.11} parent=59 // pred_check
        %p1151 = pneg %p254
      $region62: #{small_encoder_forward.11} parent=59 // pred_check_branch
        %1153 = sbr.rel (%p1151) target = $region64
      $region63: #{small_encoder_forward.11} parent=59 // pred_region
        _
      $region64: #{small_encoder_forward.11} parent=59 // pred_fallthru
        _
    $region60: #{small_encoder_forward.11} parent=5 // pred_fallthru
      _
    %p1154 = scmp.le.s32.totalorder 2, %s16
    // Predicated region
    $region65: #{small_encoder_forward.11} parent=5 // pred_check
      %p1155 = pneg %p1154
    $region66: #{small_encoder_forward.11} parent=5 // pred_check_branch
      %1157 = sbr.rel (%p1155) target = $region68
    $region67: #{small_encoder_forward.11} parent=5 // pred_region
      %s1158 = ssub.s32 %s16, 2
      // Predicated region
      $region69: #{small_encoder_forward.11} parent=67 // pred_check
        %p1159 = pneg %p260
      $region70: #{small_encoder_forward.11} parent=67 // pred_check_branch
        %1161 = sbr.rel (%p1159) target = $region72
      $region71: #{small_encoder_forward.11} parent=67 // pred_region
        %p1162 = scmp.lt.s32.totalorder %s22, 1
        %s1163 = scalar_select %p1162, %s22, 1
        %s1164 = smul.addr %s1163, 8
        %s1165 = smul.addr %s1164, 8
        %s1166 = scalar_lea.vmem %s10, %s1165
      $region72: #{small_encoder_forward.11} parent=67 // pred_fallthru
        _
    $region68: #{small_encoder_forward.11} parent=5 // pred_fallthru
      _
  $region6: #{small_encoder_forward.11} parent=0 // loop_footer
    %s20 = sadd.s32 1, %s16
  $region7: #{small_encoder_forward.11} parent=0 // loop_footer_branch
    %15 = sbr.rel target = $region3
  $region8: #{small_encoder_forward.11} parent=0 // loop_exit
    _

// kernel: small_encoder_forward.12
$region0: #{small_encoder_forward.12}
  #allocation0 [shape = 'u32[]', space=smem, size = 0x4, offset = 0x4, fixed_abs, tag = 'smem constant byte address 0x4 - core index']
  #allocation1 [shape = 'u32[72,128]{1,0:T(1,128)}', space=vmem, size = 0x9000, scoped, tag = 'internal scratch']
  #allocation2 [shape = 'f32[5,5,96]{2,1,0:T(8,128)}', space=vmem, size = 0x5000, scoped, tag = 'scratch operand']
  %s0 = inlined_call_operand.vmem [shape: f32[2,4,4,256], index: 0, kind: input, shape index: {}]
  %s1 = inlined_call_operand.vmem [shape: bf16[256,96], index: 1, kind: input, shape index: {}]
  %s2 = inlined_call_operand.vmem [shape: f32[1,96], index: 2, kind: input, shape index: {}]
  %s3 = inlined_call_operand.vmem [shape: f32[1,96], index: 3, kind: input, shape index: {}]
  %s4 = inlined_call_operand.vmem [shape: bf16[384,24], index: 4, kind: input, shape index: {}]
  %s5 = inlined_call_operand.vmem [shape: f32[1,24], index: 5, kind: input, shape index: {}]
  %s6 = inlined_call_operand.vmem [shape: f32[1,24], index: 6, kind: input, shape index: {}]
  %s7 = inlined_call_operand.vmem [shape: bf16[24,96], index: 7, kind: input, shape index: {}]
  %s8 = inlined_call_operand.vmem [shape: f32[1,96], index: 8, kind: input, shape index: {}]
  %s9 = inlined_call_operand.vmem [shape: f32[1,96], index: 9, kind: input, shape index: {}]
  %s10 = inlined_call_operand.vmem [shape: bf16[256,96], index: 10, kind: input, shape index: {}]
  %s11 = inlined_call_operand.vmem [shape: f32[1,96], index: 11, kind: input, shape index: {}]
  %s12 = inlined_call_operand.vmem [shape: f32[1,96], index: 12, kind: input, shape index: {}]
  %s13 = inlined_call_operand.vmem [shape: f32[2,4,4,96], index: 13, kind: output, shape index: {}]
  %s14 = sld [smem:[#allocation0]]
  $region85: #{small_encoder_forward.12} parent=0
    _
  %s16 = ssub.s32 1, %s14
  %s17 = scalar_select 0, %s16, %s14
  loop: start=0, step=1, limit=4
  $region2: #{small_encoder_forward.12} parent=0 // loop_pre_header
    _
  $region3: #{small_encoder_forward.12} parent=0 // loop_header
    %s19 = sphi 0, %s23
    %p20 = scmp.ge.s32.totalorder %s19, 4
    %s29 = sphi 0, %s31
    %s32 = sphi 0, %s29
    %s33 = sphi 0, %s32
    %s49 = sphi 0, %s33
    %s53 = sphi 0, %s53
    %s55 = sphi 0, %s53
    %s56 = sphi 0, %s55
    %s70 = sphi 0, %s56
    %s74 = sphi 0, %s74
    %s76 = sphi 0, %s74
    %s77 = sphi 0, %s76
    %s91 = sphi 0, %s77
    %s95 = sphi 0, %s95
    %s97 = sphi 0, %s95
    %s98 = sphi 0, %s97
    %s112 = sphi 0, %s98
    %s116 = sphi 0, %s116
    %s118 = sphi 0, %s116
    %s119 = sphi 0, %s118
    %s133 = sphi 0, %s119
    %s137 = sphi 0, %s137
    %s139 = sphi 0, %s137
    %s140 = sphi 0, %s139
    %s154 = sphi 0, %s140
    %s158 = sphi 0, %s158
    %s160 = sphi 0, %s158
    %s161 = sphi 0, %s160
    %s175 = sphi 0, %s161
    %s179 = sphi 0, %s179
    %s181 = sphi 0, %s179
    %s182 = sphi 0, %s181
    %s196 = sphi 0, %s182
    %s200 = sphi 0, %s200
    %s202 = sphi 0, %s200
    %s203 = sphi 0, %s202
    %s217 = sphi 0, %s203
    %s221 = sphi 0, %s221
    %s223 = sphi 0, %s221
    %s224 = sphi 0, %s223
    %s238 = sphi 0, %s224
    %s242 = sphi 0, %s242
    %s244 = sphi 0, %s242
    %s245 = sphi 0, %s244
    %s259 = sphi 0, %s245
    %s263 = sphi 0, %s263
    %s265 = sphi 0, %s263
    %s266 = sphi 0, %s265
    %s280 = sphi 0, %s266
    %s284 = sphi 0, %s284
    %s286 = sphi 0, %s284
    %s287 = sphi 0, %s286
    %s301 = sphi 0, %s287
    %s307 = sphi 0, %s309
    %s310 = sphi 0, %s307
    %s311 = sphi 0, %s310
    %s327 = sphi 0, %s311
  $region4: #{small_encoder_forward.12} parent=0 // loop_header_branch
    %22 = sbr.rel (%p20) target = $region8
  $region5: #{small_encoder_forward.12} parent=0 // loop_body
    %s24 = ssub.s32 %s19, 1
    %s25 = ssub.s32 %s19, 2
    %s26 = sadd.s32 %s19, 1
    %s27 = ssub.s32 %s19, %s26
    %p28 = scmp.eq.s32.totalorder %s27, 0
    %s30 = sadd.s32 %s29, 1
    %s31 = scalar_select %p28, %s29, %s30
    %p34 = pneg %p28
    %p35 = scmp.eq.s32.totalorder %s19, 1
    %p36 = por %p34, %p35
    %p37 = scmp.ne.s32.totalorder %s29, %s32
    %p38 = scmp.eq.s32.totalorder %s19, 0
    %p39 = por %p37, %p38
    %p40 = scmp.ne.s32.totalorder %s29, %s32
    %p41 = scmp.eq.s32.totalorder %s24, 1
    %p42 = por %p40, %p41
    %p43 = scmp.ne.s32.totalorder %s32, %s33
    %p44 = scmp.eq.s32.totalorder %s24, 0
    %p45 = por %p43, %p44
    %p46 = scmp.ne.s32.totalorder %s32, %s33
    %p47 = scmp.eq.s32.totalorder %s25, 1
    %p48 = por %p46, %p47
    %p50 = scmp.ne.s32.totalorder %s33, %s49
    %p51 = scmp.eq.s32.totalorder %s25, 0
    %p52 = por %p50, %p51
    %s54 = sadd.s32 %s53, 1
    %p57 = scmp.eq.s32.totalorder %s19, 1
    %p58 = scmp.ne.s32.totalorder %s53, %s55
    %p59 = scmp.eq.s32.totalorder %s19, 0
    %p60 = por %p58, %p59
    %p61 = scmp.ne.s32.totalorder %s53, %s55
    %p62 = scmp.eq.s32.totalorder %s24, 1
    %p63 = por %p61, %p62
    %p64 = scmp.ne.s32.totalorder %s55, %s56
    %p65 = scmp.eq.s32.totalorder %s24, 0
    %p66 = por %p64, %p65
    %p67 = scmp.ne.s32.totalorder %s55, %s56
    %p68 = scmp.eq.s32.totalorder %s25, 1
    %p69 = por %p67, %p68
    %p71 = scmp.ne.s32.totalorder %s56, %s70
    %p72 = scmp.eq.s32.totalorder %s25, 0
    %p73 = por %p71, %p72
    %s75 = sadd.s32 %s74, 1
    %p78 = scmp.eq.s32.totalorder %s19, 1
    %p79 = scmp.ne.s32.totalorder %s74, %s76
    %p80 = scmp.eq.s32.totalorder %s19, 0
    %p81 = por %p79, %p80
    %p82 = scmp.ne.s32.totalorder %s74, %s76
    %p83 = scmp.eq.s32.totalorder %s24, 1
    %p84 = por %p82, %p83
    %p85 = scmp.ne.s32.totalorder %s76, %s77
    %p86 = scmp.eq.s32.totalorder %s24, 0
    %p87 = por %p85, %p86
    %p88 = scmp.ne.s32.totalorder %s76, %s77
    %p89 = scmp.eq.s32.totalorder %s25, 1
    %p90 = por %p88, %p89
    %p92 = scmp.ne.s32.totalorder %s77, %s91
    %p93 = scmp.eq.s32.totalorder %s25, 0
    %p94 = por %p92, %p93
    %s96 = sadd.s32 %s95, 1
    %p99 = scmp.eq.s32.totalorder %s19, 1
    %p100 = scmp.ne.s32.totalorder %s95, %s97
    %p101 = scmp.eq.s32.totalorder %s19, 0
    %p102 = por %p100, %p101
    %p103 = scmp.ne.s32.totalorder %s95, %s97
    %p104 = scmp.eq.s32.totalorder %s24, 1
    %p105 = por %p103, %p104
    %p106 = scmp.ne.s32.totalorder %s97, %s98
    %p107 = scmp.eq.s32.totalorder %s24, 0
    %p108 = por %p106, %p107
    %p109 = scmp.ne.s32.totalorder %s97, %s98
    %p110 = scmp.eq.s32.totalorder %s25, 1
    %p111 = por %p109, %p110
    %p113 = scmp.ne.s32.totalorder %s98, %s112
    %p114 = scmp.eq.s32.totalorder %s25, 0
    %p115 = por %p113, %p114
    %s117 = sadd.s32 %s116, 1
    %p120 = scmp.eq.s32.totalorder %s19, 1
    %p121 = scmp.ne.s32.totalorder %s116, %s118
    %p122 = scmp.eq.s32.totalorder %s19, 0
    %p123 = por %p121, %p122
    %p124 = scmp.ne.s32.totalorder %s116, %s118
    %p125 = scmp.eq.s32.totalorder %s24, 1
    %p126 = por %p124, %p125
    %p127 = scmp.ne.s32.totalorder %s118, %s119
    %p128 = scmp.eq.s32.totalorder %s24, 0
    %p129 = por %p127, %p128
    %p130 = scmp.ne.s32.totalorder %s118, %s119
    %p131 = scmp.eq.s32.totalorder %s25, 1
    %p132 = por %p130, %p131
    %p134 = scmp.ne.s32.totalorder %s119, %s133
    %p135 = scmp.eq.s32.totalorder %s25, 0
    %p136 = por %p134, %p135
    %s138 = sadd.s32 %s137, 1
    %p141 = scmp.eq.s32.totalorder %s19, 1
    %p142 = scmp.ne.s32.totalorder %s137, %s139
    %p143 = scmp.eq.s32.totalorder %s19, 0
    %p144 = por %p142, %p143
    %p145 = scmp.ne.s32.totalorder %s137, %s139
    %p146 = scmp.eq.s32.totalorder %s24, 1
    %p147 = por %p145, %p146
    %p148 = scmp.ne.s32.totalorder %s139, %s140
    %p149 = scmp.eq.s32.totalorder %s24, 0
    %p150 = por %p148, %p149
    %p151 = scmp.ne.s32.totalorder %s139, %s140
    %p152 = scmp.eq.s32.totalorder %s25, 1
    %p153 = por %p151, %p152
    %p155 = scmp.ne.s32.totalorder %s140, %s154
    %p156 = scmp.eq.s32.totalorder %s25, 0
    %p157 = por %p155, %p156
    %s159 = sadd.s32 %s158, 1
    %p162 = scmp.eq.s32.totalorder %s19, 1
    %p163 = scmp.ne.s32.totalorder %s158, %s160
    %p164 = scmp.eq.s32.totalorder %s19, 0
    %p165 = por %p163, %p164
    %p166 = scmp.ne.s32.totalorder %s158, %s160
    %p167 = scmp.eq.s32.totalorder %s24, 1
    %p168 = por %p166, %p167
    %p169 = scmp.ne.s32.totalorder %s160, %s161
    %p170 = scmp.eq.s32.totalorder %s24, 0
    %p171 = por %p169, %p170
    %p172 = scmp.ne.s32.totalorder %s160, %s161
    %p173 = scmp.eq.s32.totalorder %s25, 1
    %p174 = por %p172, %p173
    %p176 = scmp.ne.s32.totalorder %s161, %s175
    %p177 = scmp.eq.s32.totalorder %s25, 0
    %p178 = por %p176, %p177
    %s180 = sadd.s32 %s179, 1
    %p183 = scmp.eq.s32.totalorder %s19, 1
    %p184 = scmp.ne.s32.totalorder %s179, %s181
    %p185 = scmp.eq.s32.totalorder %s19, 0
    %p186 = por %p184, %p185
    %p187 = scmp.ne.s32.totalorder %s179, %s181
    %p188 = scmp.eq.s32.totalorder %s24, 1
    %p189 = por %p187, %p188
    %p190 = scmp.ne.s32.totalorder %s181, %s182
    %p191 = scmp.eq.s32.totalorder %s24, 0
    %p192 = por %p190, %p191
    %p193 = scmp.ne.s32.totalorder %s181, %s182
    %p194 = scmp.eq.s32.totalorder %s25, 1
    %p195 = por %p193, %p194
    %p197 = scmp.ne.s32.totalorder %s182, %s196
    %p198 = scmp.eq.s32.totalorder %s25, 0
    %p199 = por %p197, %p198
    %s201 = sadd.s32 %s200, 1
    %p204 = scmp.eq.s32.totalorder %s19, 1
    %p205 = scmp.ne.s32.totalorder %s200, %s202
    %p206 = scmp.eq.s32.totalorder %s19, 0
    %p207 = por %p205, %p206
    %p208 = scmp.ne.s32.totalorder %s200, %s202
    %p209 = scmp.eq.s32.totalorder %s24, 1
    %p210 = por %p208, %p209
    %p211 = scmp.ne.s32.totalorder %s202, %s203
    %p212 = scmp.eq.s32.totalorder %s24, 0
    %p213 = por %p211, %p212
    %p214 = scmp.ne.s32.totalorder %s202, %s203
    %p215 = scmp.eq.s32.totalorder %s25, 1
    %p216 = por %p214, %p215
    %p218 = scmp.ne.s32.totalorder %s203, %s217
    %p219 = scmp.eq.s32.totalorder %s25, 0
    %p220 = por %p218, %p219
    %s222 = sadd.s32 %s221, 1
    %p225 = scmp.eq.s32.totalorder %s19, 1
    %p226 = scmp.ne.s32.totalorder %s221, %s223
    %p227 = scmp.eq.s32.totalorder %s19, 0
    %p228 = por %p226, %p227
    %p229 = scmp.ne.s32.totalorder %s221, %s223
    %p230 = scmp.eq.s32.totalorder %s24, 1
    %p231 = por %p229, %p230
    %p232 = scmp.ne.s32.totalorder %s223, %s224
    %p233 = scmp.eq.s32.totalorder %s24, 0
    %p234 = por %p232, %p233
    %p235 = scmp.ne.s32.totalorder %s223, %s224
    %p236 = scmp.eq.s32.totalorder %s25, 1
    %p237 = por %p235, %p236
    %p239 = scmp.ne.s32.totalorder %s224, %s238
    %p240 = scmp.eq.s32.totalorder %s25, 0
    %p241 = por %p239, %p240
    %s243 = sadd.s32 %s242, 1
    %p246 = scmp.eq.s32.totalorder %s19, 1
    %p247 = scmp.ne.s32.totalorder %s242, %s244
    %p248 = scmp.eq.s32.totalorder %s19, 0
    %p249 = por %p247, %p248
    %p250 = scmp.ne.s32.totalorder %s242, %s244
    %p251 = scmp.eq.s32.totalorder %s24, 1
    %p252 = por %p250, %p251
    %p253 = scmp.ne.s32.totalorder %s244, %s245
    %p254 = scmp.eq.s32.totalorder %s24, 0
    %p255 = por %p253, %p254
    %p256 = scmp.ne.s32.totalorder %s244, %s245
    %p257 = scmp.eq.s32.totalorder %s25, 1
    %p258 = por %p256, %p257
    %p260 = scmp.ne.s32.totalorder %s245, %s259
    %p261 = scmp.eq.s32.totalorder %s25, 0
    %p262 = por %p260, %p261
    %s264 = sadd.s32 %s263, 1
    %p267 = scmp.eq.s32.totalorder %s19, 1
    %p268 = scmp.ne.s32.totalorder %s263, %s265
    %p269 = scmp.eq.s32.totalorder %s19, 0
    %p270 = por %p268, %p269
    %p271 = scmp.ne.s32.totalorder %s263, %s265
    %p272 = scmp.eq.s32.totalorder %s24, 1
    %p273 = por %p271, %p272
    %p274 = scmp.ne.s32.totalorder %s265, %s266
    %p275 = scmp.eq.s32.totalorder %s24, 0
    %p276 = por %p274, %p275
    %p277 = scmp.ne.s32.totalorder %s265, %s266
    %p278 = scmp.eq.s32.totalorder %s25, 1
    %p279 = por %p277, %p278
    %p281 = scmp.ne.s32.totalorder %s266, %s280
    %p282 = scmp.eq.s32.totalorder %s25, 0
    %p283 = por %p281, %p282
    %s285 = sadd.s32 %s284, 1
    %p288 = scmp.eq.s32.totalorder %s19, 1
    %p289 = scmp.ne.s32.totalorder %s284, %s286
    %p290 = scmp.eq.s32.totalorder %s19, 0
    %p291 = por %p289, %p290
    %p292 = scmp.ne.s32.totalorder %s284, %s286
    %p293 = scmp.eq.s32.totalorder %s24, 1
    %p294 = por %p292, %p293
    %p295 = scmp.ne.s32.totalorder %s286, %s287
    %p296 = scmp.eq.s32.totalorder %s24, 0
    %p297 = por %p295, %p296
    %p298 = scmp.ne.s32.totalorder %s286, %s287
    %p299 = scmp.eq.s32.totalorder %s25, 1
    %p300 = por %p298, %p299
    %p302 = scmp.ne.s32.totalorder %s287, %s301
    %p303 = scmp.eq.s32.totalorder %s25, 0
    %p304 = por %p302, %p303
    %s305 = ssub.s32 %s19, %s26
    %p306 = scmp.eq.s32.totalorder %s305, 0
    %s308 = sadd.s32 %s307, 1
    %s309 = scalar_select %p306, %s307, %s308
    %p312 = pneg %p306
    %p313 = scmp.eq.s32.totalorder %s19, 1
    %p314 = por %p312, %p313
    %p315 = scmp.ne.s32.totalorder %s307, %s310
    %p316 = scmp.eq.s32.totalorder %s19, 0
    %p317 = por %p315, %p316
    %p318 = scmp.ne.s32.totalorder %s307, %s310
    %p319 = scmp.eq.s32.totalorder %s24, 1
    %p320 = por %p318, %p319
    %p321 = scmp.ne.s32.totalorder %s310, %s311
    %p322 = scmp.eq.s32.totalorder %s24, 0
    %p323 = por %p321, %p322
    %p324 = scmp.ne.s32.totalorder %s310, %s311
    %p325 = scmp.eq.s32.totalorder %s25, 1
    %p326 = por %p324, %p325
    %p328 = scmp.ne.s32.totalorder %s311, %s327
    %p329 = scmp.eq.s32.totalorder %s25, 0
    %p330 = por %p328, %p329
    %p331 = scmp.le.s32.totalorder 1, %s19
    %p332 = scmp.lt.s32.totalorder %s19, 3
    %p333 = pnand %p331, %p332
    %p334 = pneg %p333
    // Predicated region
    $region9: #{small_encoder_forward.12} parent=5 // pred_check
      _
    $region10: #{small_encoder_forward.12} parent=5 // pred_check_branch
      %336 = sbr.rel (%p333) target = $region12
    $region11: #{small_encoder_forward.12} parent=5 // pred_region
      %s337 = ssub.s32 %s19, 1
      // Predicated region
      $region13: #{small_encoder_forward.12} parent=11 // pred_check
        %p338 = pneg %p66
      $region14: #{small_encoder_forward.12} parent=11 // pred_check_branch
        %340 = sbr.rel (%p338) target = $region16
      $region15: #{small_encoder_forward.12} parent=11 // pred_region
        _
      $region16: #{small_encoder_forward.12} parent=11 // pred_fallthru
        _
      // Predicated region
      $region17: #{small_encoder_forward.12} parent=11 // pred_check
        %p341 = pneg %p87
      $region18: #{small_encoder_forward.12} parent=11 // pred_check_branch
        %343 = sbr.rel (%p341) target = $region20
      $region19: #{small_encoder_forward.12} parent=11 // pred_region
        _
      $region20: #{small_encoder_forward.12} parent=11 // pred_fallthru
        _
      // Predicated region
      $region21: #{small_encoder_forward.12} parent=11 // pred_check
        %p344 = pneg %p108
      $region22: #{small_encoder_forward.12} parent=11 // pred_check_branch
        %346 = sbr.rel (%p344) target = $region24
      $region23: #{small_encoder_forward.12} parent=11 // pred_region
        _
      $region24: #{small_encoder_forward.12} parent=11 // pred_fallthru
        _
      // Predicated region
      $region25: #{small_encoder_forward.12} parent=11 // pred_check
        %p347 = pneg %p129
      $region26: #{small_encoder_forward.12} parent=11 // pred_check_branch
        %349 = sbr.rel (%p347) target = $region28
      $region27: #{small_encoder_forward.12} parent=11 // pred_region
        _
      $region28: #{small_encoder_forward.12} parent=11 // pred_fallthru
        _
      // Predicated region
      $region29: #{small_encoder_forward.12} parent=11 // pred_check
        %p350 = pneg %p150
      $region30: #{small_encoder_forward.12} parent=11 // pred_check_branch
        %352 = sbr.rel (%p350) target = $region32
      $region31: #{small_encoder_forward.12} parent=11 // pred_region
        _
      $region32: #{small_encoder_forward.12} parent=11 // pred_fallthru
        _
      // Predicated region
      $region33: #{small_encoder_forward.12} parent=11 // pred_check
        %p353 = pneg %p171
      $region34: #{small_encoder_forward.12} parent=11 // pred_check_branch
        %355 = sbr.rel (%p353) target = $region36
      $region35: #{small_encoder_forward.12} parent=11 // pred_region
        _
      $region36: #{small_encoder_forward.12} parent=11 // pred_fallthru
        _
      // Predicated region
      $region37: #{small_encoder_forward.12} parent=11 // pred_check
        %p356 = pneg %p192
      $region38: #{small_encoder_forward.12} parent=11 // pred_check_branch
        %358 = sbr.rel (%p356) target = $region40
      $region39: #{small_encoder_forward.12} parent=11 // pred_region
        _
      $region40: #{small_encoder_forward.12} parent=11 // pred_fallthru
        _
      // Predicated region
      $region41: #{small_encoder_forward.12} parent=11 // pred_check
        %p359 = pneg %p213
      $region42: #{small_encoder_forward.12} parent=11 // pred_check_branch
        %361 = sbr.rel (%p359) target = $region44
      $region43: #{small_encoder_forward.12} parent=11 // pred_region
        _
      $region44: #{small_encoder_forward.12} parent=11 // pred_fallthru
        _
      // Predicated region
      $region45: #{small_encoder_forward.12} parent=11 // pred_check
        %p362 = pneg %p234
      $region46: #{small_encoder_forward.12} parent=11 // pred_check_branch
        %364 = sbr.rel (%p362) target = $region48
      $region47: #{small_encoder_forward.12} parent=11 // pred_region
        _
      $region48: #{small_encoder_forward.12} parent=11 // pred_fallthru
        _
      // Predicated region
      $region49: #{small_encoder_forward.12} parent=11 // pred_check
        %p365 = pneg %p255
      $region50: #{small_encoder_forward.12} parent=11 // pred_check_branch
        %367 = sbr.rel (%p365) target = $region52
      $region51: #{small_encoder_forward.12} parent=11 // pred_region
        _
      $region52: #{small_encoder_forward.12} parent=11 // pred_fallthru
        _
      // Predicated region
      $region53: #{small_encoder_forward.12} parent=11 // pred_check
        %p368 = pneg %p276
      $region54: #{small_encoder_forward.12} parent=11 // pred_check_branch
        %370 = sbr.rel (%p368) target = $region56
      $region55: #{small_encoder_forward.12} parent=11 // pred_region
        _
      $region56: #{small_encoder_forward.12} parent=11 // pred_fallthru
        _
      // Predicated region
      $region57: #{small_encoder_forward.12} parent=11 // pred_check
        %p371 = pneg %p297
      $region58: #{small_encoder_forward.12} parent=11 // pred_check_branch
        %373 = sbr.rel (%p371) target = $region60
      $region59: #{small_encoder_forward.12} parent=11 // pred_region
        _
      $region60: #{small_encoder_forward.12} parent=11 // pred_fallthru
        _
    $region12: #{small_encoder_forward.12} parent=5 // pred_fallthru
      _
    %p374 = scmp.lt.s32.totalorder %s19, 2
    // Predicated region
    $region61: #{small_encoder_forward.12} parent=5 // pred_check
      %p375 = pneg %p374
    $region62: #{small_encoder_forward.12} parent=5 // pred_check_branch
      %377 = sbr.rel (%p375) target = $region64
    $region63: #{small_encoder_forward.12} parent=5 // pred_region
      // Predicated region
      $region65: #{small_encoder_forward.12} parent=63 // pred_check
        %p378 = pneg %p39
      $region66: #{small_encoder_forward.12} parent=63 // pred_check_branch
        %380 = sbr.rel (%p378) target = $region68
      $region67: #{small_encoder_forward.12} parent=63 // pred_region
        %p381 = scmp.lt.s32.totalorder %s19, 1
        %s382 = scalar_select %p381, %s19, 1
        %s383 = smul.addr %s382, 8
        %s384 = smul.addr %s383, 4
        %s385 = scalar_lea.vmem %s0, %s384
      $region68: #{small_encoder_forward.12} parent=63 // pred_fallthru
        _
    $region64: #{small_encoder_forward.12} parent=5 // pred_fallthru
      _
    %p386 = scmp.le.s32.totalorder 1, %s19
    %p387 = scmp.lt.s32.totalorder %s19, 3
    %p388 = pnand %p386, %p387
    %p389 = pneg %p388
    // Predicated region
    $region69: #{small_encoder_forward.12} parent=5 // pred_check
      _
    $region70: #{small_encoder_forward.12} parent=5 // pred_check_branch
      %391 = sbr.rel (%p388) target = $region72
    $region71: #{small_encoder_forward.12} parent=5 // pred_region
      %s392 = ssub.s32 %s19, 1
      %p393 = scmp.lt.s32.totalorder %s24, 1
      %s394 = scalar_select %p393, %s24, 1
      %s395 = smul.addr %s394, 8
      %s396 = smul.addr %s395, 4
      %s397 = scalar_lea.vmem %s0, %s396
      %p398 = pneg %p45
      %p399 = pneg %p42
      %p400 = pneg %p66
      %p401 = pneg %p63
      %p402 = pneg %p87
      %p403 = pneg %p84
      %p404 = pneg %p108
      %p405 = pneg %p105
      %p406 = pneg %p129
      %p407 = pneg %p126
      %p408 = pneg %p150
      %p409 = pneg %p147
      %p410 = pneg %p171
      %p411 = pneg %p168
      %p412 = pneg %p192
      %p413 = pneg %p189
      %p414 = pneg %p213
      %p415 = pneg %p210
      %p416 = pneg %p234
      %p417 = pneg %p231
      %p418 = pneg %p255
      %p419 = pneg %p252
      %p420 = pneg %p276
      %p421 = pneg %p273
      %p422 = pneg %p297
      %p423 = pneg %p294
      %p424 = pneg %p323
      %p425 = pneg %p320
      %p426 = scmp.lt.s32.totalorder %s24, 1
      %s427 = scalar_select %p426, %s24, 1
      %s428 = smul.addr %s427, 4
      %s429 = smul.addr %s428, 4
      %s430 = scalar_lea.vmem %s13, %s429
      %p431 = scmp.lt.s32.totalorder %s24, 1
      %s432 = scalar_select %p431, %s24, 1
      %s433 = smul.addr %s432, 8
      %s434 = smul.addr %s433, 4
      %s435 = scalar_lea.vmem %s0, %s434
      %p436 = scmp.lt.s32.totalorder %s24, 1
      %s437 = scalar_select %p436, %s24, 1
      %s438 = smul.addr %s437, 4
      %s439 = smul.addr %s438, 4
      %s440 = scalar_lea.vmem %s13, %s439
      %v442 = vld [vmem:[%s435] sm:$0xff]
      %v443 = vld [vmem:[%s435 + $0x8] sm:$0xff]
      %v444 = vld [vmem:[%s435 + $0x10] sm:$0xff]
      %v445 = vld [vmem:[%s435 + $0x18] sm:$0xff]
      %450 = vst [vmem:[#allocation1] ss:$2 sm:$0xff] %v442
      %s451 = scalar_lea.vmem [#allocation1], 1
      %452 = vst [vmem:[%s451] ss:$2 sm:$0xff] %v443
      %s453 = scalar_lea.vmem [#allocation1], 16
      %454 = vst [vmem:[%s453] ss:$2 sm:$0xff] %v444
      %s455 = scalar_lea.vmem [#allocation1], 17
      %456 = vst [vmem:[%s455] ss:$2 sm:$0xff] %v445
      %v457 = vld.sshfl [vmem:[#allocation1] sm:$0xff pattern:$0x75316420]
      %v458 = vld.sshfl [vmem:[#allocation1 + $0x8] sm:$0xff pattern:$0x75316420]
      %v459 = vld.sshfl [vmem:[#allocation1 + $0x10] sm:$0xff pattern:$0x75316420]
      %v460 = vld.sshfl [vmem:[#allocation1 + $0x18] sm:$0xff pattern:$0x75316420]
      %v465 = vpack.c.bf16 %v459, %v457
      %v466 = vpack.c.bf16 %v460, %v458
      %v467 = vld [vmem:[%s1] sm:$0xf]
      %v468 = vld [vmem:[%s1 + $0x4] sm:$0xf]
      %v469 = vld [vmem:[%s1 + $0x8] sm:$0xf]
      %v470 = vld [vmem:[%s1 + $0xc] sm:$0xf]
      %v471 = vld [vmem:[%s1 + $0x10] sm:$0xf]
      %v472 = vld [vmem:[%s1 + $0x14] sm:$0xf]
      %v473 = vld [vmem:[%s1 + $0x18] sm:$0xf]
      %v474 = vld [vmem:[%s1 + $0x1c] sm:$0xf]
      %v475 = vld [vmem:[%s1 + $0x20] sm:$0xf]
      %v476 = vld [vmem:[%s1 + $0x24] sm:$0xf]
      %v477 = vld [vmem:[%s1 + $0x28] sm:$0xf]
      %v478 = vld [vmem:[%s1 + $0x2c] sm:$0xf]
      %v479 = vld [vmem:[%s1 + $0x30] sm:$0xf]
      %v480 = vld [vmem:[%s1 + $0x34] sm:$0xf]
      %v481 = vld [vmem:[%s1 + $0x38] sm:$0xf]
      %v482 = vld [vmem:[%s1 + $0x3c] sm:$0xf]
      %v483 = vld [vmem:[%s1 + $0x40] sm:$0xf]
      %v484 = vld [vmem:[%s1 + $0x44] sm:$0xf]
      %v485 = vld [vmem:[%s1 + $0x48] sm:$0xf]
      %v486 = vld [vmem:[%s1 + $0x4c] sm:$0xf]
      %v487 = vld [vmem:[%s1 + $0x50] sm:$0xf]
      %v488 = vld [vmem:[%s1 + $0x54] sm:$0xf]
      %v489 = vld [vmem:[%s1 + $0x58] sm:$0xf]
      %v490 = vld [vmem:[%s1 + $0x5c] sm:$0xf]
      %v491 = vld [vmem:[%s1 + $0x60] sm:$0xf]
      %v492 = vld [vmem:[%s1 + $0x64] sm:$0xf]
      %v493 = vld [vmem:[%s1 + $0x68] sm:$0xf]
      %v494 = vld [vmem:[%s1 + $0x6c] sm:$0xf]
      %v495 = vld [vmem:[%s1 + $0x70] sm:$0xf]
      %v496 = vld [vmem:[%s1 + $0x74] sm:$0xf]
      %v497 = vld [vmem:[%s1 + $0x78] sm:$0xf]
      %v498 = vld [vmem:[%s1 + $0x7c] sm:$0xf]
      %v531 = vunpack.c.l.b16 %v467
      %v532 = vunpack.c.l.b16 %v468
      %v533 = vunpack.c.l.b16 %v469
      %v534 = vunpack.c.l.b16 %v470
      %v535 = vunpack.c.l.b16 %v471
      %v536 = vunpack.c.l.b16 %v472
      %v537 = vunpack.c.l.b16 %v473
      %v538 = vunpack.c.l.b16 %v474
      %v539 = vunpack.c.l.b16 %v475
      %v540 = vunpack.c.l.b16 %v476
      %v541 = vunpack.c.l.b16 %v477
      %v542 = vunpack.c.l.b16 %v478
      %v543 = vunpack.c.l.b16 %v479
      %v544 = vunpack.c.l.b16 %v480
      %v545 = vunpack.c.l.b16 %v481
      %v546 = vunpack.c.l.b16 %v482
      %v547 = vunpack.c.l.b16 %v483
      %v548 = vunpack.c.l.b16 %v484
      %v549 = vunpack.c.l.b16 %v485
      %v550 = vunpack.c.l.b16 %v486
      %v551 = vunpack.c.l.b16 %v487
      %v552 = vunpack.c.l.b16 %v488
      %v553 = vunpack.c.l.b16 %v489
      %v554 = vunpack.c.l.b16 %v490
      %v555 = vunpack.c.l.b16 %v491
      %v556 = vunpack.c.l.b16 %v492
      %v557 = vunpack.c.l.b16 %v493
      %v558 = vunpack.c.l.b16 %v494
      %v559 = vunpack.c.l.b16 %v495
      %v560 = vunpack.c.l.b16 %v496
      %v561 = vunpack.c.l.b16 %v497
      %v562 = vunpack.c.l.b16 %v498
      %v563 = vpack.c.b16 %v532, %v531
      %v564 = vpack.c.b16 %v534, %v533
      %v565 = vpack.c.b16 %v536, %v535
      %v566 = vpack.c.b16 %v538, %v537
      %v567 = vpack.c.b16 %v540, %v539
      %v568 = vpack.c.b16 %v542, %v541
      %v569 = vpack.c.b16 %v544, %v543
      %v570 = vpack.c.b16 %v546, %v545
      %v571 = vpack.c.b16 %v548, %v547
      %v572 = vpack.c.b16 %v550, %v549
      %v573 = vpack.c.b16 %v552, %v551
      %v574 = vpack.c.b16 %v554, %v553
      %v575 = vpack.c.b16 %v556, %v555
      %v576 = vpack.c.b16 %v558, %v557
      %v577 = vpack.c.b16 %v560, %v559
      %v578 = vpack.c.b16 %v562, %v561
      %595 = vmatpush.bf16.msra.mxu0 %v570
      %596 = vmatpush.bf16.msra.mxu0 %v569
      %597 = vmatpush.bf16.msra.mxu0 %v568
      %598 = vmatpush.bf16.msra.mxu0 %v567
      %599 = vmatpush.bf16.msra.mxu0 %v566
      %600 = vmatpush.bf16.msra.mxu0 %v565
      %601 = vmatpush.bf16.msra.mxu0 %v564
      %602 = vmatpush.bf16.msra.mxu0 %v563
      %603 = vmatmul.bf16.gmra.mxu0 %v465
      %v604 = vpop.f32.mrf.mxu0
      %v605 = vadd.f32 0.0, %v604
      %v606 = vpop.f32.mrf.mxu0
      %v607 = vadd.f32 0.0, %v606
      %608 = vdwg.mxu0
      %609 = vmatpush.bf16.msra.mxu0 %v578
      %610 = vmatpush.bf16.msra.mxu0 %v577
      %611 = vmatpush.bf16.msra.mxu0 %v576
      %612 = vmatpush.bf16.msra.mxu0 %v575
      %613 = vmatpush.bf16.msra.mxu0 %v574
      %614 = vmatpush.bf16.msra.mxu0 %v573
      %615 = vmatpush.bf16.msra.mxu0 %v572
      %616 = vmatpush.bf16.msra.mxu0 %v571
      %617 = vmatmul.bf16.gmra.mxu0 %v466
      %v618 = vpop.f32.mrf.mxu0
      %v619 = vadd.f32 %v605, %v618
      %v620 = vpop.f32.mrf.mxu0
      %v621 = vadd.f32 %v607, %v620
      %622 = vdwg.mxu0
      %v623 = vld [vmem:[%s2] sm:$0x1]
      %v625 = vperm.slane %v623, 0
      %v627 = vmul.f32 %v619, %v625
      %v628 = vmul.f32 %v621, %v625
      %v629 = vld [vmem:[%s3] sm:$0x1]
      %v631 = vperm.slane %v629, 0
      %v633 = vadd.f32 %v627, %v631
      %v634 = vadd.f32 %v628, %v631
      %v635 = vmax.f32 %v633, 0.0
      %v636 = vmax.f32 %v634, 0.0
      %vm637 = vcmask 782336
      %638 = vst.msk [vmem:[#allocation2] sm:$0x1f] %vm637, 0.0
      %vm639 = vcmask 778240
      %640 = vst.msk [vmem:[#allocation2] sm:$0x1] %vm639, 0.0
      %641 = vst.msk [vmem:[#allocation2 + $0x8] sm:$0x1] %vm639, 0.0
      %642 = vst.msk [vmem:[#allocation2 + $0x10] sm:$0x1] %vm639, 0.0
      %643 = vst.msk [vmem:[#allocation2 + $0x18] sm:$0x1] %vm639, 0.0
      %644 = vst.msk [vmem:[#allocation2 + $0x20] sm:$0x1] %vm639, 0.0
      %v647 = vrot.slane %v635, 4
      %v648 = vrot.slane %v636, 4
      %s651 = scalar_lea.vmem [#allocation2], 8
      %vm652 = vcmask 781312
      %653 = vst.msk [vmem:[%s651 + $0x1] sm:$0xf] %vm652, %v635
      %654 = vst.msk [vmem:[%s651 + $0x9] sm:$0xf] %vm652, %v647
      %655 = vst.msk [vmem:[%s651 + $0x11] sm:$0xf] %vm652, %v636
      %656 = vst.msk [vmem:[%s651 + $0x19] sm:$0xf] %vm652, %v648
      %v657 = vld [vmem:[#allocation2] sm:$0x1f]
      %v658 = vld [vmem:[#allocation2 + $0x8] sm:$0x1f]
      %v659 = vld [vmem:[#allocation2 + $0x10] sm:$0x1f]
      %v660 = vld [vmem:[#allocation2 + $0x18] sm:$0x1f]
      %v661 = vld [vmem:[#allocation2 + $0x20] sm:$0x1f]
      %v666 = vrot.slane %v657, 4
      %v667 = vrot.slane %v658, 4
      %v668 = vrot.slane %v659, 4
      %v669 = vrot.slane %v660, 4
      %vm670 = vcmask 1042432
      %vm671 = vcmask 1046532
      %vm672 = vmor %vm670, %vm671
      %v673 = vrot.slane %v657, 5
      %v674 = vrot.slane %v673, 4
      %v675 = vrot.slane %v666, 5
      %v676 = vsel %vm672, %v674, %v675
      %v677 = vrot.slane %v658, 5
      %v678 = vrot.slane %v677, 4
      %v679 = vrot.slane %v667, 5
      %v680 = vsel %vm672, %v678, %v679
      %v681 = vrot.slane %v659, 5
      %v682 = vrot.slane %v681, 4
      %v683 = vrot.slane %v668, 5
      %v684 = vsel %vm672, %v682, %v683
      %v685 = vrot.slane %v660, 5
      %v686 = vrot.slane %v685, 4
      %v687 = vrot.slane %v669, 5
      %v688 = vsel %vm672, %v686, %v687
      %v690 = vrot.slane %v661, 4
      %v691 = vrot.slane %v661, 5
      %v692 = vrot.slane %v691, 4
      %v693 = vrot.slane %v690, 5
      %v694 = vsel %vm672, %v692, %v693
      %695 = vst [vmem:[#allocation1] ss:$2 sm:$0xff] %v657
      %s696 = scalar_lea.vmem [#allocation1], 1
      %697 = vst [vmem:[%s696] ss:$2 sm:$0xff] %v658
      %s698 = scalar_lea.vmem [#allocation1], 16
      %699 = vst [vmem:[%s698] ss:$2 sm:$0xff] %v659
      %s700 = scalar_lea.vmem [#allocation1], 17
      %701 = vst [vmem:[%s700] ss:$2 sm:$0xff] %v660
      %v702 = vld.sshfl [vmem:[#allocation1] sm:$0xff pattern:$0x75316420]
      %v703 = vld.sshfl [vmem:[#allocation1 + $0x10] sm:$0xff pattern:$0x75316420]
      %706 = vst [vmem:[#allocation1] ss:$2 sm:$0xff] %v676
      %s707 = scalar_lea.vmem [#allocation1], 1
      %708 = vst [vmem:[%s707] ss:$2 sm:$0xff] %v680
      %s709 = scalar_lea.vmem [#allocation1], 16
      %710 = vst [vmem:[%s709] ss:$2 sm:$0xff] %v684
      %s711 = scalar_lea.vmem [#allocation1], 17
      %712 = vst [vmem:[%s711] ss:$2 sm:$0xff] %v688
      %v713 = vld.sshfl [vmem:[#allocation1] sm:$0xff pattern:$0x75316420]
      %v714 = vld.sshfl [vmem:[#allocation1 + $0x10] sm:$0xff pattern:$0x75316420]
      %715 = vrot.lane.b32.xlu0 %v713, 96
      %v716 = vpop.permute.xlu0 %715
      %717 = vrot.lane.b32.xlu0 %v714, 96
      %v718 = vpop.permute.xlu0 %717
      %721 = vst [vmem:[#allocation1] ss:$2 sm:$0xff] %v658
      %s722 = scalar_lea.vmem [#allocation1], 1
      %723 = vst [vmem:[%s722] ss:$2 sm:$0xff] %v659
      %s724 = scalar_lea.vmem [#allocation1], 16
      %725 = vst [vmem:[%s724] ss:$2 sm:$0xff] %v660
      %s726 = scalar_lea.vmem [#allocation1], 17
      %727 = vst [vmem:[%s726] ss:$2 sm:$0xff] %v661
      %v728 = vld.sshfl [vmem:[#allocation1] sm:$0xff pattern:$0x75316420]
      %v729 = vld.sshfl [vmem:[#allocation1 + $0x10] sm:$0xff pattern:$0x75316420]
      %730 = vrot.lane.b32.xlu0 %v728, 64
      %v731 = vpop.permute.xlu0 %730
      %732 = vrot.lane.b32.xlu0 %v729, 64
      %v733 = vpop.permute.xlu0 %732
      %736 = vst [vmem:[#allocation1] ss:$2 sm:$0xff] %v680
      %s737 = scalar_lea.vmem [#allocation1], 1
      %738 = vst [vmem:[%s737] ss:$2 sm:$0xff] %v684
      %s739 = scalar_lea.vmem [#allocation1], 16
      %740 = vst [vmem:[%s739] ss:$2 sm:$0xff] %v688
      %s741 = scalar_lea.vmem [#allocation1], 17
      %742 = vst [vmem:[%s741] ss:$2 sm:$0xff] %v694
      %v743 = vld.sshfl [vmem:[#allocation1] sm:$0xff pattern:$0x75316420]
      %v744 = vld.sshfl [vmem:[#allocation1 + $0x10] sm:$0xff pattern:$0x75316420]
      %745 = vrot.lane.b32.xlu0 %v743, 32
      %v746 = vpop.permute.xlu0 %745
      %747 = vrot.lane.b32.xlu0 %v744, 32
      %v748 = vpop.permute.xlu0 %747
      %vm751 = vcmask 785408
      %v752 = vsel %vm751, %v702, %v716
      %v753 = vsel %vm751, %v703, %v718
      %vm754 = vcmask 523264
      %v755 = vsel %vm754, %v716, %v731
      %v756 = vsel %vm754, %v718, %v733
      %vm757 = vcmask 261120
      %v758 = vsel %vm757, %v731, %v746
      %v759 = vsel %vm757, %v733, %v748
      %v760 = vpack.c.bf16 %v753, %v752
      %v761 = vpack.c.bf16 %v756, %v755
      %v762 = vpack.c.bf16 %v759, %v758
      %v763 = vld [vmem:[%s4] sm:$0xf]
      %v764 = vld [vmem:[%s4 + $0x4] sm:$0xf]
      %v765 = vld [vmem:[%s4 + $0x8] sm:$0xf]
      %v766 = vld [vmem:[%s4 + $0xc] sm:$0xf]
      %v767 = vld [vmem:[%s4 + $0x10] sm:$0xf]
      %v768 = vld [vmem:[%s4 + $0x14] sm:$0xf]
      %v769 = vld [vmem:[%s4 + $0x18] sm:$0xf]
      %v770 = vld [vmem:[%s4 + $0x1c] sm:$0xf]
      %v771 = vld [vmem:[%s4 + $0x20] sm:$0xf]
      %v772 = vld [vmem:[%s4 + $0x24] sm:$0xf]
      %v773 = vld [vmem:[%s4 + $0x28] sm:$0xf]
      %v774 = vld [vmem:[%s4 + $0x2c] sm:$0xf]
      %v775 = vld [vmem:[%s4 + $0x30] sm:$0xf]
      %v776 = vld [vmem:[%s4 + $0x34] sm:$0xf]
      %v777 = vld [vmem:[%s4 + $0x38] sm:$0xf]
      %v778 = vld [vmem:[%s4 + $0x3c] sm:$0xf]
      %v779 = vld [vmem:[%s4 + $0x40] sm:$0xf]
      %v780 = vld [vmem:[%s4 + $0x44] sm:$0xf]
      %v781 = vld [vmem:[%s4 + $0x48] sm:$0xf]
      %v782 = vld [vmem:[%s4 + $0x4c] sm:$0xf]
      %v783 = vld [vmem:[%s4 + $0x50] sm:$0xf]
      %v784 = vld [vmem:[%s4 + $0x54] sm:$0xf]
      %v785 = vld [vmem:[%s4 + $0x58] sm:$0xf]
      %v786 = vld [vmem:[%s4 + $0x5c] sm:$0xf]
      %v787 = vld [vmem:[%s4 + $0x60] sm:$0xf]
      %v788 = vld [vmem:[%s4 + $0x64] sm:$0xf]
      %v789 = vld [vmem:[%s4 + $0x68] sm:$0xf]
      %v790 = vld [vmem:[%s4 + $0x6c] sm:$0xf]
      %v791 = vld [vmem:[%s4 + $0x70] sm:$0xf]
      %v792 = vld [vmem:[%s4 + $0x74] sm:$0xf]
      %v793 = vld [vmem:[%s4 + $0x78] sm:$0xf]
      %v794 = vld [vmem:[%s4 + $0x7c] sm:$0xf]
      %v795 = vld [vmem:[%s4 + $0x80] sm:$0xf]
      %v796 = vld [vmem:[%s4 + $0x84] sm:$0xf]
      %v797 = vld [vmem:[%s4 + $0x88] sm:$0xf]
      %v798 = vld [vmem:[%s4 + $0x8c] sm:$0xf]
      %v799 = vld [vmem:[%s4 + $0x90] sm:$0xf]
      %v800 = vld [vmem:[%s4 + $0x94] sm:$0xf]
      %v801 = vld [vmem:[%s4 + $0x98] sm:$0xf]
      %v802 = vld [vmem:[%s4 + $0x9c] sm:$0xf]
      %v803 = vld [vmem:[%s4 + $0xa0] sm:$0xf]
      %v804 = vld [vmem:[%s4 + $0xa4] sm:$0xf]
      %v805 = vld [vmem:[%s4 + $0xa8] sm:$0xf]
      %v806 = vld [vmem:[%s4 + $0xac] sm:$0xf]
      %v807 = vld [vmem:[%s4 + $0xb0] sm:$0xf]
      %v808 = vld [vmem:[%s4 + $0xb4] sm:$0xf]
      %v809 = vld [vmem:[%s4 + $0xb8] sm:$0xf]
      %v810 = vld [vmem:[%s4 + $0xbc] sm:$0xf]
      %v859 = vunpack.c.l.b16 %v763
      %v860 = vunpack.c.l.b16 %v764
      %v861 = vunpack.c.l.b16 %v765
      %v862 = vunpack.c.l.b16 %v766
      %v863 = vunpack.c.l.b16 %v767
      %v864 = vunpack.c.l.b16 %v768
      %v865 = vunpack.c.l.b16 %v769
      %v866 = vunpack.c.l.b16 %v770
      %v867 = vunpack.c.l.b16 %v771
      %v868 = vunpack.c.l.b16 %v772
      %v869 = vunpack.c.l.b16 %v773
      %v870 = vunpack.c.l.b16 %v774
      %v871 = vunpack.c.l.b16 %v775
      %v872 = vunpack.c.l.b16 %v776
      %v873 = vunpack.c.l.b16 %v777
      %v874 = vunpack.c.l.b16 %v778
      %v875 = vunpack.c.l.b16 %v779
      %v876 = vunpack.c.l.b16 %v780
      %v877 = vunpack.c.l.b16 %v781
      %v878 = vunpack.c.l.b16 %v782
      %v879 = vunpack.c.l.b16 %v783
      %v880 = vunpack.c.l.b16 %v784
      %v881 = vunpack.c.l.b16 %v785
      %v882 = vunpack.c.l.b16 %v786
      %v883 = vunpack.c.l.b16 %v787
      %v884 = vunpack.c.l.b16 %v788
      %v885 = vunpack.c.l.b16 %v789
      %v886 = vunpack.c.l.b16 %v790
      %v887 = vunpack.c.l.b16 %v791
      %v888 = vunpack.c.l.b16 %v792
      %v889 = vunpack.c.l.b16 %v793
      %v890 = vunpack.c.l.b16 %v794
      %v891 = vunpack.c.l.b16 %v795
      %v892 = vunpack.c.l.b16 %v796
      %v893 = vunpack.c.l.b16 %v797
      %v894 = vunpack.c.l.b16 %v798
      %v895 = vunpack.c.l.b16 %v799
      %v896 = vunpack.c.l.b16 %v800
      %v897 = vunpack.c.l.b16 %v801
      %v898 = vunpack.c.l.b16 %v802
      %v899 = vunpack.c.l.b16 %v803
      %v900 = vunpack.c.l.b16 %v804
      %v901 = vunpack.c.l.b16 %v805
      %v902 = vunpack.c.l.b16 %v806
      %v903 = vunpack.c.l.b16 %v807
      %v904 = vunpack.c.l.b16 %v808
      %v905 = vunpack.c.l.b16 %v809
      %v906 = vunpack.c.l.b16 %v810
      %v907 = vpack.c.b16 %v860, %v859
      %v908 = vpack.c.b16 %v862, %v861
      %v909 = vpack.c.b16 %v864, %v863
      %v910 = vpack.c.b16 %v866, %v865
      %v911 = vpack.c.b16 %v868, %v867
      %v912 = vpack.c.b16 %v870, %v869
      %v913 = vpack.c.b16 %v872, %v871
      %v914 = vpack.c.b16 %v874, %v873
      %v915 = vpack.c.b16 %v876, %v875
      %v916 = vpack.c.b16 %v878, %v877
      %v917 = vpack.c.b16 %v880, %v879
      %v918 = vpack.c.b16 %v882, %v881
      %v919 = vpack.c.b16 %v884, %v883
      %v920 = vpack.c.b16 %v886, %v885
      %v921 = vpack.c.b16 %v888, %v887
      %v922 = vpack.c.b16 %v890, %v889
      %v923 = vpack.c.b16 %v892, %v891
      %v924 = vpack.c.b16 %v894, %v893
      %v925 = vpack.c.b16 %v896, %v895
      %v926 = vpack.c.b16 %v898, %v897
      %v927 = vpack.c.b16 %v900, %v899
      %v928 = vpack.c.b16 %v902, %v901
      %v929 = vpack.c.b16 %v904, %v903
      %v930 = vpack.c.b16 %v906, %v905
      %955 = vmatpush.bf16.msra.mxu0 %v914
      %956 = vmatpush.bf16.msra.mxu0 %v913
      %957 = vmatpush.bf16.msra.mxu0 %v912
      %958 = vmatpush.bf16.msra.mxu0 %v911
      %959 = vmatpush.bf16.msra.mxu0 %v910
      %960 = vmatpush.bf16.msra.mxu0 %v909
      %961 = vmatpush.bf16.msra.mxu0 %v908
      %962 = vmatpush.bf16.msra.mxu0 %v907
      %963 = vmatmul.bf16.gmra.mxu0 %v760
      %v964 = vpop.f32.mrf.mxu0
      %v965 = vadd.f32 0.0, %v964
      %v966 = vpop.f32.mrf.mxu0
      %v967 = vadd.f32 0.0, %v966
      %968 = vdwg.mxu0
      %969 = vmatpush.bf16.msra.mxu0 %v922
      %970 = vmatpush.bf16.msra.mxu0 %v921
      %971 = vmatpush.bf16.msra.mxu0 %v920
      %972 = vmatpush.bf16.msra.mxu0 %v919
      %973 = vmatpush.bf16.msra.mxu0 %v918
      %974 = vmatpush.bf16.msra.mxu0 %v917
      %975 = vmatpush.bf16.msra.mxu0 %v916
      %976 = vmatpush.bf16.msra.mxu0 %v915
      %977 = vmatmul.bf16.gmra.mxu0 %v761
      %v978 = vpop.f32.mrf.mxu0
      %v979 = vadd.f32 %v965, %v978
      %v980 = vpop.f32.mrf.mxu0
      %v981 = vadd.f32 %v967, %v980
      %982 = vdwg.mxu0
      %983 = vmatpush.bf16.msra.mxu0 %v930
      %984 = vmatpush.bf16.msra.mxu0 %v929
      %985 = vmatpush.bf16.msra.mxu0 %v928
      %986 = vmatpush.bf16.msra.mxu0 %v927
      %987 = vmatpush.bf16.msra.mxu0 %v926
      %988 = vmatpush.bf16.msra.mxu0 %v925
      %989 = vmatpush.bf16.msra.mxu0 %v924
      %990 = vmatpush.bf16.msra.mxu0 %v923
      %991 = vmatmul.bf16.gmra.mxu0 %v762
      %v992 = vpop.f32.mrf.mxu0
      %v993 = vadd.f32 %v979, %v992
      %v994 = vpop.f32.mrf.mxu0
      %v995 = vadd.f32 %v981, %v994
      %996 = vdwg.mxu0
      %v997 = vld [vmem:[%s5] sm:$0x1]
      %v999 = vperm.slane %v997, 0
      %v1001 = vmul.f32 %v993, %v999
      %v1002 = vmul.f32 %v995, %v999
      %v1003 = vld [vmem:[%s6] sm:$0x1]
      %v1005 = vperm.slane %v1003, 0
      %v1007 = vadd.f32 %v1001, %v1005
      %v1008 = vadd.f32 %v1002, %v1005
      %v1009 = vmax.f32 %v1007, 0.0
      %v1010 = vmax.f32 %v1008, 0.0
      %v1011 = vpack.c.bf16 %v1010, %v1009
      %v1012 = vld [vmem:[%s7] sm:$0xf]
      %v1013 = vld [vmem:[%s7 + $0x4] sm:$0xf]
      %v1014 = vld [vmem:[%s7 + $0x8] sm:$0xf]
      %v1018 = vunpack.c.l.b16 %v1012
      %v1019 = vunpack.c.l.b16 %v1013
      %v1020 = vunpack.c.l.b16 %v1014
      %v1021 = vpack.c.b16 %v1019, %v1018
      %v1022 = vpack.c.b16 %v1020, %v1020
      %vm1024 = vcmask 195584
      %v1026 = vsel %vm1024, %v1011, 0
      %vm1028 = vcmask 1043456
      %v1030 = vsel %vm1028, %v1022, 0
      %1032 = vmatpush.bf16.msra.mxu0 0
      %1033 = vmatpush.bf16.msra.mxu0 0
      %1034 = vmatpush.bf16.msra.mxu0 0
      %1035 = vmatpush.bf16.msra.mxu0 0
      %1036 = vmatpush.bf16.msra.mxu0 0
      %1037 = vmatpush.bf16.msra.mxu0 0
      %1038 = vmatpush.bf16.msra.mxu0 %v1030
      %1039 = vmatpush.bf16.msra.mxu0 %v1021
      %1040 = vmatmul.bf16.gmra.mxu0 %v1026
      %v1041 = vpop.f32.mrf.mxu0
      %v1042 = vadd.f32 0.0, %v1041
      %v1043 = vpop.f32.mrf.mxu0
      %v1044 = vadd.f32 0.0, %v1043
      %1045 = vdwg.mxu0
      %v1046 = vld [vmem:[%s8] sm:$0x1]
      %v1048 = vperm.slane %v1046, 0
      %v1050 = vmul.f32 %v1042, %v1048
      %v1051 = vmul.f32 %v1044, %v1048
      %v1052 = vld [vmem:[%s9] sm:$0x1]
      %v1054 = vperm.slane %v1052, 0
      %v1056 = vadd.f32 %v1050, %v1054
      %v1057 = vadd.f32 %v1051, %v1054
      %v1058 = vmax.f32 %v1056, 0.0
      %v1059 = vmax.f32 %v1057, 0.0
      %v1060 = vld [vmem:[%s10] sm:$0xf]
      %v1061 = vld [vmem:[%s10 + $0x4] sm:$0xf]
      %v1062 = vld [vmem:[%s10 + $0x8] sm:$0xf]
      %v1063 = vld [vmem:[%s10 + $0xc] sm:$0xf]
      %v1064 = vld [vmem:[%s10 + $0x10] sm:$0xf]
      %v1065 = vld [vmem:[%s10 + $0x14] sm:$0xf]
      %v1066 = vld [vmem:[%s10 + $0x18] sm:$0xf]
      %v1067 = vld [vmem:[%s10 + $0x1c] sm:$0xf]
      %v1068 = vld [vmem:[%s10 + $0x20] sm:$0xf]
      %v1069 = vld [vmem:[%s10 + $0x24] sm:$0xf]
      %v1070 = vld [vmem:[%s10 + $0x28] sm:$0xf]
      %v1071 = vld [vmem:[%s10 + $0x2c] sm:$0xf]
      %v1072 = vld [vmem:[%s10 + $0x30] sm:$0xf]
      %v1073 = vld [vmem:[%s10 + $0x34] sm:$0xf]
      %v1074 = vld [vmem:[%s10 + $0x38] sm:$0xf]
      %v1075 = vld [vmem:[%s10 + $0x3c] sm:$0xf]
      %v1076 = vld [vmem:[%s10 + $0x40] sm:$0xf]
      %v1077 = vld [vmem:[%s10 + $0x44] sm:$0xf]
      %v1078 = vld [vmem:[%s10 + $0x48] sm:$0xf]
      %v1079 = vld [vmem:[%s10 + $0x4c] sm:$0xf]
      %v1080 = vld [vmem:[%s10 + $0x50] sm:$0xf]
      %v1081 = vld [vmem:[%s10 + $0x54] sm:$0xf]
      %v1082 = vld [vmem:[%s10 + $0x58] sm:$0xf]
      %v1083 = vld [vmem:[%s10 + $0x5c] sm:$0xf]
      %v1084 = vld [vmem:[%s10 + $0x60] sm:$0xf]
      %v1085 = vld [vmem:[%s10 + $0x64] sm:$0xf]
      %v1086 = vld [vmem:[%s10 + $0x68] sm:$0xf]
      %v1087 = vld [vmem:[%s10 + $0x6c] sm:$0xf]
      %v1088 = vld [vmem:[%s10 + $0x70] sm:$0xf]
      %v1089 = vld [vmem:[%s10 + $0x74] sm:$0xf]
      %v1090 = vld [vmem:[%s10 + $0x78] sm:$0xf]
      %v1091 = vld [vmem:[%s10 + $0x7c] sm:$0xf]
      %v1124 = vunpack.c.l.b16 %v1060
      %v1125 = vunpack.c.l.b16 %v1061
      %v1126 = vunpack.c.l.b16 %v1062
      %v1127 = vunpack.c.l.b16 %v1063
      %v1128 = vunpack.c.l.b16 %v1064
      %v1129 = vunpack.c.l.b16 %v1065
      %v1130 = vunpack.c.l.b16 %v1066
      %v1131 = vunpack.c.l.b16 %v1067
      %v1132 = vunpack.c.l.b16 %v1068
      %v1133 = vunpack.c.l.b16 %v1069
      %v1134 = vunpack.c.l.b16 %v1070
      %v1135 = vunpack.c.l.b16 %v1071
      %v1136 = vunpack.c.l.b16 %v1072
      %v1137 = vunpack.c.l.b16 %v1073
      %v1138 = vunpack.c.l.b16 %v1074
      %v1139 = vunpack.c.l.b16 %v1075
      %v1140 = vunpack.c.l.b16 %v1076
      %v1141 = vunpack.c.l.b16 %v1077
      %v1142 = vunpack.c.l.b16 %v1078
      %v1143 = vunpack.c.l.b16 %v1079
      %v1144 = vunpack.c.l.b16 %v1080
      %v1145 = vunpack.c.l.b16 %v1081
      %v1146 = vunpack.c.l.b16 %v1082
      %v1147 = vunpack.c.l.b16 %v1083
      %v1148 = vunpack.c.l.b16 %v1084
      %v1149 = vunpack.c.l.b16 %v1085
      %v1150 = vunpack.c.l.b16 %v1086
      %v1151 = vunpack.c.l.b16 %v1087
      %v1152 = vunpack.c.l.b16 %v1088
      %v1153 = vunpack.c.l.b16 %v1089
      %v1154 = vunpack.c.l.b16 %v1090
      %v1155 = vunpack.c.l.b16 %v1091
      %v1156 = vpack.c.b16 %v1125, %v1124
      %v1157 = vpack.c.b16 %v1127, %v1126
      %v1158 = vpack.c.b16 %v1129, %v1128
      %v1159 = vpack.c.b16 %v1131, %v1130
      %v1160 = vpack.c.b16 %v1133, %v1132
      %v1161 = vpack.c.b16 %v1135, %v1134
      %v1162 = vpack.c.b16 %v1137, %v1136
      %v1163 = vpack.c.b16 %v1139, %v1138
      %v1164 = vpack.c.b16 %v1141, %v1140
      %v1165 = vpack.c.b16 %v1143, %v1142
      %v1166 = vpack.c.b16 %v1145, %v1144
      %v1167 = vpack.c.b16 %v1147, %v1146
      %v1168 = vpack.c.b16 %v1149, %v1148
      %v1169 = vpack.c.b16 %v1151, %v1150
      %v1170 = vpack.c.b16 %v1153, %v1152
      %v1171 = vpack.c.b16 %v1155, %v1154
      %1188 = vmatpush.bf16.msra.mxu0 %v1163
      %1189 = vmatpush.bf16.msra.mxu0 %v1162
      %1190 = vmatpush.bf16.msra.mxu0 %v1161
      %1191 = vmatpush.bf16.msra.mxu0 %v1160
      %1192 = vmatpush.bf16.msra.mxu0 %v1159
      %1193 = vmatpush.bf16.msra.mxu0 %v1158
      %1194 = vmatpush.bf16.msra.mxu0 %v1157
      %1195 = vmatpush.bf16.msra.mxu0 %v1156
      %1196 = vmatmul.bf16.gmra.mxu0 %v465
      %v1197 = vpop.f32.mrf.mxu0
      %v1198 = vadd.f32 0.0, %v1197
      %v1199 = vpop.f32.mrf.mxu0
      %v1200 = vadd.f32 0.0, %v1199
      %1201 = vdwg.mxu0
      %1202 = vmatpush.bf16.msra.mxu0 %v1171
      %1203 = vmatpush.bf16.msra.mxu0 %v1170
      %1204 = vmatpush.bf16.msra.mxu0 %v1169
      %1205 = vmatpush.bf16.msra.mxu0 %v1168
      %1206 = vmatpush.bf16.msra.mxu0 %v1167
      %1207 = vmatpush.bf16.msra.mxu0 %v1166
      %1208 = vmatpush.bf16.msra.mxu0 %v1165
      %1209 = vmatpush.bf16.msra.mxu0 %v1164
      %1210 = vmatmul.bf16.gmra.mxu0 %v466
      %v1211 = vpop.f32.mrf.mxu0
      %v1212 = vadd.f32 %v1198, %v1211
      %v1213 = vpop.f32.mrf.mxu0
      %v1214 = vadd.f32 %v1200, %v1213
      %1215 = vdwg.mxu0
      %v1216 = vld [vmem:[%s11] sm:$0x1]
      %v1218 = vperm.slane %v1216, 0
      %v1220 = vmul.f32 %v1212, %v1218
      %v1221 = vmul.f32 %v1214, %v1218
      %v1222 = vld [vmem:[%s12] sm:$0x1]
      %v1224 = vperm.slane %v1222, 0
      %v1226 = vadd.f32 %v1220, %v1224
      %v1227 = vadd.f32 %v1221, %v1224
      %v1228 = vadd.f32 %v1226, %v1058
      %v1229 = vadd.f32 %v1227, %v1059
      %v1230 = vmax.f32 %v1228, 0.0
      %v1231 = vmax.f32 %v1229, 0.0
      %v1234 = vrot.slane %v1230, 4
      %v1235 = vrot.slane %v1231, 4
      %1238 = vst.msk [vmem:[%s440] sm:$0xf] %vm652, %v1230
      %1239 = vst.msk [vmem:[%s440 + $0x4] sm:$0xf] %vm652, %v1234
      %1240 = vst.msk [vmem:[%s440 + $0x8] sm:$0xf] %vm652, %v1231
      %1241 = vst.msk [vmem:[%s440 + $0xc] sm:$0xf] %vm652, %v1235
      %p1242 = scmp.lt.s32.totalorder %s24, 1
      %s1243 = scalar_select %p1242, %s24, 1
      %s1244 = smul.addr %s1243, 4
      %s1245 = smul.addr %s1244, 4
      %s1246 = scalar_lea.vmem %s13, %s1245
      // Predicated region
      $region73: #{small_encoder_forward.12} parent=71 // pred_check
        %p1247 = pneg %p320
      $region74: #{small_encoder_forward.12} parent=71 // pred_check_branch
        %1249 = sbr.rel (%p1247) target = $region76
      $region75: #{small_encoder_forward.12} parent=71 // pred_region
        _
      $region76: #{small_encoder_forward.12} parent=71 // pred_fallthru
        _
    $region72: #{small_encoder_forward.12} parent=5 // pred_fallthru
      _
    %p1250 = scmp.le.s32.totalorder 2, %s19
    // Predicated region
    $region77: #{small_encoder_forward.12} parent=5 // pred_check
      %p1251 = pneg %p1250
    $region78: #{small_encoder_forward.12} parent=5 // pred_check_branch
      %1253 = sbr.rel (%p1251) target = $region80
    $region79: #{small_encoder_forward.12} parent=5 // pred_region
      %s1254 = ssub.s32 %s19, 2
      // Predicated region
      $region81: #{small_encoder_forward.12} parent=79 // pred_check
        %p1255 = pneg %p326
      $region82: #{small_encoder_forward.12} parent=79 // pred_check_branch
        %1257 = sbr.rel (%p1255) target = $region84
      $region83: #{small_encoder_forward.12} parent=79 // pred_region
        %p1258 = scmp.lt.s32.totalorder %s25, 1
        %s1259 = scalar_select %p1258, %s25, 1
        %s1260 = smul.addr %s1259, 4
        %s1261 = smul.addr %s1260, 4
        %s1262 = scalar_lea.vmem %s13, %s1261
      $region84: #{small_encoder_forward.12} parent=79 // pred_fallthru
        _
    $region80: #{small_encoder_forward.12} parent=5 // pred_fallthru
      _
  $region6: #{small_encoder_forward.12} parent=0 // loop_footer
    %s23 = sadd.s32 1, %s19
  $region7: #{small_encoder_forward.12} parent=0 // loop_footer_branch
    %18 = sbr.rel target = $region3
  $region8: #{small_encoder_forward.12} parent=0 // loop_exit
    _

// kernel: small_encoder_forward.13
$region0: #{small_encoder_forward.13}
  #allocation0 [shape = 'u32[]', space=smem, size = 0x4, offset = 0x4, fixed_abs, tag = 'smem constant byte address 0x4 - core index']
  #allocation1 [shape = 'u32[72,128]{1,0:T(1,128)}', space=vmem, size = 0x9000, scoped, tag = 'internal scratch']
  #allocation2 [shape = 'f32[6,6,24]{2,1,0:T(8,128)}', space=vmem, size = 0x6000, scoped, tag = 'scratch operand']
  %s0 = inlined_call_operand.vmem [shape: f32[2,4,4,96], index: 0, kind: input, shape index: {}]
  %s1 = inlined_call_operand.vmem [shape: bf16[96,24], index: 1, kind: input, shape index: {}]
  %s2 = inlined_call_operand.vmem [shape: f32[1,24], index: 2, kind: input, shape index: {}]
  %s3 = inlined_call_operand.vmem [shape: f32[1,24], index: 3, kind: input, shape index: {}]
  %s4 = inlined_call_operand.vmem [shape: bf16[216,24], index: 4, kind: input, shape index: {}]
  %s5 = inlined_call_operand.vmem [shape: f32[1,24], index: 5, kind: input, shape index: {}]
  %s6 = inlined_call_operand.vmem [shape: f32[1,24], index: 6, kind: input, shape index: {}]
  %s7 = inlined_call_operand.vmem [shape: bf16[24,96], index: 7, kind: input, shape index: {}]
  %s8 = inlined_call_operand.vmem [shape: f32[1,96], index: 8, kind: input, shape index: {}]
  %s9 = inlined_call_operand.vmem [shape: f32[1,96], index: 9, kind: input, shape index: {}]
  %s10 = inlined_call_operand.vmem [shape: bf16[96,128], index: 10, kind: input, shape index: {}]
  %s11 = inlined_call_operand.vmem [shape: f32[1,128], index: 11, kind: input, shape index: {}]
  %s12 = inlined_call_operand.hbm [shape: f32[2,4,4,128], index: 12, kind: output, shape index: {}]
  %s13 = sld [smem:[#allocation0]]
  $region81: #{small_encoder_forward.13} parent=0
    _
  %s15 = ssub.s32 1, %s13
  %s16 = scalar_select 0, %s15, %s13
  $region1: #{small_encoder_forward.13} parent=0
    #allocation3 [shape = 'u8[16384]{0}', space=vmem, size = 0x4000, scoped, tag = 'output window, operand 0']
    #allocation4 [shape = 's32[2]{0}', space=sflag, size = 0x8, scoped, tag = 'scoped memory for small_encoder_forward.13']
    %17 = vsyncpa [#allocation4], 0
    %s18 = scalar_lea.sflag [#allocation4], 1
    %19 = vsyncpa %s18, 0
    loop: start=0, step=1, limit=4
    $region2: #{small_encoder_forward.13} parent=1 // loop_pre_header
      _
    $region3: #{small_encoder_forward.13} parent=1 // loop_header
      %s21 = sphi 0, %s25
      %p22 = scmp.ge.s32.totalorder %s21, 4
      %s31 = sphi 0, %s33
      %s34 = sphi 0, %s31
      %s35 = sphi 0, %s34
      %s51 = sphi 0, %s35
      %s55 = sphi 0, %s55
      %s57 = sphi 0, %s55
      %s58 = sphi 0, %s57
      %s72 = sphi 0, %s58
      %s76 = sphi 0, %s76
      %s78 = sphi 0, %s76
      %s79 = sphi 0, %s78
      %s93 = sphi 0, %s79
      %s97 = sphi 0, %s97
      %s99 = sphi 0, %s97
      %s100 = sphi 0, %s99
      %s114 = sphi 0, %s100
      %s118 = sphi 0, %s118
      %s120 = sphi 0, %s118
      %s121 = sphi 0, %s120
      %s135 = sphi 0, %s121
      %s139 = sphi 0, %s139
      %s141 = sphi 0, %s139
      %s142 = sphi 0, %s141
      %s156 = sphi 0, %s142
      %s160 = sphi 0, %s160
      %s162 = sphi 0, %s160
      %s163 = sphi 0, %s162
      %s177 = sphi 0, %s163
      %s181 = sphi 0, %s181
      %s183 = sphi 0, %s181
      %s184 = sphi 0, %s183
      %s198 = sphi 0, %s184
      %s202 = sphi 0, %s202
      %s204 = sphi 0, %s202
      %s205 = sphi 0, %s204
      %s219 = sphi 0, %s205
      %s223 = sphi 0, %s223
      %s225 = sphi 0, %s223
      %s226 = sphi 0, %s225
      %s240 = sphi 0, %s226
      %s244 = sphi 0, %s244
      %s246 = sphi 0, %s244
      %s247 = sphi 0, %s246
      %s261 = sphi 0, %s247
      %s265 = sphi 0, %s265
      %s267 = sphi 0, %s265
      %s268 = sphi 0, %s267
      %s282 = sphi 0, %s268
      %s288 = sphi 0, %s290
      %s291 = sphi 0, %s288
      %s292 = sphi 0, %s291
      %s308 = sphi 0, %s292
    $region4: #{small_encoder_forward.13} parent=1 // loop_header_branch
      %24 = sbr.rel (%p22) target = $region8
    $region5: #{small_encoder_forward.13} parent=1 // loop_body
      %s26 = ssub.s32 %s21, 1
      %s27 = ssub.s32 %s21, 2
      %s28 = sadd.s32 %s21, 1
      %s29 = ssub.s32 %s21, %s28
      %p30 = scmp.eq.s32.totalorder %s29, 0
      %s32 = sadd.s32 %s31, 1
      %s33 = scalar_select %p30, %s31, %s32
      %p36 = pneg %p30
      %p37 = scmp.eq.s32.totalorder %s21, 1
      %p38 = por %p36, %p37
      %p39 = scmp.ne.s32.totalorder %s31, %s34
      %p40 = scmp.eq.s32.totalorder %s21, 0
      %p41 = por %p39, %p40
      %p42 = scmp.ne.s32.totalorder %s31, %s34
      %p43 = scmp.eq.s32.totalorder %s26, 1
      %p44 = por %p42, %p43
      %p45 = scmp.ne.s32.totalorder %s34, %s35
      %p46 = scmp.eq.s32.totalorder %s26, 0
      %p47 = por %p45, %p46
      %p48 = scmp.ne.s32.totalorder %s34, %s35
      %p49 = scmp.eq.s32.totalorder %s27, 1
      %p50 = por %p48, %p49
      %p52 = scmp.ne.s32.totalorder %s35, %s51
      %p53 = scmp.eq.s32.totalorder %s27, 0
      %p54 = por %p52, %p53
      %s56 = sadd.s32 %s55, 1
      %p59 = scmp.eq.s32.totalorder %s21, 1
      %p60 = scmp.ne.s32.totalorder %s55, %s57
      %p61 = scmp.eq.s32.totalorder %s21, 0
      %p62 = por %p60, %p61
      %p63 = scmp.ne.s32.totalorder %s55, %s57
      %p64 = scmp.eq.s32.totalorder %s26, 1
      %p65 = por %p63, %p64
      %p66 = scmp.ne.s32.totalorder %s57, %s58
      %p67 = scmp.eq.s32.totalorder %s26, 0
      %p68 = por %p66, %p67
      %p69 = scmp.ne.s32.totalorder %s57, %s58
      %p70 = scmp.eq.s32.totalorder %s27, 1
      %p71 = por %p69, %p70
      %p73 = scmp.ne.s32.totalorder %s58, %s72
      %p74 = scmp.eq.s32.totalorder %s27, 0
      %p75 = por %p73, %p74
      %s77 = sadd.s32 %s76, 1
      %p80 = scmp.eq.s32.totalorder %s21, 1
      %p81 = scmp.ne.s32.totalorder %s76, %s78
      %p82 = scmp.eq.s32.totalorder %s21, 0
      %p83 = por %p81, %p82
      %p84 = scmp.ne.s32.totalorder %s76, %s78
      %p85 = scmp.eq.s32.totalorder %s26, 1
      %p86 = por %p84, %p85
      %p87 = scmp.ne.s32.totalorder %s78, %s79
      %p88 = scmp.eq.s32.totalorder %s26, 0
      %p89 = por %p87, %p88
      %p90 = scmp.ne.s32.totalorder %s78, %s79
      %p91 = scmp.eq.s32.totalorder %s27, 1
      %p92 = por %p90, %p91
      %p94 = scmp.ne.s32.totalorder %s79, %s93
      %p95 = scmp.eq.s32.totalorder %s27, 0
      %p96 = por %p94, %p95
      %s98 = sadd.s32 %s97, 1
      %p101 = scmp.eq.s32.totalorder %s21, 1
      %p102 = scmp.ne.s32.totalorder %s97, %s99
      %p103 = scmp.eq.s32.totalorder %s21, 0
      %p104 = por %p102, %p103
      %p105 = scmp.ne.s32.totalorder %s97, %s99
      %p106 = scmp.eq.s32.totalorder %s26, 1
      %p107 = por %p105, %p106
      %p108 = scmp.ne.s32.totalorder %s99, %s100
      %p109 = scmp.eq.s32.totalorder %s26, 0
      %p110 = por %p108, %p109
      %p111 = scmp.ne.s32.totalorder %s99, %s100
      %p112 = scmp.eq.s32.totalorder %s27, 1
      %p113 = por %p111, %p112
      %p115 = scmp.ne.s32.totalorder %s100, %s114
      %p116 = scmp.eq.s32.totalorder %s27, 0
      %p117 = por %p115, %p116
      %s119 = sadd.s32 %s118, 1
      %p122 = scmp.eq.s32.totalorder %s21, 1
      %p123 = scmp.ne.s32.totalorder %s118, %s120
      %p124 = scmp.eq.s32.totalorder %s21, 0
      %p125 = por %p123, %p124
      %p126 = scmp.ne.s32.totalorder %s118, %s120
      %p127 = scmp.eq.s32.totalorder %s26, 1
      %p128 = por %p126, %p127
      %p129 = scmp.ne.s32.totalorder %s120, %s121
      %p130 = scmp.eq.s32.totalorder %s26, 0
      %p131 = por %p129, %p130
      %p132 = scmp.ne.s32.totalorder %s120, %s121
      %p133 = scmp.eq.s32.totalorder %s27, 1
      %p134 = por %p132, %p133
      %p136 = scmp.ne.s32.totalorder %s121, %s135
      %p137 = scmp.eq.s32.totalorder %s27, 0
      %p138 = por %p136, %p137
      %s140 = sadd.s32 %s139, 1
      %p143 = scmp.eq.s32.totalorder %s21, 1
      %p144 = scmp.ne.s32.totalorder %s139, %s141
      %p145 = scmp.eq.s32.totalorder %s21, 0
      %p146 = por %p144, %p145
      %p147 = scmp.ne.s32.totalorder %s139, %s141
      %p148 = scmp.eq.s32.totalorder %s26, 1
      %p149 = por %p147, %p148
      %p150 = scmp.ne.s32.totalorder %s141, %s142
      %p151 = scmp.eq.s32.totalorder %s26, 0
      %p152 = por %p150, %p151
      %p153 = scmp.ne.s32.totalorder %s141, %s142
      %p154 = scmp.eq.s32.totalorder %s27, 1
      %p155 = por %p153, %p154
      %p157 = scmp.ne.s32.totalorder %s142, %s156
      %p158 = scmp.eq.s32.totalorder %s27, 0
      %p159 = por %p157, %p158
      %s161 = sadd.s32 %s160, 1
      %p164 = scmp.eq.s32.totalorder %s21, 1
      %p165 = scmp.ne.s32.totalorder %s160, %s162
      %p166 = scmp.eq.s32.totalorder %s21, 0
      %p167 = por %p165, %p166
      %p168 = scmp.ne.s32.totalorder %s160, %s162
      %p169 = scmp.eq.s32.totalorder %s26, 1
      %p170 = por %p168, %p169
      %p171 = scmp.ne.s32.totalorder %s162, %s163
      %p172 = scmp.eq.s32.totalorder %s26, 0
      %p173 = por %p171, %p172
      %p174 = scmp.ne.s32.totalorder %s162, %s163
      %p175 = scmp.eq.s32.totalorder %s27, 1
      %p176 = por %p174, %p175
      %p178 = scmp.ne.s32.totalorder %s163, %s177
      %p179 = scmp.eq.s32.totalorder %s27, 0
      %p180 = por %p178, %p179
      %s182 = sadd.s32 %s181, 1
      %p185 = scmp.eq.s32.totalorder %s21, 1
      %p186 = scmp.ne.s32.totalorder %s181, %s183
      %p187 = scmp.eq.s32.totalorder %s21, 0
      %p188 = por %p186, %p187
      %p189 = scmp.ne.s32.totalorder %s181, %s183
      %p190 = scmp.eq.s32.totalorder %s26, 1
      %p191 = por %p189, %p190
      %p192 = scmp.ne.s32.totalorder %s183, %s184
      %p193 = scmp.eq.s32.totalorder %s26, 0
      %p194 = por %p192, %p193
      %p195 = scmp.ne.s32.totalorder %s183, %s184
      %p196 = scmp.eq.s32.totalorder %s27, 1
      %p197 = por %p195, %p196
      %p199 = scmp.ne.s32.totalorder %s184, %s198
      %p200 = scmp.eq.s32.totalorder %s27, 0
      %p201 = por %p199, %p200
      %s203 = sadd.s32 %s202, 1
      %p206 = scmp.eq.s32.totalorder %s21, 1
      %p207 = scmp.ne.s32.totalorder %s202, %s204
      %p208 = scmp.eq.s32.totalorder %s21, 0
      %p209 = por %p207, %p208
      %p210 = scmp.ne.s32.totalorder %s202, %s204
      %p211 = scmp.eq.s32.totalorder %s26, 1
      %p212 = por %p210, %p211
      %p213 = scmp.ne.s32.totalorder %s204, %s205
      %p214 = scmp.eq.s32.totalorder %s26, 0
      %p215 = por %p213, %p214
      %p216 = scmp.ne.s32.totalorder %s204, %s205
      %p217 = scmp.eq.s32.totalorder %s27, 1
      %p218 = por %p216, %p217
      %p220 = scmp.ne.s32.totalorder %s205, %s219
      %p221 = scmp.eq.s32.totalorder %s27, 0
      %p222 = por %p220, %p221
      %s224 = sadd.s32 %s223, 1
      %p227 = scmp.eq.s32.totalorder %s21, 1
      %p228 = scmp.ne.s32.totalorder %s223, %s225
      %p229 = scmp.eq.s32.totalorder %s21, 0
      %p230 = por %p228, %p229
      %p231 = scmp.ne.s32.totalorder %s223, %s225
      %p232 = scmp.eq.s32.totalorder %s26, 1
      %p233 = por %p231, %p232
      %p234 = scmp.ne.s32.totalorder %s225, %s226
      %p235 = scmp.eq.s32.totalorder %s26, 0
      %p236 = por %p234, %p235
      %p237 = scmp.ne.s32.totalorder %s225, %s226
      %p238 = scmp.eq.s32.totalorder %s27, 1
      %p239 = por %p237, %p238
      %p241 = scmp.ne.s32.totalorder %s226, %s240
      %p242 = scmp.eq.s32.totalorder %s27, 0
      %p243 = por %p241, %p242
      %s245 = sadd.s32 %s244, 1
      %p248 = scmp.eq.s32.totalorder %s21, 1
      %p249 = scmp.ne.s32.totalorder %s244, %s246
      %p250 = scmp.eq.s32.totalorder %s21, 0
      %p251 = por %p249, %p250
      %p252 = scmp.ne.s32.totalorder %s244, %s246
      %p253 = scmp.eq.s32.totalorder %s26, 1
      %p254 = por %p252, %p253
      %p255 = scmp.ne.s32.totalorder %s246, %s247
      %p256 = scmp.eq.s32.totalorder %s26, 0
      %p257 = por %p255, %p256
      %p258 = scmp.ne.s32.totalorder %s246, %s247
      %p259 = scmp.eq.s32.totalorder %s27, 1
      %p260 = por %p258, %p259
      %p262 = scmp.ne.s32.totalorder %s247, %s261
      %p263 = scmp.eq.s32.totalorder %s27, 0
      %p264 = por %p262, %p263
      %s266 = sadd.s32 %s265, 1
      %p269 = scmp.eq.s32.totalorder %s21, 1
      %p270 = scmp.ne.s32.totalorder %s265, %s267
      %p271 = scmp.eq.s32.totalorder %s21, 0
      %p272 = por %p270, %p271
      %p273 = scmp.ne.s32.totalorder %s265, %s267
      %p274 = scmp.eq.s32.totalorder %s26, 1
      %p275 = por %p273, %p274
      %p276 = scmp.ne.s32.totalorder %s267, %s268
      %p277 = scmp.eq.s32.totalorder %s26, 0
      %p278 = por %p276, %p277
      %p279 = scmp.ne.s32.totalorder %s267, %s268
      %p280 = scmp.eq.s32.totalorder %s27, 1
      %p281 = por %p279, %p280
      %p283 = scmp.ne.s32.totalorder %s268, %s282
      %p284 = scmp.eq.s32.totalorder %s27, 0
      %p285 = por %p283, %p284
      %s286 = ssub.s32 %s21, %s28
      %p287 = scmp.eq.s32.totalorder %s286, 0
      %s289 = sadd.s32 %s288, 1
      %s290 = scalar_select %p287, %s288, %s289
      %p293 = pneg %p287
      %p294 = scmp.eq.s32.totalorder %s21, 1
      %p295 = por %p293, %p294
      %p296 = scmp.ne.s32.totalorder %s288, %s291
      %p297 = scmp.eq.s32.totalorder %s21, 0
      %p298 = por %p296, %p297
      %p299 = scmp.ne.s32.totalorder %s288, %s291
      %p300 = scmp.eq.s32.totalorder %s26, 1
      %p301 = por %p299, %p300
      %p302 = scmp.ne.s32.totalorder %s291, %s292
      %p303 = scmp.eq.s32.totalorder %s26, 0
      %p304 = por %p302, %p303
      %p305 = scmp.ne.s32.totalorder %s291, %s292
      %p306 = scmp.eq.s32.totalorder %s27, 1
      %p307 = por %p305, %p306
      %p309 = scmp.ne.s32.totalorder %s292, %s308
      %p310 = scmp.eq.s32.totalorder %s27, 0
      %p311 = por %p309, %p310
      %p312 = scmp.le.s32.totalorder 1, %s21
      %p313 = scmp.lt.s32.totalorder %s21, 3
      %p314 = pnand %p312, %p313
      %p315 = pneg %p314
      // Predicated region
      $region9: #{small_encoder_forward.13} parent=5 // pred_check
        _
      $region10: #{small_encoder_forward.13} parent=5 // pred_check_branch
        %317 = sbr.rel (%p314) target = $region12
      $region11: #{small_encoder_forward.13} parent=5 // pred_region
        %s318 = ssub.s32 %s21, 1
        // Predicated region
        $region13: #{small_encoder_forward.13} parent=11 // pred_check
          %p319 = pneg %p68
        $region14: #{small_encoder_forward.13} parent=11 // pred_check_branch
          %321 = sbr.rel (%p319) target = $region16
        $region15: #{small_encoder_forward.13} parent=11 // pred_region
          _
        $region16: #{small_encoder_forward.13} parent=11 // pred_fallthru
          _
        // Predicated region
        $region17: #{small_encoder_forward.13} parent=11 // pred_check
          %p322 = pneg %p89
        $region18: #{small_encoder_forward.13} parent=11 // pred_check_branch
          %324 = sbr.rel (%p322) target = $region20
        $region19: #{small_encoder_forward.13} parent=11 // pred_region
          _
        $region20: #{small_encoder_forward.13} parent=11 // pred_fallthru
          _
        // Predicated region
        $region21: #{small_encoder_forward.13} parent=11 // pred_check
          %p325 = pneg %p110
        $region22: #{small_encoder_forward.13} parent=11 // pred_check_branch
          %327 = sbr.rel (%p325) target = $region24
        $region23: #{small_encoder_forward.13} parent=11 // pred_region
          _
        $region24: #{small_encoder_forward.13} parent=11 // pred_fallthru
          _
        // Predicated region
        $region25: #{small_encoder_forward.13} parent=11 // pred_check
          %p328 = pneg %p131
        $region26: #{small_encoder_forward.13} parent=11 // pred_check_branch
          %330 = sbr.rel (%p328) target = $region28
        $region27: #{small_encoder_forward.13} parent=11 // pred_region
          _
        $region28: #{small_encoder_forward.13} parent=11 // pred_fallthru
          _
        // Predicated region
        $region29: #{small_encoder_forward.13} parent=11 // pred_check
          %p331 = pneg %p152
        $region30: #{small_encoder_forward.13} parent=11 // pred_check_branch
          %333 = sbr.rel (%p331) target = $region32
        $region31: #{small_encoder_forward.13} parent=11 // pred_region
          _
        $region32: #{small_encoder_forward.13} parent=11 // pred_fallthru
          _
        // Predicated region
        $region33: #{small_encoder_forward.13} parent=11 // pred_check
          %p334 = pneg %p173
        $region34: #{small_encoder_forward.13} parent=11 // pred_check_branch
          %336 = sbr.rel (%p334) target = $region36
        $region35: #{small_encoder_forward.13} parent=11 // pred_region
          _
        $region36: #{small_encoder_forward.13} parent=11 // pred_fallthru
          _
        // Predicated region
        $region37: #{small_encoder_forward.13} parent=11 // pred_check
          %p337 = pneg %p194
        $region38: #{small_encoder_forward.13} parent=11 // pred_check_branch
          %339 = sbr.rel (%p337) target = $region40
        $region39: #{small_encoder_forward.13} parent=11 // pred_region
          _
        $region40: #{small_encoder_forward.13} parent=11 // pred_fallthru
          _
        // Predicated region
        $region41: #{small_encoder_forward.13} parent=11 // pred_check
          %p340 = pneg %p215
        $region42: #{small_encoder_forward.13} parent=11 // pred_check_branch
          %342 = sbr.rel (%p340) target = $region44
        $region43: #{small_encoder_forward.13} parent=11 // pred_region
          _
        $region44: #{small_encoder_forward.13} parent=11 // pred_fallthru
          _
        // Predicated region
        $region45: #{small_encoder_forward.13} parent=11 // pred_check
          %p343 = pneg %p236
        $region46: #{small_encoder_forward.13} parent=11 // pred_check_branch
          %345 = sbr.rel (%p343) target = $region48
        $region47: #{small_encoder_forward.13} parent=11 // pred_region
          _
        $region48: #{small_encoder_forward.13} parent=11 // pred_fallthru
          _
        // Predicated region
        $region49: #{small_encoder_forward.13} parent=11 // pred_check
          %p346 = pneg %p257
        $region50: #{small_encoder_forward.13} parent=11 // pred_check_branch
          %348 = sbr.rel (%p346) target = $region52
        $region51: #{small_encoder_forward.13} parent=11 // pred_region
          _
        $region52: #{small_encoder_forward.13} parent=11 // pred_fallthru
          _
        // Predicated region
        $region53: #{small_encoder_forward.13} parent=11 // pred_check
          %p349 = pneg %p278
        $region54: #{small_encoder_forward.13} parent=11 // pred_check_branch
          %351 = sbr.rel (%p349) target = $region56
        $region55: #{small_encoder_forward.13} parent=11 // pred_region
          _
        $region56: #{small_encoder_forward.13} parent=11 // pred_fallthru
          _
      $region12: #{small_encoder_forward.13} parent=5 // pred_fallthru
        _
      %p352 = scmp.lt.s32.totalorder %s21, 2
      // Predicated region
      $region57: #{small_encoder_forward.13} parent=5 // pred_check
        %p353 = pneg %p352
      $region58: #{small_encoder_forward.13} parent=5 // pred_check_branch
        %355 = sbr.rel (%p353) target = $region60
      $region59: #{small_encoder_forward.13} parent=5 // pred_region
        // Predicated region
        $region61: #{small_encoder_forward.13} parent=59 // pred_check
          %p356 = pneg %p41
        $region62: #{small_encoder_forward.13} parent=59 // pred_check_branch
          %358 = sbr.rel (%p356) target = $region64
        $region63: #{small_encoder_forward.13} parent=59 // pred_region
          %p359 = scmp.lt.s32.totalorder %s21, 1
          %s360 = scalar_select %p359, %s21, 1
          %s361 = smul.addr %s360, 4
          %s362 = smul.addr %s361, 4
          %s363 = scalar_lea.vmem %s0, %s362
        $region64: #{small_encoder_forward.13} parent=59 // pred_fallthru
          _
      $region60: #{small_encoder_forward.13} parent=5 // pred_fallthru
        _
      %p364 = scmp.le.s32.totalorder 1, %s21
      %p365 = scmp.lt.s32.totalorder %s21, 3
      %p366 = pnand %p364, %p365
      %p367 = pneg %p366
      // Predicated region
      $region65: #{small_encoder_forward.13} parent=5 // pred_check
        _
      $region66: #{small_encoder_forward.13} parent=5 // pred_check_branch
        %369 = sbr.rel (%p366) target = $region68
      $region67: #{small_encoder_forward.13} parent=5 // pred_region
        %s370 = ssub.s32 %s21, 1
        %p371 = scmp.lt.s32.totalorder %s26, 1
        %s372 = scalar_select %p371, %s26, 1
        %s373 = smul.addr %s372, 4
        %s374 = smul.addr %s373, 4
        %s375 = scalar_lea.vmem %s0, %s374
        %p376 = pneg %p47
        %p377 = pneg %p44
        %p378 = pneg %p68
        %p379 = pneg %p65
        %p380 = pneg %p89
        %p381 = pneg %p86
        %p382 = pneg %p110
        %p383 = pneg %p107
        %p384 = pneg %p131
        %p385 = pneg %p128
        %p386 = pneg %p152
        %p387 = pneg %p149
        %p388 = pneg %p173
        %p389 = pneg %p170
        %p390 = pneg %p194
        %p391 = pneg %p191
        %p392 = pneg %p215
        %p393 = pneg %p212
        %p394 = pneg %p236
        %p395 = pneg %p233
        %p396 = pneg %p257
        %p397 = pneg %p254
        %p398 = pneg %p278
        %p399 = pneg %p275
        %p400 = pneg %p304
        %p401 = pneg %p301
        %s402 = sand.u32 %s291, 1
        %s403 = scalar_lea.sflag [#allocation4], %s402
        %s404 = sand.u32 %s291, 1
        %s405 = smul.addr %s404, 16
        %s406 = scalar_lea.vmem [#allocation3], %s405
        %p407 = scmp.lt.s32.totalorder %s26, 1
        %s408 = scalar_select %p407, %s26, 1
        %s409 = smul.addr %s408, 4
        %s410 = smul.addr %s409, 4
        %s411 = scalar_lea.vmem %s0, %s410
        %v413 = vld [vmem:[%s411] sm:$0xf]
        %v414 = vld [vmem:[%s411 + $0x4] sm:$0xf]
        %v415 = vld [vmem:[%s411 + $0x8] sm:$0xf]
        %v416 = vld [vmem:[%s411 + $0xc] sm:$0xf]
        %421 = vst [vmem:[#allocation1] ss:$2 sm:$0xff] %v413
        %s422 = scalar_lea.vmem [#allocation1], 1
        %423 = vst [vmem:[%s422] ss:$2 sm:$0xff] %v414
        %s424 = scalar_lea.vmem [#allocation1], 16
        %425 = vst [vmem:[%s424] ss:$2 sm:$0xff] %v415
        %s426 = scalar_lea.vmem [#allocation1], 17
        %427 = vst [vmem:[%s426] ss:$2 sm:$0xff] %v416
        %v428 = vld.sshfl [vmem:[#allocation1] sm:$0xff pattern:$0x75316420]
        %v429 = vld.sshfl [vmem:[#allocation1 + $0x10] sm:$0xff pattern:$0x75316420]
        %v432 = vpack.c.bf16 %v429, %v428
        %v433 = vld [vmem:[%s1] sm:$0xf]
        %v434 = vld [vmem:[%s1 + $0x4] sm:$0xf]
        %v435 = vld [vmem:[%s1 + $0x8] sm:$0xf]
        %v436 = vld [vmem:[%s1 + $0xc] sm:$0xf]
        %v437 = vld [vmem:[%s1 + $0x10] sm:$0xf]
        %v438 = vld [vmem:[%s1 + $0x14] sm:$0xf]
        %v439 = vld [vmem:[%s1 + $0x18] sm:$0xf]
        %v440 = vld [vmem:[%s1 + $0x1c] sm:$0xf]
        %v441 = vld [vmem:[%s1 + $0x20] sm:$0xf]
        %v442 = vld [vmem:[%s1 + $0x24] sm:$0xf]
        %v443 = vld [vmem:[%s1 + $0x28] sm:$0xf]
        %v444 = vld [vmem:[%s1 + $0x2c] sm:$0xf]
        %v457 = vunpack.c.l.b16 %v433
        %v458 = vunpack.c.l.b16 %v434
        %v459 = vunpack.c.l.b16 %v435
        %v460 = vunpack.c.l.b16 %v436
        %v461 = vunpack.c.l.b16 %v437
        %v462 = vunpack.c.l.b16 %v438
        %v463 = vunpack.c.l.b16 %v439
        %v464 = vunpack.c.l.b16 %v440
        %v465 = vunpack.c.l.b16 %v441
        %v466 = vunpack.c.l.b16 %v442
        %v467 = vunpack.c.l.b16 %v443
        %v468 = vunpack.c.l.b16 %v444
        %v469 = vpack.c.b16 %v458, %v457
        %v470 = vpack.c.b16 %v460, %v459
        %v471 = vpack.c.b16 %v462, %v461
        %v472 = vpack.c.b16 %v464, %v463
        %v473 = vpack.c.b16 %v466, %v465
        %v474 = vpack.c.b16 %v468, %v467
        %vm481 = vcmask 785408
        %v483 = vsel %vm481, %v432, 0
        %485 = vmatpush.bf16.msra.mxu0 0
        %486 = vmatpush.bf16.msra.mxu0 0
        %487 = vmatpush.bf16.msra.mxu0 %v474
        %488 = vmatpush.bf16.msra.mxu0 %v473
        %489 = vmatpush.bf16.msra.mxu0 %v472
        %490 = vmatpush.bf16.msra.mxu0 %v471
        %491 = vmatpush.bf16.msra.mxu0 %v470
        %492 = vmatpush.bf16.msra.mxu0 %v469
        %493 = vmatmul.bf16.gmra.mxu0 %v483
        %v494 = vpop.f32.mrf.mxu0
        %v495 = vadd.f32 0.0, %v494
        %v496 = vpop.f32.mrf.mxu0
        %v497 = vadd.f32 0.0, %v496
        %498 = vdwg.mxu0
        %v499 = vld [vmem:[%s2] sm:$0x1]
        %v501 = vperm.slane %v499, 0
        %v503 = vmul.f32 %v495, %v501
        %v504 = vmul.f32 %v497, %v501
        %v505 = vld [vmem:[%s3] sm:$0x1]
        %v507 = vperm.slane %v505, 0
        %v509 = vadd.f32 %v503, %v507
        %v510 = vadd.f32 %v504, %v507
        %v511 = vmax.f32 %v509, 0.0
        %v512 = vmax.f32 %v510, 0.0
        %vm513 = vcmask 193536
        %514 = vst.msk [vmem:[#allocation2] sm:$0x3f] %vm513, 0.0
        %vm515 = vcmask 188416
        %516 = vst.msk [vmem:[#allocation2] sm:$0x1] %vm515, 0.0
        %517 = vst.msk [vmem:[#allocation2 + $0x8] sm:$0x1] %vm515, 0.0
        %518 = vst.msk [vmem:[#allocation2 + $0x10] sm:$0x1] %vm515, 0.0
        %519 = vst.msk [vmem:[#allocation2 + $0x18] sm:$0x1] %vm515, 0.0
        %520 = vst.msk [vmem:[#allocation2 + $0x20] sm:$0x1] %vm515, 0.0
        %521 = vst.msk [vmem:[#allocation2 + $0x28] sm:$0x1] %vm515, 0.0
        %s522 = scalar_lea.vmem [#allocation2], 40
        %523 = vst.msk [vmem:[%s522] sm:$0x3f] %vm513, 0.0
        %524 = vst.msk [vmem:[#allocation2 + $0x5] sm:$0x1] %vm515, 0.0
        %525 = vst.msk [vmem:[#allocation2 + $0xd] sm:$0x1] %vm515, 0.0
        %526 = vst.msk [vmem:[#allocation2 + $0x15] sm:$0x1] %vm515, 0.0
        %527 = vst.msk [vmem:[#allocation2 + $0x1d] sm:$0x1] %vm515, 0.0
        %528 = vst.msk [vmem:[#allocation2 + $0x25] sm:$0x1] %vm515, 0.0
        %529 = vst.msk [vmem:[#allocation2 + $0x2d] sm:$0x1] %vm515, 0.0
        %v532 = vrot.slane %v511, 4
        %v533 = vrot.slane %v512, 4
        %s536 = scalar_lea.vmem [#allocation2], 8
        %vm537 = vcmask 191488
        %538 = vst.msk [vmem:[%s536 + $0x1] sm:$0xf] %vm537, %v511
        %539 = vst.msk [vmem:[%s536 + $0x9] sm:$0xf] %vm537, %v532
        %540 = vst.msk [vmem:[%s536 + $0x11] sm:$0xf] %vm537, %v512
        %541 = vst.msk [vmem:[%s536 + $0x19] sm:$0xf] %vm537, %v533
        %v542 = vld [vmem:[#allocation2] sm:$0x3f]
        %v543 = vld [vmem:[#allocation2 + $0x8] sm:$0x3f]
        %v544 = vld [vmem:[#allocation2 + $0x10] sm:$0x3f]
        %v545 = vld [vmem:[#allocation2 + $0x18] sm:$0x3f]
        %v546 = vld [vmem:[#allocation2 + $0x20] sm:$0x3f]
        %v547 = vld [vmem:[#allocation2 + $0x28] sm:$0x3f]
        %v552 = vrot.slane %v542, 4
        %v553 = vrot.slane %v543, 4
        %v554 = vrot.slane %v544, 4
        %v555 = vrot.slane %v545, 4
        %vm556 = vcmask 1042432
        %vm557 = vcmask 1046532
        %vm558 = vmor %vm556, %vm557
        %v559 = vrot.slane %v542, 5
        %v560 = vrot.slane %v559, 4
        %v561 = vrot.slane %v552, 5
        %v562 = vsel %vm558, %v560, %v561
        %v563 = vrot.slane %v543, 5
        %v564 = vrot.slane %v563, 4
        %v565 = vrot.slane %v553, 5
        %v566 = vsel %vm558, %v564, %v565
        %v567 = vrot.slane %v544, 5
        %v568 = vrot.slane %v567, 4
        %v569 = vrot.slane %v554, 5
        %v570 = vsel %vm558, %v568, %v569
        %v571 = vrot.slane %v545, 5
        %v572 = vrot.slane %v571, 4
        %v573 = vrot.slane %v555, 5
        %v574 = vsel %vm558, %v572, %v573
        %vm575 = vcmask 1041408
        %vm576 = vcmask 1045508
        %vm577 = vmor %vm575, %vm576
        %v578 = vrot.slane %v542, 6
        %v579 = vrot.slane %v578, 4
        %v580 = vrot.slane %v552, 6
        %v581 = vsel %vm577, %v579, %v580
        %v582 = vrot.slane %v543, 6
        %v583 = vrot.slane %v582, 4
        %v584 = vrot.slane %v553, 6
        %v585 = vsel %vm577, %v583, %v584
        %v586 = vrot.slane %v544, 6
        %v587 = vrot.slane %v586, 4
        %v588 = vrot.slane %v554, 6
        %v589 = vsel %vm577, %v587, %v588
        %v590 = vrot.slane %v545, 6
        %v591 = vrot.slane %v590, 4
        %v592 = vrot.slane %v555, 6
        %v593 = vsel %vm577, %v591, %v592
        %v595 = vrot.slane %v546, 4
        %v596 = vrot.slane %v546, 5
        %v597 = vrot.slane %v596, 4
        %v598 = vrot.slane %v595, 5
        %v599 = vsel %vm558, %v597, %v598
        %v600 = vrot.slane %v546, 6
        %v601 = vrot.slane %v600, 4
        %v602 = vrot.slane %v595, 6
        %v603 = vsel %vm577, %v601, %v602
        %v605 = vrot.slane %v547, 4
        %v606 = vrot.slane %v547, 5
        %v607 = vrot.slane %v606, 4
        %v608 = vrot.slane %v605, 5
        %v609 = vsel %vm558, %v607, %v608
        %v610 = vrot.slane %v547, 6
        %v611 = vrot.slane %v610, 4
        %v612 = vrot.slane %v605, 6
        %v613 = vsel %vm577, %v611, %v612
        %614 = vst [vmem:[#allocation1] ss:$2 sm:$0xff] %v542
        %s615 = scalar_lea.vmem [#allocation1], 1
        %616 = vst [vmem:[%s615] ss:$2 sm:$0xff] %v543
        %s617 = scalar_lea.vmem [#allocation1], 16
        %618 = vst [vmem:[%s617] ss:$2 sm:$0xff] %v544
        %s619 = scalar_lea.vmem [#allocation1], 17
        %620 = vst [vmem:[%s619] ss:$2 sm:$0xff] %v545
        %v621 = vld.sshfl [vmem:[#allocation1] sm:$0xff pattern:$0x75316420]
        %v622 = vld.sshfl [vmem:[#allocation1 + $0x10] sm:$0xff pattern:$0x75316420]
        %625 = vst [vmem:[#allocation1] ss:$2 sm:$0xff] %v562
        %s626 = scalar_lea.vmem [#allocation1], 1
        %627 = vst [vmem:[%s626] ss:$2 sm:$0xff] %v566
        %s628 = scalar_lea.vmem [#allocation1], 16
        %629 = vst [vmem:[%s628] ss:$2 sm:$0xff] %v570
        %s630 = scalar_lea.vmem [#allocation1], 17
        %631 = vst [vmem:[%s630] ss:$2 sm:$0xff] %v574
        %v632 = vld.sshfl [vmem:[#allocation1] sm:$0xff pattern:$0x75316420]
        %v633 = vld.sshfl [vmem:[#allocation1 + $0x10] sm:$0xff pattern:$0x75316420]
        %634 = vrot.lane.b32.xlu0 %v632, 24
        %v635 = vpop.permute.xlu0 %634
        %636 = vrot.lane.b32.xlu0 %v633, 24
        %v637 = vpop.permute.xlu0 %636
        %640 = vst [vmem:[#allocation1] ss:$2 sm:$0xff] %v581
        %s641 = scalar_lea.vmem [#allocation1], 1
        %642 = vst [vmem:[%s641] ss:$2 sm:$0xff] %v585
        %s643 = scalar_lea.vmem [#allocation1], 16
        %644 = vst [vmem:[%s643] ss:$2 sm:$0xff] %v589
        %s645 = scalar_lea.vmem [#allocation1], 17
        %646 = vst [vmem:[%s645] ss:$2 sm:$0xff] %v593
        %v647 = vld.sshfl [vmem:[#allocation1] sm:$0xff pattern:$0x75316420]
        %v648 = vld.sshfl [vmem:[#allocation1 + $0x10] sm:$0xff pattern:$0x75316420]
        %649 = vrot.lane.b32.xlu0 %v647, 48
        %v650 = vpop.permute.xlu0 %649
        %651 = vrot.lane.b32.xlu0 %v648, 48
        %v652 = vpop.permute.xlu0 %651
        %655 = vst [vmem:[#allocation1] ss:$2 sm:$0xff] %v543
        %s656 = scalar_lea.vmem [#allocation1], 1
        %657 = vst [vmem:[%s656] ss:$2 sm:$0xff] %v544
        %s658 = scalar_lea.vmem [#allocation1], 16
        %659 = vst [vmem:[%s658] ss:$2 sm:$0xff] %v545
        %s660 = scalar_lea.vmem [#allocation1], 17
        %661 = vst [vmem:[%s660] ss:$2 sm:$0xff] %v546
        %v662 = vld.sshfl [vmem:[#allocation1] sm:$0xff pattern:$0x75316420]
        %v663 = vld.sshfl [vmem:[#allocation1 + $0x10] sm:$0xff pattern:$0x75316420]
        %664 = vrot.lane.b32.xlu0 %v662, 72
        %v665 = vpop.permute.xlu0 %664
        %666 = vrot.lane.b32.xlu0 %v663, 72
        %v667 = vpop.permute.xlu0 %666
        %670 = vst [vmem:[#allocation1] ss:$2 sm:$0xff] %v566
        %s671 = scalar_lea.vmem [#allocation1], 1
        %672 = vst [vmem:[%s671] ss:$2 sm:$0xff] %v570
        %s673 = scalar_lea.vmem [#allocation1], 16
        %674 = vst [vmem:[%s673] ss:$2 sm:$0xff] %v574
        %s675 = scalar_lea.vmem [#allocation1], 17
        %676 = vst [vmem:[%s675] ss:$2 sm:$0xff] %v599
        %v677 = vld.sshfl [vmem:[#allocation1] sm:$0xff pattern:$0x75316420]
        %v678 = vld.sshfl [vmem:[#allocation1 + $0x10] sm:$0xff pattern:$0x75316420]
        %679 = vrot.lane.b32.xlu0 %v677, 96
        %v680 = vpop.permute.xlu0 %679
        %681 = vrot.lane.b32.xlu0 %v678, 96
        %v682 = vpop.permute.xlu0 %681
        %685 = vst [vmem:[#allocation1] ss:$2 sm:$0xff] %v585
        %s686 = scalar_lea.vmem [#allocation1], 1
        %687 = vst [vmem:[%s686] ss:$2 sm:$0xff] %v589
        %s688 = scalar_lea.vmem [#allocation1], 16
        %689 = vst [vmem:[%s688] ss:$2 sm:$0xff] %v593
        %s690 = scalar_lea.vmem [#allocation1], 17
        %691 = vst [vmem:[%s690] ss:$2 sm:$0xff] %v603
        %v692 = vld.sshfl [vmem:[#allocation1] sm:$0xff pattern:$0x75316420]
        %v693 = vld.sshfl [vmem:[#allocation1 + $0x10] sm:$0xff pattern:$0x75316420]
        %694 = vrot.lane.b32.xlu0 %v692, 120
        %v695 = vpop.permute.xlu0 %694
        %696 = vrot.lane.b32.xlu0 %v693, 120
        %v697 = vpop.permute.xlu0 %696
        %700 = vst [vmem:[#allocation1] ss:$2 sm:$0xff] %v544
        %s701 = scalar_lea.vmem [#allocation1], 1
        %702 = vst [vmem:[%s701] ss:$2 sm:$0xff] %v545
        %s703 = scalar_lea.vmem [#allocation1], 16
        %704 = vst [vmem:[%s703] ss:$2 sm:$0xff] %v546
        %s705 = scalar_lea.vmem [#allocation1], 17
        %706 = vst [vmem:[%s705] ss:$2 sm:$0xff] %v547
        %v707 = vld.sshfl [vmem:[#allocation1] sm:$0xff pattern:$0x75316420]
        %v708 = vld.sshfl [vmem:[#allocation1 + $0x10] sm:$0xff pattern:$0x75316420]
        %709 = vrot.lane.b32.xlu0 %v707, 16
        %v710 = vpop.permute.xlu0 %709
        %711 = vrot.lane.b32.xlu0 %v708, 16
        %v712 = vpop.permute.xlu0 %711
        %715 = vst [vmem:[#allocation1] ss:$2 sm:$0xff] %v570
        %s716 = scalar_lea.vmem [#allocation1], 1
        %717 = vst [vmem:[%s716] ss:$2 sm:$0xff] %v574
        %s718 = scalar_lea.vmem [#allocation1], 16
        %719 = vst [vmem:[%s718] ss:$2 sm:$0xff] %v599
        %s720 = scalar_lea.vmem [#allocation1], 17
        %721 = vst [vmem:[%s720] ss:$2 sm:$0xff] %v609
        %v722 = vld.sshfl [vmem:[#allocation1] sm:$0xff pattern:$0x75316420]
        %v723 = vld.sshfl [vmem:[#allocation1 + $0x10] sm:$0xff pattern:$0x75316420]
        %724 = vrot.lane.b32.xlu0 %v722, 40
        %v725 = vpop.permute.xlu0 %724
        %726 = vrot.lane.b32.xlu0 %v723, 40
        %v727 = vpop.permute.xlu0 %726
        %730 = vst [vmem:[#allocation1] ss:$2 sm:$0xff] %v589
        %s731 = scalar_lea.vmem [#allocation1], 1
        %732 = vst [vmem:[%s731] ss:$2 sm:$0xff] %v593
        %s733 = scalar_lea.vmem [#allocation1], 16
        %734 = vst [vmem:[%s733] ss:$2 sm:$0xff] %v603
        %s735 = scalar_lea.vmem [#allocation1], 17
        %736 = vst [vmem:[%s735] ss:$2 sm:$0xff] %v613
        %v737 = vld.sshfl [vmem:[#allocation1] sm:$0xff pattern:$0x75316420]
        %v738 = vld.sshfl [vmem:[#allocation1 + $0x10] sm:$0xff pattern:$0x75316420]
        %739 = vrot.lane.b32.xlu0 %v737, 64
        %v740 = vpop.permute.xlu0 %739
        %741 = vrot.lane.b32.xlu0 %v738, 64
        %v742 = vpop.permute.xlu0 %741
        %vm745 = vcmask 195584
        %v746 = vsel %vm745, %v621, %v635
        %v747 = vsel %vm745, %v622, %v637
        %vm748 = vcmask 392192
        %v749 = vsel %vm748, %v746, %v650
        %v750 = vsel %vm748, %v747, %v652
        %vm751 = vcmask 588800
        %v752 = vsel %vm751, %v749, %v665
        %v753 = vsel %vm751, %v750, %v667
        %v754 = vsel %vm481, %v752, %v680
        %v755 = vsel %vm481, %v753, %v682
        %vm756 = vcmask 982016
        %v757 = vsel %vm756, %v754, %v695
        %v758 = vsel %vm756, %v755, %v697
        %vm759 = vcmask 130048
        %v760 = vsel %vm759, %v695, %v710
        %v761 = vsel %vm759, %v697, %v712
        %vm762 = vcmask 326656
        %v763 = vsel %vm762, %v760, %v725
        %v764 = vsel %vm762, %v761, %v727
        %vm765 = vcmask 523264
        %v766 = vsel %vm765, %v763, %v740
        %v767 = vsel %vm765, %v764, %v742
        %v768 = vpack.c.bf16 %v758, %v757
        %v769 = vpack.c.bf16 %v767, %v766
        %v770 = vld [vmem:[%s4] sm:$0xf]
        %v771 = vld [vmem:[%s4 + $0x4] sm:$0xf]
        %v772 = vld [vmem:[%s4 + $0x8] sm:$0xf]
        %v773 = vld [vmem:[%s4 + $0xc] sm:$0xf]
        %v774 = vld [vmem:[%s4 + $0x10] sm:$0xf]
        %v775 = vld [vmem:[%s4 + $0x14] sm:$0xf]
        %v776 = vld [vmem:[%s4 + $0x18] sm:$0xf]
        %v777 = vld [vmem:[%s4 + $0x1c] sm:$0xf]
        %v778 = vld [vmem:[%s4 + $0x20] sm:$0xf]
        %v779 = vld [vmem:[%s4 + $0x24] sm:$0xf]
        %v780 = vld [vmem:[%s4 + $0x28] sm:$0xf]
        %v781 = vld [vmem:[%s4 + $0x2c] sm:$0xf]
        %v782 = vld [vmem:[%s4 + $0x30] sm:$0xf]
        %v783 = vld [vmem:[%s4 + $0x34] sm:$0xf]
        %v784 = vld [vmem:[%s4 + $0x38] sm:$0xf]
        %v785 = vld [vmem:[%s4 + $0x3c] sm:$0xf]
        %v786 = vld [vmem:[%s4 + $0x40] sm:$0xf]
        %v787 = vld [vmem:[%s4 + $0x44] sm:$0xf]
        %v788 = vld [vmem:[%s4 + $0x48] sm:$0xf]
        %v789 = vld [vmem:[%s4 + $0x4c] sm:$0xf]
        %v790 = vld [vmem:[%s4 + $0x50] sm:$0xf]
        %v791 = vld [vmem:[%s4 + $0x54] sm:$0xf]
        %v792 = vld [vmem:[%s4 + $0x58] sm:$0xf]
        %v793 = vld [vmem:[%s4 + $0x5c] sm:$0xf]
        %v794 = vld [vmem:[%s4 + $0x60] sm:$0xf]
        %v795 = vld [vmem:[%s4 + $0x64] sm:$0xf]
        %v796 = vld [vmem:[%s4 + $0x68] sm:$0xf]
        %v824 = vunpack.c.l.b16 %v770
        %v825 = vunpack.c.l.b16 %v771
        %v826 = vunpack.c.l.b16 %v772
        %v827 = vunpack.c.l.b16 %v773
        %v828 = vunpack.c.l.b16 %v774
        %v829 = vunpack.c.l.b16 %v775
        %v830 = vunpack.c.l.b16 %v776
        %v831 = vunpack.c.l.b16 %v777
        %v832 = vunpack.c.l.b16 %v778
        %v833 = vunpack.c.l.b16 %v779
        %v834 = vunpack.c.l.b16 %v780
        %v835 = vunpack.c.l.b16 %v781
        %v836 = vunpack.c.l.b16 %v782
        %v837 = vunpack.c.l.b16 %v783
        %v838 = vunpack.c.l.b16 %v784
        %v839 = vunpack.c.l.b16 %v785
        %v840 = vunpack.c.l.b16 %v786
        %v841 = vunpack.c.l.b16 %v787
        %v842 = vunpack.c.l.b16 %v788
        %v843 = vunpack.c.l.b16 %v789
        %v844 = vunpack.c.l.b16 %v790
        %v845 = vunpack.c.l.b16 %v791
        %v846 = vunpack.c.l.b16 %v792
        %v847 = vunpack.c.l.b16 %v793
        %v848 = vunpack.c.l.b16 %v794
        %v849 = vunpack.c.l.b16 %v795
        %v850 = vunpack.c.l.b16 %v796
        %v851 = vpack.c.b16 %v825, %v824
        %v852 = vpack.c.b16 %v827, %v826
        %v853 = vpack.c.b16 %v829, %v828
        %v854 = vpack.c.b16 %v831, %v830
        %v855 = vpack.c.b16 %v833, %v832
        %v856 = vpack.c.b16 %v835, %v834
        %v857 = vpack.c.b16 %v837, %v836
        %v858 = vpack.c.b16 %v839, %v838
        %v859 = vpack.c.b16 %v841, %v840
        %v860 = vpack.c.b16 %v843, %v842
        %v861 = vpack.c.b16 %v845, %v844
        %v862 = vpack.c.b16 %v847, %v846
        %v863 = vpack.c.b16 %v849, %v848
        %v864 = vpack.c.b16 %v850, %v850
        %vm878 = vcmask 719872
        %v880 = vsel %vm878, %v769, 0
        %vm882 = vcmask 1043456
        %v884 = vsel %vm882, %v864, 0
        %886 = vmatpush.bf16.msra.mxu0 %v858
        %887 = vmatpush.bf16.msra.mxu0 %v857
        %888 = vmatpush.bf16.msra.mxu0 %v856
        %889 = vmatpush.bf16.msra.mxu0 %v855
        %890 = vmatpush.bf16.msra.mxu0 %v854
        %891 = vmatpush.bf16.msra.mxu0 %v853
        %892 = vmatpush.bf16.msra.mxu0 %v852
        %893 = vmatpush.bf16.msra.mxu0 %v851
        %894 = vmatmul.bf16.gmra.mxu0 %v768
        %v895 = vpop.f32.mrf.mxu0
        %v896 = vadd.f32 0.0, %v895
        %v897 = vpop.f32.mrf.mxu0
        %v898 = vadd.f32 0.0, %v897
        %899 = vdwg.mxu0
        %900 = vmatpush.bf16.msra.mxu0 0
        %901 = vmatpush.bf16.msra.mxu0 0
        %902 = vmatpush.bf16.msra.mxu0 %v884
        %903 = vmatpush.bf16.msra.mxu0 %v863
        %904 = vmatpush.bf16.msra.mxu0 %v862
        %905 = vmatpush.bf16.msra.mxu0 %v861
        %906 = vmatpush.bf16.msra.mxu0 %v860
        %907 = vmatpush.bf16.msra.mxu0 %v859
        %908 = vmatmul.bf16.gmra.mxu0 %v880
        %v909 = vpop.f32.mrf.mxu0
        %v910 = vadd.f32 %v896, %v909
        %v911 = vpop.f32.mrf.mxu0
        %v912 = vadd.f32 %v898, %v911
        %913 = vdwg.mxu0
        %v914 = vld [vmem:[%s5] sm:$0x1]
        %v916 = vperm.slane %v914, 0
        %v918 = vmul.f32 %v910, %v916
        %v919 = vmul.f32 %v912, %v916
        %v920 = vld [vmem:[%s6] sm:$0x1]
        %v922 = vperm.slane %v920, 0
        %v924 = vadd.f32 %v918, %v922
        %v925 = vadd.f32 %v919, %v922
        %v926 = vmax.f32 %v924, 0.0
        %v927 = vmax.f32 %v925, 0.0
        %v928 = vpack.c.bf16 %v927, %v926
        %v929 = vld [vmem:[%s7] sm:$0xf]
        %v930 = vld [vmem:[%s7 + $0x4] sm:$0xf]
        %v931 = vld [vmem:[%s7 + $0x8] sm:$0xf]
        %v935 = vunpack.c.l.b16 %v929
        %v936 = vunpack.c.l.b16 %v930
        %v937 = vunpack.c.l.b16 %v931
        %v938 = vpack.c.b16 %v936, %v935
        %v939 = vpack.c.b16 %v937, %v937
        %v942 = vsel %vm745, %v928, 0
        %v945 = vsel %vm882, %v939, 0
        %947 = vmatpush.bf16.msra.mxu0 0
        %948 = vmatpush.bf16.msra.mxu0 0
        %949 = vmatpush.bf16.msra.mxu0 0
        %950 = vmatpush.bf16.msra.mxu0 0
        %951 = vmatpush.bf16.msra.mxu0 0
        %952 = vmatpush.bf16.msra.mxu0 0
        %953 = vmatpush.bf16.msra.mxu0 %v945
        %954 = vmatpush.bf16.msra.mxu0 %v938
        %955 = vmatmul.bf16.gmra.mxu0 %v942
        %v956 = vpop.f32.mrf.mxu0
        %v957 = vadd.f32 0.0, %v956
        %v958 = vpop.f32.mrf.mxu0
        %v959 = vadd.f32 0.0, %v958
        %960 = vdwg.mxu0
        %v961 = vld [vmem:[%s8] sm:$0x1]
        %v963 = vperm.slane %v961, 0
        %v965 = vmul.f32 %v957, %v963
        %v966 = vmul.f32 %v959, %v963
        %v967 = vld [vmem:[%s9] sm:$0x1]
        %v969 = vperm.slane %v967, 0
        %v971 = vadd.f32 %v965, %v969
        %v972 = vadd.f32 %v966, %v969
        %v973 = vmax.f32 %v971, 0.0
        %v974 = vmax.f32 %v972, 0.0
        %v977 = vrot.slane %v973, 4
        %v978 = vrot.slane %v974, 4
        %v981 = vadd.f32 %v413, %v973
        %v982 = vadd.f32 %v414, %v977
        %v983 = vadd.f32 %v415, %v974
        %v984 = vadd.f32 %v416, %v978
        %v985 = vmax.f32 %v981, 0.0
        %v986 = vmax.f32 %v982, 0.0
        %v987 = vmax.f32 %v983, 0.0
        %v988 = vmax.f32 %v984, 0.0
        %993 = vst [vmem:[#allocation1] ss:$2 sm:$0xff] %v985
        %s994 = scalar_lea.vmem [#allocation1], 1
        %995 = vst [vmem:[%s994] ss:$2 sm:$0xff] %v986
        %s996 = scalar_lea.vmem [#allocation1], 16
        %997 = vst [vmem:[%s996] ss:$2 sm:$0xff] %v987
        %s998 = scalar_lea.vmem [#allocation1], 17
        %999 = vst [vmem:[%s998] ss:$2 sm:$0xff] %v988
        %v1000 = vld.sshfl [vmem:[#allocation1] sm:$0xff pattern:$0x75316420]
        %v1001 = vld.sshfl [vmem:[#allocation1 + $0x10] sm:$0xff pattern:$0x75316420]
        %v1004 = vpack.c.bf16 %v1001, %v1000
        %v1005 = vld [vmem:[%s10] sm:$0xf]
        %v1006 = vld [vmem:[%s10 + $0x4] sm:$0xf]
        %v1007 = vld [vmem:[%s10 + $0x8] sm:$0xf]
        %v1008 = vld [vmem:[%s10 + $0xc] sm:$0xf]
        %v1009 = vld [vmem:[%s10 + $0x10] sm:$0xf]
        %v1010 = vld [vmem:[%s10 + $0x14] sm:$0xf]
        %v1011 = vld [vmem:[%s10 + $0x18] sm:$0xf]
        %v1012 = vld [vmem:[%s10 + $0x1c] sm:$0xf]
        %v1013 = vld [vmem:[%s10 + $0x20] sm:$0xf]
        %v1014 = vld [vmem:[%s10 + $0x24] sm:$0xf]
        %v1015 = vld [vmem:[%s10 + $0x28] sm:$0xf]
        %v1016 = vld [vmem:[%s10 + $0x2c] sm:$0xf]
        %v1017 = vld [vmem:[%s11] sm:$0x1]
        %v1019 = vperm.slane %v1017, 0
        %v1033 = vunpack.c.l.b16 %v1005
        %v1034 = vunpack.c.l.b16 %v1006
        %v1035 = vunpack.c.l.b16 %v1007
        %v1036 = vunpack.c.l.b16 %v1008
        %v1037 = vunpack.c.l.b16 %v1009
        %v1038 = vunpack.c.l.b16 %v1010
        %v1039 = vunpack.c.l.b16 %v1011
        %v1040 = vunpack.c.l.b16 %v1012
        %v1041 = vunpack.c.l.b16 %v1013
        %v1042 = vunpack.c.l.b16 %v1014
        %v1043 = vunpack.c.l.b16 %v1015
        %v1044 = vunpack.c.l.b16 %v1016
        %v1045 = vpack.c.b16 %v1034, %v1033
        %v1046 = vpack.c.b16 %v1036, %v1035
        %v1047 = vpack.c.b16 %v1038, %v1037
        %v1048 = vpack.c.b16 %v1040, %v1039
        %v1049 = vpack.c.b16 %v1042, %v1041
        %v1050 = vpack.c.b16 %v1044, %v1043
        %v1058 = vsel %vm481, %v1004, 0
        %1060 = vmatpush.bf16.msra.mxu0 0
        %1061 = vmatpush.bf16.msra.mxu0 0
        %1062 = vmatpush.bf16.msra.mxu0 %v1050
        %1063 = vmatpush.bf16.msra.mxu0 %v1049
        %1064 = vmatpush.bf16.msra.mxu0 %v1048
        %1065 = vmatpush.bf16.msra.mxu0 %v1047
        %1066 = vmatpush.bf16.msra.mxu0 %v1046
        %1067 = vmatpush.bf16.msra.mxu0 %v1045
        %1068 = vmatmul.bf16.gmra.mxu0 %v1058
        %v1069 = vpop.f32.mrf.mxu0
        %v1070 = vadd.f32 %v1019, %v1069
        %v1071 = vpop.f32.mrf.mxu0
        %v1072 = vadd.f32 %v1019, %v1071
        %1073 = vdwg.mxu0
        %v1076 = vrot.slane %v1070, 4
        %v1077 = vrot.slane %v1072, 4
        %1080 = vst [vmem:[%s406] sm:$0xf] %v1070
        %1081 = vst [vmem:[%s406 + $0x4] sm:$0xf] %v1076
        %1082 = vst [vmem:[%s406 + $0x8] sm:$0xf] %v1072
        %1083 = vst [vmem:[%s406 + $0xc] sm:$0xf] %v1077
        %s1084 = sand.u32 %s291, 1
        %s1085 = scalar_lea.sflag [#allocation4], %s1084
        %s1086 = sand.u32 %s291, 1
        %s1087 = smul.addr %s1086, 16
        %s1088 = scalar_lea.vmem [#allocation3], %s1087
        // Predicated region
        $region69: #{small_encoder_forward.13} parent=67 // pred_check
          %p1089 = pneg %p301
        $region70: #{small_encoder_forward.13} parent=67 // pred_check_branch
          %1091 = sbr.rel (%p1089) target = $region72
        $region71: #{small_encoder_forward.13} parent=67 // pred_region
          %1093 = vsyncadd %s1085, 0
          %s1094 = smul.addr %s26, 4
          %s1095 = smul.addr %s1094, 4
          %s1096 = scalar_lea.hbm %s12, %s1095
          %s1097 = sshll.u32 %s1088, 4
          %s1098 = int_to_ptr.vmem [resolvable:$true] %s1097
          %s1099 = sshll.u32 %s1096, 4
          %s1100 = int_to_ptr.hbm [resolvable:$true] %s1099
          %1105 = dma.vmem_to_hbm [thread:$0]  %s1098, 256, %s1100, %s1085, 64, 64, 4
        $region72: #{small_encoder_forward.13} parent=67 // pred_fallthru
          _
      $region68: #{small_encoder_forward.13} parent=5 // pred_fallthru
        _
      %p1106 = scmp.le.s32.totalorder 2, %s21
      // Predicated region
      $region73: #{small_encoder_forward.13} parent=5 // pred_check
        %p1107 = pneg %p1106
      $region74: #{small_encoder_forward.13} parent=5 // pred_check_branch
        %1109 = sbr.rel (%p1107) target = $region76
      $region75: #{small_encoder_forward.13} parent=5 // pred_region
        %s1110 = ssub.s32 %s21, 2
        // Predicated region
        $region77: #{small_encoder_forward.13} parent=75 // pred_check
          %p1111 = pneg %p307
        $region78: #{small_encoder_forward.13} parent=75 // pred_check_branch
          %1113 = sbr.rel (%p1111) target = $region80
        $region79: #{small_encoder_forward.13} parent=75 // pred_region
          %s1114 = sand.u32 %s292, 1
          %s1115 = scalar_lea.sflag [#allocation4], %s1114
          %s1116 = sand.u32 %s292, 1
          %s1117 = smul.addr %s1116, 16
          %s1118 = scalar_lea.vmem [#allocation3], %s1117
          %1120 = dma.done %s1115, 256
        $region80: #{small_encoder_forward.13} parent=75 // pred_fallthru
          _
      $region76: #{small_encoder_forward.13} parent=5 // pred_fallthru
        _
    $region6: #{small_encoder_forward.13} parent=1 // loop_footer
      %s25 = sadd.s32 1, %s21
    $region7: #{small_encoder_forward.13} parent=1 // loop_footer_branch
      %20 = sbr.rel target = $region3
    $region8: #{small_encoder_forward.13} parent=1 // loop_exit
      _
    %1121 = vsyncpa [#allocation4], 1
    %s1122 = scalar_lea.sflag [#allocation4], 1
    %1123 = vsyncpa %s1122, 1

</llo_original>
